<compile_context>
chip_gen: v7x
topology: tpu7x:2x2x1
jax: 0.10.0
libtpu: 0.0.40
codegen_flags: <defaults>
</compile_context>

<pallas_src>
import functools

import jax
import jax.numpy as jnp
from jax import lax
from jax.experimental import pallas as pl
from jax.experimental.pallas import tpu as pltpu

TM_CAP = 512                # row-tile cap for the 1x1 / fused-tail matmuls
TR_CAP = 64                 # row-tile cap for the (1,7) conv kernel
LPAD = 8                    # aligned left-halo width inside the conv scratch
VMEM_LIMIT = 32 * 1024 * 1024


def _cdiv(a, b):
    return (a + b - 1) // b


def _pick_tile(rows, cap):
    # Largest multiple-of-8 tile <= cap that still leaves >= 2 grid steps when
    # possible (keeps both TensorCores busy under "parallel" semantics).
    t = _cdiv(rows, 2)
    t = ((t + 7) // 8) * 8
    return max(8, min(cap, t))


def _cparams():
    return pltpu.CompilerParams(dimension_semantics=("parallel",),
                                vmem_limit_bytes=VMEM_LIMIT)


# ----------------------------- Pallas kernels ------------------------------ #

def _front_kernel(x_ref, w_ref, b_ref, o21_ref, o1_ref, *, c4):
    # One wide 1x1 conv (+folded BN +ReLU) producing [branch2_1 | branch1].
    acc = jnp.dot(x_ref[...], w_ref[...], preferred_element_type=jnp.float32)
    y = jnp.maximum(acc + b_ref[...], 0.0)
    o21_ref[...] = y[:, :c4].astype(o21_ref.dtype)
    o1_ref[...] = y[:, c4:].astype(o1_ref.dtype)


def _conv7_w_kernel(x_ref, w_ref, b_ref, o_ref, xpad_ref, *, length, pad):
    # (1,7) "same" conv along the sublane axis.  Halo handled in a VMEM
    # scratch (no HBM pre-padding); 7 shifted matmuls accumulate in f32.
    tr, _, cin = x_ref.shape
    cout = o_ref.shape[-1]
    xpad_ref[...] = jnp.zeros(xpad_ref.shape, xpad_ref.dtype)
    xpad_ref[:, LPAD:LPAD + length, :] = x_ref[...]      # aligned interior store
    acc = jnp.zeros((tr * length, cout), jnp.float32)
    for k in range(2 * pad + 1):                          # static unroll: 7 taps
        start = LPAD - pad + k
        xk = xpad_ref[:, start:start + length, :].reshape(tr * length, cin)
        acc = acc + jnp.dot(xk, w_ref[k], preferred_element_type=jnp.float32)
    out = jnp.maximum(acc + b_ref[...], 0.0)
    o_ref[...] = out.reshape(tr, length, cout).astype(o_ref.dtype)


def _conv7_h_kernel(x_ref, w_ref, b_ref, o_ref, xpad_ref, *, height, pad):
    # (7,1) "same" conv: the block is (1, H, W, C) so the conv axis (H) is a
    # leading (untiled) dim -- per-tap shifts are free of sublane relayouts
    # and no NHWC<->NWHC transposes are needed in HBM.
    _, _, width, cin = x_ref.shape
    cout = o_ref.shape[-1]
    zer = jnp.zeros((pad, width, cin), xpad_ref.dtype)
    xpad_ref[0:pad, :, :] = zer
    xpad_ref[pad + height:2 * pad + height, :, :] = zer
    xpad_ref[pad:pad + height, :, :] = x_ref[0]
    acc = jnp.zeros((height * width, cout), jnp.float32)
    for k in range(2 * pad + 1):
        xk = xpad_ref[k:k + height, :, :].reshape(height * width, cin)
        acc = acc + jnp.dot(xk, w_ref[k], preferred_element_type=jnp.float32)
    out = jnp.maximum(acc + b_ref[...], 0.0)
    o_ref[...] = out.reshape(1, height, width, cout).astype(o_ref.dtype)


def _tail_conv_shortcut_kernel(x_ref, b1_ref, b23_ref, wl1_ref, wl2_ref,
                               wsc_ref, bl_ref, bsc_ref, o_ref, *, scale_mul):
    # linear(cat[b1|b23]) (scale pre-folded) + 1x1-conv shortcut + residual
    # + final ReLU, with a single live full-width f32 temporary.
    acc = jnp.dot(b1_ref[...], wl1_ref[...], preferred_element_type=jnp.float32)
    acc = acc + jnp.dot(b23_ref[...], wl2_ref[...],
                        preferred_element_type=jnp.float32)
    acc = jnp.maximum(acc + bl_ref[...], 0.0)
    if scale_mul != 1.0:                       # only when scale <= 0 (not folded)
        acc = acc * scale_mul
    acc = acc + jnp.dot(x_ref[...], wsc_ref[...],
                        preferred_element_type=jnp.float32) + bsc_ref[...]
    o_ref[...] = jnp.maximum(acc, 0.0)


def _tail_identity_kernel(xf_ref, b1_ref, b23_ref, wl1_ref, wl2_ref, bl_ref,
                          o_ref, *, scale_mul):
    acc = jnp.dot(b1_ref[...], wl1_ref[...], preferred_element_type=jnp.float32)
    acc = acc + jnp.dot(b23_ref[...], wl2_ref[...],
                        preferred_element_type=jnp.float32)
    acc = jnp.maximum(acc + bl_ref[...], 0.0)
    if scale_mul != 1.0:
        acc = acc * scale_mul
    o_ref[...] = jnp.maximum(xf_ref[...] + acc, 0.0)   # identity add stays f32


# ------------------------------ JAX wrappers -------------------------------- #

def front_matmul(x2d, w, bias, c4):
    m, cin = x2d.shape
    ctot = w.shape[1]
    c6 = ctot - c4
    tm = _pick_tile(m, TM_CAP)
    return pl.pallas_call(
        functools.partial(_front_kernel, c4=c4),
        out_shape=(jax.ShapeDtypeStruct((m, c4), jnp.bfloat16),
                   jax.ShapeDtypeStruct((m, c6), jnp.bfloat16)),
        grid=(pl.cdiv(m, tm),),
        in_specs=[pl.BlockSpec((tm, cin), lambda i: (i, 0)),
                  pl.BlockSpec((cin, ctot), lambda i: (0, 0)),
                  pl.BlockSpec((1, ctot), lambda i: (0, 0))],
        out_specs=(pl.BlockSpec((tm, c4), lambda i: (i, 0)),
                   pl.BlockSpec((tm, c6), lambda i: (i, 0))),
        compiler_params=_cparams(),
    )(x2d, w, bias.reshape(1, ctot))


def conv7_along_w(x3d, w_taps, bias):
    r, length, cin = x3d.shape
    ntaps, _, cout = w_taps.shape
    pad = (ntaps - 1) // 2
    assert pad <= LPAD
    tr = _pick_tile(r, TR_CAP)
    kern = functools.partial(_conv7_w_kernel, length=length, pad=pad)
    return pl.pallas_call(
        kern,
        out_shape=jax.ShapeDtypeStruct((r, length, cout), jnp.bfloat16),
        grid=(pl.cdiv(r, tr),),
        in_specs=[pl.BlockSpec((tr, length, cin), lambda i: (i, 0, 0)),
                  pl.BlockSpec((ntaps, cin, cout), lambda i: (0, 0, 0)),
                  pl.BlockSpec((1, cout), lambda i: (0, 0))],
        out_specs=pl.BlockSpec((tr, length, cout), lambda i: (i, 0, 0)),
        scratch_shapes=[pltpu.VMEM((tr, length + 2 * LPAD, cin), jnp.bfloat16)],
        compiler_params=_cparams(),
    )(x3d, w_taps, bias.reshape(1, cout))


def conv7_along_h(x4d, w_taps, bias):
    n, h, w, cin = x4d.shape
    ntaps, _, cout = w_taps.shape
    pad = (ntaps - 1) // 2
    kern = functools.partial(_conv7_h_kernel, height=h, pad=pad)
    return pl.pallas_call(
        kern,
        out_shape=jax.ShapeDtypeStruct((n, h, w, cout), jnp.bfloat16),
        grid=(n,),
        in_specs=[pl.BlockSpec((1, h, w, cin), lambda i: (i, 0, 0, 0)),
                  pl.BlockSpec((ntaps, cin, cout), lambda i: (0, 0, 0)),
                  pl.BlockSpec((1, cout), lambda i: (0, 0))],
        out_specs=pl.BlockSpec((1, h, w, cout), lambda i: (i, 0, 0, 0)),
        scratch_shapes=[pltpu.VMEM((h + 2 * pad, w, cin), jnp.bfloat16)],
        compiler_params=_cparams(),
    )(x4d, w_taps, bias.reshape(1, cout))


def fused_tail(x2d, b1, b23, params, *, scale_mul):
    m, cin = x2d.shape
    c6 = b1.shape[1]
    cout = params["lin_w1"].shape[1]
    tm = _pick_tile(m, TM_CAP)
    row = lambda i: (i, 0)
    full = lambda i: (0, 0)
    if params["sc_w"] is not None:
        kern = functools.partial(_tail_conv_shortcut_kernel, scale_mul=scale_mul)
        return pl.pallas_call(
            kern,
            out_shape=jax.ShapeDtypeStruct((m, cout), jnp.float32),
            grid=(pl.cdiv(m, tm),),
            in_specs=[pl.BlockSpec((tm, cin), row),
                      pl.BlockSpec((tm, c6), row),
                      pl.BlockSpec((tm, c6), row),
                      pl.BlockSpec((c6, cout), full),
                      pl.BlockSpec((c6, cout), full),
                      pl.BlockSpec((cin, cout), full),
                      pl.BlockSpec((1, cout), full),
                      pl.BlockSpec((1, cout), full)],
            out_specs=pl.BlockSpec((tm, cout), row),
            compiler_params=_cparams(),
        )(x2d, b1, b23, params["lin_w1"], params["lin_w2"], params["sc_w"],
          params["lin_b"].reshape(1, cout), params["sc_b"].reshape(1, cout))
    kern = functools.partial(_tail_identity_kernel, scale_mul=scale_mul)
    return pl.pallas_call(
        kern,
        out_shape=jax.ShapeDtypeStruct((m, cout), jnp.float32),
        grid=(pl.cdiv(m, tm),),
        in_specs=[pl.BlockSpec((tm, cin), row),
                  pl.BlockSpec((tm, c6), row),
                  pl.BlockSpec((tm, c6), row),
                  pl.BlockSpec((c6, cout), full),
                  pl.BlockSpec((c6, cout), full),
                  pl.BlockSpec((1, cout), full)],
        out_specs=pl.BlockSpec((tm, cout), row),
        compiler_params=_cparams(),
    )(x2d, b1, b23, params["lin_w1"], params["lin_w2"],
      params["lin_b"].reshape(1, cout))


# --------------------------- parameters / folding --------------------------- #

def _init_conv_bn(key, cin, cout, kh, kw):
    kw_, kb, kg, kbe, km, kv = jax.random.split(key, 6)
    return {
        "w": 0.1 * jax.random.normal(kw_, (cout, cin, kh, kw), jnp.float32),
        "b": 0.05 * jax.random.normal(kb, (cout,), jnp.float32),
        "gamma": 1.0 + 0.1 * jax.random.normal(kg, (cout,), jnp.float32),
        "beta": 0.05 * jax.random.normal(kbe, (cout,), jnp.float32),
        "mean": 0.05 * jax.random.normal(km, (cout,), jnp.float32),
        "var": 0.5 + jax.random.uniform(kv, (cout,), jnp.float32),
    }


def init_raw_params(key, in_channel, inch=32):
    out_channel = 36 * inch
    params = {
        "branch1":   _init_conv_bn(jax.random.fold_in(key, 0), in_channel, 6 * inch, 1, 1),
        "branch2_1": _init_conv_bn(jax.random.fold_in(key, 1), in_channel, 4 * inch, 1, 1),
        "branch2_2": _init_conv_bn(jax.random.fold_in(key, 2), 4 * inch, 5 * inch, 1, 7),
        "branch2_3": _init_conv_bn(jax.random.fold_in(key, 3), 5 * inch, 6 * inch, 7, 1),
        "linear":    _init_conv_bn(jax.random.fold_in(key, 4), 12 * inch, 36 * inch, 1, 1),
    }
    if in_channel != out_channel:
        k1, k2 = jax.random.split(jax.random.fold_in(key, 5))
        params["shortcut"] = {
            "w": 0.1 * jax.random.normal(k1, (out_channel, in_channel, 1, 1), jnp.float32),
            "b": 0.05 * jax.random.normal(k2, (out_channel,), jnp.float32),
        }
    return params


def _fold_bn(p, eps=1e-5):
    s = p["gamma"] / jnp.sqrt(p["var"] + eps)
    w = p["w"] * s[:, None, None, None]
    b = (p["b"] - p["mean"]) * s + p["beta"]
    return w, b


def prepare_params(raw, inch, scale):
    """Fold eval-mode BN (and `scale`, when positive) into matmul-layout
    weights.  MXU operands are bf16; biases stay f32 for the epilogues."""
    out = {}
    w21, b21 = _fold_bn(raw["branch2_1"])
    w1, b1 = _fold_bn(raw["branch1"])
    out["front_w"] = jnp.concatenate(
        [w21[:, :, 0, 0].T, w1[:, :, 0, 0].T], axis=1).astype(jnp.bfloat16)
    out["front_b"] = jnp.concatenate([b21, b1], axis=0)

    w, b = _fold_bn(raw["branch2_2"])
    out["b2_2_w"] = jnp.transpose(w[:, :, 0, :], (2, 1, 0)).astype(jnp.bfloat16)  # (7, 4i, 5i)
    out["b2_2_b"] = b
    w, b = _fold_bn(raw["branch2_3"])
    out["b2_3_w"] = jnp.transpose(w[:, :, :, 0], (2, 1, 0)).astype(jnp.bfloat16)  # (7, 5i, 6i)
    out["b2_3_b"] = b

    w, b = _fold_bn(raw["linear"])
    wl = w[:, :, 0, 0].T                                     # (12i, 36i)
    s = float(scale) if scale > 0 else 1.0                   # relu(s*x)==s*relu(x) needs s>0
    out["lin_w1"] = (s * wl[:6 * inch]).astype(jnp.bfloat16)     # rows for branch1
    out["lin_w2"] = (s * wl[6 * inch:]).astype(jnp.bfloat16)     # rows for branch2_3
    out["lin_b"] = s * b
    scale_mul = 1.0 if scale > 0 else float(scale)

    if "shortcut" in raw:
        out["sc_w"] = raw["shortcut"]["w"][:, :, 0, 0].T.astype(jnp.bfloat16)
        out["sc_b"] = raw["shortcut"]["b"]
    else:
        out["sc_w"] = None
        out["sc_b"] = None
    return out, scale_mul


# --------------------------------- forward ---------------------------------- #

def inception_resnet_b_forward(x_nchw, params, *, scale_mul=1.0):
    n, cin, h, w = x_nchw.shape
    x_nhwc = jnp.transpose(x_nchw, (0, 2, 3, 1))          # the only real relayout
    m = n * h * w
    x_bf = x_nhwc.astype(jnp.bfloat16).reshape(m, cin)

    c4 = params["b2_2_w"].shape[1]                         # 4*inch (static)
    b21, b1 = front_matmul(x_bf, params["front_w"], params["front_b"], c4)

    b22 = conv7_along_w(b21.reshape(n * h, w, c4),
                        params["b2_2_w"], params["b2_2_b"])         # (n*h, w, 5i)
    c5 = b22.shape[-1]
    b23 = conv7_along_h(b22.reshape(n, h, w, c5),
                        params["b2_3_w"], params["b2_3_b"])         # (n, h, w, 6i)
    b23_2d = b23.reshape(m, b23.shape[-1])

    if params["sc_w"] is not None:
        out2d = fused_tail(x_bf, b1, b23_2d, params, scale_mul=scale_mul)
    else:
        out2d = fused_tail(x_nhwc.reshape(m, cin), b1, b23_2d, params,
                           scale_mul=scale_mul)
    cout = out2d.shape[-1]
    return jnp.transpose(out2d.reshape(n, h, w, cout), (0, 3, 1, 2))   # NCHW f32


# ------------------------- pure-JAX f32 reference --------------------------- #

def _ref_conv_bn_relu(x_nhwc, p, pad_hw, eps=1e-5):
    w = jnp.transpose(p["w"], (2, 3, 1, 0))   # HWIO
    y = lax.conv_general_dilated(
        x_nhwc, w, window_strides=(1, 1),
        padding=((pad_hw[0], pad_hw[0]), (pad_hw[1], pad_hw[1])),
        dimension_numbers=("NHWC", "HWIO", "NHWC"))
    y = y + p["b"]
    y = (y - p["mean"]) / jnp.sqrt(p["var"] + eps) * p["gamma"] + p["beta"]
    return jnp.maximum(y, 0.0)


def reference_forward(x_nchw, raw, *, scale=0.1):
    x = jnp.transpose(x_nchw, (0, 2, 3, 1))
    o1 = _ref_conv_bn_relu(x, raw["branch1"], (0, 0))
    o2 = _ref_conv_bn_relu(x, raw["branch2_1"], (0, 0))
    o2 = _ref_conv_bn_relu(o2, raw["branch2_2"], (0, 3))
    o2 = _ref_conv_bn_relu(o2, raw["branch2_3"], (3, 0))
    cat = jnp.concatenate([o1, o2], axis=-1)
    lin = _ref_conv_bn_relu(cat, raw["linear"], (0, 0))
    if "shortcut" in raw:
        wsc = jnp.transpose(raw["shortcut"]["w"], (2, 3, 1, 0))
        sc = lax.conv_general_dilated(
            x, wsc, (1, 1), ((0, 0), (0, 0)),
            dimension_numbers=("NHWC", "HWIO", "NHWC")) + raw["shortcut"]["b"]
    else:
        sc = x
    out = jnp.maximum(sc + scale * lin, 0.0)
    return jnp.transpose(out, (0, 3, 1, 2))


if __name__ == "__main__":
    key = jax.random.PRNGKey(0)

    def run_case(case_id, in_channel, inch, n, h, w, scale=0.1):
        kc = jax.random.fold_in(key, case_id)
        raw = init_raw_params(jax.random.fold_in(kc, 1), in_channel, inch=inch)
        prepped, scale_mul = prepare_params(raw, inch, scale)
        x = jax.random.normal(jax.random.fold_in(kc, 2),
                              (n, in_channel, h, w), jnp.float32)

        fwd = jax.jit(functools.partial(inception_resnet_b_forward,
                                        scale_mul=scale_mul))
        out = jax.block_until_ready(fwd(x, prepped))

        assert out.shape == (n, 36 * inch, h, w), out.shape
        assert out.dtype == jnp.float32
        assert bool(jnp.all(jnp.isfinite(out)))

        ref = jax.block_until_ready(
            jax.jit(functools.partial(reference_forward, raw=raw, scale=scale))(x))
        err = jnp.abs(out - ref)
        assert float(jnp.mean(err)) < 5e-2, (case_id, float(jnp.mean(err)))
        assert float(jnp.max(err)) < 5e-1, (case_id, float(jnp.max(err)))

    # 1x1-conv shortcut path (in_channel != 36*inch)
    run_case(0, in_channel=64, inch=8, n=2, h=16, w=16)
    # identity shortcut path (in_channel == 36*inch)
    run_case(1, in_channel=288, inch=8, n=1, h=8, w=8)

    print("KERNEL_OK")
</pallas_src>

<mosaic_0001>
module attributes {stable_mosaic.version = 11 : i64} {
  func.func @_conv7_w_kernel(%arg0: i32, %arg1: memref<16x16x32xbf16, #tpu.memory_space<vmem>>, %arg2: memref<7x32x40xbf16, #tpu.memory_space<vmem>>, %arg3: memref<1x40xf32, #tpu.memory_space<vmem>>, %arg4: memref<16x16x40xbf16, #tpu.memory_space<vmem>>, %arg5: memref<16x32x32xbf16, #tpu.memory_space<vmem>>) attributes {dimension_semantics = [#tpu.dimension_semantics<parallel>], iteration_bounds = array<i64: 2>, scalar_prefetch = 0 : i64, scratch_operands = 1 : i64, tpu.core_type = #tpu.core_type<tc>, window_params = [{transform_indices = @transform_0, window_bounds = array<i64: 16, 16, 32>}, {pipeline_mode = #tpu.pipeline_mode<synchronous>, transform_indices = @transform_1, window_bounds = array<i64: 7, 32, 40>}, {pipeline_mode = #tpu.pipeline_mode<synchronous>, transform_indices = @transform_2, window_bounds = array<i64: 1, 40>}, {transform_indices = @transform_3, window_bounds = array<i64: 16, 16, 40>}]} {
    %cst = arith.constant 0.000000e+00 : bf16
    %0 = vector.broadcast %cst : bf16 to vector<16x32x32xbf16>
    %c0 = arith.constant 0 : index
    %c0_0 = arith.constant 0 : index
    %c0_1 = arith.constant 0 : index
    %1 = vector.load %arg5[%c0, %c0_0, %c0_1] : memref<16x32x32xbf16, #tpu.memory_space<vmem>>, vector<16x32x32xbf16>
    tpu.vector_store %arg5[%c0, %c0_0, %c0_1], %0 {strides = array<i32>} : memref<16x32x32xbf16, #tpu.memory_space<vmem>>, vector<16x32x32xbf16>,
    %c0_2 = arith.constant 0 : index
    %c0_3 = arith.constant 0 : index
    %c0_4 = arith.constant 0 : index
    %2 = vector.load %arg1[%c0_2, %c0_3, %c0_4] : memref<16x16x32xbf16, #tpu.memory_space<vmem>>, vector<16x16x32xbf16>
    %c0_5 = arith.constant 0 : index
    %c8 = arith.constant 8 : index
    %c0_6 = arith.constant 0 : index
    %3 = vector.load %arg5[%c0_5, %c8, %c0_6] : memref<16x32x32xbf16, #tpu.memory_space<vmem>>, vector<16x16x32xbf16>
    tpu.vector_store %arg5[%c0_5, %c8, %c0_6], %2 {strides = array<i32>} : memref<16x32x32xbf16, #tpu.memory_space<vmem>>, vector<16x16x32xbf16>,
    %cst_7 = arith.constant 0.000000e+00 : f32
    %4 = vector.broadcast %cst_7 : f32 to vector<256x40xf32>
    %c0_8 = arith.constant 0 : index
    %c5 = arith.constant 5 : index
    %c0_9 = arith.constant 0 : index
    %5 = vector.load %arg5[%c0_8, %c5, %c0_9] : memref<16x32x32xbf16, #tpu.memory_space<vmem>>, vector<16x16x32xbf16>
    %6 = vector.shape_cast %5 : vector<16x16x32xbf16> to vector<256x32xbf16>
    %c0_10 = arith.constant 0 : index
    %c0_11 = arith.constant 0 : index
    %c0_12 = arith.constant 0 : index
    %7 = vector.load %arg2[%c0_10, %c0_11, %c0_12] : memref<7x32x40xbf16, #tpu.memory_space<vmem>>, vector<1x32x40xbf16>
    %8 = vector.shape_cast %7 : vector<1x32x40xbf16> to vector<32x40xbf16>
    %cst_13 = arith.constant dense<0.000000e+00> : vector<256x40xf32>
    %9 = tpu.matmul %6, %8, %cst_13 {dimension_numbers = #tpu.dot_dimension_numbers<[1], [0], [0], [1], [0, 0, 1, 1], [], []>} : vector<256x32xbf16>, vector<32x40xbf16>, vector<256x40xf32> -> vector<256x40xf32>
    %10 = arith.addf %4, %9 : vector<256x40xf32>
    %c0_14 = arith.constant 0 : index
    %c6 = arith.constant 6 : index
    %c0_15 = arith.constant 0 : index
    %11 = vector.load %arg5[%c0_14, %c6, %c0_15] : memref<16x32x32xbf16, #tpu.memory_space<vmem>>, vector<16x16x32xbf16>
    %12 = vector.shape_cast %11 : vector<16x16x32xbf16> to vector<256x32xbf16>
    %c1 = arith.constant 1 : index
    %c0_16 = arith.constant 0 : index
    %c0_17 = arith.constant 0 : index
    %13 = vector.load %arg2[%c1, %c0_16, %c0_17] : memref<7x32x40xbf16, #tpu.memory_space<vmem>>, vector<1x32x40xbf16>
    %14 = vector.shape_cast %13 : vector<1x32x40xbf16> to vector<32x40xbf16>
    %cst_18 = arith.constant dense<0.000000e+00> : vector<256x40xf32>
    %15 = tpu.matmul %12, %14, %cst_18 {dimension_numbers = #tpu.dot_dimension_numbers<[1], [0], [0], [1], [0, 0, 1, 1], [], []>} : vector<256x32xbf16>, vector<32x40xbf16>, vector<256x40xf32> -> vector<256x40xf32>
    %16 = arith.addf %10, %15 : vector<256x40xf32>
    %c0_19 = arith.constant 0 : index
    %c7 = arith.constant 7 : index
    %c0_20 = arith.constant 0 : index
    %17 = vector.load %arg5[%c0_19, %c7, %c0_20] : memref<16x32x32xbf16, #tpu.memory_space<vmem>>, vector<16x16x32xbf16>
    %18 = vector.shape_cast %17 : vector<16x16x32xbf16> to vector<256x32xbf16>
    %c2 = arith.constant 2 : index
    %c0_21 = arith.constant 0 : index
    %c0_22 = arith.constant 0 : index
    %19 = vector.load %arg2[%c2, %c0_21, %c0_22] : memref<7x32x40xbf16, #tpu.memory_space<vmem>>, vector<1x32x40xbf16>
    %20 = vector.shape_cast %19 : vector<1x32x40xbf16> to vector<32x40xbf16>
    %cst_23 = arith.constant dense<0.000000e+00> : vector<256x40xf32>
    %21 = tpu.matmul %18, %20, %cst_23 {dimension_numbers = #tpu.dot_dimension_numbers<[1], [0], [0], [1], [0, 0, 1, 1], [], []>} : vector<256x32xbf16>, vector<32x40xbf16>, vector<256x40xf32> -> vector<256x40xf32>
    %22 = arith.addf %16, %21 : vector<256x40xf32>
    %c0_24 = arith.constant 0 : index
    %c8_25 = arith.constant 8 : index
    %c0_26 = arith.constant 0 : index
    %23 = vector.load %arg5[%c0_24, %c8_25, %c0_26] : memref<16x32x32xbf16, #tpu.memory_space<vmem>>, vector<16x16x32xbf16>
    %24 = vector.shape_cast %23 : vector<16x16x32xbf16> to vector<256x32xbf16>
    %c3 = arith.constant 3 : index
    %c0_27 = arith.constant 0 : index
    %c0_28 = arith.constant 0 : index
    %25 = vector.load %arg2[%c3, %c0_27, %c0_28] : memref<7x32x40xbf16, #tpu.memory_space<vmem>>, vector<1x32x40xbf16>
    %26 = vector.shape_cast %25 : vector<1x32x40xbf16> to vector<32x40xbf16>
    %cst_29 = arith.constant dense<0.000000e+00> : vector<256x40xf32>
    %27 = tpu.matmul %24, %26, %cst_29 {dimension_numbers = #tpu.dot_dimension_numbers<[1], [0], [0], [1], [0, 0, 1, 1], [], []>} : vector<256x32xbf16>, vector<32x40xbf16>, vector<256x40xf32> -> vector<256x40xf32>
    %28 = arith.addf %22, %27 : vector<256x40xf32>
    %c0_30 = arith.constant 0 : index
    %c9 = arith.constant 9 : index
    %c0_31 = arith.constant 0 : index
    %29 = vector.load %arg5[%c0_30, %c9, %c0_31] : memref<16x32x32xbf16, #tpu.memory_space<vmem>>, vector<16x16x32xbf16>
    %30 = vector.shape_cast %29 : vector<16x16x32xbf16> to vector<256x32xbf16>
    %c4 = arith.constant 4 : index
    %c0_32 = arith.constant 0 : index
    %c0_33 = arith.constant 0 : index
    %31 = vector.load %arg2[%c4, %c0_32, %c0_33] : memref<7x32x40xbf16, #tpu.memory_space<vmem>>, vector<1x32x40xbf16>
    %32 = vector.shape_cast %31 : vector<1x32x40xbf16> to vector<32x40xbf16>
    %cst_34 = arith.constant dense<0.000000e+00> : vector<256x40xf32>
    %33 = tpu.matmul %30, %32, %cst_34 {dimension_numbers = #tpu.dot_dimension_numbers<[1], [0], [0], [1], [0, 0, 1, 1], [], []>} : vector<256x32xbf16>, vector<32x40xbf16>, vector<256x40xf32> -> vector<256x40xf32>
    %34 = arith.addf %28, %33 : vector<256x40xf32>
    %c0_35 = arith.constant 0 : index
    %c10 = arith.constant 10 : index
    %c0_36 = arith.constant 0 : index
    %35 = vector.load %arg5[%c0_35, %c10, %c0_36] : memref<16x32x32xbf16, #tpu.memory_space<vmem>>, vector<16x16x32xbf16>
    %36 = vector.shape_cast %35 : vector<16x16x32xbf16> to vector<256x32xbf16>
    %c5_37 = arith.constant 5 : index
    %c0_38 = arith.constant 0 : index
    %c0_39 = arith.constant 0 : index
    %37 = vector.load %arg2[%c5_37, %c0_38, %c0_39] : memref<7x32x40xbf16, #tpu.memory_space<vmem>>, vector<1x32x40xbf16>
    %38 = vector.shape_cast %37 : vector<1x32x40xbf16> to vector<32x40xbf16>
    %cst_40 = arith.constant dense<0.000000e+00> : vector<256x40xf32>
    %39 = tpu.matmul %36, %38, %cst_40 {dimension_numbers = #tpu.dot_dimension_numbers<[1], [0], [0], [1], [0, 0, 1, 1], [], []>} : vector<256x32xbf16>, vector<32x40xbf16>, vector<256x40xf32> -> vector<256x40xf32>
    %40 = arith.addf %34, %39 : vector<256x40xf32>
    %c0_41 = arith.constant 0 : index
    %c11 = arith.constant 11 : index
    %c0_42 = arith.constant 0 : index
    %41 = vector.load %arg5[%c0_41, %c11, %c0_42] : memref<16x32x32xbf16, #tpu.memory_space<vmem>>, vector<16x16x32xbf16>
    %42 = vector.shape_cast %41 : vector<16x16x32xbf16> to vector<256x32xbf16>
    %c6_43 = arith.constant 6 : index
    %c0_44 = arith.constant 0 : index
    %c0_45 = arith.constant 0 : index
    %43 = vector.load %arg2[%c6_43, %c0_44, %c0_45] : memref<7x32x40xbf16, #tpu.memory_space<vmem>>, vector<1x32x40xbf16>
    %44 = vector.shape_cast %43 : vector<1x32x40xbf16> to vector<32x40xbf16>
    %cst_46 = arith.constant dense<0.000000e+00> : vector<256x40xf32>
    %45 = tpu.matmul %42, %44, %cst_46 {dimension_numbers = #tpu.dot_dimension_numbers<[1], [0], [0], [1], [0, 0, 1, 1], [], []>} : vector<256x32xbf16>, vector<32x40xbf16>, vector<256x40xf32> -> vector<256x40xf32>
    %46 = arith.addf %40, %45 : vector<256x40xf32>
    %c0_47 = arith.constant 0 : index
    %c0_48 = arith.constant 0 : index
    %47 = vector.load %arg3[%c0_47, %c0_48] : memref<1x40xf32, #tpu.memory_space<vmem>>, vector<1x40xf32>
    %48 = vector.broadcast %47 : vector<1x40xf32> to vector<256x40xf32>
    %49 = arith.addf %46, %48 : vector<256x40xf32>
    %cst_49 = arith.constant 0.000000e+00 : f32
    %50 = vector.broadcast %cst_49 : f32 to vector<256x40xf32>
    %51 = arith.maximumf %49, %50 : vector<256x40xf32>
    %52 = vector.shape_cast %51 : vector<256x40xf32> to vector<16x16x40xf32>
    %53 = arith.truncf %52 : vector<16x16x40xf32> to vector<16x16x40xbf16>
    %c0_50 = arith.constant 0 : index
    %c0_51 = arith.constant 0 : index
    %c0_52 = arith.constant 0 : index
    %54 = vector.load %arg4[%c0_50, %c0_51, %c0_52] : memref<16x16x40xbf16, #tpu.memory_space<vmem>>, vector<16x16x40xbf16>
    tpu.vector_store %arg4[%c0_50, %c0_51, %c0_52], %53 {strides = array<i32>} : memref<16x16x40xbf16, #tpu.memory_space<vmem>>, vector<16x16x40xbf16>,
    return
  }
  func.func @transform_0(%arg0: i32) -> (i32, i32, i32) {
    %c0_i32 = arith.constant 0 : i32
    %c0_i32_0 = arith.constant 0 : i32
    %c0_i32_1 = arith.constant 0 : i32
    return %arg0, %c0_i32, %c0_i32_0 : i32, i32, i32
  }
  func.func @transform_1(%arg0: i32) -> (i32, i32, i32) {
    %c0_i32 = arith.constant 0 : i32
    %c0_i32_0 = arith.constant 0 : i32
    %c0_i32_1 = arith.constant 0 : i32
    %c0_i32_2 = arith.constant 0 : i32
    return %c0_i32, %c0_i32_0, %c0_i32_1 : i32, i32, i32
  }
  func.func @transform_2(%arg0: i32) -> (i32, i32) {
    %c0_i32 = arith.constant 0 : i32
    %c0_i32_0 = arith.constant 0 : i32
    %c0_i32_1 = arith.constant 0 : i32
    return %c0_i32, %c0_i32_0 : i32, i32
  }
  func.func @transform_3(%arg0: i32) -> (i32, i32, i32) {
    %c0_i32 = arith.constant 0 : i32
    %c0_i32_0 = arith.constant 0 : i32
    %c0_i32_1 = arith.constant 0 : i32
    return %arg0, %c0_i32, %c0_i32_0 : i32, i32, i32
  }
}

module attributes {stable_mosaic.version = 11 : i64} {
  func.func @_front_kernel(%arg0: i32, %arg1: memref<256x64xbf16, #tpu.memory_space<vmem>>, %arg2: memref<64x80xbf16, #tpu.memory_space<vmem>>, %arg3: memref<1x80xf32, #tpu.memory_space<vmem>>, %arg4: memref<256x32xbf16, #tpu.memory_space<vmem>>, %arg5: memref<256x48xbf16, #tpu.memory_space<vmem>>) attributes {dimension_semantics = [#tpu.dimension_semantics<parallel>], iteration_bounds = array<i64: 2>, scalar_prefetch = 0 : i64, scratch_operands = 0 : i64, tpu.core_type = #tpu.core_type<tc>, window_params = [{transform_indices = @transform_0, window_bounds = array<i64: 256, 64>}, {pipeline_mode = #tpu.pipeline_mode<synchronous>, transform_indices = @transform_1, window_bounds = array<i64: 64, 80>}, {pipeline_mode = #tpu.pipeline_mode<synchronous>, transform_indices = @transform_2, window_bounds = array<i64: 1, 80>}, {transform_indices = @transform_3, window_bounds = array<i64: 256, 32>}, {transform_indices = @transform_4, window_bounds = array<i64: 256, 48>}]} {
    %c0 = arith.constant 0 : index
    %c0_0 = arith.constant 0 : index
    %0 = vector.load %arg1[%c0, %c0_0] : memref<256x64xbf16, #tpu.memory_space<vmem>>, vector<256x64xbf16>
    %c0_1 = arith.constant 0 : index
    %c0_2 = arith.constant 0 : index
    %1 = vector.load %arg2[%c0_1, %c0_2] : memref<64x80xbf16, #tpu.memory_space<vmem>>, vector<64x80xbf16>
    %cst = arith.constant dense<0.000000e+00> : vector<256x80xf32>
    %2 = tpu.matmul %0, %1, %cst {dimension_numbers = #tpu.dot_dimension_numbers<[1], [0], [0], [1], [0, 0, 1, 1], [], []>} : vector<256x64xbf16>, vector<64x80xbf16>, vector<256x80xf32> -> vector<256x80xf32>
    %c0_3 = arith.constant 0 : index
    %c0_4 = arith.constant 0 : index
    %3 = vector.load %arg3[%c0_3, %c0_4] : memref<1x80xf32, #tpu.memory_space<vmem>>, vector<1x80xf32>
    %4 = vector.broadcast %3 : vector<1x80xf32> to vector<256x80xf32>
    %5 = arith.addf %2, %4 : vector<256x80xf32>
    %cst_5 = arith.constant 0.000000e+00 : f32
    %6 = vector.broadcast %cst_5 : f32 to vector<256x80xf32>
    %7 = arith.maximumf %5, %6 : vector<256x80xf32>
    %8 = vector.extract_strided_slice %7 {offsets = [0, 0], sizes = [256, 32], strides = [1, 1]} : vector<256x80xf32> to vector<256x32xf32>
    %9 = arith.truncf %8 : vector<256x32xf32> to vector<256x32xbf16>
    %c0_6 = arith.constant 0 : index
    %c0_7 = arith.constant 0 : index
    %10 = vector.load %arg4[%c0_6, %c0_7] : memref<256x32xbf16, #tpu.memory_space<vmem>>, vector<256x32xbf16>
    tpu.vector_store %arg4[%c0_6, %c0_7], %9 {strides = array<i32>} : memref<256x32xbf16, #tpu.memory_space<vmem>>, vector<256x32xbf16>,
    %11 = vector.extract_strided_slice %7 {offsets = [0, 32], sizes = [256, 48], strides = [1, 1]} : vector<256x80xf32> to vector<256x48xf32>
    %12 = arith.truncf %11 : vector<256x48xf32> to vector<256x48xbf16>
    %c0_8 = arith.constant 0 : index
    %c0_9 = arith.constant 0 : index
    %13 = vector.load %arg5[%c0_8, %c0_9] : memref<256x48xbf16, #tpu.memory_space<vmem>>, vector<256x48xbf16>
    tpu.vector_store %arg5[%c0_8, %c0_9], %12 {strides = array<i32>} : memref<256x48xbf16, #tpu.memory_space<vmem>>, vector<256x48xbf16>,
    return
  }
  func.func @transform_0(%arg0: i32) -> (i32, i32) {
    %c0_i32 = arith.constant 0 : i32
    %c0_i32_0 = arith.constant 0 : i32
    return %arg0, %c0_i32 : i32, i32
  }
  func.func @transform_1(%arg0: i32) -> (i32, i32) {
    %c0_i32 = arith.constant 0 : i32
    %c0_i32_0 = arith.constant 0 : i32
    %c0_i32_1 = arith.constant 0 : i32
    return %c0_i32, %c0_i32_0 : i32, i32
  }
  func.func @transform_2(%arg0: i32) -> (i32, i32) {
    %c0_i32 = arith.constant 0 : i32
    %c0_i32_0 = arith.constant 0 : i32
    %c0_i32_1 = arith.constant 0 : i32
    return %c0_i32, %c0_i32_0 : i32, i32
  }
  func.func @transform_3(%arg0: i32) -> (i32, i32) {
    %c0_i32 = arith.constant 0 : i32
    %c0_i32_0 = arith.constant 0 : i32
    return %arg0, %c0_i32 : i32, i32
  }
  func.func @transform_4(%arg0: i32) -> (i32, i32) {
    %c0_i32 = arith.constant 0 : i32
    %c0_i32_0 = arith.constant 0 : i32
    return %arg0, %c0_i32 : i32, i32
  }
}

module attributes {stable_mosaic.version = 11 : i64} {
  func.func @_tail_conv_shortcut_kernel(%arg0: i32, %arg1: memref<256x64xbf16, #tpu.memory_space<vmem>>, %arg2: memref<256x48xbf16, #tpu.memory_space<vmem>>, %arg3: memref<256x48xbf16, #tpu.memory_space<vmem>>, %arg4: memref<48x288xbf16, #tpu.memory_space<vmem>>, %arg5: memref<48x288xbf16, #tpu.memory_space<vmem>>, %arg6: memref<64x288xbf16, #tpu.memory_space<vmem>>, %arg7: memref<1x288xf32, #tpu.memory_space<vmem>>, %arg8: memref<1x288xf32, #tpu.memory_space<vmem>>, %arg9: memref<256x288xf32, #tpu.memory_space<vmem>>) attributes {dimension_semantics = [#tpu.dimension_semantics<parallel>], iteration_bounds = array<i64: 2>, scalar_prefetch = 0 : i64, scratch_operands = 0 : i64, tpu.core_type = #tpu.core_type<tc>, window_params = [{transform_indices = @transform_0, window_bounds = array<i64: 256, 64>}, {transform_indices = @transform_1, window_bounds = array<i64: 256, 48>}, {transform_indices = @transform_2, window_bounds = array<i64: 256, 48>}, {pipeline_mode = #tpu.pipeline_mode<synchronous>, transform_indices = @transform_3, window_bounds = array<i64: 48, 288>}, {pipeline_mode = #tpu.pipeline_mode<synchronous>, transform_indices = @transform_4, window_bounds = array<i64: 48, 288>}, {pipeline_mode = #tpu.pipeline_mode<synchronous>, transform_indices = @transform_5, window_bounds = array<i64: 64, 288>}, {pipeline_mode = #tpu.pipeline_mode<synchronous>, transform_indices = @transform_6, window_bounds = array<i64: 1, 288>}, {pipeline_mode = #tpu.pipeline_mode<synchronous>, transform_indices = @transform_7, window_bounds = array<i64: 1, 288>}, {transform_indices = @transform_8, window_bounds = array<i64: 256, 288>}]} {
    %c0 = arith.constant 0 : index
    %c0_0 = arith.constant 0 : index
    %0 = vector.load %arg2[%c0, %c0_0] : memref<256x48xbf16, #tpu.memory_space<vmem>>, vector<256x48xbf16>
    %c0_1 = arith.constant 0 : index
    %c0_2 = arith.constant 0 : index
    %1 = vector.load %arg4[%c0_1, %c0_2] : memref<48x288xbf16, #tpu.memory_space<vmem>>, vector<48x288xbf16>
    %cst = arith.constant dense<0.000000e+00> : vector<256x288xf32>
    %2 = tpu.matmul %0, %1, %cst {dimension_numbers = #tpu.dot_dimension_numbers<[1], [0], [0], [1], [0, 0, 1, 1], [], []>} : vector<256x48xbf16>, vector<48x288xbf16>, vector<256x288xf32> -> vector<256x288xf32>
    %c0_3 = arith.constant 0 : index
    %c0_4 = arith.constant 0 : index
    %3 = vector.load %arg3[%c0_3, %c0_4] : memref<256x48xbf16, #tpu.memory_space<vmem>>, vector<256x48xbf16>
    %c0_5 = arith.constant 0 : index
    %c0_6 = arith.constant 0 : index
    %4 = vector.load %arg5[%c0_5, %c0_6] : memref<48x288xbf16, #tpu.memory_space<vmem>>, vector<48x288xbf16>
    %cst_7 = arith.constant dense<0.000000e+00> : vector<256x288xf32>
    %5 = tpu.matmul %3, %4, %cst_7 {dimension_numbers = #tpu.dot_dimension_numbers<[1], [0], [0], [1], [0, 0, 1, 1], [], []>} : vector<256x48xbf16>, vector<48x288xbf16>, vector<256x288xf32> -> vector<256x288xf32>
    %6 = arith.addf %2, %5 : vector<256x288xf32>
    %c0_8 = arith.constant 0 : index
    %c0_9 = arith.constant 0 : index
    %7 = vector.load %arg7[%c0_8, %c0_9] : memref<1x288xf32, #tpu.memory_space<vmem>>, vector<1x288xf32>
    %8 = vector.broadcast %7 : vector<1x288xf32> to vector<256x288xf32>
    %9 = arith.addf %6, %8 : vector<256x288xf32>
    %cst_10 = arith.constant 0.000000e+00 : f32
    %10 = vector.broadcast %cst_10 : f32 to vector<256x288xf32>
    %11 = arith.maximumf %9, %10 : vector<256x288xf32>
    %c0_11 = arith.constant 0 : index
    %c0_12 = arith.constant 0 : index
    %12 = vector.load %arg1[%c0_11, %c0_12] : memref<256x64xbf16, #tpu.memory_space<vmem>>, vector<256x64xbf16>
    %c0_13 = arith.constant 0 : index
    %c0_14 = arith.constant 0 : index
    %13 = vector.load %arg6[%c0_13, %c0_14] : memref<64x288xbf16, #tpu.memory_space<vmem>>, vector<64x288xbf16>
    %cst_15 = arith.constant dense<0.000000e+00> : vector<256x288xf32>
    %14 = tpu.matmul %12, %13, %cst_15 {dimension_numbers = #tpu.dot_dimension_numbers<[1], [0], [0], [1], [0, 0, 1, 1], [], []>} : vector<256x64xbf16>, vector<64x288xbf16>, vector<256x288xf32> -> vector<256x288xf32>
    %15 = arith.addf %11, %14 : vector<256x288xf32>
    %c0_16 = arith.constant 0 : index
    %c0_17 = arith.constant 0 : index
    %16 = vector.load %arg8[%c0_16, %c0_17] : memref<1x288xf32, #tpu.memory_space<vmem>>, vector<1x288xf32>
    %17 = vector.broadcast %16 : vector<1x288xf32> to vector<256x288xf32>
    %18 = arith.addf %15, %17 : vector<256x288xf32>
    %cst_18 = arith.constant 0.000000e+00 : f32
    %19 = vector.broadcast %cst_18 : f32 to vector<256x288xf32>
    %20 = arith.maximumf %18, %19 : vector<256x288xf32>
    %c0_19 = arith.constant 0 : index
    %c0_20 = arith.constant 0 : index
    %21 = vector.load %arg9[%c0_19, %c0_20] : memref<256x288xf32, #tpu.memory_space<vmem>>, vector<256x288xf32>
    tpu.vector_store %arg9[%c0_19, %c0_20], %20 {strides = array<i32>} : memref<256x288xf32, #tpu.memory_space<vmem>>, vector<256x288xf32>,
    return
  }
  func.func @transform_0(%arg0: i32) -> (i32, i32) {
    %c0_i32 = arith.constant 0 : i32
    %c0_i32_0 = arith.constant 0 : i32
    return %arg0, %c0_i32 : i32, i32
  }
  func.func @transform_1(%arg0: i32) -> (i32, i32) {
    %c0_i32 = arith.constant 0 : i32
    %c0_i32_0 = arith.constant 0 : i32
    return %arg0, %c0_i32 : i32, i32
  }
  func.func @transform_2(%arg0: i32) -> (i32, i32) {
    %c0_i32 = arith.constant 0 : i32
    %c0_i32_0 = arith.constant 0 : i32
    return %arg0, %c0_i32 : i32, i32
  }
  func.func @transform_3(%arg0: i32) -> (i32, i32) {
    %c0_i32 = arith.constant 0 : i32
    %c0_i32_0 = arith.constant 0 : i32
    %c0_i32_1 = arith.constant 0 : i32
    return %c0_i32, %c0_i32_0 : i32, i32
  }
  func.func @transform_4(%arg0: i32) -> (i32, i32) {
    %c0_i32 = arith.constant 0 : i32
    %c0_i32_0 = arith.constant 0 : i32
    %c0_i32_1 = arith.constant 0 : i32
    return %c0_i32, %c0_i32_0 : i32, i32
  }
  func.func @transform_5(%arg0: i32) -> (i32, i32) {
    %c0_i32 = arith.constant 0 : i32
    %c0_i32_0 = arith.constant 0 : i32
    %c0_i32_1 = arith.constant 0 : i32
    return %c0_i32, %c0_i32_0 : i32, i32
  }
  func.func @transform_6(%arg0: i32) -> (i32, i32) {
    %c0_i32 = arith.constant 0 : i32
    %c0_i32_0 = arith.constant 0 : i32
    %c0_i32_1 = arith.constant 0 : i32
    return %c0_i32, %c0_i32_0 : i32, i32
  }
  func.func @transform_7(%arg0: i32) -> (i32, i32) {
    %c0_i32 = arith.constant 0 : i32
    %c0_i32_0 = arith.constant 0 : i32
    %c0_i32_1 = arith.constant 0 : i32
    return %c0_i32, %c0_i32_0 : i32, i32
  }
  func.func @transform_8(%arg0: i32) -> (i32, i32) {
    %c0_i32 = arith.constant 0 : i32
    %c0_i32_0 = arith.constant 0 : i32
    return %arg0, %c0_i32 : i32, i32
  }
}

module attributes {stable_mosaic.version = 11 : i64} {
  func.func @_conv7_h_kernel(%arg0: i32, %arg1: memref<1x16x16x40xbf16, #tpu.memory_space<vmem>>, %arg2: memref<7x40x48xbf16, #tpu.memory_space<vmem>>, %arg3: memref<1x48xf32, #tpu.memory_space<vmem>>, %arg4: memref<1x16x16x48xbf16, #tpu.memory_space<vmem>>, %arg5: memref<22x16x40xbf16, #tpu.memory_space<vmem>>) attributes {dimension_semantics = [#tpu.dimension_semantics<parallel>], iteration_bounds = array<i64: 2>, scalar_prefetch = 0 : i64, scratch_operands = 1 : i64, tpu.core_type = #tpu.core_type<tc>, window_params = [{transform_indices = @transform_0, window_bounds = array<i64: 1, 16, 16, 40>}, {pipeline_mode = #tpu.pipeline_mode<synchronous>, transform_indices = @transform_1, window_bounds = array<i64: 7, 40, 48>}, {pipeline_mode = #tpu.pipeline_mode<synchronous>, transform_indices = @transform_2, window_bounds = array<i64: 1, 48>}, {transform_indices = @transform_3, window_bounds = array<i64: 1, 16, 16, 48>}]} {
    %cst = arith.constant 0.000000e+00 : bf16
    %0 = vector.broadcast %cst : bf16 to vector<3x16x40xbf16>
    %c0 = arith.constant 0 : index
    %c0_0 = arith.constant 0 : index
    %c0_1 = arith.constant 0 : index
    %1 = vector.load %arg5[%c0, %c0_0, %c0_1] : memref<22x16x40xbf16, #tpu.memory_space<vmem>>, vector<3x16x40xbf16>
    tpu.vector_store %arg5[%c0, %c0_0, %c0_1], %0 {strides = array<i32>} : memref<22x16x40xbf16, #tpu.memory_space<vmem>>, vector<3x16x40xbf16>,
    %c19 = arith.constant 19 : index
    %c0_2 = arith.constant 0 : index
    %c0_3 = arith.constant 0 : index
    %2 = vector.load %arg5[%c19, %c0_2, %c0_3] : memref<22x16x40xbf16, #tpu.memory_space<vmem>>, vector<3x16x40xbf16>
    tpu.vector_store %arg5[%c19, %c0_2, %c0_3], %0 {strides = array<i32>} : memref<22x16x40xbf16, #tpu.memory_space<vmem>>, vector<3x16x40xbf16>,
    %c0_4 = arith.constant 0 : index
    %c0_5 = arith.constant 0 : index
    %c0_6 = arith.constant 0 : index
    %c0_7 = arith.constant 0 : index
    %3 = vector.load %arg1[%c0_4, %c0_5, %c0_6, %c0_7] : memref<1x16x16x40xbf16, #tpu.memory_space<vmem>>, vector<1x16x16x40xbf16>
    %4 = vector.shape_cast %3 : vector<1x16x16x40xbf16> to vector<16x16x40xbf16>
    %c3 = arith.constant 3 : index
    %c0_8 = arith.constant 0 : index
    %c0_9 = arith.constant 0 : index
    %5 = vector.load %arg5[%c3, %c0_8, %c0_9] : memref<22x16x40xbf16, #tpu.memory_space<vmem>>, vector<16x16x40xbf16>
    tpu.vector_store %arg5[%c3, %c0_8, %c0_9], %4 {strides = array<i32>} : memref<22x16x40xbf16, #tpu.memory_space<vmem>>, vector<16x16x40xbf16>,
    %cst_10 = arith.constant 0.000000e+00 : f32
    %6 = vector.broadcast %cst_10 : f32 to vector<256x48xf32>
    %c0_11 = arith.constant 0 : index
    %c0_12 = arith.constant 0 : index
    %c0_13 = arith.constant 0 : index
    %7 = vector.load %arg5[%c0_11, %c0_12, %c0_13] : memref<22x16x40xbf16, #tpu.memory_space<vmem>>, vector<16x16x40xbf16>
    %8 = vector.shape_cast %7 : vector<16x16x40xbf16> to vector<256x40xbf16>
    %c0_14 = arith.constant 0 : index
    %c0_15 = arith.constant 0 : index
    %c0_16 = arith.constant 0 : index
    %9 = vector.load %arg2[%c0_14, %c0_15, %c0_16] : memref<7x40x48xbf16, #tpu.memory_space<vmem>>, vector<1x40x48xbf16>
    %10 = vector.shape_cast %9 : vector<1x40x48xbf16> to vector<40x48xbf16>
    %cst_17 = arith.constant dense<0.000000e+00> : vector<256x48xf32>
    %11 = tpu.matmul %8, %10, %cst_17 {dimension_numbers = #tpu.dot_dimension_numbers<[1], [0], [0], [1], [0, 0, 1, 1], [], []>} : vector<256x40xbf16>, vector<40x48xbf16>, vector<256x48xf32> -> vector<256x48xf32>
    %12 = arith.addf %6, %11 : vector<256x48xf32>
    %c1 = arith.constant 1 : index
    %c0_18 = arith.constant 0 : index
    %c0_19 = arith.constant 0 : index
    %13 = vector.load %arg5[%c1, %c0_18, %c0_19] : memref<22x16x40xbf16, #tpu.memory_space<vmem>>, vector<16x16x40xbf16>
    %14 = vector.shape_cast %13 : vector<16x16x40xbf16> to vector<256x40xbf16>
    %c1_20 = arith.constant 1 : index
    %c0_21 = arith.constant 0 : index
    %c0_22 = arith.constant 0 : index
    %15 = vector.load %arg2[%c1_20, %c0_21, %c0_22] : memref<7x40x48xbf16, #tpu.memory_space<vmem>>, vector<1x40x48xbf16>
    %16 = vector.shape_cast %15 : vector<1x40x48xbf16> to vector<40x48xbf16>
    %cst_23 = arith.constant dense<0.000000e+00> : vector<256x48xf32>
    %17 = tpu.matmul %14, %16, %cst_23 {dimension_numbers = #tpu.dot_dimension_numbers<[1], [0], [0], [1], [0, 0, 1, 1], [], []>} : vector<256x40xbf16>, vector<40x48xbf16>, vector<256x48xf32> -> vector<256x48xf32>
    %18 = arith.addf %12, %17 : vector<256x48xf32>
    %c2 = arith.constant 2 : index
    %c0_24 = arith.constant 0 : index
    %c0_25 = arith.constant 0 : index
    %19 = vector.load %arg5[%c2, %c0_24, %c0_25] : memref<22x16x40xbf16, #tpu.memory_space<vmem>>, vector<16x16x40xbf16>
    %20 = vector.shape_cast %19 : vector<16x16x40xbf16> to vector<256x40xbf16>
    %c2_26 = arith.constant 2 : index
    %c0_27 = arith.constant 0 : index
    %c0_28 = arith.constant 0 : index
    %21 = vector.load %arg2[%c2_26, %c0_27, %c0_28] : memref<7x40x48xbf16, #tpu.memory_space<vmem>>, vector<1x40x48xbf16>
    %22 = vector.shape_cast %21 : vector<1x40x48xbf16> to vector<40x48xbf16>
    %cst_29 = arith.constant dense<0.000000e+00> : vector<256x48xf32>
    %23 = tpu.matmul %20, %22, %cst_29 {dimension_numbers = #tpu.dot_dimension_numbers<[1], [0], [0], [1], [0, 0, 1, 1], [], []>} : vector<256x40xbf16>, vector<40x48xbf16>, vector<256x48xf32> -> vector<256x48xf32>
    %24 = arith.addf %18, %23 : vector<256x48xf32>
    %c3_30 = arith.constant 3 : index
    %c0_31 = arith.constant 0 : index
    %c0_32 = arith.constant 0 : index
    %25 = vector.load %arg5[%c3_30, %c0_31, %c0_32] : memref<22x16x40xbf16, #tpu.memory_space<vmem>>, vector<16x16x40xbf16>
    %26 = vector.shape_cast %25 : vector<16x16x40xbf16> to vector<256x40xbf16>
    %c3_33 = arith.constant 3 : index
    %c0_34 = arith.constant 0 : index
    %c0_35 = arith.constant 0 : index
    %27 = vector.load %arg2[%c3_33, %c0_34, %c0_35] : memref<7x40x48xbf16, #tpu.memory_space<vmem>>, vector<1x40x48xbf16>
    %28 = vector.shape_cast %27 : vector<1x40x48xbf16> to vector<40x48xbf16>
    %cst_36 = arith.constant dense<0.000000e+00> : vector<256x48xf32>
    %29 = tpu.matmul %26, %28, %cst_36 {dimension_numbers = #tpu.dot_dimension_numbers<[1], [0], [0], [1], [0, 0, 1, 1], [], []>} : vector<256x40xbf16>, vector<40x48xbf16>, vector<256x48xf32> -> vector<256x48xf32>
    %30 = arith.addf %24, %29 : vector<256x48xf32>
    %c4 = arith.constant 4 : index
    %c0_37 = arith.constant 0 : index
    %c0_38 = arith.constant 0 : index
    %31 = vector.load %arg5[%c4, %c0_37, %c0_38] : memref<22x16x40xbf16, #tpu.memory_space<vmem>>, vector<16x16x40xbf16>
    %32 = vector.shape_cast %31 : vector<16x16x40xbf16> to vector<256x40xbf16>
    %c4_39 = arith.constant 4 : index
    %c0_40 = arith.constant 0 : index
    %c0_41 = arith.constant 0 : index
    %33 = vector.load %arg2[%c4_39, %c0_40, %c0_41] : memref<7x40x48xbf16, #tpu.memory_space<vmem>>, vector<1x40x48xbf16>
    %34 = vector.shape_cast %33 : vector<1x40x48xbf16> to vector<40x48xbf16>
    %cst_42 = arith.constant dense<0.000000e+00> : vector<256x48xf32>
    %35 = tpu.matmul %32, %34, %cst_42 {dimension_numbers = #tpu.dot_dimension_numbers<[1], [0], [0], [1], [0, 0, 1, 1], [], []>} : vector<256x40xbf16>, vector<40x48xbf16>, vector<256x48xf32> -> vector<256x48xf32>
    %36 = arith.addf %30, %35 : vector<256x48xf32>
    %c5 = arith.constant 5 : index
    %c0_43 = arith.constant 0 : index
    %c0_44 = arith.constant 0 : index
    %37 = vector.load %arg5[%c5, %c0_43, %c0_44] : memref<22x16x40xbf16, #tpu.memory_space<vmem>>, vector<16x16x40xbf16>
    %38 = vector.shape_cast %37 : vector<16x16x40xbf16> to vector<256x40xbf16>
    %c5_45 = arith.constant 5 : index
    %c0_46 = arith.constant 0 : index
    %c0_47 = arith.constant 0 : index
    %39 = vector.load %arg2[%c5_45, %c0_46, %c0_47] : memref<7x40x48xbf16, #tpu.memory_space<vmem>>, vector<1x40x48xbf16>
    %40 = vector.shape_cast %39 : vector<1x40x48xbf16> to vector<40x48xbf16>
    %cst_48 = arith.constant dense<0.000000e+00> : vector<256x48xf32>
    %41 = tpu.matmul %38, %40, %cst_48 {dimension_numbers = #tpu.dot_dimension_numbers<[1], [0], [0], [1], [0, 0, 1, 1], [], []>} : vector<256x40xbf16>, vector<40x48xbf16>, vector<256x48xf32> -> vector<256x48xf32>
    %42 = arith.addf %36, %41 : vector<256x48xf32>
    %c6 = arith.constant 6 : index
    %c0_49 = arith.constant 0 : index
    %c0_50 = arith.constant 0 : index
    %43 = vector.load %arg5[%c6, %c0_49, %c0_50] : memref<22x16x40xbf16, #tpu.memory_space<vmem>>, vector<16x16x40xbf16>
    %44 = vector.shape_cast %43 : vector<16x16x40xbf16> to vector<256x40xbf16>
    %c6_51 = arith.constant 6 : index
    %c0_52 = arith.constant 0 : index
    %c0_53 = arith.constant 0 : index
    %45 = vector.load %arg2[%c6_51, %c0_52, %c0_53] : memref<7x40x48xbf16, #tpu.memory_space<vmem>>, vector<1x40x48xbf16>
    %46 = vector.shape_cast %45 : vector<1x40x48xbf16> to vector<40x48xbf16>
    %cst_54 = arith.constant dense<0.000000e+00> : vector<256x48xf32>
    %47 = tpu.matmul %44, %46, %cst_54 {dimension_numbers = #tpu.dot_dimension_numbers<[1], [0], [0], [1], [0, 0, 1, 1], [], []>} : vector<256x40xbf16>, vector<40x48xbf16>, vector<256x48xf32> -> vector<256x48xf32>
    %48 = arith.addf %42, %47 : vector<256x48xf32>
    %c0_55 = arith.constant 0 : index
    %c0_56 = arith.constant 0 : index
    %49 = vector.load %arg3[%c0_55, %c0_56] : memref<1x48xf32, #tpu.memory_space<vmem>>, vector<1x48xf32>
    %50 = vector.broadcast %49 : vector<1x48xf32> to vector<256x48xf32>
    %51 = arith.addf %48, %50 : vector<256x48xf32>
    %cst_57 = arith.constant 0.000000e+00 : f32
    %52 = vector.broadcast %cst_57 : f32 to vector<256x48xf32>
    %53 = arith.maximumf %51, %52 : vector<256x48xf32>
    %54 = vector.shape_cast %53 : vector<256x48xf32> to vector<1x16x16x48xf32>
    %55 = arith.truncf %54 : vector<1x16x16x48xf32> to vector<1x16x16x48xbf16>
    %c0_58 = arith.constant 0 : index
    %c0_59 = arith.constant 0 : index
    %c0_60 = arith.constant 0 : index
    %c0_61 = arith.constant 0 : index
    %56 = vector.load %arg4[%c0_58, %c0_59, %c0_60, %c0_61] : memref<1x16x16x48xbf16, #tpu.memory_space<vmem>>, vector<1x16x16x48xbf16>
    tpu.vector_store %arg4[%c0_58, %c0_59, %c0_60, %c0_61], %55 {strides = array<i32>} : memref<1x16x16x48xbf16, #tpu.memory_space<vmem>>, vector<1x16x16x48xbf16>,
    return
  }
  func.func @transform_0(%arg0: i32) -> (i32, i32, i32, i32) {
    %c0_i32 = arith.constant 0 : i32
    %c0_i32_0 = arith.constant 0 : i32
    %c0_i32_1 = arith.constant 0 : i32
    %c0_i32_2 = arith.constant 0 : i32
    return %arg0, %c0_i32, %c0_i32_0, %c0_i32_1 : i32, i32, i32, i32
  }
  func.func @transform_1(%arg0: i32) -> (i32, i32, i32) {
    %c0_i32 = arith.constant 0 : i32
    %c0_i32_0 = arith.constant 0 : i32
    %c0_i32_1 = arith.constant 0 : i32
    %c0_i32_2 = arith.constant 0 : i32
    return %c0_i32, %c0_i32_0, %c0_i32_1 : i32, i32, i32
  }
  func.func @transform_2(%arg0: i32) -> (i32, i32) {
    %c0_i32 = arith.constant 0 : i32
    %c0_i32_0 = arith.constant 0 : i32
    %c0_i32_1 = arith.constant 0 : i32
    return %c0_i32, %c0_i32_0 : i32, i32
  }
  func.func @transform_3(%arg0: i32) -> (i32, i32, i32, i32) {
    %c0_i32 = arith.constant 0 : i32
    %c0_i32_0 = arith.constant 0 : i32
    %c0_i32_1 = arith.constant 0 : i32
    %c0_i32_2 = arith.constant 0 : i32
    return %arg0, %c0_i32, %c0_i32_0, %c0_i32_1 : i32, i32, i32, i32
  }
}

</mosaic_0001>

<llo_original>
// kernel: inception_resnet_b_forward.4
$region0: #{inception_resnet_b_forward.4}
  #allocation0 [shape = 'u32[]', space=smem, size = 0x4, offset = 0x4, fixed_abs, tag = 'smem constant byte address 0x4 - core index']
  #allocation1 [shape = 'u32[144,128]{1,0:T(1,128)}', space=vmem, size = 0x12000, scoped, tag = 'internal scratch']
  %s0 = inlined_call_operand.vmem [shape: bf16[512,64], index: 0, kind: input, shape index: {}]
  %s1 = inlined_call_operand.vmem [shape: bf16[64,80], index: 1, kind: input, shape index: {}]
  %s2 = inlined_call_operand.vmem [shape: f32[1,80], index: 2, kind: input, shape index: {}]
  %s3 = inlined_call_operand.vmem [shape: bf16[512,32], index: 3, kind: output, shape index: {0}]
  %s4 = inlined_call_operand.vmem [shape: bf16[512,48], index: 4, kind: output, shape index: {1}]
  %5 = xla_tuple %s3, %s4
  %s6 = sld [smem:[#allocation0]]
  $region53: #{inception_resnet_b_forward.4} parent=0
    _
  %s8 = ssub.s32 1, %s6
  %s9 = scalar_select 0, %s8, %s6
  loop: start=0, step=1, limit=4
  $region2: #{inception_resnet_b_forward.4} parent=0 // loop_pre_header
    _
  $region3: #{inception_resnet_b_forward.4} parent=0 // loop_header
    %s11 = sphi 0, %s15
    %p12 = scmp.ge.s32.totalorder %s11, 4
    %s21 = sphi 0, %s23
    %s24 = sphi 0, %s21
    %s25 = sphi 0, %s24
    %s41 = sphi 0, %s25
    %s45 = sphi 0, %s45
    %s47 = sphi 0, %s45
    %s48 = sphi 0, %s47
    %s62 = sphi 0, %s48
    %s66 = sphi 0, %s66
    %s68 = sphi 0, %s66
    %s69 = sphi 0, %s68
    %s83 = sphi 0, %s69
    %s89 = sphi 0, %s91
    %s92 = sphi 0, %s89
    %s93 = sphi 0, %s92
    %s109 = sphi 0, %s93
    %s115 = sphi 0, %s117
    %s118 = sphi 0, %s115
    %s119 = sphi 0, %s118
    %s135 = sphi 0, %s119
  $region4: #{inception_resnet_b_forward.4} parent=0 // loop_header_branch
    %14 = sbr.rel (%p12) target = $region8
  $region5: #{inception_resnet_b_forward.4} parent=0 // loop_body
    %s16 = ssub.s32 %s11, 1
    %s17 = ssub.s32 %s11, 2
    %s18 = sadd.s32 %s11, 1
    %s19 = ssub.s32 %s11, %s18
    %p20 = scmp.eq.s32.totalorder %s19, 0
    %s22 = sadd.s32 %s21, 1
    %s23 = scalar_select %p20, %s21, %s22
    %p26 = pneg %p20
    %p27 = scmp.eq.s32.totalorder %s11, 1
    %p28 = por %p26, %p27
    %p29 = scmp.ne.s32.totalorder %s21, %s24
    %p30 = scmp.eq.s32.totalorder %s11, 0
    %p31 = por %p29, %p30
    %p32 = scmp.ne.s32.totalorder %s21, %s24
    %p33 = scmp.eq.s32.totalorder %s16, 1
    %p34 = por %p32, %p33
    %p35 = scmp.ne.s32.totalorder %s24, %s25
    %p36 = scmp.eq.s32.totalorder %s16, 0
    %p37 = por %p35, %p36
    %p38 = scmp.ne.s32.totalorder %s24, %s25
    %p39 = scmp.eq.s32.totalorder %s17, 1
    %p40 = por %p38, %p39
    %p42 = scmp.ne.s32.totalorder %s25, %s41
    %p43 = scmp.eq.s32.totalorder %s17, 0
    %p44 = por %p42, %p43
    %s46 = sadd.s32 %s45, 1
    %p49 = scmp.eq.s32.totalorder %s11, 1
    %p50 = scmp.ne.s32.totalorder %s45, %s47
    %p51 = scmp.eq.s32.totalorder %s11, 0
    %p52 = por %p50, %p51
    %p53 = scmp.ne.s32.totalorder %s45, %s47
    %p54 = scmp.eq.s32.totalorder %s16, 1
    %p55 = por %p53, %p54
    %p56 = scmp.ne.s32.totalorder %s47, %s48
    %p57 = scmp.eq.s32.totalorder %s16, 0
    %p58 = por %p56, %p57
    %p59 = scmp.ne.s32.totalorder %s47, %s48
    %p60 = scmp.eq.s32.totalorder %s17, 1
    %p61 = por %p59, %p60
    %p63 = scmp.ne.s32.totalorder %s48, %s62
    %p64 = scmp.eq.s32.totalorder %s17, 0
    %p65 = por %p63, %p64
    %s67 = sadd.s32 %s66, 1
    %p70 = scmp.eq.s32.totalorder %s11, 1
    %p71 = scmp.ne.s32.totalorder %s66, %s68
    %p72 = scmp.eq.s32.totalorder %s11, 0
    %p73 = por %p71, %p72
    %p74 = scmp.ne.s32.totalorder %s66, %s68
    %p75 = scmp.eq.s32.totalorder %s16, 1
    %p76 = por %p74, %p75
    %p77 = scmp.ne.s32.totalorder %s68, %s69
    %p78 = scmp.eq.s32.totalorder %s16, 0
    %p79 = por %p77, %p78
    %p80 = scmp.ne.s32.totalorder %s68, %s69
    %p81 = scmp.eq.s32.totalorder %s17, 1
    %p82 = por %p80, %p81
    %p84 = scmp.ne.s32.totalorder %s69, %s83
    %p85 = scmp.eq.s32.totalorder %s17, 0
    %p86 = por %p84, %p85
    %s87 = ssub.s32 %s11, %s18
    %p88 = scmp.eq.s32.totalorder %s87, 0
    %s90 = sadd.s32 %s89, 1
    %s91 = scalar_select %p88, %s89, %s90
    %p94 = pneg %p88
    %p95 = scmp.eq.s32.totalorder %s11, 1
    %p96 = por %p94, %p95
    %p97 = scmp.ne.s32.totalorder %s89, %s92
    %p98 = scmp.eq.s32.totalorder %s11, 0
    %p99 = por %p97, %p98
    %p100 = scmp.ne.s32.totalorder %s89, %s92
    %p101 = scmp.eq.s32.totalorder %s16, 1
    %p102 = por %p100, %p101
    %p103 = scmp.ne.s32.totalorder %s92, %s93
    %p104 = scmp.eq.s32.totalorder %s16, 0
    %p105 = por %p103, %p104
    %p106 = scmp.ne.s32.totalorder %s92, %s93
    %p107 = scmp.eq.s32.totalorder %s17, 1
    %p108 = por %p106, %p107
    %p110 = scmp.ne.s32.totalorder %s93, %s109
    %p111 = scmp.eq.s32.totalorder %s17, 0
    %p112 = por %p110, %p111
    %s113 = ssub.s32 %s11, %s18
    %p114 = scmp.eq.s32.totalorder %s113, 0
    %s116 = sadd.s32 %s115, 1
    %s117 = scalar_select %p114, %s115, %s116
    %p120 = pneg %p114
    %p121 = scmp.eq.s32.totalorder %s11, 1
    %p122 = por %p120, %p121
    %p123 = scmp.ne.s32.totalorder %s115, %s118
    %p124 = scmp.eq.s32.totalorder %s11, 0
    %p125 = por %p123, %p124
    %p126 = scmp.ne.s32.totalorder %s115, %s118
    %p127 = scmp.eq.s32.totalorder %s16, 1
    %p128 = por %p126, %p127
    %p129 = scmp.ne.s32.totalorder %s118, %s119
    %p130 = scmp.eq.s32.totalorder %s16, 0
    %p131 = por %p129, %p130
    %p132 = scmp.ne.s32.totalorder %s118, %s119
    %p133 = scmp.eq.s32.totalorder %s17, 1
    %p134 = por %p132, %p133
    %p136 = scmp.ne.s32.totalorder %s119, %s135
    %p137 = scmp.eq.s32.totalorder %s17, 0
    %p138 = por %p136, %p137
    %p139 = scmp.le.s32.totalorder 1, %s11
    %p140 = scmp.lt.s32.totalorder %s11, 3
    %p141 = pnand %p139, %p140
    %p142 = pneg %p141
    // Predicated region
    $region9: #{inception_resnet_b_forward.4} parent=5 // pred_check
      _
    $region10: #{inception_resnet_b_forward.4} parent=5 // pred_check_branch
      %144 = sbr.rel (%p141) target = $region12
    $region11: #{inception_resnet_b_forward.4} parent=5 // pred_region
      %s145 = ssub.s32 %s11, 1
      // Predicated region
      $region13: #{inception_resnet_b_forward.4} parent=11 // pred_check
        %p146 = pneg %p58
      $region14: #{inception_resnet_b_forward.4} parent=11 // pred_check_branch
        %148 = sbr.rel (%p146) target = $region16
      $region15: #{inception_resnet_b_forward.4} parent=11 // pred_region
        _
      $region16: #{inception_resnet_b_forward.4} parent=11 // pred_fallthru
        _
      // Predicated region
      $region17: #{inception_resnet_b_forward.4} parent=11 // pred_check
        %p149 = pneg %p79
      $region18: #{inception_resnet_b_forward.4} parent=11 // pred_check_branch
        %151 = sbr.rel (%p149) target = $region20
      $region19: #{inception_resnet_b_forward.4} parent=11 // pred_region
        _
      $region20: #{inception_resnet_b_forward.4} parent=11 // pred_fallthru
        _
    $region12: #{inception_resnet_b_forward.4} parent=5 // pred_fallthru
      _
    %p152 = scmp.lt.s32.totalorder %s11, 2
    // Predicated region
    $region21: #{inception_resnet_b_forward.4} parent=5 // pred_check
      %p153 = pneg %p152
    $region22: #{inception_resnet_b_forward.4} parent=5 // pred_check_branch
      %155 = sbr.rel (%p153) target = $region24
    $region23: #{inception_resnet_b_forward.4} parent=5 // pred_region
      // Predicated region
      $region25: #{inception_resnet_b_forward.4} parent=23 // pred_check
        %p156 = pneg %p31
      $region26: #{inception_resnet_b_forward.4} parent=23 // pred_check_branch
        %158 = sbr.rel (%p156) target = $region28
      $region27: #{inception_resnet_b_forward.4} parent=23 // pred_region
        %s159 = smul.u32 32, %s11
        %p160 = scmp.lt.s32.totalorder %s159, 63
        %s161 = scalar_select %p160, %s159, 63
        %s162 = smul.addr %s161, 4
        %s163 = scalar_lea.vmem %s0, %s162
        %s164 = smul.u32 32, %s11
      $region28: #{inception_resnet_b_forward.4} parent=23 // pred_fallthru
        _
    $region24: #{inception_resnet_b_forward.4} parent=5 // pred_fallthru
      _
    %p165 = scmp.le.s32.totalorder 1, %s11
    %p166 = scmp.lt.s32.totalorder %s11, 3
    %p167 = pnand %p165, %p166
    %p168 = pneg %p167
    // Predicated region
    $region29: #{inception_resnet_b_forward.4} parent=5 // pred_check
      _
    $region30: #{inception_resnet_b_forward.4} parent=5 // pred_check_branch
      %170 = sbr.rel (%p167) target = $region32
    $region31: #{inception_resnet_b_forward.4} parent=5 // pred_region
      %s171 = ssub.s32 %s11, 1
      %s172 = smul.u32 32, %s16
      %p173 = scmp.lt.s32.totalorder %s172, 63
      %s174 = scalar_select %p173, %s172, 63
      %s175 = smul.addr %s174, 4
      %s176 = scalar_lea.vmem %s0, %s175
      %p177 = pneg %p37
      %p178 = pneg %p34
      %p179 = pneg %p58
      %p180 = pneg %p55
      %p181 = pneg %p79
      %p182 = pneg %p76
      %p183 = pneg %p105
      %p184 = pneg %p102
      %s185 = smul.u32 32, %s16
      %p186 = scmp.lt.s32.totalorder %s185, 63
      %s187 = scalar_select %p186, %s185, 63
      %s188 = smul.addr %s187, 4
      %s189 = scalar_lea.vmem %s3, %s188
      %p190 = pneg %p131
      %p191 = pneg %p128
      %s192 = smul.u32 32, %s16
      %p193 = scmp.lt.s32.totalorder %s192, 63
      %s194 = scalar_select %p193, %s192, 63
      %s195 = smul.addr %s194, 4
      %s196 = scalar_lea.vmem %s4, %s195
      %s197 = smul.u32 32, %s16
      %p198 = scmp.lt.s32.totalorder %s197, 63
      %s199 = scalar_select %p198, %s197, 63
      %s200 = smul.addr %s199, 4
      %s201 = scalar_lea.vmem %s0, %s200
      %s202 = smul.u32 32, %s16
      %s203 = smul.u32 32, %s16
      %p204 = scmp.lt.s32.totalorder %s203, 63
      %s205 = scalar_select %p204, %s203, 63
      %s206 = smul.addr %s205, 4
      %s207 = scalar_lea.vmem %s3, %s206
      %s208 = smul.u32 32, %s16
      %s209 = smul.u32 32, %s16
      %p210 = scmp.lt.s32.totalorder %s209, 63
      %s211 = scalar_select %p210, %s209, 63
      %s212 = smul.addr %s211, 4
      %s213 = scalar_lea.vmem %s4, %s212
      %s214 = smul.u32 32, %s16
      %v216 = vld [vmem:[%s201] sm:$0xf]
      %v217 = vld [vmem:[%s201 + $0x4] sm:$0xf]
      %v218 = vld [vmem:[%s201 + $0x8] sm:$0xf]
      %v219 = vld [vmem:[%s201 + $0xc] sm:$0xf]
      %v220 = vld [vmem:[%s201 + $0x10] sm:$0xf]
      %v221 = vld [vmem:[%s201 + $0x14] sm:$0xf]
      %v222 = vld [vmem:[%s201 + $0x18] sm:$0xf]
      %v223 = vld [vmem:[%s201 + $0x1c] sm:$0xf]
      %v224 = vld [vmem:[%s201 + $0x20] sm:$0xf]
      %v225 = vld [vmem:[%s201 + $0x24] sm:$0xf]
      %v226 = vld [vmem:[%s201 + $0x28] sm:$0xf]
      %v227 = vld [vmem:[%s201 + $0x2c] sm:$0xf]
      %v228 = vld [vmem:[%s201 + $0x30] sm:$0xf]
      %v229 = vld [vmem:[%s201 + $0x34] sm:$0xf]
      %v230 = vld [vmem:[%s201 + $0x38] sm:$0xf]
      %v231 = vld [vmem:[%s201 + $0x3c] sm:$0xf]
      %v232 = vld [vmem:[%s201 + $0x40] sm:$0xf]
      %v233 = vld [vmem:[%s201 + $0x44] sm:$0xf]
      %v234 = vld [vmem:[%s201 + $0x48] sm:$0xf]
      %v235 = vld [vmem:[%s201 + $0x4c] sm:$0xf]
      %v236 = vld [vmem:[%s201 + $0x50] sm:$0xf]
      %v237 = vld [vmem:[%s201 + $0x54] sm:$0xf]
      %v238 = vld [vmem:[%s201 + $0x58] sm:$0xf]
      %v239 = vld [vmem:[%s201 + $0x5c] sm:$0xf]
      %v240 = vld [vmem:[%s201 + $0x60] sm:$0xf]
      %v241 = vld [vmem:[%s201 + $0x64] sm:$0xf]
      %v242 = vld [vmem:[%s201 + $0x68] sm:$0xf]
      %v243 = vld [vmem:[%s201 + $0x6c] sm:$0xf]
      %v244 = vld [vmem:[%s201 + $0x70] sm:$0xf]
      %v245 = vld [vmem:[%s201 + $0x74] sm:$0xf]
      %v246 = vld [vmem:[%s201 + $0x78] sm:$0xf]
      %v247 = vld [vmem:[%s201 + $0x7c] sm:$0xf]
      %v248 = vld [vmem:[%s1] sm:$0xf]
      %v249 = vld [vmem:[%s1 + $0x4] sm:$0xf]
      %v250 = vld [vmem:[%s1 + $0x8] sm:$0xf]
      %v251 = vld [vmem:[%s1 + $0xc] sm:$0xf]
      %v252 = vld [vmem:[%s1 + $0x10] sm:$0xf]
      %v253 = vld [vmem:[%s1 + $0x14] sm:$0xf]
      %v254 = vld [vmem:[%s1 + $0x18] sm:$0xf]
      %v255 = vld [vmem:[%s1 + $0x1c] sm:$0xf]
      %v256 = vld [vmem:[%s2] sm:$0x1]
      %v258 = vlaneseq
      %v259 = vshrl.u32 %v258, 7
      %v260 = vsub.s32 0, %v259
      %v261 = vrot.slane %v256, %v260
      %v295 = vunpack.c.l.b16 %v216
      %v296 = vunpack.c.l.b16 %v217
      %v297 = vunpack.c.l.b16 %v218
      %v298 = vunpack.c.l.b16 %v219
      %v299 = vunpack.c.l.b16 %v220
      %v300 = vunpack.c.l.b16 %v221
      %v301 = vunpack.c.l.b16 %v222
      %v302 = vunpack.c.l.b16 %v223
      %v303 = vunpack.c.l.b16 %v224
      %v304 = vunpack.c.l.b16 %v225
      %v305 = vunpack.c.l.b16 %v226
      %v306 = vunpack.c.l.b16 %v227
      %v307 = vunpack.c.l.b16 %v228
      %v308 = vunpack.c.l.b16 %v229
      %v309 = vunpack.c.l.b16 %v230
      %v310 = vunpack.c.l.b16 %v231
      %v311 = vunpack.c.l.b16 %v232
      %v312 = vunpack.c.l.b16 %v233
      %v313 = vunpack.c.l.b16 %v234
      %v314 = vunpack.c.l.b16 %v235
      %v315 = vunpack.c.l.b16 %v236
      %v316 = vunpack.c.l.b16 %v237
      %v317 = vunpack.c.l.b16 %v238
      %v318 = vunpack.c.l.b16 %v239
      %v319 = vunpack.c.l.b16 %v240
      %v320 = vunpack.c.l.b16 %v241
      %v321 = vunpack.c.l.b16 %v242
      %v322 = vunpack.c.l.b16 %v243
      %v323 = vunpack.c.l.b16 %v244
      %v324 = vunpack.c.l.b16 %v245
      %v325 = vunpack.c.l.b16 %v246
      %v326 = vunpack.c.l.b16 %v247
      %v327 = vpack.c.b16 %v296, %v295
      %v328 = vpack.c.b16 %v298, %v297
      %v329 = vpack.c.b16 %v300, %v299
      %v330 = vpack.c.b16 %v302, %v301
      %v331 = vpack.c.b16 %v304, %v303
      %v332 = vpack.c.b16 %v306, %v305
      %v333 = vpack.c.b16 %v308, %v307
      %v334 = vpack.c.b16 %v310, %v309
      %v335 = vpack.c.b16 %v312, %v311
      %v336 = vpack.c.b16 %v314, %v313
      %v337 = vpack.c.b16 %v316, %v315
      %v338 = vpack.c.b16 %v318, %v317
      %v339 = vpack.c.b16 %v320, %v319
      %v340 = vpack.c.b16 %v322, %v321
      %v341 = vpack.c.b16 %v324, %v323
      %v342 = vpack.c.b16 %v326, %v325
      %v351 = vunpack.c.l.b16 %v248
      %v352 = vunpack.c.l.b16 %v249
      %v353 = vunpack.c.l.b16 %v250
      %v354 = vunpack.c.l.b16 %v251
      %v355 = vunpack.c.l.b16 %v252
      %v356 = vunpack.c.l.b16 %v253
      %v357 = vunpack.c.l.b16 %v254
      %v358 = vunpack.c.l.b16 %v255
      %v359 = vpack.c.b16 %v352, %v351
      %v360 = vpack.c.b16 %v354, %v353
      %v361 = vpack.c.b16 %v356, %v355
      %v362 = vpack.c.b16 %v358, %v357
      %vm367 = vcmask 523264
      %v369 = vsel %vm367, %v327, 0
      %v372 = vsel %vm367, %v328, 0
      %v375 = vsel %vm367, %v329, 0
      %v378 = vsel %vm367, %v330, 0
      %v381 = vsel %vm367, %v331, 0
      %v384 = vsel %vm367, %v332, 0
      %v387 = vsel %vm367, %v333, 0
      %v390 = vsel %vm367, %v334, 0
      %v393 = vsel %vm367, %v335, 0
      %v396 = vsel %vm367, %v336, 0
      %v399 = vsel %vm367, %v337, 0
      %v402 = vsel %vm367, %v338, 0
      %v405 = vsel %vm367, %v339, 0
      %v408 = vsel %vm367, %v340, 0
      %v411 = vsel %vm367, %v341, 0
      %v414 = vsel %vm367, %v342, 0
      %416 = vmatprep.subr.bf16.mxu0 0
      %417 = vmatpush1.bf16.msra.mxu0 %v359
      %418 = vmatprep.subr.bf16.mxu0 0
      %419 = vmatpush1.bf16.msra.mxu0 %v360
      %420 = vmatprep.subr.bf16.mxu0 0
      %421 = vmatpush1.bf16.msra.mxu0 %v361
      %422 = vmatprep.subr.bf16.mxu0 0
      %423 = vmatpush1.bf16.msra.mxu0 %v362
      %424 = vmatprep.subr.bf16.mxu0 0
      %425 = vmatpush1.bf16.msra.mxu0 0
      %426 = vmatprep.subr.bf16.mxu0 0
      %427 = vmatpush1.bf16.msra.mxu0 0
      %428 = vmatprep.subr.bf16.mxu0 0
      %429 = vmatpush1.bf16.msra.mxu0 0
      %430 = vmatprep.subr.bf16.mxu0 0
      %431 = vmatpush1.bf16.msra.mxu0 0
      %432 = vmatprep.subr.bf16.mxu0 0
      %433 = vmatpush1.bf16.msra.mxu0 0
      %434 = vmatprep.subr.bf16.mxu0 0
      %435 = vmatpush1.bf16.msra.mxu0 0
      %436 = vmatprep.subr.bf16.mxu0 0
      %437 = vmatpush1.bf16.msra.mxu0 0
      %438 = vmatprep.subr.bf16.mxu0 0
      %439 = vmatpush1.bf16.msra.mxu0 0
      %440 = vmatprep.subr.bf16.mxu0 0
      %441 = vmatpush1.bf16.msra.mxu0 0
      %442 = vmatprep.subr.bf16.mxu0 0
      %443 = vmatpush1.bf16.msra.mxu0 0
      %444 = vmatprep.subr.bf16.mxu0 0
      %445 = vmatpush1.bf16.msra.mxu0 0
      %446 = vmatprep.subr.bf16.mxu0 0
      %447 = vmatpush1.bf16.msra.mxu0 0
      %448 = vmatprep.mubr.bf16.mxu0 0
      %449 = vmatmul.mubr.bf16.gmra.mrb[0].mxu0 %v369
      %v450 = vpop.f32.mrb[0].mxu0
      %v451 = vadd.f32 %v261, %v450
      %v452 = vpop.f32.mrb[0].mxu0
      %v453 = vpop.f32.mrb[0].mxu0
      %v454 = vadd.f32 %v261, %v453
      %v455 = vpop.f32.mrb[0].mxu0
      %456 = vmatprep.mubr.bf16.mxu0 0
      %457 = vmatmul.mubr.bf16.gmra.mrb[0].mxu0 %v372
      %v458 = vpop.f32.mrb[0].mxu0
      %v459 = vadd.f32 %v261, %v458
      %v460 = vpop.f32.mrb[0].mxu0
      %v461 = vpop.f32.mrb[0].mxu0
      %v462 = vadd.f32 %v261, %v461
      %v463 = vpop.f32.mrb[0].mxu0
      %464 = vmatprep.mubr.bf16.mxu0 0
      %465 = vmatmul.mubr.bf16.gmra.mrb[0].mxu0 %v375
      %v466 = vpop.f32.mrb[0].mxu0
      %v467 = vadd.f32 %v261, %v466
      %v468 = vpop.f32.mrb[0].mxu0
      %v469 = vpop.f32.mrb[0].mxu0
      %v470 = vadd.f32 %v261, %v469
      %v471 = vpop.f32.mrb[0].mxu0
      %472 = vmatprep.mubr.bf16.mxu0 0
      %473 = vmatmul.mubr.bf16.gmra.mrb[0].mxu0 %v378
      %v474 = vpop.f32.mrb[0].mxu0
      %v475 = vadd.f32 %v261, %v474
      %v476 = vpop.f32.mrb[0].mxu0
      %v477 = vpop.f32.mrb[0].mxu0
      %v478 = vadd.f32 %v261, %v477
      %v479 = vpop.f32.mrb[0].mxu0
      %480 = vmatprep.mubr.bf16.mxu0 0
      %481 = vmatmul.mubr.bf16.gmra.mrb[0].mxu0 %v381
      %v482 = vpop.f32.mrb[0].mxu0
      %v483 = vadd.f32 %v261, %v482
      %v484 = vpop.f32.mrb[0].mxu0
      %v485 = vpop.f32.mrb[0].mxu0
      %v486 = vadd.f32 %v261, %v485
      %v487 = vpop.f32.mrb[0].mxu0
      %488 = vmatprep.mubr.bf16.mxu0 0
      %489 = vmatmul.mubr.bf16.gmra.mrb[0].mxu0 %v384
      %v490 = vpop.f32.mrb[0].mxu0
      %v491 = vadd.f32 %v261, %v490
      %v492 = vpop.f32.mrb[0].mxu0
      %v493 = vpop.f32.mrb[0].mxu0
      %v494 = vadd.f32 %v261, %v493
      %v495 = vpop.f32.mrb[0].mxu0
      %496 = vmatprep.mubr.bf16.mxu0 0
      %497 = vmatmul.mubr.bf16.gmra.mrb[0].mxu0 %v387
      %v498 = vpop.f32.mrb[0].mxu0
      %v499 = vadd.f32 %v261, %v498
      %v500 = vpop.f32.mrb[0].mxu0
      %v501 = vpop.f32.mrb[0].mxu0
      %v502 = vadd.f32 %v261, %v501
      %v503 = vpop.f32.mrb[0].mxu0
      %504 = vmatprep.mubr.bf16.mxu0 0
      %505 = vmatmul.mubr.bf16.gmra.mrb[0].mxu0 %v390
      %v506 = vpop.f32.mrb[0].mxu0
      %v507 = vadd.f32 %v261, %v506
      %v508 = vpop.f32.mrb[0].mxu0
      %v509 = vpop.f32.mrb[0].mxu0
      %v510 = vadd.f32 %v261, %v509
      %v511 = vpop.f32.mrb[0].mxu0
      %512 = vmatprep.mubr.bf16.mxu0 0
      %513 = vmatmul.mubr.bf16.gmra.mrb[0].mxu0 %v393
      %v514 = vpop.f32.mrb[0].mxu0
      %v515 = vadd.f32 %v261, %v514
      %v516 = vpop.f32.mrb[0].mxu0
      %v517 = vpop.f32.mrb[0].mxu0
      %v518 = vadd.f32 %v261, %v517
      %v519 = vpop.f32.mrb[0].mxu0
      %520 = vmatprep.mubr.bf16.mxu0 0
      %521 = vmatmul.mubr.bf16.gmra.mrb[0].mxu0 %v396
      %v522 = vpop.f32.mrb[0].mxu0
      %v523 = vadd.f32 %v261, %v522
      %v524 = vpop.f32.mrb[0].mxu0
      %v525 = vpop.f32.mrb[0].mxu0
      %v526 = vadd.f32 %v261, %v525
      %v527 = vpop.f32.mrb[0].mxu0
      %528 = vmatprep.mubr.bf16.mxu0 0
      %529 = vmatmul.mubr.bf16.gmra.mrb[0].mxu0 %v399
      %v530 = vpop.f32.mrb[0].mxu0
      %v531 = vadd.f32 %v261, %v530
      %v532 = vpop.f32.mrb[0].mxu0
      %v533 = vpop.f32.mrb[0].mxu0
      %v534 = vadd.f32 %v261, %v533
      %v535 = vpop.f32.mrb[0].mxu0
      %536 = vmatprep.mubr.bf16.mxu0 0
      %537 = vmatmul.mubr.bf16.gmra.mrb[0].mxu0 %v402
      %v538 = vpop.f32.mrb[0].mxu0
      %v539 = vadd.f32 %v261, %v538
      %v540 = vpop.f32.mrb[0].mxu0
      %v541 = vpop.f32.mrb[0].mxu0
      %v542 = vadd.f32 %v261, %v541
      %v543 = vpop.f32.mrb[0].mxu0
      %544 = vmatprep.mubr.bf16.mxu0 0
      %545 = vmatmul.mubr.bf16.gmra.mrb[0].mxu0 %v405
      %v546 = vpop.f32.mrb[0].mxu0
      %v547 = vadd.f32 %v261, %v546
      %v548 = vpop.f32.mrb[0].mxu0
      %v549 = vpop.f32.mrb[0].mxu0
      %v550 = vadd.f32 %v261, %v549
      %v551 = vpop.f32.mrb[0].mxu0
      %552 = vmatprep.mubr.bf16.mxu0 0
      %553 = vmatmul.mubr.bf16.gmra.mrb[0].mxu0 %v408
      %v554 = vpop.f32.mrb[0].mxu0
      %v555 = vadd.f32 %v261, %v554
      %v556 = vpop.f32.mrb[0].mxu0
      %v557 = vpop.f32.mrb[0].mxu0
      %v558 = vadd.f32 %v261, %v557
      %v559 = vpop.f32.mrb[0].mxu0
      %560 = vmatprep.mubr.bf16.mxu0 0
      %561 = vmatmul.mubr.bf16.gmra.mrb[0].mxu0 %v411
      %v562 = vpop.f32.mrb[0].mxu0
      %v563 = vadd.f32 %v261, %v562
      %v564 = vpop.f32.mrb[0].mxu0
      %v565 = vpop.f32.mrb[0].mxu0
      %v566 = vadd.f32 %v261, %v565
      %v567 = vpop.f32.mrb[0].mxu0
      %568 = vmatprep.mubr.bf16.mxu0 0
      %569 = vmatmul.mubr.bf16.gmra.mrb[0].mxu0 %v414
      %v570 = vpop.f32.mrb[0].mxu0
      %v571 = vadd.f32 %v261, %v570
      %v572 = vpop.f32.mrb[0].mxu0
      %v573 = vpop.f32.mrb[0].mxu0
      %v574 = vadd.f32 %v261, %v573
      %v575 = vpop.f32.mrb[0].mxu0
      %576 = vdwg.mxu0
      %v577 = vmax.f32 %v451, 0.0
      %v578 = vmax.f32 %v454, 0.0
      %v579 = vmax.f32 %v459, 0.0
      %v580 = vmax.f32 %v462, 0.0
      %v581 = vmax.f32 %v467, 0.0
      %v582 = vmax.f32 %v470, 0.0
      %v583 = vmax.f32 %v475, 0.0
      %v584 = vmax.f32 %v478, 0.0
      %v585 = vmax.f32 %v483, 0.0
      %v586 = vmax.f32 %v486, 0.0
      %v587 = vmax.f32 %v491, 0.0
      %v588 = vmax.f32 %v494, 0.0
      %v589 = vmax.f32 %v499, 0.0
      %v590 = vmax.f32 %v502, 0.0
      %v591 = vmax.f32 %v507, 0.0
      %v592 = vmax.f32 %v510, 0.0
      %v593 = vmax.f32 %v515, 0.0
      %v594 = vmax.f32 %v518, 0.0
      %v595 = vmax.f32 %v523, 0.0
      %v596 = vmax.f32 %v526, 0.0
      %v597 = vmax.f32 %v531, 0.0
      %v598 = vmax.f32 %v534, 0.0
      %v599 = vmax.f32 %v539, 0.0
      %v600 = vmax.f32 %v542, 0.0
      %v601 = vmax.f32 %v547, 0.0
      %v602 = vmax.f32 %v550, 0.0
      %v603 = vmax.f32 %v555, 0.0
      %v604 = vmax.f32 %v558, 0.0
      %v605 = vmax.f32 %v563, 0.0
      %v606 = vmax.f32 %v566, 0.0
      %v607 = vmax.f32 %v571, 0.0
      %v608 = vmax.f32 %v574, 0.0
      %v609 = vpack.c.bf16 %v578, %v577
      %v610 = vpack.c.bf16 %v580, %v579
      %v611 = vpack.c.bf16 %v582, %v581
      %v612 = vpack.c.bf16 %v584, %v583
      %v613 = vpack.c.bf16 %v586, %v585
      %v614 = vpack.c.bf16 %v588, %v587
      %v615 = vpack.c.bf16 %v590, %v589
      %v616 = vpack.c.bf16 %v592, %v591
      %v617 = vpack.c.bf16 %v594, %v593
      %v618 = vpack.c.bf16 %v596, %v595
      %v619 = vpack.c.bf16 %v598, %v597
      %v620 = vpack.c.bf16 %v600, %v599
      %v621 = vpack.c.bf16 %v602, %v601
      %v622 = vpack.c.bf16 %v604, %v603
      %v623 = vpack.c.bf16 %v606, %v605
      %v624 = vpack.c.bf16 %v608, %v607
      %v641 = vunpack.c.l.b16 %v609
      %v642 = vunpack.c.h.b16 %v609
      %v643 = vunpack.c.l.b16 %v610
      %v644 = vunpack.c.h.b16 %v610
      %v645 = vunpack.c.l.b16 %v611
      %v646 = vunpack.c.h.b16 %v611
      %v647 = vunpack.c.l.b16 %v612
      %v648 = vunpack.c.h.b16 %v612
      %v649 = vunpack.c.l.b16 %v613
      %v650 = vunpack.c.h.b16 %v613
      %v651 = vunpack.c.l.b16 %v614
      %v652 = vunpack.c.h.b16 %v614
      %v653 = vunpack.c.l.b16 %v615
      %v654 = vunpack.c.h.b16 %v615
      %v655 = vunpack.c.l.b16 %v616
      %v656 = vunpack.c.h.b16 %v616
      %v657 = vunpack.c.l.b16 %v617
      %v658 = vunpack.c.h.b16 %v617
      %v659 = vunpack.c.l.b16 %v618
      %v660 = vunpack.c.h.b16 %v618
      %v661 = vunpack.c.l.b16 %v619
      %v662 = vunpack.c.h.b16 %v619
      %v663 = vunpack.c.l.b16 %v620
      %v664 = vunpack.c.h.b16 %v620
      %v665 = vunpack.c.l.b16 %v621
      %v666 = vunpack.c.h.b16 %v621
      %v667 = vunpack.c.l.b16 %v622
      %v668 = vunpack.c.h.b16 %v622
      %v669 = vunpack.c.l.b16 %v623
      %v670 = vunpack.c.h.b16 %v623
      %v671 = vunpack.c.l.b16 %v624
      %v672 = vunpack.c.h.b16 %v624
      %v673 = vpack.c.b16 %v641, %v641
      %v674 = vpack.c.b16 %v642, %v642
      %v675 = vpack.c.b16 %v643, %v643
      %v676 = vpack.c.b16 %v644, %v644
      %v677 = vpack.c.b16 %v645, %v645
      %v678 = vpack.c.b16 %v646, %v646
      %v679 = vpack.c.b16 %v647, %v647
      %v680 = vpack.c.b16 %v648, %v648
      %v681 = vpack.c.b16 %v649, %v649
      %v682 = vpack.c.b16 %v650, %v650
      %v683 = vpack.c.b16 %v651, %v651
      %v684 = vpack.c.b16 %v652, %v652
      %v685 = vpack.c.b16 %v653, %v653
      %v686 = vpack.c.b16 %v654, %v654
      %v687 = vpack.c.b16 %v655, %v655
      %v688 = vpack.c.b16 %v656, %v656
      %v689 = vpack.c.b16 %v657, %v657
      %v690 = vpack.c.b16 %v658, %v658
      %v691 = vpack.c.b16 %v659, %v659
      %v692 = vpack.c.b16 %v660, %v660
      %v693 = vpack.c.b16 %v661, %v661
      %v694 = vpack.c.b16 %v662, %v662
      %v695 = vpack.c.b16 %v663, %v663
      %v696 = vpack.c.b16 %v664, %v664
      %v697 = vpack.c.b16 %v665, %v665
      %v698 = vpack.c.b16 %v666, %v666
      %v699 = vpack.c.b16 %v667, %v667
      %v700 = vpack.c.b16 %v668, %v668
      %v701 = vpack.c.b16 %v669, %v669
      %v702 = vpack.c.b16 %v670, %v670
      %v703 = vpack.c.b16 %v671, %v671
      %v704 = vpack.c.b16 %v672, %v672
      %vm737 = vcmask 257024
      %738 = vst.msk [vmem:[%s207] sm:$0xf] %vm737, %v673
      %739 = vst.msk [vmem:[%s207 + $0x4] sm:$0xf] %vm737, %v674
      %740 = vst.msk [vmem:[%s207 + $0x8] sm:$0xf] %vm737, %v675
      %741 = vst.msk [vmem:[%s207 + $0xc] sm:$0xf] %vm737, %v676
      %742 = vst.msk [vmem:[%s207 + $0x10] sm:$0xf] %vm737, %v677
      %743 = vst.msk [vmem:[%s207 + $0x14] sm:$0xf] %vm737, %v678
      %744 = vst.msk [vmem:[%s207 + $0x18] sm:$0xf] %vm737, %v679
      %745 = vst.msk [vmem:[%s207 + $0x1c] sm:$0xf] %vm737, %v680
      %746 = vst.msk [vmem:[%s207 + $0x20] sm:$0xf] %vm737, %v681
      %747 = vst.msk [vmem:[%s207 + $0x24] sm:$0xf] %vm737, %v682
      %748 = vst.msk [vmem:[%s207 + $0x28] sm:$0xf] %vm737, %v683
      %749 = vst.msk [vmem:[%s207 + $0x2c] sm:$0xf] %vm737, %v684
      %750 = vst.msk [vmem:[%s207 + $0x30] sm:$0xf] %vm737, %v685
      %751 = vst.msk [vmem:[%s207 + $0x34] sm:$0xf] %vm737, %v686
      %752 = vst.msk [vmem:[%s207 + $0x38] sm:$0xf] %vm737, %v687
      %753 = vst.msk [vmem:[%s207 + $0x3c] sm:$0xf] %vm737, %v688
      %754 = vst.msk [vmem:[%s207 + $0x40] sm:$0xf] %vm737, %v689
      %755 = vst.msk [vmem:[%s207 + $0x44] sm:$0xf] %vm737, %v690
      %756 = vst.msk [vmem:[%s207 + $0x48] sm:$0xf] %vm737, %v691
      %757 = vst.msk [vmem:[%s207 + $0x4c] sm:$0xf] %vm737, %v692
      %758 = vst.msk [vmem:[%s207 + $0x50] sm:$0xf] %vm737, %v693
      %759 = vst.msk [vmem:[%s207 + $0x54] sm:$0xf] %vm737, %v694
      %760 = vst.msk [vmem:[%s207 + $0x58] sm:$0xf] %vm737, %v695
      %761 = vst.msk [vmem:[%s207 + $0x5c] sm:$0xf] %vm737, %v696
      %762 = vst.msk [vmem:[%s207 + $0x60] sm:$0xf] %vm737, %v697
      %763 = vst.msk [vmem:[%s207 + $0x64] sm:$0xf] %vm737, %v698
      %764 = vst.msk [vmem:[%s207 + $0x68] sm:$0xf] %vm737, %v699
      %765 = vst.msk [vmem:[%s207 + $0x6c] sm:$0xf] %vm737, %v700
      %766 = vst.msk [vmem:[%s207 + $0x70] sm:$0xf] %vm737, %v701
      %767 = vst.msk [vmem:[%s207 + $0x74] sm:$0xf] %vm737, %v702
      %768 = vst.msk [vmem:[%s207 + $0x78] sm:$0xf] %vm737, %v703
      %769 = vst.msk [vmem:[%s207 + $0x7c] sm:$0xf] %vm737, %v704
      %770 = vrot.lane.b32.xlu0 %v673, 96
      %v771 = vpop.permute.xlu0 %770
      %772 = vrot.lane.b32.xlu0 %v674, 96
      %v773 = vpop.permute.xlu0 %772
      %774 = vrot.lane.b32.xlu0 %v675, 96
      %v775 = vpop.permute.xlu0 %774
      %776 = vrot.lane.b32.xlu0 %v676, 96
      %v777 = vpop.permute.xlu0 %776
      %778 = vrot.lane.b32.xlu0 %v677, 96
      %v779 = vpop.permute.xlu0 %778
      %780 = vrot.lane.b32.xlu0 %v678, 96
      %v781 = vpop.permute.xlu0 %780
      %782 = vrot.lane.b32.xlu0 %v679, 96
      %v783 = vpop.permute.xlu0 %782
      %784 = vrot.lane.b32.xlu0 %v680, 96
      %v785 = vpop.permute.xlu0 %784
      %786 = vrot.lane.b32.xlu0 %v681, 96
      %v787 = vpop.permute.xlu0 %786
      %788 = vrot.lane.b32.xlu0 %v682, 96
      %v789 = vpop.permute.xlu0 %788
      %790 = vrot.lane.b32.xlu0 %v683, 96
      %v791 = vpop.permute.xlu0 %790
      %792 = vrot.lane.b32.xlu0 %v684, 96
      %v793 = vpop.permute.xlu0 %792
      %794 = vrot.lane.b32.xlu0 %v685, 96
      %v795 = vpop.permute.xlu0 %794
      %796 = vrot.lane.b32.xlu0 %v686, 96
      %v797 = vpop.permute.xlu0 %796
      %798 = vrot.lane.b32.xlu0 %v687, 96
      %v799 = vpop.permute.xlu0 %798
      %800 = vrot.lane.b32.xlu0 %v688, 96
      %v801 = vpop.permute.xlu0 %800
      %802 = vrot.lane.b32.xlu0 %v689, 96
      %v803 = vpop.permute.xlu0 %802
      %804 = vrot.lane.b32.xlu0 %v690, 96
      %v805 = vpop.permute.xlu0 %804
      %806 = vrot.lane.b32.xlu0 %v691, 96
      %v807 = vpop.permute.xlu0 %806
      %808 = vrot.lane.b32.xlu0 %v692, 96
      %v809 = vpop.permute.xlu0 %808
      %810 = vrot.lane.b32.xlu0 %v693, 96
      %v811 = vpop.permute.xlu0 %810
      %812 = vrot.lane.b32.xlu0 %v694, 96
      %v813 = vpop.permute.xlu0 %812
      %814 = vrot.lane.b32.xlu0 %v695, 96
      %v815 = vpop.permute.xlu0 %814
      %816 = vrot.lane.b32.xlu0 %v696, 96
      %v817 = vpop.permute.xlu0 %816
      %818 = vrot.lane.b32.xlu0 %v697, 96
      %v819 = vpop.permute.xlu0 %818
      %820 = vrot.lane.b32.xlu0 %v698, 96
      %v821 = vpop.permute.xlu0 %820
      %822 = vrot.lane.b32.xlu0 %v699, 96
      %v823 = vpop.permute.xlu0 %822
      %824 = vrot.lane.b32.xlu0 %v700, 96
      %v825 = vpop.permute.xlu0 %824
      %826 = vrot.lane.b32.xlu0 %v701, 96
      %v827 = vpop.permute.xlu0 %826
      %828 = vrot.lane.b32.xlu0 %v702, 96
      %v829 = vpop.permute.xlu0 %828
      %830 = vrot.lane.b32.xlu0 %v703, 96
      %v831 = vpop.permute.xlu0 %830
      %832 = vrot.lane.b32.xlu0 %v704, 96
      %v833 = vpop.permute.xlu0 %832
      %vm866 = vcmask 388096
      %867 = vst.msk [vmem:[%s213] sm:$0xf] %vm866, %v771
      %868 = vst.msk [vmem:[%s213 + $0x4] sm:$0xf] %vm866, %v773
      %869 = vst.msk [vmem:[%s213 + $0x8] sm:$0xf] %vm866, %v775
      %870 = vst.msk [vmem:[%s213 + $0xc] sm:$0xf] %vm866, %v777
      %871 = vst.msk [vmem:[%s213 + $0x10] sm:$0xf] %vm866, %v779
      %872 = vst.msk [vmem:[%s213 + $0x14] sm:$0xf] %vm866, %v781
      %873 = vst.msk [vmem:[%s213 + $0x18] sm:$0xf] %vm866, %v783
      %874 = vst.msk [vmem:[%s213 + $0x1c] sm:$0xf] %vm866, %v785
      %875 = vst.msk [vmem:[%s213 + $0x20] sm:$0xf] %vm866, %v787
      %876 = vst.msk [vmem:[%s213 + $0x24] sm:$0xf] %vm866, %v789
      %877 = vst.msk [vmem:[%s213 + $0x28] sm:$0xf] %vm866, %v791
      %878 = vst.msk [vmem:[%s213 + $0x2c] sm:$0xf] %vm866, %v793
      %879 = vst.msk [vmem:[%s213 + $0x30] sm:$0xf] %vm866, %v795
      %880 = vst.msk [vmem:[%s213 + $0x34] sm:$0xf] %vm866, %v797
      %881 = vst.msk [vmem:[%s213 + $0x38] sm:$0xf] %vm866, %v799
      %882 = vst.msk [vmem:[%s213 + $0x3c] sm:$0xf] %vm866, %v801
      %883 = vst.msk [vmem:[%s213 + $0x40] sm:$0xf] %vm866, %v803
      %884 = vst.msk [vmem:[%s213 + $0x44] sm:$0xf] %vm866, %v805
      %885 = vst.msk [vmem:[%s213 + $0x48] sm:$0xf] %vm866, %v807
      %886 = vst.msk [vmem:[%s213 + $0x4c] sm:$0xf] %vm866, %v809
      %887 = vst.msk [vmem:[%s213 + $0x50] sm:$0xf] %vm866, %v811
      %888 = vst.msk [vmem:[%s213 + $0x54] sm:$0xf] %vm866, %v813
      %889 = vst.msk [vmem:[%s213 + $0x58] sm:$0xf] %vm866, %v815
      %890 = vst.msk [vmem:[%s213 + $0x5c] sm:$0xf] %vm866, %v817
      %891 = vst.msk [vmem:[%s213 + $0x60] sm:$0xf] %vm866, %v819
      %892 = vst.msk [vmem:[%s213 + $0x64] sm:$0xf] %vm866, %v821
      %893 = vst.msk [vmem:[%s213 + $0x68] sm:$0xf] %vm866, %v823
      %894 = vst.msk [vmem:[%s213 + $0x6c] sm:$0xf] %vm866, %v825
      %895 = vst.msk [vmem:[%s213 + $0x70] sm:$0xf] %vm866, %v827
      %896 = vst.msk [vmem:[%s213 + $0x74] sm:$0xf] %vm866, %v829
      %897 = vst.msk [vmem:[%s213 + $0x78] sm:$0xf] %vm866, %v831
      %898 = vst.msk [vmem:[%s213 + $0x7c] sm:$0xf] %vm866, %v833
      %s899 = smul.u32 32, %s16
      %p900 = scmp.lt.s32.totalorder %s899, 63
      %s901 = scalar_select %p900, %s899, 63
      %s902 = smul.addr %s901, 4
      %s903 = scalar_lea.vmem %s3, %s902
      %s904 = smul.u32 32, %s16
      %p905 = scmp.lt.s32.totalorder %s904, 63
      %s906 = scalar_select %p905, %s904, 63
      %s907 = smul.addr %s906, 4
      %s908 = scalar_lea.vmem %s4, %s907
      // Predicated region
      $region33: #{inception_resnet_b_forward.4} parent=31 // pred_check
        %p909 = pneg %p102
      $region34: #{inception_resnet_b_forward.4} parent=31 // pred_check_branch
        %911 = sbr.rel (%p909) target = $region36
      $region35: #{inception_resnet_b_forward.4} parent=31 // pred_region
        %s912 = smul.u32 32, %s16
      $region36: #{inception_resnet_b_forward.4} parent=31 // pred_fallthru
        _
      // Predicated region
      $region37: #{inception_resnet_b_forward.4} parent=31 // pred_check
        %p913 = pneg %p128
      $region38: #{inception_resnet_b_forward.4} parent=31 // pred_check_branch
        %915 = sbr.rel (%p913) target = $region40
      $region39: #{inception_resnet_b_forward.4} parent=31 // pred_region
        %s916 = smul.u32 32, %s16
      $region40: #{inception_resnet_b_forward.4} parent=31 // pred_fallthru
        _
    $region32: #{inception_resnet_b_forward.4} parent=5 // pred_fallthru
      _
    %p917 = scmp.le.s32.totalorder 2, %s11
    // Predicated region
    $region41: #{inception_resnet_b_forward.4} parent=5 // pred_check
      %p918 = pneg %p917
    $region42: #{inception_resnet_b_forward.4} parent=5 // pred_check_branch
      %920 = sbr.rel (%p918) target = $region44
    $region43: #{inception_resnet_b_forward.4} parent=5 // pred_region
      %s921 = ssub.s32 %s11, 2
      // Predicated region
      $region45: #{inception_resnet_b_forward.4} parent=43 // pred_check
        %p922 = pneg %p108
      $region46: #{inception_resnet_b_forward.4} parent=43 // pred_check_branch
        %924 = sbr.rel (%p922) target = $region48
      $region47: #{inception_resnet_b_forward.4} parent=43 // pred_region
        %s925 = smul.u32 32, %s17
        %p926 = scmp.lt.s32.totalorder %s925, 63
        %s927 = scalar_select %p926, %s925, 63
        %s928 = smul.addr %s927, 4
        %s929 = scalar_lea.vmem %s3, %s928
      $region48: #{inception_resnet_b_forward.4} parent=43 // pred_fallthru
        _
      // Predicated region
      $region49: #{inception_resnet_b_forward.4} parent=43 // pred_check
        %p930 = pneg %p134
      $region50: #{inception_resnet_b_forward.4} parent=43 // pred_check_branch
        %932 = sbr.rel (%p930) target = $region52
      $region51: #{inception_resnet_b_forward.4} parent=43 // pred_region
        %s933 = smul.u32 32, %s17
        %p934 = scmp.lt.s32.totalorder %s933, 63
        %s935 = scalar_select %p934, %s933, 63
        %s936 = smul.addr %s935, 4
        %s937 = scalar_lea.vmem %s4, %s936
      $region52: #{inception_resnet_b_forward.4} parent=43 // pred_fallthru
        _
    $region44: #{inception_resnet_b_forward.4} parent=5 // pred_fallthru
      _
  $region6: #{inception_resnet_b_forward.4} parent=0 // loop_footer
    %s15 = sadd.s32 1, %s11
  $region7: #{inception_resnet_b_forward.4} parent=0 // loop_footer_branch
    %10 = sbr.rel target = $region3
  $region8: #{inception_resnet_b_forward.4} parent=0 // loop_exit
    _

// kernel: inception_resnet_b_forward.7
$region0: #{inception_resnet_b_forward.7}
  #allocation0 [shape = 'u32[]', space=smem, size = 0x4, offset = 0x4, fixed_abs, tag = 'smem constant byte address 0x4 - core index']
  #allocation1 [shape = 'u32[144,128]{1,0:T(1,128)}', space=vmem, size = 0x12000, scoped, tag = 'internal scratch']
  %s0 = inlined_call_operand.vmem [shape: bf16[512,64], index: 0, kind: input, shape index: {}]
  %s1 = inlined_call_operand.vmem [shape: bf16[512,48], index: 1, kind: input, shape index: {}]
  %s2 = inlined_call_operand.vmem [shape: bf16[512,48], index: 2, kind: input, shape index: {}]
  %s3 = inlined_call_operand.vmem [shape: bf16[48,288], index: 3, kind: input, shape index: {}]
  %s4 = inlined_call_operand.vmem [shape: bf16[48,288], index: 4, kind: input, shape index: {}]
  %s5 = inlined_call_operand.vmem [shape: bf16[64,288], index: 5, kind: input, shape index: {}]
  %s6 = inlined_call_operand.vmem [shape: f32[1,288], index: 6, kind: input, shape index: {}]
  %s7 = inlined_call_operand.vmem [shape: f32[1,288], index: 7, kind: input, shape index: {}]
  %s8 = inlined_call_operand.hbm [shape: f32[512,288], index: 8, kind: output, shape index: {}]
  %s9 = sld [smem:[#allocation0]]
  $region65: #{inception_resnet_b_forward.7} parent=0
    _
  %s11 = ssub.s32 1, %s9
  %s12 = scalar_select 0, %s11, %s9
  $region1: #{inception_resnet_b_forward.7} parent=0
    #allocation2 [shape = 'u8[786432]{0}', space=vmem, size = 0xc0000, scoped, tag = 'output window, operand 0']
    #allocation3 [shape = 's32[2]{0}', space=sflag, size = 0x8, scoped, tag = 'scoped memory for inception_resnet_b_forward.7']
    %13 = vsyncpa [#allocation3], 0
    %s14 = scalar_lea.sflag [#allocation3], 1
    %15 = vsyncpa %s14, 0
    loop: start=0, step=1, limit=4
    $region2: #{inception_resnet_b_forward.7} parent=1 // loop_pre_header
      _
    $region3: #{inception_resnet_b_forward.7} parent=1 // loop_header
      %s17 = sphi 0, %s21
      %p18 = scmp.ge.s32.totalorder %s17, 4
      %s27 = sphi 0, %s29
      %s30 = sphi 0, %s27
      %s31 = sphi 0, %s30
      %s47 = sphi 0, %s31
      %s53 = sphi 0, %s55
      %s56 = sphi 0, %s53
      %s57 = sphi 0, %s56
      %s73 = sphi 0, %s57
      %s79 = sphi 0, %s81
      %s82 = sphi 0, %s79
      %s83 = sphi 0, %s82
      %s99 = sphi 0, %s83
      %s103 = sphi 0, %s103
      %s105 = sphi 0, %s103
      %s106 = sphi 0, %s105
      %s120 = sphi 0, %s106
      %s124 = sphi 0, %s124
      %s126 = sphi 0, %s124
      %s127 = sphi 0, %s126
      %s141 = sphi 0, %s127
      %s145 = sphi 0, %s145
      %s147 = sphi 0, %s145
      %s148 = sphi 0, %s147
      %s162 = sphi 0, %s148
      %s166 = sphi 0, %s166
      %s168 = sphi 0, %s166
      %s169 = sphi 0, %s168
      %s183 = sphi 0, %s169
      %s187 = sphi 0, %s187
      %s189 = sphi 0, %s187
      %s190 = sphi 0, %s189
      %s204 = sphi 0, %s190
      %s210 = sphi 0, %s212
      %s213 = sphi 0, %s210
      %s214 = sphi 0, %s213
      %s230 = sphi 0, %s214
    $region4: #{inception_resnet_b_forward.7} parent=1 // loop_header_branch
      %20 = sbr.rel (%p18) target = $region8
    $region5: #{inception_resnet_b_forward.7} parent=1 // loop_body
      %s22 = ssub.s32 %s17, 1
      %s23 = ssub.s32 %s17, 2
      %s24 = sadd.s32 %s17, 1
      %s25 = ssub.s32 %s17, %s24
      %p26 = scmp.eq.s32.totalorder %s25, 0
      %s28 = sadd.s32 %s27, 1
      %s29 = scalar_select %p26, %s27, %s28
      %p32 = pneg %p26
      %p33 = scmp.eq.s32.totalorder %s17, 1
      %p34 = por %p32, %p33
      %p35 = scmp.ne.s32.totalorder %s27, %s30
      %p36 = scmp.eq.s32.totalorder %s17, 0
      %p37 = por %p35, %p36
      %p38 = scmp.ne.s32.totalorder %s27, %s30
      %p39 = scmp.eq.s32.totalorder %s22, 1
      %p40 = por %p38, %p39
      %p41 = scmp.ne.s32.totalorder %s30, %s31
      %p42 = scmp.eq.s32.totalorder %s22, 0
      %p43 = por %p41, %p42
      %p44 = scmp.ne.s32.totalorder %s30, %s31
      %p45 = scmp.eq.s32.totalorder %s23, 1
      %p46 = por %p44, %p45
      %p48 = scmp.ne.s32.totalorder %s31, %s47
      %p49 = scmp.eq.s32.totalorder %s23, 0
      %p50 = por %p48, %p49
      %s51 = ssub.s32 %s17, %s24
      %p52 = scmp.eq.s32.totalorder %s51, 0
      %s54 = sadd.s32 %s53, 1
      %s55 = scalar_select %p52, %s53, %s54
      %p58 = pneg %p52
      %p59 = scmp.eq.s32.totalorder %s17, 1
      %p60 = por %p58, %p59
      %p61 = scmp.ne.s32.totalorder %s53, %s56
      %p62 = scmp.eq.s32.totalorder %s17, 0
      %p63 = por %p61, %p62
      %p64 = scmp.ne.s32.totalorder %s53, %s56
      %p65 = scmp.eq.s32.totalorder %s22, 1
      %p66 = por %p64, %p65
      %p67 = scmp.ne.s32.totalorder %s56, %s57
      %p68 = scmp.eq.s32.totalorder %s22, 0
      %p69 = por %p67, %p68
      %p70 = scmp.ne.s32.totalorder %s56, %s57
      %p71 = scmp.eq.s32.totalorder %s23, 1
      %p72 = por %p70, %p71
      %p74 = scmp.ne.s32.totalorder %s57, %s73
      %p75 = scmp.eq.s32.totalorder %s23, 0
      %p76 = por %p74, %p75
      %s77 = ssub.s32 %s17, %s24
      %p78 = scmp.eq.s32.totalorder %s77, 0
      %s80 = sadd.s32 %s79, 1
      %s81 = scalar_select %p78, %s79, %s80
      %p84 = pneg %p78
      %p85 = scmp.eq.s32.totalorder %s17, 1
      %p86 = por %p84, %p85
      %p87 = scmp.ne.s32.totalorder %s79, %s82
      %p88 = scmp.eq.s32.totalorder %s17, 0
      %p89 = por %p87, %p88
      %p90 = scmp.ne.s32.totalorder %s79, %s82
      %p91 = scmp.eq.s32.totalorder %s22, 1
      %p92 = por %p90, %p91
      %p93 = scmp.ne.s32.totalorder %s82, %s83
      %p94 = scmp.eq.s32.totalorder %s22, 0
      %p95 = por %p93, %p94
      %p96 = scmp.ne.s32.totalorder %s82, %s83
      %p97 = scmp.eq.s32.totalorder %s23, 1
      %p98 = por %p96, %p97
      %p100 = scmp.ne.s32.totalorder %s83, %s99
      %p101 = scmp.eq.s32.totalorder %s23, 0
      %p102 = por %p100, %p101
      %s104 = sadd.s32 %s103, 1
      %p107 = scmp.eq.s32.totalorder %s17, 1
      %p108 = scmp.ne.s32.totalorder %s103, %s105
      %p109 = scmp.eq.s32.totalorder %s17, 0
      %p110 = por %p108, %p109
      %p111 = scmp.ne.s32.totalorder %s103, %s105
      %p112 = scmp.eq.s32.totalorder %s22, 1
      %p113 = por %p111, %p112
      %p114 = scmp.ne.s32.totalorder %s105, %s106
      %p115 = scmp.eq.s32.totalorder %s22, 0
      %p116 = por %p114, %p115
      %p117 = scmp.ne.s32.totalorder %s105, %s106
      %p118 = scmp.eq.s32.totalorder %s23, 1
      %p119 = por %p117, %p118
      %p121 = scmp.ne.s32.totalorder %s106, %s120
      %p122 = scmp.eq.s32.totalorder %s23, 0
      %p123 = por %p121, %p122
      %s125 = sadd.s32 %s124, 1
      %p128 = scmp.eq.s32.totalorder %s17, 1
      %p129 = scmp.ne.s32.totalorder %s124, %s126
      %p130 = scmp.eq.s32.totalorder %s17, 0
      %p131 = por %p129, %p130
      %p132 = scmp.ne.s32.totalorder %s124, %s126
      %p133 = scmp.eq.s32.totalorder %s22, 1
      %p134 = por %p132, %p133
      %p135 = scmp.ne.s32.totalorder %s126, %s127
      %p136 = scmp.eq.s32.totalorder %s22, 0
      %p137 = por %p135, %p136
      %p138 = scmp.ne.s32.totalorder %s126, %s127
      %p139 = scmp.eq.s32.totalorder %s23, 1
      %p140 = por %p138, %p139
      %p142 = scmp.ne.s32.totalorder %s127, %s141
      %p143 = scmp.eq.s32.totalorder %s23, 0
      %p144 = por %p142, %p143
      %s146 = sadd.s32 %s145, 1
      %p149 = scmp.eq.s32.totalorder %s17, 1
      %p150 = scmp.ne.s32.totalorder %s145, %s147
      %p151 = scmp.eq.s32.totalorder %s17, 0
      %p152 = por %p150, %p151
      %p153 = scmp.ne.s32.totalorder %s145, %s147
      %p154 = scmp.eq.s32.totalorder %s22, 1
      %p155 = por %p153, %p154
      %p156 = scmp.ne.s32.totalorder %s147, %s148
      %p157 = scmp.eq.s32.totalorder %s22, 0
      %p158 = por %p156, %p157
      %p159 = scmp.ne.s32.totalorder %s147, %s148
      %p160 = scmp.eq.s32.totalorder %s23, 1
      %p161 = por %p159, %p160
      %p163 = scmp.ne.s32.totalorder %s148, %s162
      %p164 = scmp.eq.s32.totalorder %s23, 0
      %p165 = por %p163, %p164
      %s167 = sadd.s32 %s166, 1
      %p170 = scmp.eq.s32.totalorder %s17, 1
      %p171 = scmp.ne.s32.totalorder %s166, %s168
      %p172 = scmp.eq.s32.totalorder %s17, 0
      %p173 = por %p171, %p172
      %p174 = scmp.ne.s32.totalorder %s166, %s168
      %p175 = scmp.eq.s32.totalorder %s22, 1
      %p176 = por %p174, %p175
      %p177 = scmp.ne.s32.totalorder %s168, %s169
      %p178 = scmp.eq.s32.totalorder %s22, 0
      %p179 = por %p177, %p178
      %p180 = scmp.ne.s32.totalorder %s168, %s169
      %p181 = scmp.eq.s32.totalorder %s23, 1
      %p182 = por %p180, %p181
      %p184 = scmp.ne.s32.totalorder %s169, %s183
      %p185 = scmp.eq.s32.totalorder %s23, 0
      %p186 = por %p184, %p185
      %s188 = sadd.s32 %s187, 1
      %p191 = scmp.eq.s32.totalorder %s17, 1
      %p192 = scmp.ne.s32.totalorder %s187, %s189
      %p193 = scmp.eq.s32.totalorder %s17, 0
      %p194 = por %p192, %p193
      %p195 = scmp.ne.s32.totalorder %s187, %s189
      %p196 = scmp.eq.s32.totalorder %s22, 1
      %p197 = por %p195, %p196
      %p198 = scmp.ne.s32.totalorder %s189, %s190
      %p199 = scmp.eq.s32.totalorder %s22, 0
      %p200 = por %p198, %p199
      %p201 = scmp.ne.s32.totalorder %s189, %s190
      %p202 = scmp.eq.s32.totalorder %s23, 1
      %p203 = por %p201, %p202
      %p205 = scmp.ne.s32.totalorder %s190, %s204
      %p206 = scmp.eq.s32.totalorder %s23, 0
      %p207 = por %p205, %p206
      %s208 = ssub.s32 %s17, %s24
      %p209 = scmp.eq.s32.totalorder %s208, 0
      %s211 = sadd.s32 %s210, 1
      %s212 = scalar_select %p209, %s210, %s211
      %p215 = pneg %p209
      %p216 = scmp.eq.s32.totalorder %s17, 1
      %p217 = por %p215, %p216
      %p218 = scmp.ne.s32.totalorder %s210, %s213
      %p219 = scmp.eq.s32.totalorder %s17, 0
      %p220 = por %p218, %p219
      %p221 = scmp.ne.s32.totalorder %s210, %s213
      %p222 = scmp.eq.s32.totalorder %s22, 1
      %p223 = por %p221, %p222
      %p224 = scmp.ne.s32.totalorder %s213, %s214
      %p225 = scmp.eq.s32.totalorder %s22, 0
      %p226 = por %p224, %p225
      %p227 = scmp.ne.s32.totalorder %s213, %s214
      %p228 = scmp.eq.s32.totalorder %s23, 1
      %p229 = por %p227, %p228
      %p231 = scmp.ne.s32.totalorder %s214, %s230
      %p232 = scmp.eq.s32.totalorder %s23, 0
      %p233 = por %p231, %p232
      %p234 = scmp.le.s32.totalorder 1, %s17
      %p235 = scmp.lt.s32.totalorder %s17, 3
      %p236 = pnand %p234, %p235
      %p237 = pneg %p236
      // Predicated region
      $region9: #{inception_resnet_b_forward.7} parent=5 // pred_check
        _
      $region10: #{inception_resnet_b_forward.7} parent=5 // pred_check_branch
        %239 = sbr.rel (%p236) target = $region12
      $region11: #{inception_resnet_b_forward.7} parent=5 // pred_region
        %s240 = ssub.s32 %s17, 1
        // Predicated region
        $region13: #{inception_resnet_b_forward.7} parent=11 // pred_check
          %p241 = pneg %p116
        $region14: #{inception_resnet_b_forward.7} parent=11 // pred_check_branch
          %243 = sbr.rel (%p241) target = $region16
        $region15: #{inception_resnet_b_forward.7} parent=11 // pred_region
          _
        $region16: #{inception_resnet_b_forward.7} parent=11 // pred_fallthru
          _
        // Predicated region
        $region17: #{inception_resnet_b_forward.7} parent=11 // pred_check
          %p244 = pneg %p137
        $region18: #{inception_resnet_b_forward.7} parent=11 // pred_check_branch
          %246 = sbr.rel (%p244) target = $region20
        $region19: #{inception_resnet_b_forward.7} parent=11 // pred_region
          _
        $region20: #{inception_resnet_b_forward.7} parent=11 // pred_fallthru
          _
        // Predicated region
        $region21: #{inception_resnet_b_forward.7} parent=11 // pred_check
          %p247 = pneg %p158
        $region22: #{inception_resnet_b_forward.7} parent=11 // pred_check_branch
          %249 = sbr.rel (%p247) target = $region24
        $region23: #{inception_resnet_b_forward.7} parent=11 // pred_region
          _
        $region24: #{inception_resnet_b_forward.7} parent=11 // pred_fallthru
          _
        // Predicated region
        $region25: #{inception_resnet_b_forward.7} parent=11 // pred_check
          %p250 = pneg %p179
        $region26: #{inception_resnet_b_forward.7} parent=11 // pred_check_branch
          %252 = sbr.rel (%p250) target = $region28
        $region27: #{inception_resnet_b_forward.7} parent=11 // pred_region
          _
        $region28: #{inception_resnet_b_forward.7} parent=11 // pred_fallthru
          _
        // Predicated region
        $region29: #{inception_resnet_b_forward.7} parent=11 // pred_check
          %p253 = pneg %p200
        $region30: #{inception_resnet_b_forward.7} parent=11 // pred_check_branch
          %255 = sbr.rel (%p253) target = $region32
        $region31: #{inception_resnet_b_forward.7} parent=11 // pred_region
          _
        $region32: #{inception_resnet_b_forward.7} parent=11 // pred_fallthru
          _
      $region12: #{inception_resnet_b_forward.7} parent=5 // pred_fallthru
        _
      %p256 = scmp.lt.s32.totalorder %s17, 2
      // Predicated region
      $region33: #{inception_resnet_b_forward.7} parent=5 // pred_check
        %p257 = pneg %p256
      $region34: #{inception_resnet_b_forward.7} parent=5 // pred_check_branch
        %259 = sbr.rel (%p257) target = $region36
      $region35: #{inception_resnet_b_forward.7} parent=5 // pred_region
        // Predicated region
        $region37: #{inception_resnet_b_forward.7} parent=35 // pred_check
          %p260 = pneg %p37
        $region38: #{inception_resnet_b_forward.7} parent=35 // pred_check_branch
          %262 = sbr.rel (%p260) target = $region40
        $region39: #{inception_resnet_b_forward.7} parent=35 // pred_region
          %s263 = smul.u32 32, %s17
          %p264 = scmp.lt.s32.totalorder %s263, 63
          %s265 = scalar_select %p264, %s263, 63
          %s266 = smul.addr %s265, 4
          %s267 = scalar_lea.vmem %s0, %s266
          %s268 = smul.u32 32, %s17
        $region40: #{inception_resnet_b_forward.7} parent=35 // pred_fallthru
          _
        // Predicated region
        $region41: #{inception_resnet_b_forward.7} parent=35 // pred_check
          %p269 = pneg %p63
        $region42: #{inception_resnet_b_forward.7} parent=35 // pred_check_branch
          %271 = sbr.rel (%p269) target = $region44
        $region43: #{inception_resnet_b_forward.7} parent=35 // pred_region
          %s272 = smul.u32 32, %s17
          %p273 = scmp.lt.s32.totalorder %s272, 63
          %s274 = scalar_select %p273, %s272, 63
          %s275 = smul.addr %s274, 4
          %s276 = scalar_lea.vmem %s1, %s275
          %s277 = smul.u32 32, %s17
        $region44: #{inception_resnet_b_forward.7} parent=35 // pred_fallthru
          _
        // Predicated region
        $region45: #{inception_resnet_b_forward.7} parent=35 // pred_check
          %p278 = pneg %p89
        $region46: #{inception_resnet_b_forward.7} parent=35 // pred_check_branch
          %280 = sbr.rel (%p278) target = $region48
        $region47: #{inception_resnet_b_forward.7} parent=35 // pred_region
          %s281 = smul.u32 32, %s17
          %p282 = scmp.lt.s32.totalorder %s281, 63
          %s283 = scalar_select %p282, %s281, 63
          %s284 = smul.addr %s283, 4
          %s285 = scalar_lea.vmem %s2, %s284
          %s286 = smul.u32 32, %s17
        $region48: #{inception_resnet_b_forward.7} parent=35 // pred_fallthru
          _
      $region36: #{inception_resnet_b_forward.7} parent=5 // pred_fallthru
        _
      %p287 = scmp.le.s32.totalorder 1, %s17
      %p288 = scmp.lt.s32.totalorder %s17, 3
      %p289 = pnand %p287, %p288
      %p290 = pneg %p289
      // Predicated region
      $region49: #{inception_resnet_b_forward.7} parent=5 // pred_check
        _
      $region50: #{inception_resnet_b_forward.7} parent=5 // pred_check_branch
        %292 = sbr.rel (%p289) target = $region52
      $region51: #{inception_resnet_b_forward.7} parent=5 // pred_region
        %s293 = ssub.s32 %s17, 1
        %s294 = smul.u32 32, %s22
        %p295 = scmp.lt.s32.totalorder %s294, 63
        %s296 = scalar_select %p295, %s294, 63
        %s297 = smul.addr %s296, 4
        %s298 = scalar_lea.vmem %s0, %s297
        %p299 = pneg %p43
        %p300 = pneg %p40
        %s301 = smul.u32 32, %s22
        %p302 = scmp.lt.s32.totalorder %s301, 63
        %s303 = scalar_select %p302, %s301, 63
        %s304 = smul.addr %s303, 4
        %s305 = scalar_lea.vmem %s1, %s304
        %p306 = pneg %p69
        %p307 = pneg %p66
        %s308 = smul.u32 32, %s22
        %p309 = scmp.lt.s32.totalorder %s308, 63
        %s310 = scalar_select %p309, %s308, 63
        %s311 = smul.addr %s310, 4
        %s312 = scalar_lea.vmem %s2, %s311
        %p313 = pneg %p95
        %p314 = pneg %p92
        %p315 = pneg %p116
        %p316 = pneg %p113
        %p317 = pneg %p137
        %p318 = pneg %p134
        %p319 = pneg %p158
        %p320 = pneg %p155
        %p321 = pneg %p179
        %p322 = pneg %p176
        %p323 = pneg %p200
        %p324 = pneg %p197
        %p325 = pneg %p226
        %p326 = pneg %p223
        %s327 = sand.u32 %s213, 1
        %s328 = scalar_lea.sflag [#allocation3], %s327
        %s329 = sand.u32 %s213, 1
        %s330 = smul.addr %s329, 768
        %s331 = scalar_lea.vmem [#allocation2], %s330
        %s332 = smul.u32 32, %s22
        %p333 = scmp.lt.s32.totalorder %s332, 63
        %s334 = scalar_select %p333, %s332, 63
        %s335 = smul.addr %s334, 4
        %s336 = scalar_lea.vmem %s0, %s335
        %s337 = smul.u32 32, %s22
        %s338 = smul.u32 32, %s22
        %p339 = scmp.lt.s32.totalorder %s338, 63
        %s340 = scalar_select %p339, %s338, 63
        %s341 = smul.addr %s340, 4
        %s342 = scalar_lea.vmem %s1, %s341
        %s343 = smul.u32 32, %s22
        %s344 = smul.u32 32, %s22
        %p345 = scmp.lt.s32.totalorder %s344, 63
        %s346 = scalar_select %p345, %s344, 63
        %s347 = smul.addr %s346, 4
        %s348 = scalar_lea.vmem %s2, %s347
        %s349 = smul.u32 32, %s22
        %s350 = smul.u32 32, %s22
        %v352 = vld [vmem:[%s342] sm:$0xf]
        %v353 = vld [vmem:[%s342 + $0x4] sm:$0xf]
        %v354 = vld [vmem:[%s342 + $0x8] sm:$0xf]
        %v355 = vld [vmem:[%s342 + $0xc] sm:$0xf]
        %v356 = vld [vmem:[%s342 + $0x10] sm:$0xf]
        %v357 = vld [vmem:[%s342 + $0x14] sm:$0xf]
        %v358 = vld [vmem:[%s342 + $0x18] sm:$0xf]
        %v359 = vld [vmem:[%s342 + $0x1c] sm:$0xf]
        %v360 = vld [vmem:[%s342 + $0x20] sm:$0xf]
        %v361 = vld [vmem:[%s342 + $0x24] sm:$0xf]
        %v362 = vld [vmem:[%s342 + $0x28] sm:$0xf]
        %v363 = vld [vmem:[%s342 + $0x2c] sm:$0xf]
        %v364 = vld [vmem:[%s342 + $0x30] sm:$0xf]
        %v365 = vld [vmem:[%s342 + $0x34] sm:$0xf]
        %v366 = vld [vmem:[%s342 + $0x38] sm:$0xf]
        %v367 = vld [vmem:[%s342 + $0x3c] sm:$0xf]
        %v368 = vld [vmem:[%s342 + $0x40] sm:$0xf]
        %v369 = vld [vmem:[%s342 + $0x44] sm:$0xf]
        %v370 = vld [vmem:[%s342 + $0x48] sm:$0xf]
        %v371 = vld [vmem:[%s342 + $0x4c] sm:$0xf]
        %v372 = vld [vmem:[%s342 + $0x50] sm:$0xf]
        %v373 = vld [vmem:[%s342 + $0x54] sm:$0xf]
        %v374 = vld [vmem:[%s342 + $0x58] sm:$0xf]
        %v375 = vld [vmem:[%s342 + $0x5c] sm:$0xf]
        %v376 = vld [vmem:[%s342 + $0x60] sm:$0xf]
        %v377 = vld [vmem:[%s342 + $0x64] sm:$0xf]
        %v378 = vld [vmem:[%s342 + $0x68] sm:$0xf]
        %v379 = vld [vmem:[%s342 + $0x6c] sm:$0xf]
        %v380 = vld [vmem:[%s342 + $0x70] sm:$0xf]
        %v381 = vld [vmem:[%s342 + $0x74] sm:$0xf]
        %v382 = vld [vmem:[%s342 + $0x78] sm:$0xf]
        %v383 = vld [vmem:[%s342 + $0x7c] sm:$0xf]
        %v384 = vld [vmem:[%s3] sm:$0xff]
        %v385 = vld [vmem:[%s3 + $0x8] sm:$0xf]
        %v386 = vld [vmem:[%s3 + $0xc] sm:$0xff]
        %v387 = vld [vmem:[%s3 + $0x14] sm:$0xf]
        %v388 = vld [vmem:[%s3 + $0x18] sm:$0xff]
        %v389 = vld [vmem:[%s3 + $0x20] sm:$0xf]
        %v390 = vld [vmem:[%s3 + $0x24] sm:$0xff]
        %v391 = vld [vmem:[%s3 + $0x2c] sm:$0xf]
        %v392 = vld [vmem:[%s3 + $0x30] sm:$0xff]
        %v393 = vld [vmem:[%s3 + $0x38] sm:$0xf]
        %v394 = vld [vmem:[%s3 + $0x3c] sm:$0xff]
        %v395 = vld [vmem:[%s3 + $0x44] sm:$0xf]
        %v396 = vld [vmem:[%s348] sm:$0xf]
        %v397 = vld [vmem:[%s348 + $0x4] sm:$0xf]
        %v398 = vld [vmem:[%s348 + $0x8] sm:$0xf]
        %v399 = vld [vmem:[%s348 + $0xc] sm:$0xf]
        %v400 = vld [vmem:[%s348 + $0x10] sm:$0xf]
        %v401 = vld [vmem:[%s348 + $0x14] sm:$0xf]
        %v402 = vld [vmem:[%s348 + $0x18] sm:$0xf]
        %v403 = vld [vmem:[%s348 + $0x1c] sm:$0xf]
        %v404 = vld [vmem:[%s348 + $0x20] sm:$0xf]
        %v405 = vld [vmem:[%s348 + $0x24] sm:$0xf]
        %v406 = vld [vmem:[%s348 + $0x28] sm:$0xf]
        %v407 = vld [vmem:[%s348 + $0x2c] sm:$0xf]
        %v408 = vld [vmem:[%s348 + $0x30] sm:$0xf]
        %v409 = vld [vmem:[%s348 + $0x34] sm:$0xf]
        %v410 = vld [vmem:[%s348 + $0x38] sm:$0xf]
        %v411 = vld [vmem:[%s348 + $0x3c] sm:$0xf]
        %v412 = vld [vmem:[%s348 + $0x40] sm:$0xf]
        %v413 = vld [vmem:[%s348 + $0x44] sm:$0xf]
        %v414 = vld [vmem:[%s348 + $0x48] sm:$0xf]
        %v415 = vld [vmem:[%s348 + $0x4c] sm:$0xf]
        %v416 = vld [vmem:[%s348 + $0x50] sm:$0xf]
        %v417 = vld [vmem:[%s348 + $0x54] sm:$0xf]
        %v418 = vld [vmem:[%s348 + $0x58] sm:$0xf]
        %v419 = vld [vmem:[%s348 + $0x5c] sm:$0xf]
        %v420 = vld [vmem:[%s348 + $0x60] sm:$0xf]
        %v421 = vld [vmem:[%s348 + $0x64] sm:$0xf]
        %v422 = vld [vmem:[%s348 + $0x68] sm:$0xf]
        %v423 = vld [vmem:[%s348 + $0x6c] sm:$0xf]
        %v424 = vld [vmem:[%s348 + $0x70] sm:$0xf]
        %v425 = vld [vmem:[%s348 + $0x74] sm:$0xf]
        %v426 = vld [vmem:[%s348 + $0x78] sm:$0xf]
        %v427 = vld [vmem:[%s348 + $0x7c] sm:$0xf]
        %v428 = vld [vmem:[%s4] sm:$0xff]
        %v429 = vld [vmem:[%s4 + $0x8] sm:$0xf]
        %v430 = vld [vmem:[%s4 + $0xc] sm:$0xff]
        %v431 = vld [vmem:[%s4 + $0x14] sm:$0xf]
        %v432 = vld [vmem:[%s4 + $0x18] sm:$0xff]
        %v433 = vld [vmem:[%s4 + $0x20] sm:$0xf]
        %v434 = vld [vmem:[%s4 + $0x24] sm:$0xff]
        %v435 = vld [vmem:[%s4 + $0x2c] sm:$0xf]
        %v436 = vld [vmem:[%s4 + $0x30] sm:$0xff]
        %v437 = vld [vmem:[%s4 + $0x38] sm:$0xf]
        %v438 = vld [vmem:[%s4 + $0x3c] sm:$0xff]
        %v439 = vld [vmem:[%s4 + $0x44] sm:$0xf]
        %v472 = vunpack.c.l.b16 %v396
        %v473 = vunpack.c.l.b16 %v397
        %v474 = vunpack.c.l.b16 %v398
        %v475 = vunpack.c.l.b16 %v399
        %v476 = vunpack.c.l.b16 %v400
        %v477 = vunpack.c.l.b16 %v401
        %v478 = vunpack.c.l.b16 %v402
        %v479 = vunpack.c.l.b16 %v403
        %v480 = vunpack.c.l.b16 %v404
        %v481 = vunpack.c.l.b16 %v405
        %v482 = vunpack.c.l.b16 %v406
        %v483 = vunpack.c.l.b16 %v407
        %v484 = vunpack.c.l.b16 %v408
        %v485 = vunpack.c.l.b16 %v409
        %v486 = vunpack.c.l.b16 %v410
        %v487 = vunpack.c.l.b16 %v411
        %v488 = vunpack.c.l.b16 %v412
        %v489 = vunpack.c.l.b16 %v413
        %v490 = vunpack.c.l.b16 %v414
        %v491 = vunpack.c.l.b16 %v415
        %v492 = vunpack.c.l.b16 %v416
        %v493 = vunpack.c.l.b16 %v417
        %v494 = vunpack.c.l.b16 %v418
        %v495 = vunpack.c.l.b16 %v419
        %v496 = vunpack.c.l.b16 %v420
        %v497 = vunpack.c.l.b16 %v421
        %v498 = vunpack.c.l.b16 %v422
        %v499 = vunpack.c.l.b16 %v423
        %v500 = vunpack.c.l.b16 %v424
        %v501 = vunpack.c.l.b16 %v425
        %v502 = vunpack.c.l.b16 %v426
        %v503 = vunpack.c.l.b16 %v427
        %v504 = vpack.c.b16 %v473, %v472
        %v505 = vpack.c.b16 %v475, %v474
        %v506 = vpack.c.b16 %v477, %v476
        %v507 = vpack.c.b16 %v479, %v478
        %v508 = vpack.c.b16 %v481, %v480
        %v509 = vpack.c.b16 %v483, %v482
        %v510 = vpack.c.b16 %v485, %v484
        %v511 = vpack.c.b16 %v487, %v486
        %v512 = vpack.c.b16 %v489, %v488
        %v513 = vpack.c.b16 %v491, %v490
        %v514 = vpack.c.b16 %v493, %v492
        %v515 = vpack.c.b16 %v495, %v494
        %v516 = vpack.c.b16 %v497, %v496
        %v517 = vpack.c.b16 %v499, %v498
        %v518 = vpack.c.b16 %v501, %v500
        %v519 = vpack.c.b16 %v503, %v502
        %v532 = vunpack.c.l.b16 %v428
        %v533 = vunpack.c.h.b16 %v428
        %v534 = vunpack.c.l.b16 %v429
        %v535 = vunpack.c.l.b16 %v430
        %v536 = vunpack.c.h.b16 %v430
        %v537 = vunpack.c.l.b16 %v431
        %v538 = vunpack.c.l.b16 %v432
        %v539 = vunpack.c.h.b16 %v432
        %v540 = vunpack.c.l.b16 %v433
        %v541 = vunpack.c.l.b16 %v434
        %v542 = vunpack.c.h.b16 %v434
        %v543 = vunpack.c.l.b16 %v435
        %v544 = vunpack.c.l.b16 %v436
        %v545 = vunpack.c.h.b16 %v436
        %v546 = vunpack.c.l.b16 %v437
        %v547 = vunpack.c.l.b16 %v438
        %v548 = vunpack.c.h.b16 %v438
        %v549 = vunpack.c.l.b16 %v439
        %v550 = vpack.c.b16 %v535, %v532
        %v551 = vpack.c.b16 %v536, %v533
        %v552 = vpack.c.b16 %v537, %v534
        %v553 = vpack.c.b16 %v541, %v538
        %v554 = vpack.c.b16 %v542, %v539
        %v555 = vpack.c.b16 %v543, %v540
        %v556 = vpack.c.b16 %v547, %v544
        %v557 = vpack.c.b16 %v548, %v545
        %v558 = vpack.c.b16 %v549, %v546
        %vm568 = vcmask 392192
        %v570 = vsel %vm568, %v504, 0
        %v573 = vsel %vm568, %v505, 0
        %v576 = vsel %vm568, %v506, 0
        %v579 = vsel %vm568, %v507, 0
        %v582 = vsel %vm568, %v508, 0
        %v585 = vsel %vm568, %v509, 0
        %v588 = vsel %vm568, %v510, 0
        %v591 = vsel %vm568, %v511, 0
        %v594 = vsel %vm568, %v512, 0
        %v597 = vsel %vm568, %v513, 0
        %v600 = vsel %vm568, %v514, 0
        %v603 = vsel %vm568, %v515, 0
        %v606 = vsel %vm568, %v516, 0
        %v609 = vsel %vm568, %v517, 0
        %v612 = vsel %vm568, %v518, 0
        %v615 = vsel %vm568, %v519, 0
        %617 = vmatprep.subr.bf16.mxu0 %v551
        %618 = vmatpush1.bf16.msra.mxu0 %v550
        %619 = vmatprep.subr.bf16.mxu0 %v554
        %620 = vmatpush1.bf16.msra.mxu0 %v553
        %621 = vmatprep.subr.bf16.mxu0 %v557
        %622 = vmatpush1.bf16.msra.mxu0 %v556
        %623 = vmatprep.subr.bf16.mxu0 0
        %624 = vmatpush1.bf16.msra.mxu0 0
        %625 = vmatprep.subr.bf16.mxu0 0
        %626 = vmatpush1.bf16.msra.mxu0 0
        %627 = vmatprep.subr.bf16.mxu0 0
        %628 = vmatpush1.bf16.msra.mxu0 0
        %629 = vmatprep.subr.bf16.mxu0 0
        %630 = vmatpush1.bf16.msra.mxu0 0
        %631 = vmatprep.subr.bf16.mxu0 0
        %632 = vmatpush1.bf16.msra.mxu0 0
        %633 = vmatprep.subr.bf16.mxu0 0
        %634 = vmatpush1.bf16.msra.mxu0 0
        %635 = vmatprep.subr.bf16.mxu0 0
        %636 = vmatpush1.bf16.msra.mxu0 0
        %637 = vmatprep.subr.bf16.mxu0 0
        %638 = vmatpush1.bf16.msra.mxu0 0
        %639 = vmatprep.subr.bf16.mxu0 0
        %640 = vmatpush1.bf16.msra.mxu0 0
        %641 = vmatprep.subr.bf16.mxu0 0
        %642 = vmatpush1.bf16.msra.mxu0 0
        %643 = vmatprep.subr.bf16.mxu0 0
        %644 = vmatpush1.bf16.msra.mxu0 0
        %645 = vmatprep.subr.bf16.mxu0 0
        %646 = vmatpush1.bf16.msra.mxu0 0
        %647 = vmatprep.subr.bf16.mxu0 0
        %648 = vmatpush1.bf16.msra.mxu0 0
        %649 = vmatprep.mubr.bf16.mxu0 0
        %650 = vmatmul.mubr.bf16.gmra.mrb[0].mxu0 %v570
        %v651 = vpop.f32.mrb[0].mxu0
        %v652 = vadd.f32 0.0, %v651
        %v653 = vpop.f32.mrb[0].mxu0
        %v654 = vadd.f32 0.0, %v653
        %v655 = vpop.f32.mrb[0].mxu0
        %v656 = vadd.f32 0.0, %v655
        %v657 = vpop.f32.mrb[0].mxu0
        %v658 = vadd.f32 0.0, %v657
        %659 = vmatprep.mubr.bf16.mxu0 0
        %660 = vmatmul.mubr.bf16.gmra.mrb[0].mxu0 %v573
        %v661 = vpop.f32.mrb[0].mxu0
        %v662 = vadd.f32 0.0, %v661
        %v663 = vpop.f32.mrb[0].mxu0
        %v664 = vadd.f32 0.0, %v663
        %v665 = vpop.f32.mrb[0].mxu0
        %v666 = vadd.f32 0.0, %v665
        %v667 = vpop.f32.mrb[0].mxu0
        %v668 = vadd.f32 0.0, %v667
        %669 = vmatprep.mubr.bf16.mxu0 0
        %670 = vmatmul.mubr.bf16.gmra.mrb[0].mxu0 %v576
        %v671 = vpop.f32.mrb[0].mxu0
        %v672 = vadd.f32 0.0, %v671
        %v673 = vpop.f32.mrb[0].mxu0
        %v674 = vadd.f32 0.0, %v673
        %v675 = vpop.f32.mrb[0].mxu0
        %v676 = vadd.f32 0.0, %v675
        %v677 = vpop.f32.mrb[0].mxu0
        %v678 = vadd.f32 0.0, %v677
        %679 = vmatprep.mubr.bf16.mxu0 0
        %680 = vmatmul.mubr.bf16.gmra.mrb[0].mxu0 %v579
        %v681 = vpop.f32.mrb[0].mxu0
        %v682 = vadd.f32 0.0, %v681
        %v683 = vpop.f32.mrb[0].mxu0
        %v684 = vadd.f32 0.0, %v683
        %v685 = vpop.f32.mrb[0].mxu0
        %v686 = vadd.f32 0.0, %v685
        %v687 = vpop.f32.mrb[0].mxu0
        %v688 = vadd.f32 0.0, %v687
        %689 = vmatprep.mubr.bf16.mxu0 0
        %690 = vmatmul.mubr.bf16.gmra.mrb[0].mxu0 %v582
        %v691 = vpop.f32.mrb[0].mxu0
        %v692 = vadd.f32 0.0, %v691
        %v693 = vpop.f32.mrb[0].mxu0
        %v694 = vadd.f32 0.0, %v693
        %v695 = vpop.f32.mrb[0].mxu0
        %v696 = vadd.f32 0.0, %v695
        %v697 = vpop.f32.mrb[0].mxu0
        %v698 = vadd.f32 0.0, %v697
        %699 = vmatprep.mubr.bf16.mxu0 0
        %700 = vmatmul.mubr.bf16.gmra.mrb[0].mxu0 %v585
        %v701 = vpop.f32.mrb[0].mxu0
        %v702 = vadd.f32 0.0, %v701
        %v703 = vpop.f32.mrb[0].mxu0
        %v704 = vadd.f32 0.0, %v703
        %v705 = vpop.f32.mrb[0].mxu0
        %v706 = vadd.f32 0.0, %v705
        %v707 = vpop.f32.mrb[0].mxu0
        %v708 = vadd.f32 0.0, %v707
        %709 = vmatprep.mubr.bf16.mxu0 0
        %710 = vmatmul.mubr.bf16.gmra.mrb[0].mxu0 %v588
        %v711 = vpop.f32.mrb[0].mxu0
        %v712 = vadd.f32 0.0, %v711
        %v713 = vpop.f32.mrb[0].mxu0
        %v714 = vadd.f32 0.0, %v713
        %v715 = vpop.f32.mrb[0].mxu0
        %v716 = vadd.f32 0.0, %v715
        %v717 = vpop.f32.mrb[0].mxu0
        %v718 = vadd.f32 0.0, %v717
        %719 = vmatprep.mubr.bf16.mxu0 0
        %720 = vmatmul.mubr.bf16.gmra.mrb[0].mxu0 %v591
        %v721 = vpop.f32.mrb[0].mxu0
        %v722 = vadd.f32 0.0, %v721
        %v723 = vpop.f32.mrb[0].mxu0
        %v724 = vadd.f32 0.0, %v723
        %v725 = vpop.f32.mrb[0].mxu0
        %v726 = vadd.f32 0.0, %v725
        %v727 = vpop.f32.mrb[0].mxu0
        %v728 = vadd.f32 0.0, %v727
        %729 = vmatprep.mubr.bf16.mxu0 0
        %730 = vmatmul.mubr.bf16.gmra.mrb[0].mxu0 %v594
        %v731 = vpop.f32.mrb[0].mxu0
        %v732 = vadd.f32 0.0, %v731
        %v733 = vpop.f32.mrb[0].mxu0
        %v734 = vadd.f32 0.0, %v733
        %v735 = vpop.f32.mrb[0].mxu0
        %v736 = vadd.f32 0.0, %v735
        %v737 = vpop.f32.mrb[0].mxu0
        %v738 = vadd.f32 0.0, %v737
        %739 = vmatprep.mubr.bf16.mxu0 0
        %740 = vmatmul.mubr.bf16.gmra.mrb[0].mxu0 %v597
        %v741 = vpop.f32.mrb[0].mxu0
        %v742 = vadd.f32 0.0, %v741
        %v743 = vpop.f32.mrb[0].mxu0
        %v744 = vadd.f32 0.0, %v743
        %v745 = vpop.f32.mrb[0].mxu0
        %v746 = vadd.f32 0.0, %v745
        %v747 = vpop.f32.mrb[0].mxu0
        %v748 = vadd.f32 0.0, %v747
        %749 = vmatprep.mubr.bf16.mxu0 0
        %750 = vmatmul.mubr.bf16.gmra.mrb[0].mxu0 %v600
        %v751 = vpop.f32.mrb[0].mxu0
        %v752 = vadd.f32 0.0, %v751
        %v753 = vpop.f32.mrb[0].mxu0
        %v754 = vadd.f32 0.0, %v753
        %v755 = vpop.f32.mrb[0].mxu0
        %v756 = vadd.f32 0.0, %v755
        %v757 = vpop.f32.mrb[0].mxu0
        %v758 = vadd.f32 0.0, %v757
        %759 = vmatprep.mubr.bf16.mxu0 0
        %760 = vmatmul.mubr.bf16.gmra.mrb[0].mxu0 %v603
        %v761 = vpop.f32.mrb[0].mxu0
        %v762 = vadd.f32 0.0, %v761
        %v763 = vpop.f32.mrb[0].mxu0
        %v764 = vadd.f32 0.0, %v763
        %v765 = vpop.f32.mrb[0].mxu0
        %v766 = vadd.f32 0.0, %v765
        %v767 = vpop.f32.mrb[0].mxu0
        %v768 = vadd.f32 0.0, %v767
        %769 = vmatprep.mubr.bf16.mxu0 0
        %770 = vmatmul.mubr.bf16.gmra.mrb[0].mxu0 %v606
        %v771 = vpop.f32.mrb[0].mxu0
        %v772 = vadd.f32 0.0, %v771
        %v773 = vpop.f32.mrb[0].mxu0
        %v774 = vadd.f32 0.0, %v773
        %v775 = vpop.f32.mrb[0].mxu0
        %v776 = vadd.f32 0.0, %v775
        %v777 = vpop.f32.mrb[0].mxu0
        %v778 = vadd.f32 0.0, %v777
        %779 = vmatprep.mubr.bf16.mxu0 0
        %780 = vmatmul.mubr.bf16.gmra.mrb[0].mxu0 %v609
        %v781 = vpop.f32.mrb[0].mxu0
        %v782 = vadd.f32 0.0, %v781
        %v783 = vpop.f32.mrb[0].mxu0
        %v784 = vadd.f32 0.0, %v783
        %v785 = vpop.f32.mrb[0].mxu0
        %v786 = vadd.f32 0.0, %v785
        %v787 = vpop.f32.mrb[0].mxu0
        %v788 = vadd.f32 0.0, %v787
        %789 = vmatprep.mubr.bf16.mxu0 0
        %790 = vmatmul.mubr.bf16.gmra.mrb[0].mxu0 %v612
        %v791 = vpop.f32.mrb[0].mxu0
        %v792 = vadd.f32 0.0, %v791
        %v793 = vpop.f32.mrb[0].mxu0
        %v794 = vadd.f32 0.0, %v793
        %v795 = vpop.f32.mrb[0].mxu0
        %v796 = vadd.f32 0.0, %v795
        %v797 = vpop.f32.mrb[0].mxu0
        %v798 = vadd.f32 0.0, %v797
        %799 = vmatprep.mubr.bf16.mxu0 0
        %800 = vmatmul.mubr.bf16.gmra.mrb[0].mxu0 %v615
        %v801 = vpop.f32.mrb[0].mxu0
        %v802 = vadd.f32 0.0, %v801
        %v803 = vpop.f32.mrb[0].mxu0
        %v804 = vadd.f32 0.0, %v803
        %v805 = vpop.f32.mrb[0].mxu0
        %v806 = vadd.f32 0.0, %v805
        %v807 = vpop.f32.mrb[0].mxu0
        %v808 = vadd.f32 0.0, %v807
        %809 = vdwg.mxu0
        %810 = vmatprep.subr.bf16.mxu0 0
        %811 = vmatpush1.bf16.msra.mxu0 %v552
        %812 = vmatprep.subr.bf16.mxu0 0
        %813 = vmatpush1.bf16.msra.mxu0 %v555
        %814 = vmatprep.subr.bf16.mxu0 0
        %815 = vmatpush1.bf16.msra.mxu0 %v558
        %816 = vmatprep.subr.bf16.mxu0 0
        %817 = vmatpush1.bf16.msra.mxu0 0
        %818 = vmatprep.subr.bf16.mxu0 0
        %819 = vmatpush1.bf16.msra.mxu0 0
        %820 = vmatprep.subr.bf16.mxu0 0
        %821 = vmatpush1.bf16.msra.mxu0 0
        %822 = vmatprep.subr.bf16.mxu0 0
        %823 = vmatpush1.bf16.msra.mxu0 0
        %824 = vmatprep.subr.bf16.mxu0 0
        %825 = vmatpush1.bf16.msra.mxu0 0
        %826 = vmatprep.subr.bf16.mxu0 0
        %827 = vmatpush1.bf16.msra.mxu0 0
        %828 = vmatprep.subr.bf16.mxu0 0
        %829 = vmatpush1.bf16.msra.mxu0 0
        %830 = vmatprep.subr.bf16.mxu0 0
        %831 = vmatpush1.bf16.msra.mxu0 0
        %832 = vmatprep.subr.bf16.mxu0 0
        %833 = vmatpush1.bf16.msra.mxu0 0
        %834 = vmatprep.subr.bf16.mxu0 0
        %835 = vmatpush1.bf16.msra.mxu0 0
        %836 = vmatprep.subr.bf16.mxu0 0
        %837 = vmatpush1.bf16.msra.mxu0 0
        %838 = vmatprep.subr.bf16.mxu0 0
        %839 = vmatpush1.bf16.msra.mxu0 0
        %840 = vmatprep.subr.bf16.mxu0 0
        %841 = vmatpush1.bf16.msra.mxu0 0
        %842 = vmatprep.mubr.bf16.mxu0 0
        %843 = vmatmul.mubr.bf16.gmra.mrb[0].mxu0 %v570
        %v844 = vpop.f32.mrb[0].mxu0
        %v845 = vadd.f32 0.0, %v844
        %v846 = vpop.f32.mrb[0].mxu0
        %v847 = vpop.f32.mrb[0].mxu0
        %v848 = vadd.f32 0.0, %v847
        %v849 = vpop.f32.mrb[0].mxu0
        %850 = vmatprep.mubr.bf16.mxu0 0
        %851 = vmatmul.mubr.bf16.gmra.mrb[0].mxu0 %v573
        %v852 = vpop.f32.mrb[0].mxu0
        %v853 = vadd.f32 0.0, %v852
        %v854 = vpop.f32.mrb[0].mxu0
        %v855 = vpop.f32.mrb[0].mxu0
        %v856 = vadd.f32 0.0, %v855
        %v857 = vpop.f32.mrb[0].mxu0
        %858 = vmatprep.mubr.bf16.mxu0 0
        %859 = vmatmul.mubr.bf16.gmra.mrb[0].mxu0 %v576
        %v860 = vpop.f32.mrb[0].mxu0
        %v861 = vadd.f32 0.0, %v860
        %v862 = vpop.f32.mrb[0].mxu0
        %v863 = vpop.f32.mrb[0].mxu0
        %v864 = vadd.f32 0.0, %v863
        %v865 = vpop.f32.mrb[0].mxu0
        %866 = vmatprep.mubr.bf16.mxu0 0
        %867 = vmatmul.mubr.bf16.gmra.mrb[0].mxu0 %v579
        %v868 = vpop.f32.mrb[0].mxu0
        %v869 = vadd.f32 0.0, %v868
        %v870 = vpop.f32.mrb[0].mxu0
        %v871 = vpop.f32.mrb[0].mxu0
        %v872 = vadd.f32 0.0, %v871
        %v873 = vpop.f32.mrb[0].mxu0
        %874 = vmatprep.mubr.bf16.mxu0 0
        %875 = vmatmul.mubr.bf16.gmra.mrb[0].mxu0 %v582
        %v876 = vpop.f32.mrb[0].mxu0
        %v877 = vadd.f32 0.0, %v876
        %v878 = vpop.f32.mrb[0].mxu0
        %v879 = vpop.f32.mrb[0].mxu0
        %v880 = vadd.f32 0.0, %v879
        %v881 = vpop.f32.mrb[0].mxu0
        %882 = vmatprep.mubr.bf16.mxu0 0
        %883 = vmatmul.mubr.bf16.gmra.mrb[0].mxu0 %v585
        %v884 = vpop.f32.mrb[0].mxu0
        %v885 = vadd.f32 0.0, %v884
        %v886 = vpop.f32.mrb[0].mxu0
        %v887 = vpop.f32.mrb[0].mxu0
        %v888 = vadd.f32 0.0, %v887
        %v889 = vpop.f32.mrb[0].mxu0
        %890 = vmatprep.mubr.bf16.mxu0 0
        %891 = vmatmul.mubr.bf16.gmra.mrb[0].mxu0 %v588
        %v892 = vpop.f32.mrb[0].mxu0
        %v893 = vadd.f32 0.0, %v892
        %v894 = vpop.f32.mrb[0].mxu0
        %v895 = vpop.f32.mrb[0].mxu0
        %v896 = vadd.f32 0.0, %v895
        %v897 = vpop.f32.mrb[0].mxu0
        %898 = vmatprep.mubr.bf16.mxu0 0
        %899 = vmatmul.mubr.bf16.gmra.mrb[0].mxu0 %v591
        %v900 = vpop.f32.mrb[0].mxu0
        %v901 = vadd.f32 0.0, %v900
        %v902 = vpop.f32.mrb[0].mxu0
        %v903 = vpop.f32.mrb[0].mxu0
        %v904 = vadd.f32 0.0, %v903
        %v905 = vpop.f32.mrb[0].mxu0
        %906 = vmatprep.mubr.bf16.mxu0 0
        %907 = vmatmul.mubr.bf16.gmra.mrb[0].mxu0 %v594
        %v908 = vpop.f32.mrb[0].mxu0
        %v909 = vadd.f32 0.0, %v908
        %v910 = vpop.f32.mrb[0].mxu0
        %v911 = vpop.f32.mrb[0].mxu0
        %v912 = vadd.f32 0.0, %v911
        %v913 = vpop.f32.mrb[0].mxu0
        %914 = vmatprep.mubr.bf16.mxu0 0
        %915 = vmatmul.mubr.bf16.gmra.mrb[0].mxu0 %v597
        %v916 = vpop.f32.mrb[0].mxu0
        %v917 = vadd.f32 0.0, %v916
        %v918 = vpop.f32.mrb[0].mxu0
        %v919 = vpop.f32.mrb[0].mxu0
        %v920 = vadd.f32 0.0, %v919
        %v921 = vpop.f32.mrb[0].mxu0
        %922 = vmatprep.mubr.bf16.mxu0 0
        %923 = vmatmul.mubr.bf16.gmra.mrb[0].mxu0 %v600
        %v924 = vpop.f32.mrb[0].mxu0
        %v925 = vadd.f32 0.0, %v924
        %v926 = vpop.f32.mrb[0].mxu0
        %v927 = vpop.f32.mrb[0].mxu0
        %v928 = vadd.f32 0.0, %v927
        %v929 = vpop.f32.mrb[0].mxu0
        %930 = vmatprep.mubr.bf16.mxu0 0
        %931 = vmatmul.mubr.bf16.gmra.mrb[0].mxu0 %v603
        %v932 = vpop.f32.mrb[0].mxu0
        %v933 = vadd.f32 0.0, %v932
        %v934 = vpop.f32.mrb[0].mxu0
        %v935 = vpop.f32.mrb[0].mxu0
        %v936 = vadd.f32 0.0, %v935
        %v937 = vpop.f32.mrb[0].mxu0
        %938 = vmatprep.mubr.bf16.mxu0 0
        %939 = vmatmul.mubr.bf16.gmra.mrb[0].mxu0 %v606
        %v940 = vpop.f32.mrb[0].mxu0
        %v941 = vadd.f32 0.0, %v940
        %v942 = vpop.f32.mrb[0].mxu0
        %v943 = vpop.f32.mrb[0].mxu0
        %v944 = vadd.f32 0.0, %v943
        %v945 = vpop.f32.mrb[0].mxu0
        %946 = vmatprep.mubr.bf16.mxu0 0
        %947 = vmatmul.mubr.bf16.gmra.mrb[0].mxu0 %v609
        %v948 = vpop.f32.mrb[0].mxu0
        %v949 = vadd.f32 0.0, %v948
        %v950 = vpop.f32.mrb[0].mxu0
        %v951 = vpop.f32.mrb[0].mxu0
        %v952 = vadd.f32 0.0, %v951
        %v953 = vpop.f32.mrb[0].mxu0
        %954 = vmatprep.mubr.bf16.mxu0 0
        %955 = vmatmul.mubr.bf16.gmra.mrb[0].mxu0 %v612
        %v956 = vpop.f32.mrb[0].mxu0
        %v957 = vadd.f32 0.0, %v956
        %v958 = vpop.f32.mrb[0].mxu0
        %v959 = vpop.f32.mrb[0].mxu0
        %v960 = vadd.f32 0.0, %v959
        %v961 = vpop.f32.mrb[0].mxu0
        %962 = vmatprep.mubr.bf16.mxu0 0
        %963 = vmatmul.mubr.bf16.gmra.mrb[0].mxu0 %v615
        %v964 = vpop.f32.mrb[0].mxu0
        %v965 = vadd.f32 0.0, %v964
        %v966 = vpop.f32.mrb[0].mxu0
        %v967 = vpop.f32.mrb[0].mxu0
        %v968 = vadd.f32 0.0, %v967
        %v969 = vpop.f32.mrb[0].mxu0
        %970 = vdwg.mxu0
        %v1003 = vunpack.c.l.b16 %v352
        %v1004 = vunpack.c.l.b16 %v353
        %v1005 = vunpack.c.l.b16 %v354
        %v1006 = vunpack.c.l.b16 %v355
        %v1007 = vunpack.c.l.b16 %v356
        %v1008 = vunpack.c.l.b16 %v357
        %v1009 = vunpack.c.l.b16 %v358
        %v1010 = vunpack.c.l.b16 %v359
        %v1011 = vunpack.c.l.b16 %v360
        %v1012 = vunpack.c.l.b16 %v361
        %v1013 = vunpack.c.l.b16 %v362
        %v1014 = vunpack.c.l.b16 %v363
        %v1015 = vunpack.c.l.b16 %v364
        %v1016 = vunpack.c.l.b16 %v365
        %v1017 = vunpack.c.l.b16 %v366
        %v1018 = vunpack.c.l.b16 %v367
        %v1019 = vunpack.c.l.b16 %v368
        %v1020 = vunpack.c.l.b16 %v369
        %v1021 = vunpack.c.l.b16 %v370
        %v1022 = vunpack.c.l.b16 %v371
        %v1023 = vunpack.c.l.b16 %v372
        %v1024 = vunpack.c.l.b16 %v373
        %v1025 = vunpack.c.l.b16 %v374
        %v1026 = vunpack.c.l.b16 %v375
        %v1027 = vunpack.c.l.b16 %v376
        %v1028 = vunpack.c.l.b16 %v377
        %v1029 = vunpack.c.l.b16 %v378
        %v1030 = vunpack.c.l.b16 %v379
        %v1031 = vunpack.c.l.b16 %v380
        %v1032 = vunpack.c.l.b16 %v381
        %v1033 = vunpack.c.l.b16 %v382
        %v1034 = vunpack.c.l.b16 %v383
        %v1035 = vpack.c.b16 %v1004, %v1003
        %v1036 = vpack.c.b16 %v1006, %v1005
        %v1037 = vpack.c.b16 %v1008, %v1007
        %v1038 = vpack.c.b16 %v1010, %v1009
        %v1039 = vpack.c.b16 %v1012, %v1011
        %v1040 = vpack.c.b16 %v1014, %v1013
        %v1041 = vpack.c.b16 %v1016, %v1015
        %v1042 = vpack.c.b16 %v1018, %v1017
        %v1043 = vpack.c.b16 %v1020, %v1019
        %v1044 = vpack.c.b16 %v1022, %v1021
        %v1045 = vpack.c.b16 %v1024, %v1023
        %v1046 = vpack.c.b16 %v1026, %v1025
        %v1047 = vpack.c.b16 %v1028, %v1027
        %v1048 = vpack.c.b16 %v1030, %v1029
        %v1049 = vpack.c.b16 %v1032, %v1031
        %v1050 = vpack.c.b16 %v1034, %v1033
        %v1063 = vunpack.c.l.b16 %v384
        %v1064 = vunpack.c.h.b16 %v384
        %v1065 = vunpack.c.l.b16 %v385
        %v1066 = vunpack.c.l.b16 %v386
        %v1067 = vunpack.c.h.b16 %v386
        %v1068 = vunpack.c.l.b16 %v387
        %v1069 = vunpack.c.l.b16 %v388
        %v1070 = vunpack.c.h.b16 %v388
        %v1071 = vunpack.c.l.b16 %v389
        %v1072 = vunpack.c.l.b16 %v390
        %v1073 = vunpack.c.h.b16 %v390
        %v1074 = vunpack.c.l.b16 %v391
        %v1075 = vunpack.c.l.b16 %v392
        %v1076 = vunpack.c.h.b16 %v392
        %v1077 = vunpack.c.l.b16 %v393
        %v1078 = vunpack.c.l.b16 %v394
        %v1079 = vunpack.c.h.b16 %v394
        %v1080 = vunpack.c.l.b16 %v395
        %v1081 = vpack.c.b16 %v1066, %v1063
        %v1082 = vpack.c.b16 %v1067, %v1064
        %v1083 = vpack.c.b16 %v1068, %v1065
        %v1084 = vpack.c.b16 %v1072, %v1069
        %v1085 = vpack.c.b16 %v1073, %v1070
        %v1086 = vpack.c.b16 %v1074, %v1071
        %v1087 = vpack.c.b16 %v1078, %v1075
        %v1088 = vpack.c.b16 %v1079, %v1076
        %v1089 = vpack.c.b16 %v1080, %v1077
        %v1100 = vsel %vm568, %v1035, 0
        %v1103 = vsel %vm568, %v1036, 0
        %v1106 = vsel %vm568, %v1037, 0
        %v1109 = vsel %vm568, %v1038, 0
        %v1112 = vsel %vm568, %v1039, 0
        %v1115 = vsel %vm568, %v1040, 0
        %v1118 = vsel %vm568, %v1041, 0
        %v1121 = vsel %vm568, %v1042, 0
        %v1124 = vsel %vm568, %v1043, 0
        %v1127 = vsel %vm568, %v1044, 0
        %v1130 = vsel %vm568, %v1045, 0
        %v1133 = vsel %vm568, %v1046, 0
        %v1136 = vsel %vm568, %v1047, 0
        %v1139 = vsel %vm568, %v1048, 0
        %v1142 = vsel %vm568, %v1049, 0
        %v1145 = vsel %vm568, %v1050, 0
        %1147 = vmatprep.subr.bf16.mxu0 %v1082
        %1148 = vmatpush1.bf16.msra.mxu0 %v1081
        %1149 = vmatprep.subr.bf16.mxu0 %v1085
        %1150 = vmatpush1.bf16.msra.mxu0 %v1084
        %1151 = vmatprep.subr.bf16.mxu0 %v1088
        %1152 = vmatpush1.bf16.msra.mxu0 %v1087
        %1153 = vmatprep.subr.bf16.mxu0 0
        %1154 = vmatpush1.bf16.msra.mxu0 0
        %1155 = vmatprep.subr.bf16.mxu0 0
        %1156 = vmatpush1.bf16.msra.mxu0 0
        %1157 = vmatprep.subr.bf16.mxu0 0
        %1158 = vmatpush1.bf16.msra.mxu0 0
        %1159 = vmatprep.subr.bf16.mxu0 0
        %1160 = vmatpush1.bf16.msra.mxu0 0
        %1161 = vmatprep.subr.bf16.mxu0 0
        %1162 = vmatpush1.bf16.msra.mxu0 0
        %1163 = vmatprep.subr.bf16.mxu0 0
        %1164 = vmatpush1.bf16.msra.mxu0 0
        %1165 = vmatprep.subr.bf16.mxu0 0
        %1166 = vmatpush1.bf16.msra.mxu0 0
        %1167 = vmatprep.subr.bf16.mxu0 0
        %1168 = vmatpush1.bf16.msra.mxu0 0
        %1169 = vmatprep.subr.bf16.mxu0 0
        %1170 = vmatpush1.bf16.msra.mxu0 0
        %1171 = vmatprep.subr.bf16.mxu0 0
        %1172 = vmatpush1.bf16.msra.mxu0 0
        %1173 = vmatprep.subr.bf16.mxu0 0
        %1174 = vmatpush1.bf16.msra.mxu0 0
        %1175 = vmatprep.subr.bf16.mxu0 0
        %1176 = vmatpush1.bf16.msra.mxu0 0
        %1177 = vmatprep.subr.bf16.mxu0 0
        %1178 = vmatpush1.bf16.msra.mxu0 0
        %1179 = vmatprep.mubr.bf16.mxu0 0
        %1180 = vmatmul.mubr.bf16.gmra.mrb[0].mxu0 %v1100
        %v1181 = vpop.f32.mrb[0].mxu0
        %v1182 = vadd.f32 %v652, %v1181
        %v1183 = vpop.f32.mrb[0].mxu0
        %v1184 = vadd.f32 %v654, %v1183
        %v1185 = vpop.f32.mrb[0].mxu0
        %v1186 = vadd.f32 %v656, %v1185
        %v1187 = vpop.f32.mrb[0].mxu0
        %v1188 = vadd.f32 %v658, %v1187
        %1189 = vmatprep.mubr.bf16.mxu0 0
        %1190 = vmatmul.mubr.bf16.gmra.mrb[0].mxu0 %v1103
        %v1191 = vpop.f32.mrb[0].mxu0
        %v1192 = vadd.f32 %v662, %v1191
        %v1193 = vpop.f32.mrb[0].mxu0
        %v1194 = vadd.f32 %v664, %v1193
        %v1195 = vpop.f32.mrb[0].mxu0
        %v1196 = vadd.f32 %v666, %v1195
        %v1197 = vpop.f32.mrb[0].mxu0
        %v1198 = vadd.f32 %v668, %v1197
        %1199 = vmatprep.mubr.bf16.mxu0 0
        %1200 = vmatmul.mubr.bf16.gmra.mrb[0].mxu0 %v1106
        %v1201 = vpop.f32.mrb[0].mxu0
        %v1202 = vadd.f32 %v672, %v1201
        %v1203 = vpop.f32.mrb[0].mxu0
        %v1204 = vadd.f32 %v674, %v1203
        %v1205 = vpop.f32.mrb[0].mxu0
        %v1206 = vadd.f32 %v676, %v1205
        %v1207 = vpop.f32.mrb[0].mxu0
        %v1208 = vadd.f32 %v678, %v1207
        %1209 = vmatprep.mubr.bf16.mxu0 0
        %1210 = vmatmul.mubr.bf16.gmra.mrb[0].mxu0 %v1109
        %v1211 = vpop.f32.mrb[0].mxu0
        %v1212 = vadd.f32 %v682, %v1211
        %v1213 = vpop.f32.mrb[0].mxu0
        %v1214 = vadd.f32 %v684, %v1213
        %v1215 = vpop.f32.mrb[0].mxu0
        %v1216 = vadd.f32 %v686, %v1215
        %v1217 = vpop.f32.mrb[0].mxu0
        %v1218 = vadd.f32 %v688, %v1217
        %1219 = vmatprep.mubr.bf16.mxu0 0
        %1220 = vmatmul.mubr.bf16.gmra.mrb[0].mxu0 %v1112
        %v1221 = vpop.f32.mrb[0].mxu0
        %v1222 = vadd.f32 %v692, %v1221
        %v1223 = vpop.f32.mrb[0].mxu0
        %v1224 = vadd.f32 %v694, %v1223
        %v1225 = vpop.f32.mrb[0].mxu0
        %v1226 = vadd.f32 %v696, %v1225
        %v1227 = vpop.f32.mrb[0].mxu0
        %v1228 = vadd.f32 %v698, %v1227
        %1229 = vmatprep.mubr.bf16.mxu0 0
        %1230 = vmatmul.mubr.bf16.gmra.mrb[0].mxu0 %v1115
        %v1231 = vpop.f32.mrb[0].mxu0
        %v1232 = vadd.f32 %v702, %v1231
        %v1233 = vpop.f32.mrb[0].mxu0
        %v1234 = vadd.f32 %v704, %v1233
        %v1235 = vpop.f32.mrb[0].mxu0
        %v1236 = vadd.f32 %v706, %v1235
        %v1237 = vpop.f32.mrb[0].mxu0
        %v1238 = vadd.f32 %v708, %v1237
        %1239 = vmatprep.mubr.bf16.mxu0 0
        %1240 = vmatmul.mubr.bf16.gmra.mrb[0].mxu0 %v1118
        %v1241 = vpop.f32.mrb[0].mxu0
        %v1242 = vadd.f32 %v712, %v1241
        %v1243 = vpop.f32.mrb[0].mxu0
        %v1244 = vadd.f32 %v714, %v1243
        %v1245 = vpop.f32.mrb[0].mxu0
        %v1246 = vadd.f32 %v716, %v1245
        %v1247 = vpop.f32.mrb[0].mxu0
        %v1248 = vadd.f32 %v718, %v1247
        %1249 = vmatprep.mubr.bf16.mxu0 0
        %1250 = vmatmul.mubr.bf16.gmra.mrb[0].mxu0 %v1121
        %v1251 = vpop.f32.mrb[0].mxu0
        %v1252 = vadd.f32 %v722, %v1251
        %v1253 = vpop.f32.mrb[0].mxu0
        %v1254 = vadd.f32 %v724, %v1253
        %v1255 = vpop.f32.mrb[0].mxu0
        %v1256 = vadd.f32 %v726, %v1255
        %v1257 = vpop.f32.mrb[0].mxu0
        %v1258 = vadd.f32 %v728, %v1257
        %1259 = vmatprep.mubr.bf16.mxu0 0
        %1260 = vmatmul.mubr.bf16.gmra.mrb[0].mxu0 %v1124
        %v1261 = vpop.f32.mrb[0].mxu0
        %v1262 = vadd.f32 %v732, %v1261
        %v1263 = vpop.f32.mrb[0].mxu0
        %v1264 = vadd.f32 %v734, %v1263
        %v1265 = vpop.f32.mrb[0].mxu0
        %v1266 = vadd.f32 %v736, %v1265
        %v1267 = vpop.f32.mrb[0].mxu0
        %v1268 = vadd.f32 %v738, %v1267
        %1269 = vmatprep.mubr.bf16.mxu0 0
        %1270 = vmatmul.mubr.bf16.gmra.mrb[0].mxu0 %v1127
        %v1271 = vpop.f32.mrb[0].mxu0
        %v1272 = vadd.f32 %v742, %v1271
        %v1273 = vpop.f32.mrb[0].mxu0
        %v1274 = vadd.f32 %v744, %v1273
        %v1275 = vpop.f32.mrb[0].mxu0
        %v1276 = vadd.f32 %v746, %v1275
        %v1277 = vpop.f32.mrb[0].mxu0
        %v1278 = vadd.f32 %v748, %v1277
        %1279 = vmatprep.mubr.bf16.mxu0 0
        %1280 = vmatmul.mubr.bf16.gmra.mrb[0].mxu0 %v1130
        %v1281 = vpop.f32.mrb[0].mxu0
        %v1282 = vadd.f32 %v752, %v1281
        %v1283 = vpop.f32.mrb[0].mxu0
        %v1284 = vadd.f32 %v754, %v1283
        %v1285 = vpop.f32.mrb[0].mxu0
        %v1286 = vadd.f32 %v756, %v1285
        %v1287 = vpop.f32.mrb[0].mxu0
        %v1288 = vadd.f32 %v758, %v1287
        %1289 = vmatprep.mubr.bf16.mxu0 0
        %1290 = vmatmul.mubr.bf16.gmra.mrb[0].mxu0 %v1133
        %v1291 = vpop.f32.mrb[0].mxu0
        %v1292 = vadd.f32 %v762, %v1291
        %v1293 = vpop.f32.mrb[0].mxu0
        %v1294 = vadd.f32 %v764, %v1293
        %v1295 = vpop.f32.mrb[0].mxu0
        %v1296 = vadd.f32 %v766, %v1295
        %v1297 = vpop.f32.mrb[0].mxu0
        %v1298 = vadd.f32 %v768, %v1297
        %1299 = vmatprep.mubr.bf16.mxu0 0
        %1300 = vmatmul.mubr.bf16.gmra.mrb[0].mxu0 %v1136
        %v1301 = vpop.f32.mrb[0].mxu0
        %v1302 = vadd.f32 %v772, %v1301
        %v1303 = vpop.f32.mrb[0].mxu0
        %v1304 = vadd.f32 %v774, %v1303
        %v1305 = vpop.f32.mrb[0].mxu0
        %v1306 = vadd.f32 %v776, %v1305
        %v1307 = vpop.f32.mrb[0].mxu0
        %v1308 = vadd.f32 %v778, %v1307
        %1309 = vmatprep.mubr.bf16.mxu0 0
        %1310 = vmatmul.mubr.bf16.gmra.mrb[0].mxu0 %v1139
        %v1311 = vpop.f32.mrb[0].mxu0
        %v1312 = vadd.f32 %v782, %v1311
        %v1313 = vpop.f32.mrb[0].mxu0
        %v1314 = vadd.f32 %v784, %v1313
        %v1315 = vpop.f32.mrb[0].mxu0
        %v1316 = vadd.f32 %v786, %v1315
        %v1317 = vpop.f32.mrb[0].mxu0
        %v1318 = vadd.f32 %v788, %v1317
        %1319 = vmatprep.mubr.bf16.mxu0 0
        %1320 = vmatmul.mubr.bf16.gmra.mrb[0].mxu0 %v1142
        %v1321 = vpop.f32.mrb[0].mxu0
        %v1322 = vadd.f32 %v792, %v1321
        %v1323 = vpop.f32.mrb[0].mxu0
        %v1324 = vadd.f32 %v794, %v1323
        %v1325 = vpop.f32.mrb[0].mxu0
        %v1326 = vadd.f32 %v796, %v1325
        %v1327 = vpop.f32.mrb[0].mxu0
        %v1328 = vadd.f32 %v798, %v1327
        %1329 = vmatprep.mubr.bf16.mxu0 0
        %1330 = vmatmul.mubr.bf16.gmra.mrb[0].mxu0 %v1145
        %v1331 = vpop.f32.mrb[0].mxu0
        %v1332 = vadd.f32 %v802, %v1331
        %v1333 = vpop.f32.mrb[0].mxu0
        %v1334 = vadd.f32 %v804, %v1333
        %v1335 = vpop.f32.mrb[0].mxu0
        %v1336 = vadd.f32 %v806, %v1335
        %v1337 = vpop.f32.mrb[0].mxu0
        %v1338 = vadd.f32 %v808, %v1337
        %1339 = vdwg.mxu0
        %1340 = vmatprep.subr.bf16.mxu0 0
        %1341 = vmatpush1.bf16.msra.mxu0 %v1083
        %1342 = vmatprep.subr.bf16.mxu0 0
        %1343 = vmatpush1.bf16.msra.mxu0 %v1086
        %1344 = vmatprep.subr.bf16.mxu0 0
        %1345 = vmatpush1.bf16.msra.mxu0 %v1089
        %1346 = vmatprep.subr.bf16.mxu0 0
        %1347 = vmatpush1.bf16.msra.mxu0 0
        %1348 = vmatprep.subr.bf16.mxu0 0
        %1349 = vmatpush1.bf16.msra.mxu0 0
        %1350 = vmatprep.subr.bf16.mxu0 0
        %1351 = vmatpush1.bf16.msra.mxu0 0
        %1352 = vmatprep.subr.bf16.mxu0 0
        %1353 = vmatpush1.bf16.msra.mxu0 0
        %1354 = vmatprep.subr.bf16.mxu0 0
        %1355 = vmatpush1.bf16.msra.mxu0 0
        %1356 = vmatprep.subr.bf16.mxu0 0
        %1357 = vmatpush1.bf16.msra.mxu0 0
        %1358 = vmatprep.subr.bf16.mxu0 0
        %1359 = vmatpush1.bf16.msra.mxu0 0
        %1360 = vmatprep.subr.bf16.mxu0 0
        %1361 = vmatpush1.bf16.msra.mxu0 0
        %1362 = vmatprep.subr.bf16.mxu0 0
        %1363 = vmatpush1.bf16.msra.mxu0 0
        %1364 = vmatprep.subr.bf16.mxu0 0
        %1365 = vmatpush1.bf16.msra.mxu0 0
        %1366 = vmatprep.subr.bf16.mxu0 0
        %1367 = vmatpush1.bf16.msra.mxu0 0
        %1368 = vmatprep.subr.bf16.mxu0 0
        %1369 = vmatpush1.bf16.msra.mxu0 0
        %1370 = vmatprep.subr.bf16.mxu0 0
        %1371 = vmatpush1.bf16.msra.mxu0 0
        %1372 = vmatprep.mubr.bf16.mxu0 0
        %1373 = vmatmul.mubr.bf16.gmra.mrb[0].mxu0 %v1100
        %v1374 = vpop.f32.mrb[0].mxu0
        %v1375 = vadd.f32 %v845, %v1374
        %v1376 = vpop.f32.mrb[0].mxu0
        %v1377 = vpop.f32.mrb[0].mxu0
        %v1378 = vadd.f32 %v848, %v1377
        %v1379 = vpop.f32.mrb[0].mxu0
        %1380 = vmatprep.mubr.bf16.mxu0 0
        %1381 = vmatmul.mubr.bf16.gmra.mrb[0].mxu0 %v1103
        %v1382 = vpop.f32.mrb[0].mxu0
        %v1383 = vadd.f32 %v853, %v1382
        %v1384 = vpop.f32.mrb[0].mxu0
        %v1385 = vpop.f32.mrb[0].mxu0
        %v1386 = vadd.f32 %v856, %v1385
        %v1387 = vpop.f32.mrb[0].mxu0
        %1388 = vmatprep.mubr.bf16.mxu0 0
        %1389 = vmatmul.mubr.bf16.gmra.mrb[0].mxu0 %v1106
        %v1390 = vpop.f32.mrb[0].mxu0
        %v1391 = vadd.f32 %v861, %v1390
        %v1392 = vpop.f32.mrb[0].mxu0
        %v1393 = vpop.f32.mrb[0].mxu0
        %v1394 = vadd.f32 %v864, %v1393
        %v1395 = vpop.f32.mrb[0].mxu0
        %1396 = vmatprep.mubr.bf16.mxu0 0
        %1397 = vmatmul.mubr.bf16.gmra.mrb[0].mxu0 %v1109
        %v1398 = vpop.f32.mrb[0].mxu0
        %v1399 = vadd.f32 %v869, %v1398
        %v1400 = vpop.f32.mrb[0].mxu0
        %v1401 = vpop.f32.mrb[0].mxu0
        %v1402 = vadd.f32 %v872, %v1401
        %v1403 = vpop.f32.mrb[0].mxu0
        %1404 = vmatprep.mubr.bf16.mxu0 0
        %1405 = vmatmul.mubr.bf16.gmra.mrb[0].mxu0 %v1112
        %v1406 = vpop.f32.mrb[0].mxu0
        %v1407 = vadd.f32 %v877, %v1406
        %v1408 = vpop.f32.mrb[0].mxu0
        %v1409 = vpop.f32.mrb[0].mxu0
        %v1410 = vadd.f32 %v880, %v1409
        %v1411 = vpop.f32.mrb[0].mxu0
        %1412 = vmatprep.mubr.bf16.mxu0 0
        %1413 = vmatmul.mubr.bf16.gmra.mrb[0].mxu0 %v1115
        %v1414 = vpop.f32.mrb[0].mxu0
        %v1415 = vadd.f32 %v885, %v1414
        %v1416 = vpop.f32.mrb[0].mxu0
        %v1417 = vpop.f32.mrb[0].mxu0
        %v1418 = vadd.f32 %v888, %v1417
        %v1419 = vpop.f32.mrb[0].mxu0
        %1420 = vmatprep.mubr.bf16.mxu0 0
        %1421 = vmatmul.mubr.bf16.gmra.mrb[0].mxu0 %v1118
        %v1422 = vpop.f32.mrb[0].mxu0
        %v1423 = vadd.f32 %v893, %v1422
        %v1424 = vpop.f32.mrb[0].mxu0
        %v1425 = vpop.f32.mrb[0].mxu0
        %v1426 = vadd.f32 %v896, %v1425
        %v1427 = vpop.f32.mrb[0].mxu0
        %1428 = vmatprep.mubr.bf16.mxu0 0
        %1429 = vmatmul.mubr.bf16.gmra.mrb[0].mxu0 %v1121
        %v1430 = vpop.f32.mrb[0].mxu0
        %v1431 = vadd.f32 %v901, %v1430
        %v1432 = vpop.f32.mrb[0].mxu0
        %v1433 = vpop.f32.mrb[0].mxu0
        %v1434 = vadd.f32 %v904, %v1433
        %v1435 = vpop.f32.mrb[0].mxu0
        %1436 = vmatprep.mubr.bf16.mxu0 0
        %1437 = vmatmul.mubr.bf16.gmra.mrb[0].mxu0 %v1124
        %v1438 = vpop.f32.mrb[0].mxu0
        %v1439 = vadd.f32 %v909, %v1438
        %v1440 = vpop.f32.mrb[0].mxu0
        %v1441 = vpop.f32.mrb[0].mxu0
        %v1442 = vadd.f32 %v912, %v1441
        %v1443 = vpop.f32.mrb[0].mxu0
        %1444 = vmatprep.mubr.bf16.mxu0 0
        %1445 = vmatmul.mubr.bf16.gmra.mrb[0].mxu0 %v1127
        %v1446 = vpop.f32.mrb[0].mxu0
        %v1447 = vadd.f32 %v917, %v1446
        %v1448 = vpop.f32.mrb[0].mxu0
        %v1449 = vpop.f32.mrb[0].mxu0
        %v1450 = vadd.f32 %v920, %v1449
        %v1451 = vpop.f32.mrb[0].mxu0
        %1452 = vmatprep.mubr.bf16.mxu0 0
        %1453 = vmatmul.mubr.bf16.gmra.mrb[0].mxu0 %v1130
        %v1454 = vpop.f32.mrb[0].mxu0
        %v1455 = vadd.f32 %v925, %v1454
        %v1456 = vpop.f32.mrb[0].mxu0
        %v1457 = vpop.f32.mrb[0].mxu0
        %v1458 = vadd.f32 %v928, %v1457
        %v1459 = vpop.f32.mrb[0].mxu0
        %1460 = vmatprep.mubr.bf16.mxu0 0
        %1461 = vmatmul.mubr.bf16.gmra.mrb[0].mxu0 %v1133
        %v1462 = vpop.f32.mrb[0].mxu0
        %v1463 = vadd.f32 %v933, %v1462
        %v1464 = vpop.f32.mrb[0].mxu0
        %v1465 = vpop.f32.mrb[0].mxu0
        %v1466 = vadd.f32 %v936, %v1465
        %v1467 = vpop.f32.mrb[0].mxu0
        %1468 = vmatprep.mubr.bf16.mxu0 0
        %1469 = vmatmul.mubr.bf16.gmra.mrb[0].mxu0 %v1136
        %v1470 = vpop.f32.mrb[0].mxu0
        %v1471 = vadd.f32 %v941, %v1470
        %v1472 = vpop.f32.mrb[0].mxu0
        %v1473 = vpop.f32.mrb[0].mxu0
        %v1474 = vadd.f32 %v944, %v1473
        %v1475 = vpop.f32.mrb[0].mxu0
        %1476 = vmatprep.mubr.bf16.mxu0 0
        %1477 = vmatmul.mubr.bf16.gmra.mrb[0].mxu0 %v1139
        %v1478 = vpop.f32.mrb[0].mxu0
        %v1479 = vadd.f32 %v949, %v1478
        %v1480 = vpop.f32.mrb[0].mxu0
        %v1481 = vpop.f32.mrb[0].mxu0
        %v1482 = vadd.f32 %v952, %v1481
        %v1483 = vpop.f32.mrb[0].mxu0
        %1484 = vmatprep.mubr.bf16.mxu0 0
        %1485 = vmatmul.mubr.bf16.gmra.mrb[0].mxu0 %v1142
        %v1486 = vpop.f32.mrb[0].mxu0
        %v1487 = vadd.f32 %v957, %v1486
        %v1488 = vpop.f32.mrb[0].mxu0
        %v1489 = vpop.f32.mrb[0].mxu0
        %v1490 = vadd.f32 %v960, %v1489
        %v1491 = vpop.f32.mrb[0].mxu0
        %1492 = vmatprep.mubr.bf16.mxu0 0
        %1493 = vmatmul.mubr.bf16.gmra.mrb[0].mxu0 %v1145
        %v1494 = vpop.f32.mrb[0].mxu0
        %v1495 = vadd.f32 %v965, %v1494
        %v1496 = vpop.f32.mrb[0].mxu0
        %v1497 = vpop.f32.mrb[0].mxu0
        %v1498 = vadd.f32 %v968, %v1497
        %v1499 = vpop.f32.mrb[0].mxu0
        %1500 = vdwg.mxu0
        %v1501 = vld [vmem:[%s6] sm:$0x7]
        %v1503 = vlaneseq
        %v1504 = vshrl.u32 %v1503, 7
        %v1505 = vsub.s32 0, %v1504
        %v1506 = vrot.slane %v1501, %v1505
        %v1507 = vlaneseq
        %v1508 = vshrl.u32 %v1507, 7
        %v1509 = vsub.s32 1, %v1508
        %v1510 = vrot.slane %v1501, %v1509
        %v1511 = vlaneseq
        %v1512 = vshrl.u32 %v1511, 7
        %v1513 = vsub.s32 2, %v1512
        %v1514 = vrot.slane %v1501, %v1513
        %v1518 = vadd.f32 %v1182, %v1506
        %v1519 = vadd.f32 %v1184, %v1510
        %v1520 = vadd.f32 %v1375, %v1514
        %v1521 = vadd.f32 %v1186, %v1506
        %v1522 = vadd.f32 %v1188, %v1510
        %v1523 = vadd.f32 %v1378, %v1514
        %v1524 = vadd.f32 %v1192, %v1506
        %v1525 = vadd.f32 %v1194, %v1510
        %v1526 = vadd.f32 %v1383, %v1514
        %v1527 = vadd.f32 %v1196, %v1506
        %v1528 = vadd.f32 %v1198, %v1510
        %v1529 = vadd.f32 %v1386, %v1514
        %v1530 = vadd.f32 %v1202, %v1506
        %v1531 = vadd.f32 %v1204, %v1510
        %v1532 = vadd.f32 %v1391, %v1514
        %v1533 = vadd.f32 %v1206, %v1506
        %v1534 = vadd.f32 %v1208, %v1510
        %v1535 = vadd.f32 %v1394, %v1514
        %v1536 = vadd.f32 %v1212, %v1506
        %v1537 = vadd.f32 %v1214, %v1510
        %v1538 = vadd.f32 %v1399, %v1514
        %v1539 = vadd.f32 %v1216, %v1506
        %v1540 = vadd.f32 %v1218, %v1510
        %v1541 = vadd.f32 %v1402, %v1514
        %v1542 = vadd.f32 %v1222, %v1506
        %v1543 = vadd.f32 %v1224, %v1510
        %v1544 = vadd.f32 %v1407, %v1514
        %v1545 = vadd.f32 %v1226, %v1506
        %v1546 = vadd.f32 %v1228, %v1510
        %v1547 = vadd.f32 %v1410, %v1514
        %v1548 = vadd.f32 %v1232, %v1506
        %v1549 = vadd.f32 %v1234, %v1510
        %v1550 = vadd.f32 %v1415, %v1514
        %v1551 = vadd.f32 %v1236, %v1506
        %v1552 = vadd.f32 %v1238, %v1510
        %v1553 = vadd.f32 %v1418, %v1514
        %v1554 = vadd.f32 %v1242, %v1506
        %v1555 = vadd.f32 %v1244, %v1510
        %v1556 = vadd.f32 %v1423, %v1514
        %v1557 = vadd.f32 %v1246, %v1506
        %v1558 = vadd.f32 %v1248, %v1510
        %v1559 = vadd.f32 %v1426, %v1514
        %v1560 = vadd.f32 %v1252, %v1506
        %v1561 = vadd.f32 %v1254, %v1510
        %v1562 = vadd.f32 %v1431, %v1514
        %v1563 = vadd.f32 %v1256, %v1506
        %v1564 = vadd.f32 %v1258, %v1510
        %v1565 = vadd.f32 %v1434, %v1514
        %v1566 = vadd.f32 %v1262, %v1506
        %v1567 = vadd.f32 %v1264, %v1510
        %v1568 = vadd.f32 %v1439, %v1514
        %v1569 = vadd.f32 %v1266, %v1506
        %v1570 = vadd.f32 %v1268, %v1510
        %v1571 = vadd.f32 %v1442, %v1514
        %v1572 = vadd.f32 %v1272, %v1506
        %v1573 = vadd.f32 %v1274, %v1510
        %v1574 = vadd.f32 %v1447, %v1514
        %v1575 = vadd.f32 %v1276, %v1506
        %v1576 = vadd.f32 %v1278, %v1510
        %v1577 = vadd.f32 %v1450, %v1514
        %v1578 = vadd.f32 %v1282, %v1506
        %v1579 = vadd.f32 %v1284, %v1510
        %v1580 = vadd.f32 %v1455, %v1514
        %v1581 = vadd.f32 %v1286, %v1506
        %v1582 = vadd.f32 %v1288, %v1510
        %v1583 = vadd.f32 %v1458, %v1514
        %v1584 = vadd.f32 %v1292, %v1506
        %v1585 = vadd.f32 %v1294, %v1510
        %v1586 = vadd.f32 %v1463, %v1514
        %v1587 = vadd.f32 %v1296, %v1506
        %v1588 = vadd.f32 %v1298, %v1510
        %v1589 = vadd.f32 %v1466, %v1514
        %v1590 = vadd.f32 %v1302, %v1506
        %v1591 = vadd.f32 %v1304, %v1510
        %v1592 = vadd.f32 %v1471, %v1514
        %v1593 = vadd.f32 %v1306, %v1506
        %v1594 = vadd.f32 %v1308, %v1510
        %v1595 = vadd.f32 %v1474, %v1514
        %v1596 = vadd.f32 %v1312, %v1506
        %v1597 = vadd.f32 %v1314, %v1510
        %v1598 = vadd.f32 %v1479, %v1514
        %v1599 = vadd.f32 %v1316, %v1506
        %v1600 = vadd.f32 %v1318, %v1510
        %v1601 = vadd.f32 %v1482, %v1514
        %v1602 = vadd.f32 %v1322, %v1506
        %v1603 = vadd.f32 %v1324, %v1510
        %v1604 = vadd.f32 %v1487, %v1514
        %v1605 = vadd.f32 %v1326, %v1506
        %v1606 = vadd.f32 %v1328, %v1510
        %v1607 = vadd.f32 %v1490, %v1514
        %v1608 = vadd.f32 %v1332, %v1506
        %v1609 = vadd.f32 %v1334, %v1510
        %v1610 = vadd.f32 %v1495, %v1514
        %v1611 = vadd.f32 %v1336, %v1506
        %v1612 = vadd.f32 %v1338, %v1510
        %v1613 = vadd.f32 %v1498, %v1514
        %v1614 = vmax.f32 %v1518, 0.0
        %v1615 = vmax.f32 %v1519, 0.0
        %v1616 = vmax.f32 %v1520, 0.0
        %v1617 = vmax.f32 %v1521, 0.0
        %v1618 = vmax.f32 %v1522, 0.0
        %v1619 = vmax.f32 %v1523, 0.0
        %v1620 = vmax.f32 %v1524, 0.0
        %v1621 = vmax.f32 %v1525, 0.0
        %v1622 = vmax.f32 %v1526, 0.0
        %v1623 = vmax.f32 %v1527, 0.0
        %v1624 = vmax.f32 %v1528, 0.0
        %v1625 = vmax.f32 %v1529, 0.0
        %v1626 = vmax.f32 %v1530, 0.0
        %v1627 = vmax.f32 %v1531, 0.0
        %v1628 = vmax.f32 %v1532, 0.0
        %v1629 = vmax.f32 %v1533, 0.0
        %v1630 = vmax.f32 %v1534, 0.0
        %v1631 = vmax.f32 %v1535, 0.0
        %v1632 = vmax.f32 %v1536, 0.0
        %v1633 = vmax.f32 %v1537, 0.0
        %v1634 = vmax.f32 %v1538, 0.0
        %v1635 = vmax.f32 %v1539, 0.0
        %v1636 = vmax.f32 %v1540, 0.0
        %v1637 = vmax.f32 %v1541, 0.0
        %v1638 = vmax.f32 %v1542, 0.0
        %v1639 = vmax.f32 %v1543, 0.0
        %v1640 = vmax.f32 %v1544, 0.0
        %v1641 = vmax.f32 %v1545, 0.0
        %v1642 = vmax.f32 %v1546, 0.0
        %v1643 = vmax.f32 %v1547, 0.0
        %v1644 = vmax.f32 %v1548, 0.0
        %v1645 = vmax.f32 %v1549, 0.0
        %v1646 = vmax.f32 %v1550, 0.0
        %v1647 = vmax.f32 %v1551, 0.0
        %v1648 = vmax.f32 %v1552, 0.0
        %v1649 = vmax.f32 %v1553, 0.0
        %v1650 = vmax.f32 %v1554, 0.0
        %v1651 = vmax.f32 %v1555, 0.0
        %v1652 = vmax.f32 %v1556, 0.0
        %v1653 = vmax.f32 %v1557, 0.0
        %v1654 = vmax.f32 %v1558, 0.0
        %v1655 = vmax.f32 %v1559, 0.0
        %v1656 = vmax.f32 %v1560, 0.0
        %v1657 = vmax.f32 %v1561, 0.0
        %v1658 = vmax.f32 %v1562, 0.0
        %v1659 = vmax.f32 %v1563, 0.0
        %v1660 = vmax.f32 %v1564, 0.0
        %v1661 = vmax.f32 %v1565, 0.0
        %v1662 = vmax.f32 %v1566, 0.0
        %v1663 = vmax.f32 %v1567, 0.0
        %v1664 = vmax.f32 %v1568, 0.0
        %v1665 = vmax.f32 %v1569, 0.0
        %v1666 = vmax.f32 %v1570, 0.0
        %v1667 = vmax.f32 %v1571, 0.0
        %v1668 = vmax.f32 %v1572, 0.0
        %v1669 = vmax.f32 %v1573, 0.0
        %v1670 = vmax.f32 %v1574, 0.0
        %v1671 = vmax.f32 %v1575, 0.0
        %v1672 = vmax.f32 %v1576, 0.0
        %v1673 = vmax.f32 %v1577, 0.0
        %v1674 = vmax.f32 %v1578, 0.0
        %v1675 = vmax.f32 %v1579, 0.0
        %v1676 = vmax.f32 %v1580, 0.0
        %v1677 = vmax.f32 %v1581, 0.0
        %v1678 = vmax.f32 %v1582, 0.0
        %v1679 = vmax.f32 %v1583, 0.0
        %v1680 = vmax.f32 %v1584, 0.0
        %v1681 = vmax.f32 %v1585, 0.0
        %v1682 = vmax.f32 %v1586, 0.0
        %v1683 = vmax.f32 %v1587, 0.0
        %v1684 = vmax.f32 %v1588, 0.0
        %v1685 = vmax.f32 %v1589, 0.0
        %v1686 = vmax.f32 %v1590, 0.0
        %v1687 = vmax.f32 %v1591, 0.0
        %v1688 = vmax.f32 %v1592, 0.0
        %v1689 = vmax.f32 %v1593, 0.0
        %v1690 = vmax.f32 %v1594, 0.0
        %v1691 = vmax.f32 %v1595, 0.0
        %v1692 = vmax.f32 %v1596, 0.0
        %v1693 = vmax.f32 %v1597, 0.0
        %v1694 = vmax.f32 %v1598, 0.0
        %v1695 = vmax.f32 %v1599, 0.0
        %v1696 = vmax.f32 %v1600, 0.0
        %v1697 = vmax.f32 %v1601, 0.0
        %v1698 = vmax.f32 %v1602, 0.0
        %v1699 = vmax.f32 %v1603, 0.0
        %v1700 = vmax.f32 %v1604, 0.0
        %v1701 = vmax.f32 %v1605, 0.0
        %v1702 = vmax.f32 %v1606, 0.0
        %v1703 = vmax.f32 %v1607, 0.0
        %v1704 = vmax.f32 %v1608, 0.0
        %v1705 = vmax.f32 %v1609, 0.0
        %v1706 = vmax.f32 %v1610, 0.0
        %v1707 = vmax.f32 %v1611, 0.0
        %v1708 = vmax.f32 %v1612, 0.0
        %v1709 = vmax.f32 %v1613, 0.0
        %v1710 = vld [vmem:[%s336] sm:$0xf]
        %v1711 = vld [vmem:[%s336 + $0x4] sm:$0xf]
        %v1712 = vld [vmem:[%s336 + $0x8] sm:$0xf]
        %v1713 = vld [vmem:[%s336 + $0xc] sm:$0xf]
        %v1714 = vld [vmem:[%s336 + $0x10] sm:$0xf]
        %v1715 = vld [vmem:[%s336 + $0x14] sm:$0xf]
        %v1716 = vld [vmem:[%s336 + $0x18] sm:$0xf]
        %v1717 = vld [vmem:[%s336 + $0x1c] sm:$0xf]
        %v1718 = vld [vmem:[%s336 + $0x20] sm:$0xf]
        %v1719 = vld [vmem:[%s336 + $0x24] sm:$0xf]
        %v1720 = vld [vmem:[%s336 + $0x28] sm:$0xf]
        %v1721 = vld [vmem:[%s336 + $0x2c] sm:$0xf]
        %v1722 = vld [vmem:[%s336 + $0x30] sm:$0xf]
        %v1723 = vld [vmem:[%s336 + $0x34] sm:$0xf]
        %v1724 = vld [vmem:[%s336 + $0x38] sm:$0xf]
        %v1725 = vld [vmem:[%s336 + $0x3c] sm:$0xf]
        %v1726 = vld [vmem:[%s336 + $0x40] sm:$0xf]
        %v1727 = vld [vmem:[%s336 + $0x44] sm:$0xf]
        %v1728 = vld [vmem:[%s336 + $0x48] sm:$0xf]
        %v1729 = vld [vmem:[%s336 + $0x4c] sm:$0xf]
        %v1730 = vld [vmem:[%s336 + $0x50] sm:$0xf]
        %v1731 = vld [vmem:[%s336 + $0x54] sm:$0xf]
        %v1732 = vld [vmem:[%s336 + $0x58] sm:$0xf]
        %v1733 = vld [vmem:[%s336 + $0x5c] sm:$0xf]
        %v1734 = vld [vmem:[%s336 + $0x60] sm:$0xf]
        %v1735 = vld [vmem:[%s336 + $0x64] sm:$0xf]
        %v1736 = vld [vmem:[%s336 + $0x68] sm:$0xf]
        %v1737 = vld [vmem:[%s336 + $0x6c] sm:$0xf]
        %v1738 = vld [vmem:[%s336 + $0x70] sm:$0xf]
        %v1739 = vld [vmem:[%s336 + $0x74] sm:$0xf]
        %v1740 = vld [vmem:[%s336 + $0x78] sm:$0xf]
        %v1741 = vld [vmem:[%s336 + $0x7c] sm:$0xf]
        %v1742 = vld [vmem:[%s5] sm:$0xff]
        %v1743 = vld [vmem:[%s5 + $0x8] sm:$0xf]
        %v1744 = vld [vmem:[%s5 + $0xc] sm:$0xff]
        %v1745 = vld [vmem:[%s5 + $0x14] sm:$0xf]
        %v1746 = vld [vmem:[%s5 + $0x18] sm:$0xff]
        %v1747 = vld [vmem:[%s5 + $0x20] sm:$0xf]
        %v1748 = vld [vmem:[%s5 + $0x24] sm:$0xff]
        %v1749 = vld [vmem:[%s5 + $0x2c] sm:$0xf]
        %v1750 = vld [vmem:[%s5 + $0x30] sm:$0xff]
        %v1751 = vld [vmem:[%s5 + $0x38] sm:$0xf]
        %v1752 = vld [vmem:[%s5 + $0x3c] sm:$0xff]
        %v1753 = vld [vmem:[%s5 + $0x44] sm:$0xf]
        %v1754 = vld [vmem:[%s5 + $0x48] sm:$0xff]
        %v1755 = vld [vmem:[%s5 + $0x50] sm:$0xf]
        %v1756 = vld [vmem:[%s5 + $0x54] sm:$0xff]
        %v1757 = vld [vmem:[%s5 + $0x5c] sm:$0xf]
        %v1790 = vunpack.c.l.b16 %v1710
        %v1791 = vunpack.c.l.b16 %v1711
        %v1792 = vunpack.c.l.b16 %v1712
        %v1793 = vunpack.c.l.b16 %v1713
        %v1794 = vunpack.c.l.b16 %v1714
        %v1795 = vunpack.c.l.b16 %v1715
        %v1796 = vunpack.c.l.b16 %v1716
        %v1797 = vunpack.c.l.b16 %v1717
        %v1798 = vunpack.c.l.b16 %v1718
        %v1799 = vunpack.c.l.b16 %v1719
        %v1800 = vunpack.c.l.b16 %v1720
        %v1801 = vunpack.c.l.b16 %v1721
        %v1802 = vunpack.c.l.b16 %v1722
        %v1803 = vunpack.c.l.b16 %v1723
        %v1804 = vunpack.c.l.b16 %v1724
        %v1805 = vunpack.c.l.b16 %v1725
        %v1806 = vunpack.c.l.b16 %v1726
        %v1807 = vunpack.c.l.b16 %v1727
        %v1808 = vunpack.c.l.b16 %v1728
        %v1809 = vunpack.c.l.b16 %v1729
        %v1810 = vunpack.c.l.b16 %v1730
        %v1811 = vunpack.c.l.b16 %v1731
        %v1812 = vunpack.c.l.b16 %v1732
        %v1813 = vunpack.c.l.b16 %v1733
        %v1814 = vunpack.c.l.b16 %v1734
        %v1815 = vunpack.c.l.b16 %v1735
        %v1816 = vunpack.c.l.b16 %v1736
        %v1817 = vunpack.c.l.b16 %v1737
        %v1818 = vunpack.c.l.b16 %v1738
        %v1819 = vunpack.c.l.b16 %v1739
        %v1820 = vunpack.c.l.b16 %v1740
        %v1821 = vunpack.c.l.b16 %v1741
        %v1822 = vpack.c.b16 %v1791, %v1790
        %v1823 = vpack.c.b16 %v1793, %v1792
        %v1824 = vpack.c.b16 %v1795, %v1794
        %v1825 = vpack.c.b16 %v1797, %v1796
        %v1826 = vpack.c.b16 %v1799, %v1798
        %v1827 = vpack.c.b16 %v1801, %v1800
        %v1828 = vpack.c.b16 %v1803, %v1802
        %v1829 = vpack.c.b16 %v1805, %v1804
        %v1830 = vpack.c.b16 %v1807, %v1806
        %v1831 = vpack.c.b16 %v1809, %v1808
        %v1832 = vpack.c.b16 %v1811, %v1810
        %v1833 = vpack.c.b16 %v1813, %v1812
        %v1834 = vpack.c.b16 %v1815, %v1814
        %v1835 = vpack.c.b16 %v1817, %v1816
        %v1836 = vpack.c.b16 %v1819, %v1818
        %v1837 = vpack.c.b16 %v1821, %v1820
        %v1854 = vunpack.c.l.b16 %v1742
        %v1855 = vunpack.c.h.b16 %v1742
        %v1856 = vunpack.c.l.b16 %v1743
        %v1857 = vunpack.c.l.b16 %v1744
        %v1858 = vunpack.c.h.b16 %v1744
        %v1859 = vunpack.c.l.b16 %v1745
        %v1860 = vunpack.c.l.b16 %v1746
        %v1861 = vunpack.c.h.b16 %v1746
        %v1862 = vunpack.c.l.b16 %v1747
        %v1863 = vunpack.c.l.b16 %v1748
        %v1864 = vunpack.c.h.b16 %v1748
        %v1865 = vunpack.c.l.b16 %v1749
        %v1866 = vunpack.c.l.b16 %v1750
        %v1867 = vunpack.c.h.b16 %v1750
        %v1868 = vunpack.c.l.b16 %v1751
        %v1869 = vunpack.c.l.b16 %v1752
        %v1870 = vunpack.c.h.b16 %v1752
        %v1871 = vunpack.c.l.b16 %v1753
        %v1872 = vunpack.c.l.b16 %v1754
        %v1873 = vunpack.c.h.b16 %v1754
        %v1874 = vunpack.c.l.b16 %v1755
        %v1875 = vunpack.c.l.b16 %v1756
        %v1876 = vunpack.c.h.b16 %v1756
        %v1877 = vunpack.c.l.b16 %v1757
        %v1878 = vpack.c.b16 %v1857, %v1854
        %v1879 = vpack.c.b16 %v1858, %v1855
        %v1880 = vpack.c.b16 %v1859, %v1856
        %v1881 = vpack.c.b16 %v1863, %v1860
        %v1882 = vpack.c.b16 %v1864, %v1861
        %v1883 = vpack.c.b16 %v1865, %v1862
        %v1884 = vpack.c.b16 %v1869, %v1866
        %v1885 = vpack.c.b16 %v1870, %v1867
        %v1886 = vpack.c.b16 %v1871, %v1868
        %v1887 = vpack.c.b16 %v1875, %v1872
        %v1888 = vpack.c.b16 %v1876, %v1873
        %v1889 = vpack.c.b16 %v1877, %v1874
        %vm1902 = vcmask 523264
        %v1904 = vsel %vm1902, %v1822, 0
        %v1907 = vsel %vm1902, %v1823, 0
        %v1910 = vsel %vm1902, %v1824, 0
        %v1913 = vsel %vm1902, %v1825, 0
        %v1916 = vsel %vm1902, %v1826, 0
        %v1919 = vsel %vm1902, %v1827, 0
        %v1922 = vsel %vm1902, %v1828, 0
        %v1925 = vsel %vm1902, %v1829, 0
        %v1928 = vsel %vm1902, %v1830, 0
        %v1931 = vsel %vm1902, %v1831, 0
        %v1934 = vsel %vm1902, %v1832, 0
        %v1937 = vsel %vm1902, %v1833, 0
        %v1940 = vsel %vm1902, %v1834, 0
        %v1943 = vsel %vm1902, %v1835, 0
        %v1946 = vsel %vm1902, %v1836, 0
        %v1949 = vsel %vm1902, %v1837, 0
        %1951 = vmatprep.subr.bf16.mxu0 %v1879
        %1952 = vmatpush1.bf16.msra.mxu0 %v1878
        %1953 = vmatprep.subr.bf16.mxu0 %v1882
        %1954 = vmatpush1.bf16.msra.mxu0 %v1881
        %1955 = vmatprep.subr.bf16.mxu0 %v1885
        %1956 = vmatpush1.bf16.msra.mxu0 %v1884
        %1957 = vmatprep.subr.bf16.mxu0 %v1888
        %1958 = vmatpush1.bf16.msra.mxu0 %v1887
        %1959 = vmatprep.subr.bf16.mxu0 0
        %1960 = vmatpush1.bf16.msra.mxu0 0
        %1961 = vmatprep.subr.bf16.mxu0 0
        %1962 = vmatpush1.bf16.msra.mxu0 0
        %1963 = vmatprep.subr.bf16.mxu0 0
        %1964 = vmatpush1.bf16.msra.mxu0 0
        %1965 = vmatprep.subr.bf16.mxu0 0
        %1966 = vmatpush1.bf16.msra.mxu0 0
        %1967 = vmatprep.subr.bf16.mxu0 0
        %1968 = vmatpush1.bf16.msra.mxu0 0
        %1969 = vmatprep.subr.bf16.mxu0 0
        %1970 = vmatpush1.bf16.msra.mxu0 0
        %1971 = vmatprep.subr.bf16.mxu0 0
        %1972 = vmatpush1.bf16.msra.mxu0 0
        %1973 = vmatprep.subr.bf16.mxu0 0
        %1974 = vmatpush1.bf16.msra.mxu0 0
        %1975 = vmatprep.subr.bf16.mxu0 0
        %1976 = vmatpush1.bf16.msra.mxu0 0
        %1977 = vmatprep.subr.bf16.mxu0 0
        %1978 = vmatpush1.bf16.msra.mxu0 0
        %1979 = vmatprep.subr.bf16.mxu0 0
        %1980 = vmatpush1.bf16.msra.mxu0 0
        %1981 = vmatprep.subr.bf16.mxu0 0
        %1982 = vmatpush1.bf16.msra.mxu0 0
        %1983 = vmatprep.mubr.bf16.mxu0 0
        %1984 = vmatmul.mubr.bf16.gmra.mrb[0].mxu0 %v1904
        %v1985 = vpop.f32.mrb[0].mxu0
        %v1986 = vadd.f32 0.0, %v1985
        %v1987 = vpop.f32.mrb[0].mxu0
        %v1988 = vadd.f32 0.0, %v1987
        %v1989 = vpop.f32.mrb[0].mxu0
        %v1990 = vadd.f32 0.0, %v1989
        %v1991 = vpop.f32.mrb[0].mxu0
        %v1992 = vadd.f32 0.0, %v1991
        %1993 = vmatprep.mubr.bf16.mxu0 0
        %1994 = vmatmul.mubr.bf16.gmra.mrb[0].mxu0 %v1907
        %v1995 = vpop.f32.mrb[0].mxu0
        %v1996 = vadd.f32 0.0, %v1995
        %v1997 = vpop.f32.mrb[0].mxu0
        %v1998 = vadd.f32 0.0, %v1997
        %v1999 = vpop.f32.mrb[0].mxu0
        %v2000 = vadd.f32 0.0, %v1999
        %v2001 = vpop.f32.mrb[0].mxu0
        %v2002 = vadd.f32 0.0, %v2001
        %2003 = vmatprep.mubr.bf16.mxu0 0
        %2004 = vmatmul.mubr.bf16.gmra.mrb[0].mxu0 %v1910
        %v2005 = vpop.f32.mrb[0].mxu0
        %v2006 = vadd.f32 0.0, %v2005
        %v2007 = vpop.f32.mrb[0].mxu0
        %v2008 = vadd.f32 0.0, %v2007
        %v2009 = vpop.f32.mrb[0].mxu0
        %v2010 = vadd.f32 0.0, %v2009
        %v2011 = vpop.f32.mrb[0].mxu0
        %v2012 = vadd.f32 0.0, %v2011
        %2013 = vmatprep.mubr.bf16.mxu0 0
        %2014 = vmatmul.mubr.bf16.gmra.mrb[0].mxu0 %v1913
        %v2015 = vpop.f32.mrb[0].mxu0
        %v2016 = vadd.f32 0.0, %v2015
        %v2017 = vpop.f32.mrb[0].mxu0
        %v2018 = vadd.f32 0.0, %v2017
        %v2019 = vpop.f32.mrb[0].mxu0
        %v2020 = vadd.f32 0.0, %v2019
        %v2021 = vpop.f32.mrb[0].mxu0
        %v2022 = vadd.f32 0.0, %v2021
        %2023 = vmatprep.mubr.bf16.mxu0 0
        %2024 = vmatmul.mubr.bf16.gmra.mrb[0].mxu0 %v1916
        %v2025 = vpop.f32.mrb[0].mxu0
        %v2026 = vadd.f32 0.0, %v2025
        %v2027 = vpop.f32.mrb[0].mxu0
        %v2028 = vadd.f32 0.0, %v2027
        %v2029 = vpop.f32.mrb[0].mxu0
        %v2030 = vadd.f32 0.0, %v2029
        %v2031 = vpop.f32.mrb[0].mxu0
        %v2032 = vadd.f32 0.0, %v2031
        %2033 = vmatprep.mubr.bf16.mxu0 0
        %2034 = vmatmul.mubr.bf16.gmra.mrb[0].mxu0 %v1919
        %v2035 = vpop.f32.mrb[0].mxu0
        %v2036 = vadd.f32 0.0, %v2035
        %v2037 = vpop.f32.mrb[0].mxu0
        %v2038 = vadd.f32 0.0, %v2037
        %v2039 = vpop.f32.mrb[0].mxu0
        %v2040 = vadd.f32 0.0, %v2039
        %v2041 = vpop.f32.mrb[0].mxu0
        %v2042 = vadd.f32 0.0, %v2041
        %2043 = vmatprep.mubr.bf16.mxu0 0
        %2044 = vmatmul.mubr.bf16.gmra.mrb[0].mxu0 %v1922
        %v2045 = vpop.f32.mrb[0].mxu0
        %v2046 = vadd.f32 0.0, %v2045
        %v2047 = vpop.f32.mrb[0].mxu0
        %v2048 = vadd.f32 0.0, %v2047
        %v2049 = vpop.f32.mrb[0].mxu0
        %v2050 = vadd.f32 0.0, %v2049
        %v2051 = vpop.f32.mrb[0].mxu0
        %v2052 = vadd.f32 0.0, %v2051
        %2053 = vmatprep.mubr.bf16.mxu0 0
        %2054 = vmatmul.mubr.bf16.gmra.mrb[0].mxu0 %v1925
        %v2055 = vpop.f32.mrb[0].mxu0
        %v2056 = vadd.f32 0.0, %v2055
        %v2057 = vpop.f32.mrb[0].mxu0
        %v2058 = vadd.f32 0.0, %v2057
        %v2059 = vpop.f32.mrb[0].mxu0
        %v2060 = vadd.f32 0.0, %v2059
        %v2061 = vpop.f32.mrb[0].mxu0
        %v2062 = vadd.f32 0.0, %v2061
        %2063 = vmatprep.mubr.bf16.mxu0 0
        %2064 = vmatmul.mubr.bf16.gmra.mrb[0].mxu0 %v1928
        %v2065 = vpop.f32.mrb[0].mxu0
        %v2066 = vadd.f32 0.0, %v2065
        %v2067 = vpop.f32.mrb[0].mxu0
        %v2068 = vadd.f32 0.0, %v2067
        %v2069 = vpop.f32.mrb[0].mxu0
        %v2070 = vadd.f32 0.0, %v2069
        %v2071 = vpop.f32.mrb[0].mxu0
        %v2072 = vadd.f32 0.0, %v2071
        %2073 = vmatprep.mubr.bf16.mxu0 0
        %2074 = vmatmul.mubr.bf16.gmra.mrb[0].mxu0 %v1931
        %v2075 = vpop.f32.mrb[0].mxu0
        %v2076 = vadd.f32 0.0, %v2075
        %v2077 = vpop.f32.mrb[0].mxu0
        %v2078 = vadd.f32 0.0, %v2077
        %v2079 = vpop.f32.mrb[0].mxu0
        %v2080 = vadd.f32 0.0, %v2079
        %v2081 = vpop.f32.mrb[0].mxu0
        %v2082 = vadd.f32 0.0, %v2081
        %2083 = vmatprep.mubr.bf16.mxu0 0
        %2084 = vmatmul.mubr.bf16.gmra.mrb[0].mxu0 %v1934
        %v2085 = vpop.f32.mrb[0].mxu0
        %v2086 = vadd.f32 0.0, %v2085
        %v2087 = vpop.f32.mrb[0].mxu0
        %v2088 = vadd.f32 0.0, %v2087
        %v2089 = vpop.f32.mrb[0].mxu0
        %v2090 = vadd.f32 0.0, %v2089
        %v2091 = vpop.f32.mrb[0].mxu0
        %v2092 = vadd.f32 0.0, %v2091
        %2093 = vmatprep.mubr.bf16.mxu0 0
        %2094 = vmatmul.mubr.bf16.gmra.mrb[0].mxu0 %v1937
        %v2095 = vpop.f32.mrb[0].mxu0
        %v2096 = vadd.f32 0.0, %v2095
        %v2097 = vpop.f32.mrb[0].mxu0
        %v2098 = vadd.f32 0.0, %v2097
        %v2099 = vpop.f32.mrb[0].mxu0
        %v2100 = vadd.f32 0.0, %v2099
        %v2101 = vpop.f32.mrb[0].mxu0
        %v2102 = vadd.f32 0.0, %v2101
        %2103 = vmatprep.mubr.bf16.mxu0 0
        %2104 = vmatmul.mubr.bf16.gmra.mrb[0].mxu0 %v1940
        %v2105 = vpop.f32.mrb[0].mxu0
        %v2106 = vadd.f32 0.0, %v2105
        %v2107 = vpop.f32.mrb[0].mxu0
        %v2108 = vadd.f32 0.0, %v2107
        %v2109 = vpop.f32.mrb[0].mxu0
        %v2110 = vadd.f32 0.0, %v2109
        %v2111 = vpop.f32.mrb[0].mxu0
        %v2112 = vadd.f32 0.0, %v2111
        %2113 = vmatprep.mubr.bf16.mxu0 0
        %2114 = vmatmul.mubr.bf16.gmra.mrb[0].mxu0 %v1943
        %v2115 = vpop.f32.mrb[0].mxu0
        %v2116 = vadd.f32 0.0, %v2115
        %v2117 = vpop.f32.mrb[0].mxu0
        %v2118 = vadd.f32 0.0, %v2117
        %v2119 = vpop.f32.mrb[0].mxu0
        %v2120 = vadd.f32 0.0, %v2119
        %v2121 = vpop.f32.mrb[0].mxu0
        %v2122 = vadd.f32 0.0, %v2121
        %2123 = vmatprep.mubr.bf16.mxu0 0
        %2124 = vmatmul.mubr.bf16.gmra.mrb[0].mxu0 %v1946
        %v2125 = vpop.f32.mrb[0].mxu0
        %v2126 = vadd.f32 0.0, %v2125
        %v2127 = vpop.f32.mrb[0].mxu0
        %v2128 = vadd.f32 0.0, %v2127
        %v2129 = vpop.f32.mrb[0].mxu0
        %v2130 = vadd.f32 0.0, %v2129
        %v2131 = vpop.f32.mrb[0].mxu0
        %v2132 = vadd.f32 0.0, %v2131
        %2133 = vmatprep.mubr.bf16.mxu0 0
        %2134 = vmatmul.mubr.bf16.gmra.mrb[0].mxu0 %v1949
        %v2135 = vpop.f32.mrb[0].mxu0
        %v2136 = vadd.f32 0.0, %v2135
        %v2137 = vpop.f32.mrb[0].mxu0
        %v2138 = vadd.f32 0.0, %v2137
        %v2139 = vpop.f32.mrb[0].mxu0
        %v2140 = vadd.f32 0.0, %v2139
        %v2141 = vpop.f32.mrb[0].mxu0
        %v2142 = vadd.f32 0.0, %v2141
        %2143 = vdwg.mxu0
        %2144 = vmatprep.subr.bf16.mxu0 0
        %2145 = vmatpush1.bf16.msra.mxu0 %v1880
        %2146 = vmatprep.subr.bf16.mxu0 0
        %2147 = vmatpush1.bf16.msra.mxu0 %v1883
        %2148 = vmatprep.subr.bf16.mxu0 0
        %2149 = vmatpush1.bf16.msra.mxu0 %v1886
        %2150 = vmatprep.subr.bf16.mxu0 0
        %2151 = vmatpush1.bf16.msra.mxu0 %v1889
        %2152 = vmatprep.subr.bf16.mxu0 0
        %2153 = vmatpush1.bf16.msra.mxu0 0
        %2154 = vmatprep.subr.bf16.mxu0 0
        %2155 = vmatpush1.bf16.msra.mxu0 0
        %2156 = vmatprep.subr.bf16.mxu0 0
        %2157 = vmatpush1.bf16.msra.mxu0 0
        %2158 = vmatprep.subr.bf16.mxu0 0
        %2159 = vmatpush1.bf16.msra.mxu0 0
        %2160 = vmatprep.subr.bf16.mxu0 0
        %2161 = vmatpush1.bf16.msra.mxu0 0
        %2162 = vmatprep.subr.bf16.mxu0 0
        %2163 = vmatpush1.bf16.msra.mxu0 0
        %2164 = vmatprep.subr.bf16.mxu0 0
        %2165 = vmatpush1.bf16.msra.mxu0 0
        %2166 = vmatprep.subr.bf16.mxu0 0
        %2167 = vmatpush1.bf16.msra.mxu0 0
        %2168 = vmatprep.subr.bf16.mxu0 0
        %2169 = vmatpush1.bf16.msra.mxu0 0
        %2170 = vmatprep.subr.bf16.mxu0 0
        %2171 = vmatpush1.bf16.msra.mxu0 0
        %2172 = vmatprep.subr.bf16.mxu0 0
        %2173 = vmatpush1.bf16.msra.mxu0 0
        %2174 = vmatprep.subr.bf16.mxu0 0
        %2175 = vmatpush1.bf16.msra.mxu0 0
        %2176 = vmatprep.mubr.bf16.mxu0 0
        %2177 = vmatmul.mubr.bf16.gmra.mrb[0].mxu0 %v1904
        %v2178 = vpop.f32.mrb[0].mxu0
        %v2179 = vadd.f32 0.0, %v2178
        %v2180 = vpop.f32.mrb[0].mxu0
        %v2181 = vpop.f32.mrb[0].mxu0
        %v2182 = vadd.f32 0.0, %v2181
        %v2183 = vpop.f32.mrb[0].mxu0
        %2184 = vmatprep.mubr.bf16.mxu0 0
        %2185 = vmatmul.mubr.bf16.gmra.mrb[0].mxu0 %v1907
        %v2186 = vpop.f32.mrb[0].mxu0
        %v2187 = vadd.f32 0.0, %v2186
        %v2188 = vpop.f32.mrb[0].mxu0
        %v2189 = vpop.f32.mrb[0].mxu0
        %v2190 = vadd.f32 0.0, %v2189
        %v2191 = vpop.f32.mrb[0].mxu0
        %2192 = vmatprep.mubr.bf16.mxu0 0
        %2193 = vmatmul.mubr.bf16.gmra.mrb[0].mxu0 %v1910
        %v2194 = vpop.f32.mrb[0].mxu0
        %v2195 = vadd.f32 0.0, %v2194
        %v2196 = vpop.f32.mrb[0].mxu0
        %v2197 = vpop.f32.mrb[0].mxu0
        %v2198 = vadd.f32 0.0, %v2197
        %v2199 = vpop.f32.mrb[0].mxu0
        %2200 = vmatprep.mubr.bf16.mxu0 0
        %2201 = vmatmul.mubr.bf16.gmra.mrb[0].mxu0 %v1913
        %v2202 = vpop.f32.mrb[0].mxu0
        %v2203 = vadd.f32 0.0, %v2202
        %v2204 = vpop.f32.mrb[0].mxu0
        %v2205 = vpop.f32.mrb[0].mxu0
        %v2206 = vadd.f32 0.0, %v2205
        %v2207 = vpop.f32.mrb[0].mxu0
        %2208 = vmatprep.mubr.bf16.mxu0 0
        %2209 = vmatmul.mubr.bf16.gmra.mrb[0].mxu0 %v1916
        %v2210 = vpop.f32.mrb[0].mxu0
        %v2211 = vadd.f32 0.0, %v2210
        %v2212 = vpop.f32.mrb[0].mxu0
        %v2213 = vpop.f32.mrb[0].mxu0
        %v2214 = vadd.f32 0.0, %v2213
        %v2215 = vpop.f32.mrb[0].mxu0
        %2216 = vmatprep.mubr.bf16.mxu0 0
        %2217 = vmatmul.mubr.bf16.gmra.mrb[0].mxu0 %v1919
        %v2218 = vpop.f32.mrb[0].mxu0
        %v2219 = vadd.f32 0.0, %v2218
        %v2220 = vpop.f32.mrb[0].mxu0
        %v2221 = vpop.f32.mrb[0].mxu0
        %v2222 = vadd.f32 0.0, %v2221
        %v2223 = vpop.f32.mrb[0].mxu0
        %2224 = vmatprep.mubr.bf16.mxu0 0
        %2225 = vmatmul.mubr.bf16.gmra.mrb[0].mxu0 %v1922
        %v2226 = vpop.f32.mrb[0].mxu0
        %v2227 = vadd.f32 0.0, %v2226
        %v2228 = vpop.f32.mrb[0].mxu0
        %v2229 = vpop.f32.mrb[0].mxu0
        %v2230 = vadd.f32 0.0, %v2229
        %v2231 = vpop.f32.mrb[0].mxu0
        %2232 = vmatprep.mubr.bf16.mxu0 0
        %2233 = vmatmul.mubr.bf16.gmra.mrb[0].mxu0 %v1925
        %v2234 = vpop.f32.mrb[0].mxu0
        %v2235 = vadd.f32 0.0, %v2234
        %v2236 = vpop.f32.mrb[0].mxu0
        %v2237 = vpop.f32.mrb[0].mxu0
        %v2238 = vadd.f32 0.0, %v2237
        %v2239 = vpop.f32.mrb[0].mxu0
        %2240 = vmatprep.mubr.bf16.mxu0 0
        %2241 = vmatmul.mubr.bf16.gmra.mrb[0].mxu0 %v1928
        %v2242 = vpop.f32.mrb[0].mxu0
        %v2243 = vadd.f32 0.0, %v2242
        %v2244 = vpop.f32.mrb[0].mxu0
        %v2245 = vpop.f32.mrb[0].mxu0
        %v2246 = vadd.f32 0.0, %v2245
        %v2247 = vpop.f32.mrb[0].mxu0
        %2248 = vmatprep.mubr.bf16.mxu0 0
        %2249 = vmatmul.mubr.bf16.gmra.mrb[0].mxu0 %v1931
        %v2250 = vpop.f32.mrb[0].mxu0
        %v2251 = vadd.f32 0.0, %v2250
        %v2252 = vpop.f32.mrb[0].mxu0
        %v2253 = vpop.f32.mrb[0].mxu0
        %v2254 = vadd.f32 0.0, %v2253
        %v2255 = vpop.f32.mrb[0].mxu0
        %2256 = vmatprep.mubr.bf16.mxu0 0
        %2257 = vmatmul.mubr.bf16.gmra.mrb[0].mxu0 %v1934
        %v2258 = vpop.f32.mrb[0].mxu0
        %v2259 = vadd.f32 0.0, %v2258
        %v2260 = vpop.f32.mrb[0].mxu0
        %v2261 = vpop.f32.mrb[0].mxu0
        %v2262 = vadd.f32 0.0, %v2261
        %v2263 = vpop.f32.mrb[0].mxu0
        %2264 = vmatprep.mubr.bf16.mxu0 0
        %2265 = vmatmul.mubr.bf16.gmra.mrb[0].mxu0 %v1937
        %v2266 = vpop.f32.mrb[0].mxu0
        %v2267 = vadd.f32 0.0, %v2266
        %v2268 = vpop.f32.mrb[0].mxu0
        %v2269 = vpop.f32.mrb[0].mxu0
        %v2270 = vadd.f32 0.0, %v2269
        %v2271 = vpop.f32.mrb[0].mxu0
        %2272 = vmatprep.mubr.bf16.mxu0 0
        %2273 = vmatmul.mubr.bf16.gmra.mrb[0].mxu0 %v1940
        %v2274 = vpop.f32.mrb[0].mxu0
        %v2275 = vadd.f32 0.0, %v2274
        %v2276 = vpop.f32.mrb[0].mxu0
        %v2277 = vpop.f32.mrb[0].mxu0
        %v2278 = vadd.f32 0.0, %v2277
        %v2279 = vpop.f32.mrb[0].mxu0
        %2280 = vmatprep.mubr.bf16.mxu0 0
        %2281 = vmatmul.mubr.bf16.gmra.mrb[0].mxu0 %v1943
        %v2282 = vpop.f32.mrb[0].mxu0
        %v2283 = vadd.f32 0.0, %v2282
        %v2284 = vpop.f32.mrb[0].mxu0
        %v2285 = vpop.f32.mrb[0].mxu0
        %v2286 = vadd.f32 0.0, %v2285
        %v2287 = vpop.f32.mrb[0].mxu0
        %2288 = vmatprep.mubr.bf16.mxu0 0
        %2289 = vmatmul.mubr.bf16.gmra.mrb[0].mxu0 %v1946
        %v2290 = vpop.f32.mrb[0].mxu0
        %v2291 = vadd.f32 0.0, %v2290
        %v2292 = vpop.f32.mrb[0].mxu0
        %v2293 = vpop.f32.mrb[0].mxu0
        %v2294 = vadd.f32 0.0, %v2293
        %v2295 = vpop.f32.mrb[0].mxu0
        %2296 = vmatprep.mubr.bf16.mxu0 0
        %2297 = vmatmul.mubr.bf16.gmra.mrb[0].mxu0 %v1949
        %v2298 = vpop.f32.mrb[0].mxu0
        %v2299 = vadd.f32 0.0, %v2298
        %v2300 = vpop.f32.mrb[0].mxu0
        %v2301 = vpop.f32.mrb[0].mxu0
        %v2302 = vadd.f32 0.0, %v2301
        %v2303 = vpop.f32.mrb[0].mxu0
        %2304 = vdwg.mxu0
        %v2305 = vadd.f32 %v1614, %v1986
        %v2306 = vadd.f32 %v1615, %v1988
        %v2307 = vadd.f32 %v1616, %v2179
        %v2308 = vadd.f32 %v1617, %v1990
        %v2309 = vadd.f32 %v1618, %v1992
        %v2310 = vadd.f32 %v1619, %v2182
        %v2311 = vadd.f32 %v1620, %v1996
        %v2312 = vadd.f32 %v1621, %v1998
        %v2313 = vadd.f32 %v1622, %v2187
        %v2314 = vadd.f32 %v1623, %v2000
        %v2315 = vadd.f32 %v1624, %v2002
        %v2316 = vadd.f32 %v1625, %v2190
        %v2317 = vadd.f32 %v1626, %v2006
        %v2318 = vadd.f32 %v1627, %v2008
        %v2319 = vadd.f32 %v1628, %v2195
        %v2320 = vadd.f32 %v1629, %v2010
        %v2321 = vadd.f32 %v1630, %v2012
        %v2322 = vadd.f32 %v1631, %v2198
        %v2323 = vadd.f32 %v1632, %v2016
        %v2324 = vadd.f32 %v1633, %v2018
        %v2325 = vadd.f32 %v1634, %v2203
        %v2326 = vadd.f32 %v1635, %v2020
        %v2327 = vadd.f32 %v1636, %v2022
        %v2328 = vadd.f32 %v1637, %v2206
        %v2329 = vadd.f32 %v1638, %v2026
        %v2330 = vadd.f32 %v1639, %v2028
        %v2331 = vadd.f32 %v1640, %v2211
        %v2332 = vadd.f32 %v1641, %v2030
        %v2333 = vadd.f32 %v1642, %v2032
        %v2334 = vadd.f32 %v1643, %v2214
        %v2335 = vadd.f32 %v1644, %v2036
        %v2336 = vadd.f32 %v1645, %v2038
        %v2337 = vadd.f32 %v1646, %v2219
        %v2338 = vadd.f32 %v1647, %v2040
        %v2339 = vadd.f32 %v1648, %v2042
        %v2340 = vadd.f32 %v1649, %v2222
        %v2341 = vadd.f32 %v1650, %v2046
        %v2342 = vadd.f32 %v1651, %v2048
        %v2343 = vadd.f32 %v1652, %v2227
        %v2344 = vadd.f32 %v1653, %v2050
        %v2345 = vadd.f32 %v1654, %v2052
        %v2346 = vadd.f32 %v1655, %v2230
        %v2347 = vadd.f32 %v1656, %v2056
        %v2348 = vadd.f32 %v1657, %v2058
        %v2349 = vadd.f32 %v1658, %v2235
        %v2350 = vadd.f32 %v1659, %v2060
        %v2351 = vadd.f32 %v1660, %v2062
        %v2352 = vadd.f32 %v1661, %v2238
        %v2353 = vadd.f32 %v1662, %v2066
        %v2354 = vadd.f32 %v1663, %v2068
        %v2355 = vadd.f32 %v1664, %v2243
        %v2356 = vadd.f32 %v1665, %v2070
        %v2357 = vadd.f32 %v1666, %v2072
        %v2358 = vadd.f32 %v1667, %v2246
        %v2359 = vadd.f32 %v1668, %v2076
        %v2360 = vadd.f32 %v1669, %v2078
        %v2361 = vadd.f32 %v1670, %v2251
        %v2362 = vadd.f32 %v1671, %v2080
        %v2363 = vadd.f32 %v1672, %v2082
        %v2364 = vadd.f32 %v1673, %v2254
        %v2365 = vadd.f32 %v1674, %v2086
        %v2366 = vadd.f32 %v1675, %v2088
        %v2367 = vadd.f32 %v1676, %v2259
        %v2368 = vadd.f32 %v1677, %v2090
        %v2369 = vadd.f32 %v1678, %v2092
        %v2370 = vadd.f32 %v1679, %v2262
        %v2371 = vadd.f32 %v1680, %v2096
        %v2372 = vadd.f32 %v1681, %v2098
        %v2373 = vadd.f32 %v1682, %v2267
        %v2374 = vadd.f32 %v1683, %v2100
        %v2375 = vadd.f32 %v1684, %v2102
        %v2376 = vadd.f32 %v1685, %v2270
        %v2377 = vadd.f32 %v1686, %v2106
        %v2378 = vadd.f32 %v1687, %v2108
        %v2379 = vadd.f32 %v1688, %v2275
        %v2380 = vadd.f32 %v1689, %v2110
        %v2381 = vadd.f32 %v1690, %v2112
        %v2382 = vadd.f32 %v1691, %v2278
        %v2383 = vadd.f32 %v1692, %v2116
        %v2384 = vadd.f32 %v1693, %v2118
        %v2385 = vadd.f32 %v1694, %v2283
        %v2386 = vadd.f32 %v1695, %v2120
        %v2387 = vadd.f32 %v1696, %v2122
        %v2388 = vadd.f32 %v1697, %v2286
        %v2389 = vadd.f32 %v1698, %v2126
        %v2390 = vadd.f32 %v1699, %v2128
        %v2391 = vadd.f32 %v1700, %v2291
        %v2392 = vadd.f32 %v1701, %v2130
        %v2393 = vadd.f32 %v1702, %v2132
        %v2394 = vadd.f32 %v1703, %v2294
        %v2395 = vadd.f32 %v1704, %v2136
        %v2396 = vadd.f32 %v1705, %v2138
        %v2397 = vadd.f32 %v1706, %v2299
        %v2398 = vadd.f32 %v1707, %v2140
        %v2399 = vadd.f32 %v1708, %v2142
        %v2400 = vadd.f32 %v1709, %v2302
        %v2401 = vld [vmem:[%s7] sm:$0x7]
        %v2403 = vlaneseq
        %v2404 = vshrl.u32 %v2403, 7
        %v2405 = vsub.s32 0, %v2404
        %v2406 = vrot.slane %v2401, %v2405
        %v2407 = vlaneseq
        %v2408 = vshrl.u32 %v2407, 7
        %v2409 = vsub.s32 1, %v2408
        %v2410 = vrot.slane %v2401, %v2409
        %v2411 = vlaneseq
        %v2412 = vshrl.u32 %v2411, 7
        %v2413 = vsub.s32 2, %v2412
        %v2414 = vrot.slane %v2401, %v2413
        %v2418 = vadd.f32 %v2305, %v2406
        %v2419 = vadd.f32 %v2306, %v2410
        %v2420 = vadd.f32 %v2307, %v2414
        %v2421 = vadd.f32 %v2308, %v2406
        %v2422 = vadd.f32 %v2309, %v2410
        %v2423 = vadd.f32 %v2310, %v2414
        %v2424 = vadd.f32 %v2311, %v2406
        %v2425 = vadd.f32 %v2312, %v2410
        %v2426 = vadd.f32 %v2313, %v2414
        %v2427 = vadd.f32 %v2314, %v2406
        %v2428 = vadd.f32 %v2315, %v2410
        %v2429 = vadd.f32 %v2316, %v2414
        %v2430 = vadd.f32 %v2317, %v2406
        %v2431 = vadd.f32 %v2318, %v2410
        %v2432 = vadd.f32 %v2319, %v2414
        %v2433 = vadd.f32 %v2320, %v2406
        %v2434 = vadd.f32 %v2321, %v2410
        %v2435 = vadd.f32 %v2322, %v2414
        %v2436 = vadd.f32 %v2323, %v2406
        %v2437 = vadd.f32 %v2324, %v2410
        %v2438 = vadd.f32 %v2325, %v2414
        %v2439 = vadd.f32 %v2326, %v2406
        %v2440 = vadd.f32 %v2327, %v2410
        %v2441 = vadd.f32 %v2328, %v2414
        %v2442 = vadd.f32 %v2329, %v2406
        %v2443 = vadd.f32 %v2330, %v2410
        %v2444 = vadd.f32 %v2331, %v2414
        %v2445 = vadd.f32 %v2332, %v2406
        %v2446 = vadd.f32 %v2333, %v2410
        %v2447 = vadd.f32 %v2334, %v2414
        %v2448 = vadd.f32 %v2335, %v2406
        %v2449 = vadd.f32 %v2336, %v2410
        %v2450 = vadd.f32 %v2337, %v2414
        %v2451 = vadd.f32 %v2338, %v2406
        %v2452 = vadd.f32 %v2339, %v2410
        %v2453 = vadd.f32 %v2340, %v2414
        %v2454 = vadd.f32 %v2341, %v2406
        %v2455 = vadd.f32 %v2342, %v2410
        %v2456 = vadd.f32 %v2343, %v2414
        %v2457 = vadd.f32 %v2344, %v2406
        %v2458 = vadd.f32 %v2345, %v2410
        %v2459 = vadd.f32 %v2346, %v2414
        %v2460 = vadd.f32 %v2347, %v2406
        %v2461 = vadd.f32 %v2348, %v2410
        %v2462 = vadd.f32 %v2349, %v2414
        %v2463 = vadd.f32 %v2350, %v2406
        %v2464 = vadd.f32 %v2351, %v2410
        %v2465 = vadd.f32 %v2352, %v2414
        %v2466 = vadd.f32 %v2353, %v2406
        %v2467 = vadd.f32 %v2354, %v2410
        %v2468 = vadd.f32 %v2355, %v2414
        %v2469 = vadd.f32 %v2356, %v2406
        %v2470 = vadd.f32 %v2357, %v2410
        %v2471 = vadd.f32 %v2358, %v2414
        %v2472 = vadd.f32 %v2359, %v2406
        %v2473 = vadd.f32 %v2360, %v2410
        %v2474 = vadd.f32 %v2361, %v2414
        %v2475 = vadd.f32 %v2362, %v2406
        %v2476 = vadd.f32 %v2363, %v2410
        %v2477 = vadd.f32 %v2364, %v2414
        %v2478 = vadd.f32 %v2365, %v2406
        %v2479 = vadd.f32 %v2366, %v2410
        %v2480 = vadd.f32 %v2367, %v2414
        %v2481 = vadd.f32 %v2368, %v2406
        %v2482 = vadd.f32 %v2369, %v2410
        %v2483 = vadd.f32 %v2370, %v2414
        %v2484 = vadd.f32 %v2371, %v2406
        %v2485 = vadd.f32 %v2372, %v2410
        %v2486 = vadd.f32 %v2373, %v2414
        %v2487 = vadd.f32 %v2374, %v2406
        %v2488 = vadd.f32 %v2375, %v2410
        %v2489 = vadd.f32 %v2376, %v2414
        %v2490 = vadd.f32 %v2377, %v2406
        %v2491 = vadd.f32 %v2378, %v2410
        %v2492 = vadd.f32 %v2379, %v2414
        %v2493 = vadd.f32 %v2380, %v2406
        %v2494 = vadd.f32 %v2381, %v2410
        %v2495 = vadd.f32 %v2382, %v2414
        %v2496 = vadd.f32 %v2383, %v2406
        %v2497 = vadd.f32 %v2384, %v2410
        %v2498 = vadd.f32 %v2385, %v2414
        %v2499 = vadd.f32 %v2386, %v2406
        %v2500 = vadd.f32 %v2387, %v2410
        %v2501 = vadd.f32 %v2388, %v2414
        %v2502 = vadd.f32 %v2389, %v2406
        %v2503 = vadd.f32 %v2390, %v2410
        %v2504 = vadd.f32 %v2391, %v2414
        %v2505 = vadd.f32 %v2392, %v2406
        %v2506 = vadd.f32 %v2393, %v2410
        %v2507 = vadd.f32 %v2394, %v2414
        %v2508 = vadd.f32 %v2395, %v2406
        %v2509 = vadd.f32 %v2396, %v2410
        %v2510 = vadd.f32 %v2397, %v2414
        %v2511 = vadd.f32 %v2398, %v2406
        %v2512 = vadd.f32 %v2399, %v2410
        %v2513 = vadd.f32 %v2400, %v2414
        %v2514 = vmax.f32 %v2418, 0.0
        %v2515 = vmax.f32 %v2419, 0.0
        %v2516 = vmax.f32 %v2420, 0.0
        %v2517 = vmax.f32 %v2421, 0.0
        %v2518 = vmax.f32 %v2422, 0.0
        %v2519 = vmax.f32 %v2423, 0.0
        %v2520 = vmax.f32 %v2424, 0.0
        %v2521 = vmax.f32 %v2425, 0.0
        %v2522 = vmax.f32 %v2426, 0.0
        %v2523 = vmax.f32 %v2427, 0.0
        %v2524 = vmax.f32 %v2428, 0.0
        %v2525 = vmax.f32 %v2429, 0.0
        %v2526 = vmax.f32 %v2430, 0.0
        %v2527 = vmax.f32 %v2431, 0.0
        %v2528 = vmax.f32 %v2432, 0.0
        %v2529 = vmax.f32 %v2433, 0.0
        %v2530 = vmax.f32 %v2434, 0.0
        %v2531 = vmax.f32 %v2435, 0.0
        %v2532 = vmax.f32 %v2436, 0.0
        %v2533 = vmax.f32 %v2437, 0.0
        %v2534 = vmax.f32 %v2438, 0.0
        %v2535 = vmax.f32 %v2439, 0.0
        %v2536 = vmax.f32 %v2440, 0.0
        %v2537 = vmax.f32 %v2441, 0.0
        %v2538 = vmax.f32 %v2442, 0.0
        %v2539 = vmax.f32 %v2443, 0.0
        %v2540 = vmax.f32 %v2444, 0.0
        %v2541 = vmax.f32 %v2445, 0.0
        %v2542 = vmax.f32 %v2446, 0.0
        %v2543 = vmax.f32 %v2447, 0.0
        %v2544 = vmax.f32 %v2448, 0.0
        %v2545 = vmax.f32 %v2449, 0.0
        %v2546 = vmax.f32 %v2450, 0.0
        %v2547 = vmax.f32 %v2451, 0.0
        %v2548 = vmax.f32 %v2452, 0.0
        %v2549 = vmax.f32 %v2453, 0.0
        %v2550 = vmax.f32 %v2454, 0.0
        %v2551 = vmax.f32 %v2455, 0.0
        %v2552 = vmax.f32 %v2456, 0.0
        %v2553 = vmax.f32 %v2457, 0.0
        %v2554 = vmax.f32 %v2458, 0.0
        %v2555 = vmax.f32 %v2459, 0.0
        %v2556 = vmax.f32 %v2460, 0.0
        %v2557 = vmax.f32 %v2461, 0.0
        %v2558 = vmax.f32 %v2462, 0.0
        %v2559 = vmax.f32 %v2463, 0.0
        %v2560 = vmax.f32 %v2464, 0.0
        %v2561 = vmax.f32 %v2465, 0.0
        %v2562 = vmax.f32 %v2466, 0.0
        %v2563 = vmax.f32 %v2467, 0.0
        %v2564 = vmax.f32 %v2468, 0.0
        %v2565 = vmax.f32 %v2469, 0.0
        %v2566 = vmax.f32 %v2470, 0.0
        %v2567 = vmax.f32 %v2471, 0.0
        %v2568 = vmax.f32 %v2472, 0.0
        %v2569 = vmax.f32 %v2473, 0.0
        %v2570 = vmax.f32 %v2474, 0.0
        %v2571 = vmax.f32 %v2475, 0.0
        %v2572 = vmax.f32 %v2476, 0.0
        %v2573 = vmax.f32 %v2477, 0.0
        %v2574 = vmax.f32 %v2478, 0.0
        %v2575 = vmax.f32 %v2479, 0.0
        %v2576 = vmax.f32 %v2480, 0.0
        %v2577 = vmax.f32 %v2481, 0.0
        %v2578 = vmax.f32 %v2482, 0.0
        %v2579 = vmax.f32 %v2483, 0.0
        %v2580 = vmax.f32 %v2484, 0.0
        %v2581 = vmax.f32 %v2485, 0.0
        %v2582 = vmax.f32 %v2486, 0.0
        %v2583 = vmax.f32 %v2487, 0.0
        %v2584 = vmax.f32 %v2488, 0.0
        %v2585 = vmax.f32 %v2489, 0.0
        %v2586 = vmax.f32 %v2490, 0.0
        %v2587 = vmax.f32 %v2491, 0.0
        %v2588 = vmax.f32 %v2492, 0.0
        %v2589 = vmax.f32 %v2493, 0.0
        %v2590 = vmax.f32 %v2494, 0.0
        %v2591 = vmax.f32 %v2495, 0.0
        %v2592 = vmax.f32 %v2496, 0.0
        %v2593 = vmax.f32 %v2497, 0.0
        %v2594 = vmax.f32 %v2498, 0.0
        %v2595 = vmax.f32 %v2499, 0.0
        %v2596 = vmax.f32 %v2500, 0.0
        %v2597 = vmax.f32 %v2501, 0.0
        %v2598 = vmax.f32 %v2502, 0.0
        %v2599 = vmax.f32 %v2503, 0.0
        %v2600 = vmax.f32 %v2504, 0.0
        %v2601 = vmax.f32 %v2505, 0.0
        %v2602 = vmax.f32 %v2506, 0.0
        %v2603 = vmax.f32 %v2507, 0.0
        %v2604 = vmax.f32 %v2508, 0.0
        %v2605 = vmax.f32 %v2509, 0.0
        %v2606 = vmax.f32 %v2510, 0.0
        %v2607 = vmax.f32 %v2511, 0.0
        %v2608 = vmax.f32 %v2512, 0.0
        %v2609 = vmax.f32 %v2513, 0.0
        %2610 = vst [vmem:[%s331] sm:$0xff] %v2514
        %2611 = vst [vmem:[%s331 + $0x8] sm:$0xff] %v2515
        %vm2612 = vcmask 261120
        %2613 = vst.msk [vmem:[%s331 + $0x10] sm:$0xff] %vm2612, %v2516
        %2614 = vst [vmem:[%s331 + $0x18] sm:$0xff] %v2517
        %2615 = vst [vmem:[%s331 + $0x20] sm:$0xff] %v2518
        %2616 = vst.msk [vmem:[%s331 + $0x28] sm:$0xff] %vm2612, %v2519
        %2617 = vst [vmem:[%s331 + $0x30] sm:$0xff] %v2520
        %2618 = vst [vmem:[%s331 + $0x38] sm:$0xff] %v2521
        %2619 = vst.msk [vmem:[%s331 + $0x40] sm:$0xff] %vm2612, %v2522
        %2620 = vst [vmem:[%s331 + $0x48] sm:$0xff] %v2523
        %2621 = vst [vmem:[%s331 + $0x50] sm:$0xff] %v2524
        %2622 = vst.msk [vmem:[%s331 + $0x58] sm:$0xff] %vm2612, %v2525
        %2623 = vst [vmem:[%s331 + $0x60] sm:$0xff] %v2526
        %2624 = vst [vmem:[%s331 + $0x68] sm:$0xff] %v2527
        %2625 = vst.msk [vmem:[%s331 + $0x70] sm:$0xff] %vm2612, %v2528
        %2626 = vst [vmem:[%s331 + $0x78] sm:$0xff] %v2529
        %2627 = vst [vmem:[%s331 + $0x80] sm:$0xff] %v2530
        %2628 = vst.msk [vmem:[%s331 + $0x88] sm:$0xff] %vm2612, %v2531
        %2629 = vst [vmem:[%s331 + $0x90] sm:$0xff] %v2532
        %2630 = vst [vmem:[%s331 + $0x98] sm:$0xff] %v2533
        %2631 = vst.msk [vmem:[%s331 + $0xa0] sm:$0xff] %vm2612, %v2534
        %2632 = vst [vmem:[%s331 + $0xa8] sm:$0xff] %v2535
        %2633 = vst [vmem:[%s331 + $0xb0] sm:$0xff] %v2536
        %2634 = vst.msk [vmem:[%s331 + $0xb8] sm:$0xff] %vm2612, %v2537
        %2635 = vst [vmem:[%s331 + $0xc0] sm:$0xff] %v2538
        %2636 = vst [vmem:[%s331 + $0xc8] sm:$0xff] %v2539
        %2637 = vst.msk [vmem:[%s331 + $0xd0] sm:$0xff] %vm2612, %v2540
        %2638 = vst [vmem:[%s331 + $0xd8] sm:$0xff] %v2541
        %2639 = vst [vmem:[%s331 + $0xe0] sm:$0xff] %v2542
        %2640 = vst.msk [vmem:[%s331 + $0xe8] sm:$0xff] %vm2612, %v2543
        %2641 = vst [vmem:[%s331 + $0xf0] sm:$0xff] %v2544
        %2642 = vst [vmem:[%s331 + $0xf8] sm:$0xff] %v2545
        %2643 = vst.msk [vmem:[%s331 + $0x100] sm:$0xff] %vm2612, %v2546
        %2644 = vst [vmem:[%s331 + $0x108] sm:$0xff] %v2547
        %2645 = vst [vmem:[%s331 + $0x110] sm:$0xff] %v2548
        %2646 = vst.msk [vmem:[%s331 + $0x118] sm:$0xff] %vm2612, %v2549
        %2647 = vst [vmem:[%s331 + $0x120] sm:$0xff] %v2550
        %2648 = vst [vmem:[%s331 + $0x128] sm:$0xff] %v2551
        %2649 = vst.msk [vmem:[%s331 + $0x130] sm:$0xff] %vm2612, %v2552
        %2650 = vst [vmem:[%s331 + $0x138] sm:$0xff] %v2553
        %2651 = vst [vmem:[%s331 + $0x140] sm:$0xff] %v2554
        %2652 = vst.msk [vmem:[%s331 + $0x148] sm:$0xff] %vm2612, %v2555
        %2653 = vst [vmem:[%s331 + $0x150] sm:$0xff] %v2556
        %2654 = vst [vmem:[%s331 + $0x158] sm:$0xff] %v2557
        %2655 = vst.msk [vmem:[%s331 + $0x160] sm:$0xff] %vm2612, %v2558
        %2656 = vst [vmem:[%s331 + $0x168] sm:$0xff] %v2559
        %2657 = vst [vmem:[%s331 + $0x170] sm:$0xff] %v2560
        %2658 = vst.msk [vmem:[%s331 + $0x178] sm:$0xff] %vm2612, %v2561
        %2659 = vst [vmem:[%s331 + $0x180] sm:$0xff] %v2562
        %2660 = vst [vmem:[%s331 + $0x188] sm:$0xff] %v2563
        %2661 = vst.msk [vmem:[%s331 + $0x190] sm:$0xff] %vm2612, %v2564
        %2662 = vst [vmem:[%s331 + $0x198] sm:$0xff] %v2565
        %2663 = vst [vmem:[%s331 + $0x1a0] sm:$0xff] %v2566
        %2664 = vst.msk [vmem:[%s331 + $0x1a8] sm:$0xff] %vm2612, %v2567
        %2665 = vst [vmem:[%s331 + $0x1b0] sm:$0xff] %v2568
        %2666 = vst [vmem:[%s331 + $0x1b8] sm:$0xff] %v2569
        %2667 = vst.msk [vmem:[%s331 + $0x1c0] sm:$0xff] %vm2612, %v2570
        %2668 = vst [vmem:[%s331 + $0x1c8] sm:$0xff] %v2571
        %2669 = vst [vmem:[%s331 + $0x1d0] sm:$0xff] %v2572
        %2670 = vst.msk [vmem:[%s331 + $0x1d8] sm:$0xff] %vm2612, %v2573
        %2671 = vst [vmem:[%s331 + $0x1e0] sm:$0xff] %v2574
        %2672 = vst [vmem:[%s331 + $0x1e8] sm:$0xff] %v2575
        %2673 = vst.msk [vmem:[%s331 + $0x1f0] sm:$0xff] %vm2612, %v2576
        %2674 = vst [vmem:[%s331 + $0x1f8] sm:$0xff] %v2577
        %2675 = vst [vmem:[%s331 + $0x200] sm:$0xff] %v2578
        %2676 = vst.msk [vmem:[%s331 + $0x208] sm:$0xff] %vm2612, %v2579
        %2677 = vst [vmem:[%s331 + $0x210] sm:$0xff] %v2580
        %2678 = vst [vmem:[%s331 + $0x218] sm:$0xff] %v2581
        %2679 = vst.msk [vmem:[%s331 + $0x220] sm:$0xff] %vm2612, %v2582
        %2680 = vst [vmem:[%s331 + $0x228] sm:$0xff] %v2583
        %2681 = vst [vmem:[%s331 + $0x230] sm:$0xff] %v2584
        %2682 = vst.msk [vmem:[%s331 + $0x238] sm:$0xff] %vm2612, %v2585
        %2683 = vst [vmem:[%s331 + $0x240] sm:$0xff] %v2586
        %2684 = vst [vmem:[%s331 + $0x248] sm:$0xff] %v2587
        %2685 = vst.msk [vmem:[%s331 + $0x250] sm:$0xff] %vm2612, %v2588
        %2686 = vst [vmem:[%s331 + $0x258] sm:$0xff] %v2589
        %2687 = vst [vmem:[%s331 + $0x260] sm:$0xff] %v2590
        %2688 = vst.msk [vmem:[%s331 + $0x268] sm:$0xff] %vm2612, %v2591
        %2689 = vst [vmem:[%s331 + $0x270] sm:$0xff] %v2592
        %2690 = vst [vmem:[%s331 + $0x278] sm:$0xff] %v2593
        %2691 = vst.msk [vmem:[%s331 + $0x280] sm:$0xff] %vm2612, %v2594
        %2692 = vst [vmem:[%s331 + $0x288] sm:$0xff] %v2595
        %2693 = vst [vmem:[%s331 + $0x290] sm:$0xff] %v2596
        %2694 = vst.msk [vmem:[%s331 + $0x298] sm:$0xff] %vm2612, %v2597
        %2695 = vst [vmem:[%s331 + $0x2a0] sm:$0xff] %v2598
        %2696 = vst [vmem:[%s331 + $0x2a8] sm:$0xff] %v2599
        %2697 = vst.msk [vmem:[%s331 + $0x2b0] sm:$0xff] %vm2612, %v2600
        %2698 = vst [vmem:[%s331 + $0x2b8] sm:$0xff] %v2601
        %2699 = vst [vmem:[%s331 + $0x2c0] sm:$0xff] %v2602
        %2700 = vst.msk [vmem:[%s331 + $0x2c8] sm:$0xff] %vm2612, %v2603
        %2701 = vst [vmem:[%s331 + $0x2d0] sm:$0xff] %v2604
        %2702 = vst [vmem:[%s331 + $0x2d8] sm:$0xff] %v2605
        %2703 = vst.msk [vmem:[%s331 + $0x2e0] sm:$0xff] %vm2612, %v2606
        %2704 = vst [vmem:[%s331 + $0x2e8] sm:$0xff] %v2607
        %2705 = vst [vmem:[%s331 + $0x2f0] sm:$0xff] %v2608
        %2706 = vst.msk [vmem:[%s331 + $0x2f8] sm:$0xff] %vm2612, %v2609
        %s2707 = sand.u32 %s213, 1
        %s2708 = scalar_lea.sflag [#allocation3], %s2707
        %s2709 = sand.u32 %s213, 1
        %s2710 = smul.addr %s2709, 768
        %s2711 = scalar_lea.vmem [#allocation2], %s2710
        // Predicated region
        $region53: #{inception_resnet_b_forward.7} parent=51 // pred_check
          %p2712 = pneg %p223
        $region54: #{inception_resnet_b_forward.7} parent=51 // pred_check_branch
          %2714 = sbr.rel (%p2712) target = $region56
        $region55: #{inception_resnet_b_forward.7} parent=51 // pred_region
          %s2715 = smul.u32 32, %s22
          %s2717 = ssub.s32 12288, 12288
          %2718 = vsyncadd %s2708, %s2717
          %s2719 = smul.addr %s2715, 3
          %s2720 = smul.addr %s2719, 128
          %s2721 = scalar_lea.hbm %s8, %s2720
          %s2722 = sshll.u32 %s2711, 4
          %s2723 = int_to_ptr.vmem [resolvable:$true] %s2722
          %2728 = dma.vmem_to_hbm [thread:$0]  %s2723, 12288, %s2721, %s2708, 384, 384, 24
        $region56: #{inception_resnet_b_forward.7} parent=51 // pred_fallthru
          _
      $region52: #{inception_resnet_b_forward.7} parent=5 // pred_fallthru
        _
      %p2729 = scmp.le.s32.totalorder 2, %s17
      // Predicated region
      $region57: #{inception_resnet_b_forward.7} parent=5 // pred_check
        %p2730 = pneg %p2729
      $region58: #{inception_resnet_b_forward.7} parent=5 // pred_check_branch
        %2732 = sbr.rel (%p2730) target = $region60
      $region59: #{inception_resnet_b_forward.7} parent=5 // pred_region
        %s2733 = ssub.s32 %s17, 2
        // Predicated region
        $region61: #{inception_resnet_b_forward.7} parent=59 // pred_check
          %p2734 = pneg %p229
        $region62: #{inception_resnet_b_forward.7} parent=59 // pred_check_branch
          %2736 = sbr.rel (%p2734) target = $region64
        $region63: #{inception_resnet_b_forward.7} parent=59 // pred_region
          %s2737 = sand.u32 %s214, 1
          %s2738 = scalar_lea.sflag [#allocation3], %s2737
          %s2739 = sand.u32 %s214, 1
          %s2740 = smul.addr %s2739, 768
          %s2741 = scalar_lea.vmem [#allocation2], %s2740
          %2742 = dma.done %s2738, 12288
        $region64: #{inception_resnet_b_forward.7} parent=59 // pred_fallthru
          _
      $region60: #{inception_resnet_b_forward.7} parent=5 // pred_fallthru
        _
    $region6: #{inception_resnet_b_forward.7} parent=1 // loop_footer
      %s21 = sadd.s32 1, %s17
    $region7: #{inception_resnet_b_forward.7} parent=1 // loop_footer_branch
      %16 = sbr.rel target = $region3
    $region8: #{inception_resnet_b_forward.7} parent=1 // loop_exit
      _
    %2743 = vsyncpa [#allocation3], 1
    %s2744 = scalar_lea.sflag [#allocation3], 1
    %2745 = vsyncpa %s2744, 1

// kernel: inception_resnet_b_forward.6
$region0: #{inception_resnet_b_forward.6}
  #allocation0 [shape = 'u32[]', space=smem, size = 0x4, offset = 0x4, fixed_abs, tag = 'smem constant byte address 0x4 - core index']
  #allocation1 [shape = 'u32[144,128]{1,0:T(1,128)}', space=vmem, size = 0x12000, scoped, tag = 'internal scratch']
  #allocation2 [shape = 'bf16[22,16,40]{2,1,0:T(16,128)(2,1)}', space=vmem, size = 0x16000, scoped, tag = 'scratch operand']
  %s0 = inlined_call_operand.vmem [shape: bf16[2,16,16,40], index: 0, kind: input, shape index: {}]
  %s1 = inlined_call_operand.vmem [shape: bf16[7,40,48], index: 1, kind: input, shape index: {}]
  %s2 = inlined_call_operand.vmem [shape: f32[1,48], index: 2, kind: input, shape index: {}]
  %s3 = inlined_call_operand.vmem [shape: bf16[2,16,16,48], index: 3, kind: output, shape index: {}]
  %s4 = sld [smem:[#allocation0]]
  $region45: #{inception_resnet_b_forward.6} parent=0
    _
  %s6 = ssub.s32 1, %s4
  %s7 = scalar_select 0, %s6, %s4
  loop: start=0, step=1, limit=4
  $region2: #{inception_resnet_b_forward.6} parent=0 // loop_pre_header
    _
  $region3: #{inception_resnet_b_forward.6} parent=0 // loop_header
    %s9 = sphi 0, %s13
    %p10 = scmp.ge.s32.totalorder %s9, 4
    %s19 = sphi 0, %s21
    %s22 = sphi 0, %s19
    %s23 = sphi 0, %s22
    %s39 = sphi 0, %s23
    %s43 = sphi 0, %s43
    %s45 = sphi 0, %s43
    %s46 = sphi 0, %s45
    %s60 = sphi 0, %s46
    %s64 = sphi 0, %s64
    %s66 = sphi 0, %s64
    %s67 = sphi 0, %s66
    %s81 = sphi 0, %s67
    %s87 = sphi 0, %s89
    %s90 = sphi 0, %s87
    %s91 = sphi 0, %s90
    %s107 = sphi 0, %s91
  $region4: #{inception_resnet_b_forward.6} parent=0 // loop_header_branch
    %12 = sbr.rel (%p10) target = $region8
  $region5: #{inception_resnet_b_forward.6} parent=0 // loop_body
    %s14 = ssub.s32 %s9, 1
    %s15 = ssub.s32 %s9, 2
    %s16 = sadd.s32 %s9, 1
    %s17 = ssub.s32 %s9, %s16
    %p18 = scmp.eq.s32.totalorder %s17, 0
    %s20 = sadd.s32 %s19, 1
    %s21 = scalar_select %p18, %s19, %s20
    %p24 = pneg %p18
    %p25 = scmp.eq.s32.totalorder %s9, 1
    %p26 = por %p24, %p25
    %p27 = scmp.ne.s32.totalorder %s19, %s22
    %p28 = scmp.eq.s32.totalorder %s9, 0
    %p29 = por %p27, %p28
    %p30 = scmp.ne.s32.totalorder %s19, %s22
    %p31 = scmp.eq.s32.totalorder %s14, 1
    %p32 = por %p30, %p31
    %p33 = scmp.ne.s32.totalorder %s22, %s23
    %p34 = scmp.eq.s32.totalorder %s14, 0
    %p35 = por %p33, %p34
    %p36 = scmp.ne.s32.totalorder %s22, %s23
    %p37 = scmp.eq.s32.totalorder %s15, 1
    %p38 = por %p36, %p37
    %p40 = scmp.ne.s32.totalorder %s23, %s39
    %p41 = scmp.eq.s32.totalorder %s15, 0
    %p42 = por %p40, %p41
    %s44 = sadd.s32 %s43, 1
    %p47 = scmp.eq.s32.totalorder %s9, 1
    %p48 = scmp.ne.s32.totalorder %s43, %s45
    %p49 = scmp.eq.s32.totalorder %s9, 0
    %p50 = por %p48, %p49
    %p51 = scmp.ne.s32.totalorder %s43, %s45
    %p52 = scmp.eq.s32.totalorder %s14, 1
    %p53 = por %p51, %p52
    %p54 = scmp.ne.s32.totalorder %s45, %s46
    %p55 = scmp.eq.s32.totalorder %s14, 0
    %p56 = por %p54, %p55
    %p57 = scmp.ne.s32.totalorder %s45, %s46
    %p58 = scmp.eq.s32.totalorder %s15, 1
    %p59 = por %p57, %p58
    %p61 = scmp.ne.s32.totalorder %s46, %s60
    %p62 = scmp.eq.s32.totalorder %s15, 0
    %p63 = por %p61, %p62
    %s65 = sadd.s32 %s64, 1
    %p68 = scmp.eq.s32.totalorder %s9, 1
    %p69 = scmp.ne.s32.totalorder %s64, %s66
    %p70 = scmp.eq.s32.totalorder %s9, 0
    %p71 = por %p69, %p70
    %p72 = scmp.ne.s32.totalorder %s64, %s66
    %p73 = scmp.eq.s32.totalorder %s14, 1
    %p74 = por %p72, %p73
    %p75 = scmp.ne.s32.totalorder %s66, %s67
    %p76 = scmp.eq.s32.totalorder %s14, 0
    %p77 = por %p75, %p76
    %p78 = scmp.ne.s32.totalorder %s66, %s67
    %p79 = scmp.eq.s32.totalorder %s15, 1
    %p80 = por %p78, %p79
    %p82 = scmp.ne.s32.totalorder %s67, %s81
    %p83 = scmp.eq.s32.totalorder %s15, 0
    %p84 = por %p82, %p83
    %s85 = ssub.s32 %s9, %s16
    %p86 = scmp.eq.s32.totalorder %s85, 0
    %s88 = sadd.s32 %s87, 1
    %s89 = scalar_select %p86, %s87, %s88
    %p92 = pneg %p86
    %p93 = scmp.eq.s32.totalorder %s9, 1
    %p94 = por %p92, %p93
    %p95 = scmp.ne.s32.totalorder %s87, %s90
    %p96 = scmp.eq.s32.totalorder %s9, 0
    %p97 = por %p95, %p96
    %p98 = scmp.ne.s32.totalorder %s87, %s90
    %p99 = scmp.eq.s32.totalorder %s14, 1
    %p100 = por %p98, %p99
    %p101 = scmp.ne.s32.totalorder %s90, %s91
    %p102 = scmp.eq.s32.totalorder %s14, 0
    %p103 = por %p101, %p102
    %p104 = scmp.ne.s32.totalorder %s90, %s91
    %p105 = scmp.eq.s32.totalorder %s15, 1
    %p106 = por %p104, %p105
    %p108 = scmp.ne.s32.totalorder %s91, %s107
    %p109 = scmp.eq.s32.totalorder %s15, 0
    %p110 = por %p108, %p109
    %p111 = scmp.le.s32.totalorder 1, %s9
    %p112 = scmp.lt.s32.totalorder %s9, 3
    %p113 = pnand %p111, %p112
    %p114 = pneg %p113
    // Predicated region
    $region9: #{inception_resnet_b_forward.6} parent=5 // pred_check
      _
    $region10: #{inception_resnet_b_forward.6} parent=5 // pred_check_branch
      %116 = sbr.rel (%p113) target = $region12
    $region11: #{inception_resnet_b_forward.6} parent=5 // pred_region
      %s117 = ssub.s32 %s9, 1
      // Predicated region
      $region13: #{inception_resnet_b_forward.6} parent=11 // pred_check
        %p118 = pneg %p56
      $region14: #{inception_resnet_b_forward.6} parent=11 // pred_check_branch
        %120 = sbr.rel (%p118) target = $region16
      $region15: #{inception_resnet_b_forward.6} parent=11 // pred_region
        _
      $region16: #{inception_resnet_b_forward.6} parent=11 // pred_fallthru
        _
      // Predicated region
      $region17: #{inception_resnet_b_forward.6} parent=11 // pred_check
        %p121 = pneg %p77
      $region18: #{inception_resnet_b_forward.6} parent=11 // pred_check_branch
        %123 = sbr.rel (%p121) target = $region20
      $region19: #{inception_resnet_b_forward.6} parent=11 // pred_region
        _
      $region20: #{inception_resnet_b_forward.6} parent=11 // pred_fallthru
        _
    $region12: #{inception_resnet_b_forward.6} parent=5 // pred_fallthru
      _
    %p124 = scmp.lt.s32.totalorder %s9, 2
    // Predicated region
    $region21: #{inception_resnet_b_forward.6} parent=5 // pred_check
      %p125 = pneg %p124
    $region22: #{inception_resnet_b_forward.6} parent=5 // pred_check_branch
      %127 = sbr.rel (%p125) target = $region24
    $region23: #{inception_resnet_b_forward.6} parent=5 // pred_region
      // Predicated region
      $region25: #{inception_resnet_b_forward.6} parent=23 // pred_check
        %p128 = pneg %p29
      $region26: #{inception_resnet_b_forward.6} parent=23 // pred_check_branch
        %130 = sbr.rel (%p128) target = $region28
      $region27: #{inception_resnet_b_forward.6} parent=23 // pred_region
        %p131 = scmp.lt.s32.totalorder %s9, 1
        %s132 = scalar_select %p131, %s9, 1
        %s133 = smul.addr %s132, 32
        %s134 = smul.addr %s133, 4
        %s135 = scalar_lea.vmem %s0, %s134
      $region28: #{inception_resnet_b_forward.6} parent=23 // pred_fallthru
        _
    $region24: #{inception_resnet_b_forward.6} parent=5 // pred_fallthru
      _
    %p136 = scmp.le.s32.totalorder 1, %s9
    %p137 = scmp.lt.s32.totalorder %s9, 3
    %p138 = pnand %p136, %p137
    %p139 = pneg %p138
    // Predicated region
    $region29: #{inception_resnet_b_forward.6} parent=5 // pred_check
      _
    $region30: #{inception_resnet_b_forward.6} parent=5 // pred_check_branch
      %141 = sbr.rel (%p138) target = $region32
    $region31: #{inception_resnet_b_forward.6} parent=5 // pred_region
      %s142 = ssub.s32 %s9, 1
      %p143 = scmp.lt.s32.totalorder %s14, 1
      %s144 = scalar_select %p143, %s14, 1
      %s145 = smul.addr %s144, 32
      %s146 = smul.addr %s145, 4
      %s147 = scalar_lea.vmem %s0, %s146
      %p148 = pneg %p35
      %p149 = pneg %p32
      %p150 = pneg %p56
      %p151 = pneg %p53
      %p152 = pneg %p77
      %p153 = pneg %p74
      %p154 = pneg %p103
      %p155 = pneg %p100
      %p156 = scmp.lt.s32.totalorder %s14, 1
      %s157 = scalar_select %p156, %s14, 1
      %s158 = smul.addr %s157, 32
      %s159 = smul.addr %s158, 4
      %s160 = scalar_lea.vmem %s3, %s159
      %p161 = scmp.lt.s32.totalorder %s14, 1
      %s162 = scalar_select %p161, %s14, 1
      %s163 = smul.addr %s162, 32
      %s164 = smul.addr %s163, 4
      %s165 = scalar_lea.vmem %s0, %s164
      %p166 = scmp.lt.s32.totalorder %s14, 1
      %s167 = scalar_select %p166, %s14, 1
      %s168 = smul.addr %s167, 32
      %s169 = smul.addr %s168, 4
      %s170 = scalar_lea.vmem %s3, %s169
      %vm172 = vcmask 326656
      %173 = vst.msk [vmem:[#allocation2] sm:$0xff] %vm172, 0
      %174 = vst.msk [vmem:[#allocation2 + $0x8] sm:$0xff] %vm172, 0
      %175 = vst.msk [vmem:[#allocation2 + $0x10] sm:$0xff] %vm172, 0
      %s176 = scalar_lea.vmem [#allocation2], 152
      %177 = vst.msk [vmem:[%s176] sm:$0xff] %vm172, 0
      %178 = vst.msk [vmem:[%s176 + $0x8] sm:$0xff] %vm172, 0
      %179 = vst.msk [vmem:[%s176 + $0x10] sm:$0xff] %vm172, 0
      %v180 = vld [vmem:[%s165] sm:$0xf]
      %v181 = vld [vmem:[%s165 + $0x4] sm:$0xf]
      %v182 = vld [vmem:[%s165 + $0x8] sm:$0xf]
      %v183 = vld [vmem:[%s165 + $0xc] sm:$0xf]
      %v184 = vld [vmem:[%s165 + $0x10] sm:$0xf]
      %v185 = vld [vmem:[%s165 + $0x14] sm:$0xf]
      %v186 = vld [vmem:[%s165 + $0x18] sm:$0xf]
      %v187 = vld [vmem:[%s165 + $0x1c] sm:$0xf]
      %v188 = vld [vmem:[%s165 + $0x20] sm:$0xf]
      %v189 = vld [vmem:[%s165 + $0x24] sm:$0xf]
      %v190 = vld [vmem:[%s165 + $0x28] sm:$0xf]
      %v191 = vld [vmem:[%s165 + $0x2c] sm:$0xf]
      %v192 = vld [vmem:[%s165 + $0x30] sm:$0xf]
      %v193 = vld [vmem:[%s165 + $0x34] sm:$0xf]
      %v194 = vld [vmem:[%s165 + $0x38] sm:$0xf]
      %v195 = vld [vmem:[%s165 + $0x3c] sm:$0xf]
      %v196 = vld [vmem:[%s165 + $0x40] sm:$0xf]
      %v197 = vld [vmem:[%s165 + $0x44] sm:$0xf]
      %v198 = vld [vmem:[%s165 + $0x48] sm:$0xf]
      %v199 = vld [vmem:[%s165 + $0x4c] sm:$0xf]
      %v200 = vld [vmem:[%s165 + $0x50] sm:$0xf]
      %v201 = vld [vmem:[%s165 + $0x54] sm:$0xf]
      %v202 = vld [vmem:[%s165 + $0x58] sm:$0xf]
      %v203 = vld [vmem:[%s165 + $0x5c] sm:$0xf]
      %v204 = vld [vmem:[%s165 + $0x60] sm:$0xf]
      %v205 = vld [vmem:[%s165 + $0x64] sm:$0xf]
      %v206 = vld [vmem:[%s165 + $0x68] sm:$0xf]
      %v207 = vld [vmem:[%s165 + $0x6c] sm:$0xf]
      %v208 = vld [vmem:[%s165 + $0x70] sm:$0xf]
      %v209 = vld [vmem:[%s165 + $0x74] sm:$0xf]
      %v210 = vld [vmem:[%s165 + $0x78] sm:$0xf]
      %v211 = vld [vmem:[%s165 + $0x7c] sm:$0xf]
      %v244 = vunpack.c.l.b16 %v180
      %v245 = vunpack.c.l.b16 %v181
      %v246 = vunpack.c.l.b16 %v182
      %v247 = vunpack.c.l.b16 %v183
      %v248 = vunpack.c.l.b16 %v184
      %v249 = vunpack.c.l.b16 %v185
      %v250 = vunpack.c.l.b16 %v186
      %v251 = vunpack.c.l.b16 %v187
      %v252 = vunpack.c.l.b16 %v188
      %v253 = vunpack.c.l.b16 %v189
      %v254 = vunpack.c.l.b16 %v190
      %v255 = vunpack.c.l.b16 %v191
      %v256 = vunpack.c.l.b16 %v192
      %v257 = vunpack.c.l.b16 %v193
      %v258 = vunpack.c.l.b16 %v194
      %v259 = vunpack.c.l.b16 %v195
      %v260 = vunpack.c.l.b16 %v196
      %v261 = vunpack.c.l.b16 %v197
      %v262 = vunpack.c.l.b16 %v198
      %v263 = vunpack.c.l.b16 %v199
      %v264 = vunpack.c.l.b16 %v200
      %v265 = vunpack.c.l.b16 %v201
      %v266 = vunpack.c.l.b16 %v202
      %v267 = vunpack.c.l.b16 %v203
      %v268 = vunpack.c.l.b16 %v204
      %v269 = vunpack.c.l.b16 %v205
      %v270 = vunpack.c.l.b16 %v206
      %v271 = vunpack.c.l.b16 %v207
      %v272 = vunpack.c.l.b16 %v208
      %v273 = vunpack.c.l.b16 %v209
      %v274 = vunpack.c.l.b16 %v210
      %v275 = vunpack.c.l.b16 %v211
      %v276 = vpack.c.b16 %v245, %v244
      %v277 = vpack.c.b16 %v247, %v246
      %v278 = vpack.c.b16 %v249, %v248
      %v279 = vpack.c.b16 %v251, %v250
      %v280 = vpack.c.b16 %v253, %v252
      %v281 = vpack.c.b16 %v255, %v254
      %v282 = vpack.c.b16 %v257, %v256
      %v283 = vpack.c.b16 %v259, %v258
      %v284 = vpack.c.b16 %v261, %v260
      %v285 = vpack.c.b16 %v263, %v262
      %v286 = vpack.c.b16 %v265, %v264
      %v287 = vpack.c.b16 %v267, %v266
      %v288 = vpack.c.b16 %v269, %v268
      %v289 = vpack.c.b16 %v271, %v270
      %v290 = vpack.c.b16 %v273, %v272
      %v291 = vpack.c.b16 %v275, %v274
      %s308 = scalar_lea.vmem [#allocation2], 24
      %309 = vst.msk [vmem:[%s308] sm:$0xff] %vm172, %v276
      %310 = vst.msk [vmem:[%s308 + $0x8] sm:$0xff] %vm172, %v277
      %311 = vst.msk [vmem:[%s308 + $0x10] sm:$0xff] %vm172, %v278
      %312 = vst.msk [vmem:[%s308 + $0x18] sm:$0xff] %vm172, %v279
      %313 = vst.msk [vmem:[%s308 + $0x20] sm:$0xff] %vm172, %v280
      %314 = vst.msk [vmem:[%s308 + $0x28] sm:$0xff] %vm172, %v281
      %315 = vst.msk [vmem:[%s308 + $0x30] sm:$0xff] %vm172, %v282
      %316 = vst.msk [vmem:[%s308 + $0x38] sm:$0xff] %vm172, %v283
      %317 = vst.msk [vmem:[%s308 + $0x40] sm:$0xff] %vm172, %v284
      %318 = vst.msk [vmem:[%s308 + $0x48] sm:$0xff] %vm172, %v285
      %319 = vst.msk [vmem:[%s308 + $0x50] sm:$0xff] %vm172, %v286
      %320 = vst.msk [vmem:[%s308 + $0x58] sm:$0xff] %vm172, %v287
      %321 = vst.msk [vmem:[%s308 + $0x60] sm:$0xff] %vm172, %v288
      %322 = vst.msk [vmem:[%s308 + $0x68] sm:$0xff] %vm172, %v289
      %323 = vst.msk [vmem:[%s308 + $0x70] sm:$0xff] %vm172, %v290
      %324 = vst.msk [vmem:[%s308 + $0x78] sm:$0xff] %vm172, %v291
      %v325 = vld [vmem:[#allocation2] sm:$0xff]
      %v326 = vld [vmem:[#allocation2 + $0x8] sm:$0xff]
      %v327 = vld [vmem:[#allocation2 + $0x10] sm:$0xff]
      %v328 = vld [vmem:[#allocation2 + $0x18] sm:$0xff]
      %v329 = vld [vmem:[#allocation2 + $0x20] sm:$0xff]
      %v330 = vld [vmem:[#allocation2 + $0x28] sm:$0xff]
      %v331 = vld [vmem:[#allocation2 + $0x30] sm:$0xff]
      %v332 = vld [vmem:[#allocation2 + $0x38] sm:$0xff]
      %v333 = vld [vmem:[#allocation2 + $0x40] sm:$0xff]
      %v334 = vld [vmem:[#allocation2 + $0x48] sm:$0xff]
      %v335 = vld [vmem:[#allocation2 + $0x50] sm:$0xff]
      %v336 = vld [vmem:[#allocation2 + $0x58] sm:$0xff]
      %v337 = vld [vmem:[#allocation2 + $0x60] sm:$0xff]
      %v338 = vld [vmem:[#allocation2 + $0x68] sm:$0xff]
      %v339 = vld [vmem:[#allocation2 + $0x70] sm:$0xff]
      %v340 = vld [vmem:[#allocation2 + $0x78] sm:$0xff]
      %v341 = vld [vmem:[%s1] sm:$0xf]
      %v342 = vld [vmem:[%s1 + $0x4] sm:$0xf]
      %v343 = vld [vmem:[%s1 + $0x8] sm:$0xf]
      %v344 = vld [vmem:[%s1 + $0xc] sm:$0xf]
      %v345 = vld [vmem:[%s1 + $0x10] sm:$0xf]
      %s346 = scalar_lea.vmem [#allocation2], 8
      %v347 = vld [vmem:[%s346] sm:$0xff]
      %v348 = vld [vmem:[%s346 + $0x8] sm:$0xff]
      %v349 = vld [vmem:[%s346 + $0x10] sm:$0xff]
      %v350 = vld [vmem:[%s346 + $0x18] sm:$0xff]
      %v351 = vld [vmem:[%s346 + $0x20] sm:$0xff]
      %v352 = vld [vmem:[%s346 + $0x28] sm:$0xff]
      %v353 = vld [vmem:[%s346 + $0x30] sm:$0xff]
      %v354 = vld [vmem:[%s346 + $0x38] sm:$0xff]
      %v355 = vld [vmem:[%s346 + $0x40] sm:$0xff]
      %v356 = vld [vmem:[%s346 + $0x48] sm:$0xff]
      %v357 = vld [vmem:[%s346 + $0x50] sm:$0xff]
      %v358 = vld [vmem:[%s346 + $0x58] sm:$0xff]
      %v359 = vld [vmem:[%s346 + $0x60] sm:$0xff]
      %v360 = vld [vmem:[%s346 + $0x68] sm:$0xff]
      %v361 = vld [vmem:[%s346 + $0x70] sm:$0xff]
      %v362 = vld [vmem:[%s346 + $0x78] sm:$0xff]
      %s363 = scalar_lea.vmem %s1, 20
      %v364 = vld [vmem:[%s363] sm:$0xf]
      %v365 = vld [vmem:[%s363 + $0x4] sm:$0xf]
      %v366 = vld [vmem:[%s363 + $0x8] sm:$0xf]
      %v367 = vld [vmem:[%s363 + $0xc] sm:$0xf]
      %v368 = vld [vmem:[%s363 + $0x10] sm:$0xf]
      %v374 = vunpack.c.l.b16 %v364
      %v375 = vunpack.c.l.b16 %v365
      %v376 = vunpack.c.l.b16 %v366
      %v377 = vunpack.c.l.b16 %v367
      %v378 = vunpack.c.l.b16 %v368
      %v379 = vpack.c.b16 %v375, %v374
      %v380 = vpack.c.b16 %v377, %v376
      %v381 = vpack.c.b16 %v378, %v378
      %v385 = vsel %vm172, %v347, 0
      %v388 = vsel %vm172, %v348, 0
      %v391 = vsel %vm172, %v349, 0
      %v394 = vsel %vm172, %v350, 0
      %v397 = vsel %vm172, %v351, 0
      %v400 = vsel %vm172, %v352, 0
      %v403 = vsel %vm172, %v353, 0
      %v406 = vsel %vm172, %v354, 0
      %v409 = vsel %vm172, %v355, 0
      %v412 = vsel %vm172, %v356, 0
      %v415 = vsel %vm172, %v357, 0
      %v418 = vsel %vm172, %v358, 0
      %v421 = vsel %vm172, %v359, 0
      %v424 = vsel %vm172, %v360, 0
      %v427 = vsel %vm172, %v361, 0
      %v430 = vsel %vm172, %v362, 0
      %vm432 = vcmask 1043456
      %v434 = vsel %vm432, %v381, 0
      %436 = vmatprep.subr.bf16.mxu0 0
      %437 = vmatpush1.bf16.msra.mxu0 %v379
      %438 = vmatprep.subr.bf16.mxu0 0
      %439 = vmatpush1.bf16.msra.mxu0 %v380
      %440 = vmatprep.subr.bf16.mxu0 0
      %441 = vmatpush1.bf16.msra.mxu0 %v434
      %442 = vmatprep.subr.bf16.mxu0 0
      %443 = vmatpush1.bf16.msra.mxu0 0
      %444 = vmatprep.subr.bf16.mxu0 0
      %445 = vmatpush1.bf16.msra.mxu0 0
      %446 = vmatprep.subr.bf16.mxu0 0
      %447 = vmatpush1.bf16.msra.mxu0 0
      %448 = vmatprep.subr.bf16.mxu0 0
      %449 = vmatpush1.bf16.msra.mxu0 0
      %450 = vmatprep.subr.bf16.mxu0 0
      %451 = vmatpush1.bf16.msra.mxu0 0
      %452 = vmatprep.subr.bf16.mxu0 0
      %453 = vmatpush1.bf16.msra.mxu0 0
      %454 = vmatprep.subr.bf16.mxu0 0
      %455 = vmatpush1.bf16.msra.mxu0 0
      %456 = vmatprep.subr.bf16.mxu0 0
      %457 = vmatpush1.bf16.msra.mxu0 0
      %458 = vmatprep.subr.bf16.mxu0 0
      %459 = vmatpush1.bf16.msra.mxu0 0
      %460 = vmatprep.subr.bf16.mxu0 0
      %461 = vmatpush1.bf16.msra.mxu0 0
      %462 = vmatprep.subr.bf16.mxu0 0
      %463 = vmatpush1.bf16.msra.mxu0 0
      %464 = vmatprep.subr.bf16.mxu0 0
      %465 = vmatpush1.bf16.msra.mxu0 0
      %466 = vmatprep.subr.bf16.mxu0 0
      %467 = vmatpush1.bf16.msra.mxu0 0
      %468 = vmatprep.mubr.bf16.mxu0 0
      %469 = vmatmul.mubr.bf16.gmra.mrb[0].mxu0 %v385
      %v470 = vpop.f32.mrb[0].mxu0
      %v471 = vadd.f32 0.0, %v470
      %v472 = vpop.f32.mrb[0].mxu0
      %v473 = vpop.f32.mrb[0].mxu0
      %v474 = vadd.f32 0.0, %v473
      %v475 = vpop.f32.mrb[0].mxu0
      %476 = vmatprep.mubr.bf16.mxu0 0
      %477 = vmatmul.mubr.bf16.gmra.mrb[0].mxu0 %v388
      %v478 = vpop.f32.mrb[0].mxu0
      %v479 = vadd.f32 0.0, %v478
      %v480 = vpop.f32.mrb[0].mxu0
      %v481 = vpop.f32.mrb[0].mxu0
      %v482 = vadd.f32 0.0, %v481
      %v483 = vpop.f32.mrb[0].mxu0
      %484 = vmatprep.mubr.bf16.mxu0 0
      %485 = vmatmul.mubr.bf16.gmra.mrb[0].mxu0 %v391
      %v486 = vpop.f32.mrb[0].mxu0
      %v487 = vadd.f32 0.0, %v486
      %v488 = vpop.f32.mrb[0].mxu0
      %v489 = vpop.f32.mrb[0].mxu0
      %v490 = vadd.f32 0.0, %v489
      %v491 = vpop.f32.mrb[0].mxu0
      %492 = vmatprep.mubr.bf16.mxu0 0
      %493 = vmatmul.mubr.bf16.gmra.mrb[0].mxu0 %v394
      %v494 = vpop.f32.mrb[0].mxu0
      %v495 = vadd.f32 0.0, %v494
      %v496 = vpop.f32.mrb[0].mxu0
      %v497 = vpop.f32.mrb[0].mxu0
      %v498 = vadd.f32 0.0, %v497
      %v499 = vpop.f32.mrb[0].mxu0
      %500 = vmatprep.mubr.bf16.mxu0 0
      %501 = vmatmul.mubr.bf16.gmra.mrb[0].mxu0 %v397
      %v502 = vpop.f32.mrb[0].mxu0
      %v503 = vadd.f32 0.0, %v502
      %v504 = vpop.f32.mrb[0].mxu0
      %v505 = vpop.f32.mrb[0].mxu0
      %v506 = vadd.f32 0.0, %v505
      %v507 = vpop.f32.mrb[0].mxu0
      %508 = vmatprep.mubr.bf16.mxu0 0
      %509 = vmatmul.mubr.bf16.gmra.mrb[0].mxu0 %v400
      %v510 = vpop.f32.mrb[0].mxu0
      %v511 = vadd.f32 0.0, %v510
      %v512 = vpop.f32.mrb[0].mxu0
      %v513 = vpop.f32.mrb[0].mxu0
      %v514 = vadd.f32 0.0, %v513
      %v515 = vpop.f32.mrb[0].mxu0
      %516 = vmatprep.mubr.bf16.mxu0 0
      %517 = vmatmul.mubr.bf16.gmra.mrb[0].mxu0 %v403
      %v518 = vpop.f32.mrb[0].mxu0
      %v519 = vadd.f32 0.0, %v518
      %v520 = vpop.f32.mrb[0].mxu0
      %v521 = vpop.f32.mrb[0].mxu0
      %v522 = vadd.f32 0.0, %v521
      %v523 = vpop.f32.mrb[0].mxu0
      %524 = vmatprep.mubr.bf16.mxu0 0
      %525 = vmatmul.mubr.bf16.gmra.mrb[0].mxu0 %v406
      %v526 = vpop.f32.mrb[0].mxu0
      %v527 = vadd.f32 0.0, %v526
      %v528 = vpop.f32.mrb[0].mxu0
      %v529 = vpop.f32.mrb[0].mxu0
      %v530 = vadd.f32 0.0, %v529
      %v531 = vpop.f32.mrb[0].mxu0
      %532 = vmatprep.mubr.bf16.mxu0 0
      %533 = vmatmul.mubr.bf16.gmra.mrb[0].mxu0 %v409
      %v534 = vpop.f32.mrb[0].mxu0
      %v535 = vadd.f32 0.0, %v534
      %v536 = vpop.f32.mrb[0].mxu0
      %v537 = vpop.f32.mrb[0].mxu0
      %v538 = vadd.f32 0.0, %v537
      %v539 = vpop.f32.mrb[0].mxu0
      %540 = vmatprep.mubr.bf16.mxu0 0
      %541 = vmatmul.mubr.bf16.gmra.mrb[0].mxu0 %v412
      %v542 = vpop.f32.mrb[0].mxu0
      %v543 = vadd.f32 0.0, %v542
      %v544 = vpop.f32.mrb[0].mxu0
      %v545 = vpop.f32.mrb[0].mxu0
      %v546 = vadd.f32 0.0, %v545
      %v547 = vpop.f32.mrb[0].mxu0
      %548 = vmatprep.mubr.bf16.mxu0 0
      %549 = vmatmul.mubr.bf16.gmra.mrb[0].mxu0 %v415
      %v550 = vpop.f32.mrb[0].mxu0
      %v551 = vadd.f32 0.0, %v550
      %v552 = vpop.f32.mrb[0].mxu0
      %v553 = vpop.f32.mrb[0].mxu0
      %v554 = vadd.f32 0.0, %v553
      %v555 = vpop.f32.mrb[0].mxu0
      %556 = vmatprep.mubr.bf16.mxu0 0
      %557 = vmatmul.mubr.bf16.gmra.mrb[0].mxu0 %v418
      %v558 = vpop.f32.mrb[0].mxu0
      %v559 = vadd.f32 0.0, %v558
      %v560 = vpop.f32.mrb[0].mxu0
      %v561 = vpop.f32.mrb[0].mxu0
      %v562 = vadd.f32 0.0, %v561
      %v563 = vpop.f32.mrb[0].mxu0
      %564 = vmatprep.mubr.bf16.mxu0 0
      %565 = vmatmul.mubr.bf16.gmra.mrb[0].mxu0 %v421
      %v566 = vpop.f32.mrb[0].mxu0
      %v567 = vadd.f32 0.0, %v566
      %v568 = vpop.f32.mrb[0].mxu0
      %v569 = vpop.f32.mrb[0].mxu0
      %v570 = vadd.f32 0.0, %v569
      %v571 = vpop.f32.mrb[0].mxu0
      %572 = vmatprep.mubr.bf16.mxu0 0
      %573 = vmatmul.mubr.bf16.gmra.mrb[0].mxu0 %v424
      %v574 = vpop.f32.mrb[0].mxu0
      %v575 = vadd.f32 0.0, %v574
      %v576 = vpop.f32.mrb[0].mxu0
      %v577 = vpop.f32.mrb[0].mxu0
      %v578 = vadd.f32 0.0, %v577
      %v579 = vpop.f32.mrb[0].mxu0
      %580 = vmatprep.mubr.bf16.mxu0 0
      %581 = vmatmul.mubr.bf16.gmra.mrb[0].mxu0 %v427
      %v582 = vpop.f32.mrb[0].mxu0
      %v583 = vadd.f32 0.0, %v582
      %v584 = vpop.f32.mrb[0].mxu0
      %v585 = vpop.f32.mrb[0].mxu0
      %v586 = vadd.f32 0.0, %v585
      %v587 = vpop.f32.mrb[0].mxu0
      %588 = vmatprep.mubr.bf16.mxu0 0
      %589 = vmatmul.mubr.bf16.gmra.mrb[0].mxu0 %v430
      %v590 = vpop.f32.mrb[0].mxu0
      %v591 = vadd.f32 0.0, %v590
      %v592 = vpop.f32.mrb[0].mxu0
      %v593 = vpop.f32.mrb[0].mxu0
      %v594 = vadd.f32 0.0, %v593
      %v595 = vpop.f32.mrb[0].mxu0
      %596 = vdwg.mxu0
      %v602 = vunpack.c.l.b16 %v341
      %v603 = vunpack.c.l.b16 %v342
      %v604 = vunpack.c.l.b16 %v343
      %v605 = vunpack.c.l.b16 %v344
      %v606 = vunpack.c.l.b16 %v345
      %v607 = vpack.c.b16 %v603, %v602
      %v608 = vpack.c.b16 %v605, %v604
      %v609 = vpack.c.b16 %v606, %v606
      %v613 = vsel %vm172, %v325, 0
      %v616 = vsel %vm172, %v326, 0
      %v619 = vsel %vm172, %v327, 0
      %v622 = vsel %vm172, %v328, 0
      %v625 = vsel %vm172, %v329, 0
      %v628 = vsel %vm172, %v330, 0
      %v631 = vsel %vm172, %v331, 0
      %v634 = vsel %vm172, %v332, 0
      %v637 = vsel %vm172, %v333, 0
      %v640 = vsel %vm172, %v334, 0
      %v643 = vsel %vm172, %v335, 0
      %v646 = vsel %vm172, %v336, 0
      %v649 = vsel %vm172, %v337, 0
      %v652 = vsel %vm172, %v338, 0
      %v655 = vsel %vm172, %v339, 0
      %v658 = vsel %vm172, %v340, 0
      %v661 = vsel %vm432, %v609, 0
      %663 = vmatprep.subr.bf16.mxu0 0
      %664 = vmatpush1.bf16.msra.mxu0 %v607
      %665 = vmatprep.subr.bf16.mxu0 0
      %666 = vmatpush1.bf16.msra.mxu0 %v608
      %667 = vmatprep.subr.bf16.mxu0 0
      %668 = vmatpush1.bf16.msra.mxu0 %v661
      %669 = vmatprep.subr.bf16.mxu0 0
      %670 = vmatpush1.bf16.msra.mxu0 0
      %671 = vmatprep.subr.bf16.mxu0 0
      %672 = vmatpush1.bf16.msra.mxu0 0
      %673 = vmatprep.subr.bf16.mxu0 0
      %674 = vmatpush1.bf16.msra.mxu0 0
      %675 = vmatprep.subr.bf16.mxu0 0
      %676 = vmatpush1.bf16.msra.mxu0 0
      %677 = vmatprep.subr.bf16.mxu0 0
      %678 = vmatpush1.bf16.msra.mxu0 0
      %679 = vmatprep.subr.bf16.mxu0 0
      %680 = vmatpush1.bf16.msra.mxu0 0
      %681 = vmatprep.subr.bf16.mxu0 0
      %682 = vmatpush1.bf16.msra.mxu0 0
      %683 = vmatprep.subr.bf16.mxu0 0
      %684 = vmatpush1.bf16.msra.mxu0 0
      %685 = vmatprep.subr.bf16.mxu0 0
      %686 = vmatpush1.bf16.msra.mxu0 0
      %687 = vmatprep.subr.bf16.mxu0 0
      %688 = vmatpush1.bf16.msra.mxu0 0
      %689 = vmatprep.subr.bf16.mxu0 0
      %690 = vmatpush1.bf16.msra.mxu0 0
      %691 = vmatprep.subr.bf16.mxu0 0
      %692 = vmatpush1.bf16.msra.mxu0 0
      %693 = vmatprep.subr.bf16.mxu0 0
      %694 = vmatpush1.bf16.msra.mxu0 0
      %695 = vmatprep.mubr.bf16.mxu0 0
      %696 = vmatmul.mubr.bf16.gmra.mrb[0].mxu0 %v613
      %v697 = vpop.f32.mrb[0].mxu0
      %v698 = vadd.f32 %v471, %v697
      %v699 = vpop.f32.mrb[0].mxu0
      %v700 = vpop.f32.mrb[0].mxu0
      %v701 = vadd.f32 %v474, %v700
      %v702 = vpop.f32.mrb[0].mxu0
      %703 = vmatprep.mubr.bf16.mxu0 0
      %704 = vmatmul.mubr.bf16.gmra.mrb[0].mxu0 %v616
      %v705 = vpop.f32.mrb[0].mxu0
      %v706 = vadd.f32 %v479, %v705
      %v707 = vpop.f32.mrb[0].mxu0
      %v708 = vpop.f32.mrb[0].mxu0
      %v709 = vadd.f32 %v482, %v708
      %v710 = vpop.f32.mrb[0].mxu0
      %711 = vmatprep.mubr.bf16.mxu0 0
      %712 = vmatmul.mubr.bf16.gmra.mrb[0].mxu0 %v619
      %v713 = vpop.f32.mrb[0].mxu0
      %v714 = vadd.f32 %v487, %v713
      %v715 = vpop.f32.mrb[0].mxu0
      %v716 = vpop.f32.mrb[0].mxu0
      %v717 = vadd.f32 %v490, %v716
      %v718 = vpop.f32.mrb[0].mxu0
      %719 = vmatprep.mubr.bf16.mxu0 0
      %720 = vmatmul.mubr.bf16.gmra.mrb[0].mxu0 %v622
      %v721 = vpop.f32.mrb[0].mxu0
      %v722 = vadd.f32 %v495, %v721
      %v723 = vpop.f32.mrb[0].mxu0
      %v724 = vpop.f32.mrb[0].mxu0
      %v725 = vadd.f32 %v498, %v724
      %v726 = vpop.f32.mrb[0].mxu0
      %727 = vmatprep.mubr.bf16.mxu0 0
      %728 = vmatmul.mubr.bf16.gmra.mrb[0].mxu0 %v625
      %v729 = vpop.f32.mrb[0].mxu0
      %v730 = vadd.f32 %v503, %v729
      %v731 = vpop.f32.mrb[0].mxu0
      %v732 = vpop.f32.mrb[0].mxu0
      %v733 = vadd.f32 %v506, %v732
      %v734 = vpop.f32.mrb[0].mxu0
      %735 = vmatprep.mubr.bf16.mxu0 0
      %736 = vmatmul.mubr.bf16.gmra.mrb[0].mxu0 %v628
      %v737 = vpop.f32.mrb[0].mxu0
      %v738 = vadd.f32 %v511, %v737
      %v739 = vpop.f32.mrb[0].mxu0
      %v740 = vpop.f32.mrb[0].mxu0
      %v741 = vadd.f32 %v514, %v740
      %v742 = vpop.f32.mrb[0].mxu0
      %743 = vmatprep.mubr.bf16.mxu0 0
      %744 = vmatmul.mubr.bf16.gmra.mrb[0].mxu0 %v631
      %v745 = vpop.f32.mrb[0].mxu0
      %v746 = vadd.f32 %v519, %v745
      %v747 = vpop.f32.mrb[0].mxu0
      %v748 = vpop.f32.mrb[0].mxu0
      %v749 = vadd.f32 %v522, %v748
      %v750 = vpop.f32.mrb[0].mxu0
      %751 = vmatprep.mubr.bf16.mxu0 0
      %752 = vmatmul.mubr.bf16.gmra.mrb[0].mxu0 %v634
      %v753 = vpop.f32.mrb[0].mxu0
      %v754 = vadd.f32 %v527, %v753
      %v755 = vpop.f32.mrb[0].mxu0
      %v756 = vpop.f32.mrb[0].mxu0
      %v757 = vadd.f32 %v530, %v756
      %v758 = vpop.f32.mrb[0].mxu0
      %759 = vmatprep.mubr.bf16.mxu0 0
      %760 = vmatmul.mubr.bf16.gmra.mrb[0].mxu0 %v637
      %v761 = vpop.f32.mrb[0].mxu0
      %v762 = vadd.f32 %v535, %v761
      %v763 = vpop.f32.mrb[0].mxu0
      %v764 = vpop.f32.mrb[0].mxu0
      %v765 = vadd.f32 %v538, %v764
      %v766 = vpop.f32.mrb[0].mxu0
      %767 = vmatprep.mubr.bf16.mxu0 0
      %768 = vmatmul.mubr.bf16.gmra.mrb[0].mxu0 %v640
      %v769 = vpop.f32.mrb[0].mxu0
      %v770 = vadd.f32 %v543, %v769
      %v771 = vpop.f32.mrb[0].mxu0
      %v772 = vpop.f32.mrb[0].mxu0
      %v773 = vadd.f32 %v546, %v772
      %v774 = vpop.f32.mrb[0].mxu0
      %775 = vmatprep.mubr.bf16.mxu0 0
      %776 = vmatmul.mubr.bf16.gmra.mrb[0].mxu0 %v643
      %v777 = vpop.f32.mrb[0].mxu0
      %v778 = vadd.f32 %v551, %v777
      %v779 = vpop.f32.mrb[0].mxu0
      %v780 = vpop.f32.mrb[0].mxu0
      %v781 = vadd.f32 %v554, %v780
      %v782 = vpop.f32.mrb[0].mxu0
      %783 = vmatprep.mubr.bf16.mxu0 0
      %784 = vmatmul.mubr.bf16.gmra.mrb[0].mxu0 %v646
      %v785 = vpop.f32.mrb[0].mxu0
      %v786 = vadd.f32 %v559, %v785
      %v787 = vpop.f32.mrb[0].mxu0
      %v788 = vpop.f32.mrb[0].mxu0
      %v789 = vadd.f32 %v562, %v788
      %v790 = vpop.f32.mrb[0].mxu0
      %791 = vmatprep.mubr.bf16.mxu0 0
      %792 = vmatmul.mubr.bf16.gmra.mrb[0].mxu0 %v649
      %v793 = vpop.f32.mrb[0].mxu0
      %v794 = vadd.f32 %v567, %v793
      %v795 = vpop.f32.mrb[0].mxu0
      %v796 = vpop.f32.mrb[0].mxu0
      %v797 = vadd.f32 %v570, %v796
      %v798 = vpop.f32.mrb[0].mxu0
      %799 = vmatprep.mubr.bf16.mxu0 0
      %800 = vmatmul.mubr.bf16.gmra.mrb[0].mxu0 %v652
      %v801 = vpop.f32.mrb[0].mxu0
      %v802 = vadd.f32 %v575, %v801
      %v803 = vpop.f32.mrb[0].mxu0
      %v804 = vpop.f32.mrb[0].mxu0
      %v805 = vadd.f32 %v578, %v804
      %v806 = vpop.f32.mrb[0].mxu0
      %807 = vmatprep.mubr.bf16.mxu0 0
      %808 = vmatmul.mubr.bf16.gmra.mrb[0].mxu0 %v655
      %v809 = vpop.f32.mrb[0].mxu0
      %v810 = vadd.f32 %v583, %v809
      %v811 = vpop.f32.mrb[0].mxu0
      %v812 = vpop.f32.mrb[0].mxu0
      %v813 = vadd.f32 %v586, %v812
      %v814 = vpop.f32.mrb[0].mxu0
      %815 = vmatprep.mubr.bf16.mxu0 0
      %816 = vmatmul.mubr.bf16.gmra.mrb[0].mxu0 %v658
      %v817 = vpop.f32.mrb[0].mxu0
      %v818 = vadd.f32 %v591, %v817
      %v819 = vpop.f32.mrb[0].mxu0
      %v820 = vpop.f32.mrb[0].mxu0
      %v821 = vadd.f32 %v594, %v820
      %v822 = vpop.f32.mrb[0].mxu0
      %823 = vdwg.mxu0
      %s824 = scalar_lea.vmem [#allocation2], 16
      %v825 = vld [vmem:[%s824] sm:$0xff]
      %v826 = vld [vmem:[%s824 + $0x8] sm:$0xff]
      %v827 = vld [vmem:[%s824 + $0x10] sm:$0xff]
      %v828 = vld [vmem:[%s824 + $0x18] sm:$0xff]
      %v829 = vld [vmem:[%s824 + $0x20] sm:$0xff]
      %v830 = vld [vmem:[%s824 + $0x28] sm:$0xff]
      %v831 = vld [vmem:[%s824 + $0x30] sm:$0xff]
      %v832 = vld [vmem:[%s824 + $0x38] sm:$0xff]
      %v833 = vld [vmem:[%s824 + $0x40] sm:$0xff]
      %v834 = vld [vmem:[%s824 + $0x48] sm:$0xff]
      %v835 = vld [vmem:[%s824 + $0x50] sm:$0xff]
      %v836 = vld [vmem:[%s824 + $0x58] sm:$0xff]
      %v837 = vld [vmem:[%s824 + $0x60] sm:$0xff]
      %v838 = vld [vmem:[%s824 + $0x68] sm:$0xff]
      %v839 = vld [vmem:[%s824 + $0x70] sm:$0xff]
      %v840 = vld [vmem:[%s824 + $0x78] sm:$0xff]
      %s841 = scalar_lea.vmem %s1, 40
      %v842 = vld [vmem:[%s841] sm:$0xf]
      %v843 = vld [vmem:[%s841 + $0x4] sm:$0xf]
      %v844 = vld [vmem:[%s841 + $0x8] sm:$0xf]
      %v845 = vld [vmem:[%s841 + $0xc] sm:$0xf]
      %v846 = vld [vmem:[%s841 + $0x10] sm:$0xf]
      %v852 = vunpack.c.l.b16 %v842
      %v853 = vunpack.c.l.b16 %v843
      %v854 = vunpack.c.l.b16 %v844
      %v855 = vunpack.c.l.b16 %v845
      %v856 = vunpack.c.l.b16 %v846
      %v857 = vpack.c.b16 %v853, %v852
      %v858 = vpack.c.b16 %v855, %v854
      %v859 = vpack.c.b16 %v856, %v856
      %v863 = vsel %vm172, %v825, 0
      %v866 = vsel %vm172, %v826, 0
      %v869 = vsel %vm172, %v827, 0
      %v872 = vsel %vm172, %v828, 0
      %v875 = vsel %vm172, %v829, 0
      %v878 = vsel %vm172, %v830, 0
      %v881 = vsel %vm172, %v831, 0
      %v884 = vsel %vm172, %v832, 0
      %v887 = vsel %vm172, %v833, 0
      %v890 = vsel %vm172, %v834, 0
      %v893 = vsel %vm172, %v835, 0
      %v896 = vsel %vm172, %v836, 0
      %v899 = vsel %vm172, %v837, 0
      %v902 = vsel %vm172, %v838, 0
      %v905 = vsel %vm172, %v839, 0
      %v908 = vsel %vm172, %v840, 0
      %v911 = vsel %vm432, %v859, 0
      %913 = vmatprep.subr.bf16.mxu0 0
      %914 = vmatpush1.bf16.msra.mxu0 %v857
      %915 = vmatprep.subr.bf16.mxu0 0
      %916 = vmatpush1.bf16.msra.mxu0 %v858
      %917 = vmatprep.subr.bf16.mxu0 0
      %918 = vmatpush1.bf16.msra.mxu0 %v911
      %919 = vmatprep.subr.bf16.mxu0 0
      %920 = vmatpush1.bf16.msra.mxu0 0
      %921 = vmatprep.subr.bf16.mxu0 0
      %922 = vmatpush1.bf16.msra.mxu0 0
      %923 = vmatprep.subr.bf16.mxu0 0
      %924 = vmatpush1.bf16.msra.mxu0 0
      %925 = vmatprep.subr.bf16.mxu0 0
      %926 = vmatpush1.bf16.msra.mxu0 0
      %927 = vmatprep.subr.bf16.mxu0 0
      %928 = vmatpush1.bf16.msra.mxu0 0
      %929 = vmatprep.subr.bf16.mxu0 0
      %930 = vmatpush1.bf16.msra.mxu0 0
      %931 = vmatprep.subr.bf16.mxu0 0
      %932 = vmatpush1.bf16.msra.mxu0 0
      %933 = vmatprep.subr.bf16.mxu0 0
      %934 = vmatpush1.bf16.msra.mxu0 0
      %935 = vmatprep.subr.bf16.mxu0 0
      %936 = vmatpush1.bf16.msra.mxu0 0
      %937 = vmatprep.subr.bf16.mxu0 0
      %938 = vmatpush1.bf16.msra.mxu0 0
      %939 = vmatprep.subr.bf16.mxu0 0
      %940 = vmatpush1.bf16.msra.mxu0 0
      %941 = vmatprep.subr.bf16.mxu0 0
      %942 = vmatpush1.bf16.msra.mxu0 0
      %943 = vmatprep.subr.bf16.mxu0 0
      %944 = vmatpush1.bf16.msra.mxu0 0
      %945 = vmatprep.mubr.bf16.mxu0 0
      %946 = vmatmul.mubr.bf16.gmra.mrb[0].mxu0 %v863
      %v947 = vpop.f32.mrb[0].mxu0
      %v948 = vadd.f32 0.0, %v947
      %v949 = vpop.f32.mrb[0].mxu0
      %v950 = vpop.f32.mrb[0].mxu0
      %v951 = vadd.f32 0.0, %v950
      %v952 = vpop.f32.mrb[0].mxu0
      %953 = vmatprep.mubr.bf16.mxu0 0
      %954 = vmatmul.mubr.bf16.gmra.mrb[0].mxu0 %v866
      %v955 = vpop.f32.mrb[0].mxu0
      %v956 = vadd.f32 0.0, %v955
      %v957 = vpop.f32.mrb[0].mxu0
      %v958 = vpop.f32.mrb[0].mxu0
      %v959 = vadd.f32 0.0, %v958
      %v960 = vpop.f32.mrb[0].mxu0
      %961 = vmatprep.mubr.bf16.mxu0 0
      %962 = vmatmul.mubr.bf16.gmra.mrb[0].mxu0 %v869
      %v963 = vpop.f32.mrb[0].mxu0
      %v964 = vadd.f32 0.0, %v963
      %v965 = vpop.f32.mrb[0].mxu0
      %v966 = vpop.f32.mrb[0].mxu0
      %v967 = vadd.f32 0.0, %v966
      %v968 = vpop.f32.mrb[0].mxu0
      %969 = vmatprep.mubr.bf16.mxu0 0
      %970 = vmatmul.mubr.bf16.gmra.mrb[0].mxu0 %v872
      %v971 = vpop.f32.mrb[0].mxu0
      %v972 = vadd.f32 0.0, %v971
      %v973 = vpop.f32.mrb[0].mxu0
      %v974 = vpop.f32.mrb[0].mxu0
      %v975 = vadd.f32 0.0, %v974
      %v976 = vpop.f32.mrb[0].mxu0
      %977 = vmatprep.mubr.bf16.mxu0 0
      %978 = vmatmul.mubr.bf16.gmra.mrb[0].mxu0 %v875
      %v979 = vpop.f32.mrb[0].mxu0
      %v980 = vadd.f32 0.0, %v979
      %v981 = vpop.f32.mrb[0].mxu0
      %v982 = vpop.f32.mrb[0].mxu0
      %v983 = vadd.f32 0.0, %v982
      %v984 = vpop.f32.mrb[0].mxu0
      %985 = vmatprep.mubr.bf16.mxu0 0
      %986 = vmatmul.mubr.bf16.gmra.mrb[0].mxu0 %v878
      %v987 = vpop.f32.mrb[0].mxu0
      %v988 = vadd.f32 0.0, %v987
      %v989 = vpop.f32.mrb[0].mxu0
      %v990 = vpop.f32.mrb[0].mxu0
      %v991 = vadd.f32 0.0, %v990
      %v992 = vpop.f32.mrb[0].mxu0
      %993 = vmatprep.mubr.bf16.mxu0 0
      %994 = vmatmul.mubr.bf16.gmra.mrb[0].mxu0 %v881
      %v995 = vpop.f32.mrb[0].mxu0
      %v996 = vadd.f32 0.0, %v995
      %v997 = vpop.f32.mrb[0].mxu0
      %v998 = vpop.f32.mrb[0].mxu0
      %v999 = vadd.f32 0.0, %v998
      %v1000 = vpop.f32.mrb[0].mxu0
      %1001 = vmatprep.mubr.bf16.mxu0 0
      %1002 = vmatmul.mubr.bf16.gmra.mrb[0].mxu0 %v884
      %v1003 = vpop.f32.mrb[0].mxu0
      %v1004 = vadd.f32 0.0, %v1003
      %v1005 = vpop.f32.mrb[0].mxu0
      %v1006 = vpop.f32.mrb[0].mxu0
      %v1007 = vadd.f32 0.0, %v1006
      %v1008 = vpop.f32.mrb[0].mxu0
      %1009 = vmatprep.mubr.bf16.mxu0 0
      %1010 = vmatmul.mubr.bf16.gmra.mrb[0].mxu0 %v887
      %v1011 = vpop.f32.mrb[0].mxu0
      %v1012 = vadd.f32 0.0, %v1011
      %v1013 = vpop.f32.mrb[0].mxu0
      %v1014 = vpop.f32.mrb[0].mxu0
      %v1015 = vadd.f32 0.0, %v1014
      %v1016 = vpop.f32.mrb[0].mxu0
      %1017 = vmatprep.mubr.bf16.mxu0 0
      %1018 = vmatmul.mubr.bf16.gmra.mrb[0].mxu0 %v890
      %v1019 = vpop.f32.mrb[0].mxu0
      %v1020 = vadd.f32 0.0, %v1019
      %v1021 = vpop.f32.mrb[0].mxu0
      %v1022 = vpop.f32.mrb[0].mxu0
      %v1023 = vadd.f32 0.0, %v1022
      %v1024 = vpop.f32.mrb[0].mxu0
      %1025 = vmatprep.mubr.bf16.mxu0 0
      %1026 = vmatmul.mubr.bf16.gmra.mrb[0].mxu0 %v893
      %v1027 = vpop.f32.mrb[0].mxu0
      %v1028 = vadd.f32 0.0, %v1027
      %v1029 = vpop.f32.mrb[0].mxu0
      %v1030 = vpop.f32.mrb[0].mxu0
      %v1031 = vadd.f32 0.0, %v1030
      %v1032 = vpop.f32.mrb[0].mxu0
      %1033 = vmatprep.mubr.bf16.mxu0 0
      %1034 = vmatmul.mubr.bf16.gmra.mrb[0].mxu0 %v896
      %v1035 = vpop.f32.mrb[0].mxu0
      %v1036 = vadd.f32 0.0, %v1035
      %v1037 = vpop.f32.mrb[0].mxu0
      %v1038 = vpop.f32.mrb[0].mxu0
      %v1039 = vadd.f32 0.0, %v1038
      %v1040 = vpop.f32.mrb[0].mxu0
      %1041 = vmatprep.mubr.bf16.mxu0 0
      %1042 = vmatmul.mubr.bf16.gmra.mrb[0].mxu0 %v899
      %v1043 = vpop.f32.mrb[0].mxu0
      %v1044 = vadd.f32 0.0, %v1043
      %v1045 = vpop.f32.mrb[0].mxu0
      %v1046 = vpop.f32.mrb[0].mxu0
      %v1047 = vadd.f32 0.0, %v1046
      %v1048 = vpop.f32.mrb[0].mxu0
      %1049 = vmatprep.mubr.bf16.mxu0 0
      %1050 = vmatmul.mubr.bf16.gmra.mrb[0].mxu0 %v902
      %v1051 = vpop.f32.mrb[0].mxu0
      %v1052 = vadd.f32 0.0, %v1051
      %v1053 = vpop.f32.mrb[0].mxu0
      %v1054 = vpop.f32.mrb[0].mxu0
      %v1055 = vadd.f32 0.0, %v1054
      %v1056 = vpop.f32.mrb[0].mxu0
      %1057 = vmatprep.mubr.bf16.mxu0 0
      %1058 = vmatmul.mubr.bf16.gmra.mrb[0].mxu0 %v905
      %v1059 = vpop.f32.mrb[0].mxu0
      %v1060 = vadd.f32 0.0, %v1059
      %v1061 = vpop.f32.mrb[0].mxu0
      %v1062 = vpop.f32.mrb[0].mxu0
      %v1063 = vadd.f32 0.0, %v1062
      %v1064 = vpop.f32.mrb[0].mxu0
      %1065 = vmatprep.mubr.bf16.mxu0 0
      %1066 = vmatmul.mubr.bf16.gmra.mrb[0].mxu0 %v908
      %v1067 = vpop.f32.mrb[0].mxu0
      %v1068 = vadd.f32 0.0, %v1067
      %v1069 = vpop.f32.mrb[0].mxu0
      %v1070 = vpop.f32.mrb[0].mxu0
      %v1071 = vadd.f32 0.0, %v1070
      %v1072 = vpop.f32.mrb[0].mxu0
      %1073 = vdwg.mxu0
      %v1074 = vadd.f32 %v698, %v948
      %v1075 = vadd.f32 %v701, %v951
      %v1076 = vadd.f32 %v706, %v956
      %v1077 = vadd.f32 %v709, %v959
      %v1078 = vadd.f32 %v714, %v964
      %v1079 = vadd.f32 %v717, %v967
      %v1080 = vadd.f32 %v722, %v972
      %v1081 = vadd.f32 %v725, %v975
      %v1082 = vadd.f32 %v730, %v980
      %v1083 = vadd.f32 %v733, %v983
      %v1084 = vadd.f32 %v738, %v988
      %v1085 = vadd.f32 %v741, %v991
      %v1086 = vadd.f32 %v746, %v996
      %v1087 = vadd.f32 %v749, %v999
      %v1088 = vadd.f32 %v754, %v1004
      %v1089 = vadd.f32 %v757, %v1007
      %v1090 = vadd.f32 %v762, %v1012
      %v1091 = vadd.f32 %v765, %v1015
      %v1092 = vadd.f32 %v770, %v1020
      %v1093 = vadd.f32 %v773, %v1023
      %v1094 = vadd.f32 %v778, %v1028
      %v1095 = vadd.f32 %v781, %v1031
      %v1096 = vadd.f32 %v786, %v1036
      %v1097 = vadd.f32 %v789, %v1039
      %v1098 = vadd.f32 %v794, %v1044
      %v1099 = vadd.f32 %v797, %v1047
      %v1100 = vadd.f32 %v802, %v1052
      %v1101 = vadd.f32 %v805, %v1055
      %v1102 = vadd.f32 %v810, %v1060
      %v1103 = vadd.f32 %v813, %v1063
      %v1104 = vadd.f32 %v818, %v1068
      %v1105 = vadd.f32 %v821, %v1071
      %v1106 = vld [vmem:[%s308] sm:$0xff]
      %v1107 = vld [vmem:[%s308 + $0x8] sm:$0xff]
      %v1108 = vld [vmem:[%s308 + $0x10] sm:$0xff]
      %v1109 = vld [vmem:[%s308 + $0x18] sm:$0xff]
      %v1110 = vld [vmem:[%s308 + $0x20] sm:$0xff]
      %v1111 = vld [vmem:[%s308 + $0x28] sm:$0xff]
      %v1112 = vld [vmem:[%s308 + $0x30] sm:$0xff]
      %v1113 = vld [vmem:[%s308 + $0x38] sm:$0xff]
      %v1114 = vld [vmem:[%s308 + $0x40] sm:$0xff]
      %v1115 = vld [vmem:[%s308 + $0x48] sm:$0xff]
      %v1116 = vld [vmem:[%s308 + $0x50] sm:$0xff]
      %v1117 = vld [vmem:[%s308 + $0x58] sm:$0xff]
      %v1118 = vld [vmem:[%s308 + $0x60] sm:$0xff]
      %v1119 = vld [vmem:[%s308 + $0x68] sm:$0xff]
      %v1120 = vld [vmem:[%s308 + $0x70] sm:$0xff]
      %v1121 = vld [vmem:[%s308 + $0x78] sm:$0xff]
      %s1122 = scalar_lea.vmem %s1, 60
      %v1123 = vld [vmem:[%s1122] sm:$0xf]
      %v1124 = vld [vmem:[%s1122 + $0x4] sm:$0xf]
      %v1125 = vld [vmem:[%s1122 + $0x8] sm:$0xf]
      %v1126 = vld [vmem:[%s1122 + $0xc] sm:$0xf]
      %v1127 = vld [vmem:[%s1122 + $0x10] sm:$0xf]
      %v1133 = vunpack.c.l.b16 %v1123
      %v1134 = vunpack.c.l.b16 %v1124
      %v1135 = vunpack.c.l.b16 %v1125
      %v1136 = vunpack.c.l.b16 %v1126
      %v1137 = vunpack.c.l.b16 %v1127
      %v1138 = vpack.c.b16 %v1134, %v1133
      %v1139 = vpack.c.b16 %v1136, %v1135
      %v1140 = vpack.c.b16 %v1137, %v1137
      %v1144 = vsel %vm172, %v1106, 0
      %v1147 = vsel %vm172, %v1107, 0
      %v1150 = vsel %vm172, %v1108, 0
      %v1153 = vsel %vm172, %v1109, 0
      %v1156 = vsel %vm172, %v1110, 0
      %v1159 = vsel %vm172, %v1111, 0
      %v1162 = vsel %vm172, %v1112, 0
      %v1165 = vsel %vm172, %v1113, 0
      %v1168 = vsel %vm172, %v1114, 0
      %v1171 = vsel %vm172, %v1115, 0
      %v1174 = vsel %vm172, %v1116, 0
      %v1177 = vsel %vm172, %v1117, 0
      %v1180 = vsel %vm172, %v1118, 0
      %v1183 = vsel %vm172, %v1119, 0
      %v1186 = vsel %vm172, %v1120, 0
      %v1189 = vsel %vm172, %v1121, 0
      %v1192 = vsel %vm432, %v1140, 0
      %1194 = vmatprep.subr.bf16.mxu0 0
      %1195 = vmatpush1.bf16.msra.mxu0 %v1138
      %1196 = vmatprep.subr.bf16.mxu0 0
      %1197 = vmatpush1.bf16.msra.mxu0 %v1139
      %1198 = vmatprep.subr.bf16.mxu0 0
      %1199 = vmatpush1.bf16.msra.mxu0 %v1192
      %1200 = vmatprep.subr.bf16.mxu0 0
      %1201 = vmatpush1.bf16.msra.mxu0 0
      %1202 = vmatprep.subr.bf16.mxu0 0
      %1203 = vmatpush1.bf16.msra.mxu0 0
      %1204 = vmatprep.subr.bf16.mxu0 0
      %1205 = vmatpush1.bf16.msra.mxu0 0
      %1206 = vmatprep.subr.bf16.mxu0 0
      %1207 = vmatpush1.bf16.msra.mxu0 0
      %1208 = vmatprep.subr.bf16.mxu0 0
      %1209 = vmatpush1.bf16.msra.mxu0 0
      %1210 = vmatprep.subr.bf16.mxu0 0
      %1211 = vmatpush1.bf16.msra.mxu0 0
      %1212 = vmatprep.subr.bf16.mxu0 0
      %1213 = vmatpush1.bf16.msra.mxu0 0
      %1214 = vmatprep.subr.bf16.mxu0 0
      %1215 = vmatpush1.bf16.msra.mxu0 0
      %1216 = vmatprep.subr.bf16.mxu0 0
      %1217 = vmatpush1.bf16.msra.mxu0 0
      %1218 = vmatprep.subr.bf16.mxu0 0
      %1219 = vmatpush1.bf16.msra.mxu0 0
      %1220 = vmatprep.subr.bf16.mxu0 0
      %1221 = vmatpush1.bf16.msra.mxu0 0
      %1222 = vmatprep.subr.bf16.mxu0 0
      %1223 = vmatpush1.bf16.msra.mxu0 0
      %1224 = vmatprep.subr.bf16.mxu0 0
      %1225 = vmatpush1.bf16.msra.mxu0 0
      %1226 = vmatprep.mubr.bf16.mxu0 0
      %1227 = vmatmul.mubr.bf16.gmra.mrb[0].mxu0 %v1144
      %v1228 = vpop.f32.mrb[0].mxu0
      %v1229 = vadd.f32 0.0, %v1228
      %v1230 = vpop.f32.mrb[0].mxu0
      %v1231 = vpop.f32.mrb[0].mxu0
      %v1232 = vadd.f32 0.0, %v1231
      %v1233 = vpop.f32.mrb[0].mxu0
      %1234 = vmatprep.mubr.bf16.mxu0 0
      %1235 = vmatmul.mubr.bf16.gmra.mrb[0].mxu0 %v1147
      %v1236 = vpop.f32.mrb[0].mxu0
      %v1237 = vadd.f32 0.0, %v1236
      %v1238 = vpop.f32.mrb[0].mxu0
      %v1239 = vpop.f32.mrb[0].mxu0
      %v1240 = vadd.f32 0.0, %v1239
      %v1241 = vpop.f32.mrb[0].mxu0
      %1242 = vmatprep.mubr.bf16.mxu0 0
      %1243 = vmatmul.mubr.bf16.gmra.mrb[0].mxu0 %v1150
      %v1244 = vpop.f32.mrb[0].mxu0
      %v1245 = vadd.f32 0.0, %v1244
      %v1246 = vpop.f32.mrb[0].mxu0
      %v1247 = vpop.f32.mrb[0].mxu0
      %v1248 = vadd.f32 0.0, %v1247
      %v1249 = vpop.f32.mrb[0].mxu0
      %1250 = vmatprep.mubr.bf16.mxu0 0
      %1251 = vmatmul.mubr.bf16.gmra.mrb[0].mxu0 %v1153
      %v1252 = vpop.f32.mrb[0].mxu0
      %v1253 = vadd.f32 0.0, %v1252
      %v1254 = vpop.f32.mrb[0].mxu0
      %v1255 = vpop.f32.mrb[0].mxu0
      %v1256 = vadd.f32 0.0, %v1255
      %v1257 = vpop.f32.mrb[0].mxu0
      %1258 = vmatprep.mubr.bf16.mxu0 0
      %1259 = vmatmul.mubr.bf16.gmra.mrb[0].mxu0 %v1156
      %v1260 = vpop.f32.mrb[0].mxu0
      %v1261 = vadd.f32 0.0, %v1260
      %v1262 = vpop.f32.mrb[0].mxu0
      %v1263 = vpop.f32.mrb[0].mxu0
      %v1264 = vadd.f32 0.0, %v1263
      %v1265 = vpop.f32.mrb[0].mxu0
      %1266 = vmatprep.mubr.bf16.mxu0 0
      %1267 = vmatmul.mubr.bf16.gmra.mrb[0].mxu0 %v1159
      %v1268 = vpop.f32.mrb[0].mxu0
      %v1269 = vadd.f32 0.0, %v1268
      %v1270 = vpop.f32.mrb[0].mxu0
      %v1271 = vpop.f32.mrb[0].mxu0
      %v1272 = vadd.f32 0.0, %v1271
      %v1273 = vpop.f32.mrb[0].mxu0
      %1274 = vmatprep.mubr.bf16.mxu0 0
      %1275 = vmatmul.mubr.bf16.gmra.mrb[0].mxu0 %v1162
      %v1276 = vpop.f32.mrb[0].mxu0
      %v1277 = vadd.f32 0.0, %v1276
      %v1278 = vpop.f32.mrb[0].mxu0
      %v1279 = vpop.f32.mrb[0].mxu0
      %v1280 = vadd.f32 0.0, %v1279
      %v1281 = vpop.f32.mrb[0].mxu0
      %1282 = vmatprep.mubr.bf16.mxu0 0
      %1283 = vmatmul.mubr.bf16.gmra.mrb[0].mxu0 %v1165
      %v1284 = vpop.f32.mrb[0].mxu0
      %v1285 = vadd.f32 0.0, %v1284
      %v1286 = vpop.f32.mrb[0].mxu0
      %v1287 = vpop.f32.mrb[0].mxu0
      %v1288 = vadd.f32 0.0, %v1287
      %v1289 = vpop.f32.mrb[0].mxu0
      %1290 = vmatprep.mubr.bf16.mxu0 0
      %1291 = vmatmul.mubr.bf16.gmra.mrb[0].mxu0 %v1168
      %v1292 = vpop.f32.mrb[0].mxu0
      %v1293 = vadd.f32 0.0, %v1292
      %v1294 = vpop.f32.mrb[0].mxu0
      %v1295 = vpop.f32.mrb[0].mxu0
      %v1296 = vadd.f32 0.0, %v1295
      %v1297 = vpop.f32.mrb[0].mxu0
      %1298 = vmatprep.mubr.bf16.mxu0 0
      %1299 = vmatmul.mubr.bf16.gmra.mrb[0].mxu0 %v1171
      %v1300 = vpop.f32.mrb[0].mxu0
      %v1301 = vadd.f32 0.0, %v1300
      %v1302 = vpop.f32.mrb[0].mxu0
      %v1303 = vpop.f32.mrb[0].mxu0
      %v1304 = vadd.f32 0.0, %v1303
      %v1305 = vpop.f32.mrb[0].mxu0
      %1306 = vmatprep.mubr.bf16.mxu0 0
      %1307 = vmatmul.mubr.bf16.gmra.mrb[0].mxu0 %v1174
      %v1308 = vpop.f32.mrb[0].mxu0
      %v1309 = vadd.f32 0.0, %v1308
      %v1310 = vpop.f32.mrb[0].mxu0
      %v1311 = vpop.f32.mrb[0].mxu0
      %v1312 = vadd.f32 0.0, %v1311
      %v1313 = vpop.f32.mrb[0].mxu0
      %1314 = vmatprep.mubr.bf16.mxu0 0
      %1315 = vmatmul.mubr.bf16.gmra.mrb[0].mxu0 %v1177
      %v1316 = vpop.f32.mrb[0].mxu0
      %v1317 = vadd.f32 0.0, %v1316
      %v1318 = vpop.f32.mrb[0].mxu0
      %v1319 = vpop.f32.mrb[0].mxu0
      %v1320 = vadd.f32 0.0, %v1319
      %v1321 = vpop.f32.mrb[0].mxu0
      %1322 = vmatprep.mubr.bf16.mxu0 0
      %1323 = vmatmul.mubr.bf16.gmra.mrb[0].mxu0 %v1180
      %v1324 = vpop.f32.mrb[0].mxu0
      %v1325 = vadd.f32 0.0, %v1324
      %v1326 = vpop.f32.mrb[0].mxu0
      %v1327 = vpop.f32.mrb[0].mxu0
      %v1328 = vadd.f32 0.0, %v1327
      %v1329 = vpop.f32.mrb[0].mxu0
      %1330 = vmatprep.mubr.bf16.mxu0 0
      %1331 = vmatmul.mubr.bf16.gmra.mrb[0].mxu0 %v1183
      %v1332 = vpop.f32.mrb[0].mxu0
      %v1333 = vadd.f32 0.0, %v1332
      %v1334 = vpop.f32.mrb[0].mxu0
      %v1335 = vpop.f32.mrb[0].mxu0
      %v1336 = vadd.f32 0.0, %v1335
      %v1337 = vpop.f32.mrb[0].mxu0
      %1338 = vmatprep.mubr.bf16.mxu0 0
      %1339 = vmatmul.mubr.bf16.gmra.mrb[0].mxu0 %v1186
      %v1340 = vpop.f32.mrb[0].mxu0
      %v1341 = vadd.f32 0.0, %v1340
      %v1342 = vpop.f32.mrb[0].mxu0
      %v1343 = vpop.f32.mrb[0].mxu0
      %v1344 = vadd.f32 0.0, %v1343
      %v1345 = vpop.f32.mrb[0].mxu0
      %1346 = vmatprep.mubr.bf16.mxu0 0
      %1347 = vmatmul.mubr.bf16.gmra.mrb[0].mxu0 %v1189
      %v1348 = vpop.f32.mrb[0].mxu0
      %v1349 = vadd.f32 0.0, %v1348
      %v1350 = vpop.f32.mrb[0].mxu0
      %v1351 = vpop.f32.mrb[0].mxu0
      %v1352 = vadd.f32 0.0, %v1351
      %v1353 = vpop.f32.mrb[0].mxu0
      %1354 = vdwg.mxu0
      %v1355 = vadd.f32 %v1074, %v1229
      %v1356 = vadd.f32 %v1075, %v1232
      %v1357 = vadd.f32 %v1076, %v1237
      %v1358 = vadd.f32 %v1077, %v1240
      %v1359 = vadd.f32 %v1078, %v1245
      %v1360 = vadd.f32 %v1079, %v1248
      %v1361 = vadd.f32 %v1080, %v1253
      %v1362 = vadd.f32 %v1081, %v1256
      %v1363 = vadd.f32 %v1082, %v1261
      %v1364 = vadd.f32 %v1083, %v1264
      %v1365 = vadd.f32 %v1084, %v1269
      %v1366 = vadd.f32 %v1085, %v1272
      %v1367 = vadd.f32 %v1086, %v1277
      %v1368 = vadd.f32 %v1087, %v1280
      %v1369 = vadd.f32 %v1088, %v1285
      %v1370 = vadd.f32 %v1089, %v1288
      %v1371 = vadd.f32 %v1090, %v1293
      %v1372 = vadd.f32 %v1091, %v1296
      %v1373 = vadd.f32 %v1092, %v1301
      %v1374 = vadd.f32 %v1093, %v1304
      %v1375 = vadd.f32 %v1094, %v1309
      %v1376 = vadd.f32 %v1095, %v1312
      %v1377 = vadd.f32 %v1096, %v1317
      %v1378 = vadd.f32 %v1097, %v1320
      %v1379 = vadd.f32 %v1098, %v1325
      %v1380 = vadd.f32 %v1099, %v1328
      %v1381 = vadd.f32 %v1100, %v1333
      %v1382 = vadd.f32 %v1101, %v1336
      %v1383 = vadd.f32 %v1102, %v1341
      %v1384 = vadd.f32 %v1103, %v1344
      %v1385 = vadd.f32 %v1104, %v1349
      %v1386 = vadd.f32 %v1105, %v1352
      %s1387 = scalar_lea.vmem [#allocation2], 32
      %v1388 = vld [vmem:[%s1387] sm:$0xff]
      %v1389 = vld [vmem:[%s1387 + $0x8] sm:$0xff]
      %v1390 = vld [vmem:[%s1387 + $0x10] sm:$0xff]
      %v1391 = vld [vmem:[%s1387 + $0x18] sm:$0xff]
      %v1392 = vld [vmem:[%s1387 + $0x20] sm:$0xff]
      %v1393 = vld [vmem:[%s1387 + $0x28] sm:$0xff]
      %v1394 = vld [vmem:[%s1387 + $0x30] sm:$0xff]
      %v1395 = vld [vmem:[%s1387 + $0x38] sm:$0xff]
      %v1396 = vld [vmem:[%s1387 + $0x40] sm:$0xff]
      %v1397 = vld [vmem:[%s1387 + $0x48] sm:$0xff]
      %v1398 = vld [vmem:[%s1387 + $0x50] sm:$0xff]
      %v1399 = vld [vmem:[%s1387 + $0x58] sm:$0xff]
      %v1400 = vld [vmem:[%s1387 + $0x60] sm:$0xff]
      %v1401 = vld [vmem:[%s1387 + $0x68] sm:$0xff]
      %v1402 = vld [vmem:[%s1387 + $0x70] sm:$0xff]
      %v1403 = vld [vmem:[%s1387 + $0x78] sm:$0xff]
      %s1404 = scalar_lea.vmem %s1, 80
      %v1405 = vld [vmem:[%s1404] sm:$0xf]
      %v1406 = vld [vmem:[%s1404 + $0x4] sm:$0xf]
      %v1407 = vld [vmem:[%s1404 + $0x8] sm:$0xf]
      %v1408 = vld [vmem:[%s1404 + $0xc] sm:$0xf]
      %v1409 = vld [vmem:[%s1404 + $0x10] sm:$0xf]
      %v1415 = vunpack.c.l.b16 %v1405
      %v1416 = vunpack.c.l.b16 %v1406
      %v1417 = vunpack.c.l.b16 %v1407
      %v1418 = vunpack.c.l.b16 %v1408
      %v1419 = vunpack.c.l.b16 %v1409
      %v1420 = vpack.c.b16 %v1416, %v1415
      %v1421 = vpack.c.b16 %v1418, %v1417
      %v1422 = vpack.c.b16 %v1419, %v1419
      %v1426 = vsel %vm172, %v1388, 0
      %v1429 = vsel %vm172, %v1389, 0
      %v1432 = vsel %vm172, %v1390, 0
      %v1435 = vsel %vm172, %v1391, 0
      %v1438 = vsel %vm172, %v1392, 0
      %v1441 = vsel %vm172, %v1393, 0
      %v1444 = vsel %vm172, %v1394, 0
      %v1447 = vsel %vm172, %v1395, 0
      %v1450 = vsel %vm172, %v1396, 0
      %v1453 = vsel %vm172, %v1397, 0
      %v1456 = vsel %vm172, %v1398, 0
      %v1459 = vsel %vm172, %v1399, 0
      %v1462 = vsel %vm172, %v1400, 0
      %v1465 = vsel %vm172, %v1401, 0
      %v1468 = vsel %vm172, %v1402, 0
      %v1471 = vsel %vm172, %v1403, 0
      %v1474 = vsel %vm432, %v1422, 0
      %1476 = vmatprep.subr.bf16.mxu0 0
      %1477 = vmatpush1.bf16.msra.mxu0 %v1420
      %1478 = vmatprep.subr.bf16.mxu0 0
      %1479 = vmatpush1.bf16.msra.mxu0 %v1421
      %1480 = vmatprep.subr.bf16.mxu0 0
      %1481 = vmatpush1.bf16.msra.mxu0 %v1474
      %1482 = vmatprep.subr.bf16.mxu0 0
      %1483 = vmatpush1.bf16.msra.mxu0 0
      %1484 = vmatprep.subr.bf16.mxu0 0
      %1485 = vmatpush1.bf16.msra.mxu0 0
      %1486 = vmatprep.subr.bf16.mxu0 0
      %1487 = vmatpush1.bf16.msra.mxu0 0
      %1488 = vmatprep.subr.bf16.mxu0 0
      %1489 = vmatpush1.bf16.msra.mxu0 0
      %1490 = vmatprep.subr.bf16.mxu0 0
      %1491 = vmatpush1.bf16.msra.mxu0 0
      %1492 = vmatprep.subr.bf16.mxu0 0
      %1493 = vmatpush1.bf16.msra.mxu0 0
      %1494 = vmatprep.subr.bf16.mxu0 0
      %1495 = vmatpush1.bf16.msra.mxu0 0
      %1496 = vmatprep.subr.bf16.mxu0 0
      %1497 = vmatpush1.bf16.msra.mxu0 0
      %1498 = vmatprep.subr.bf16.mxu0 0
      %1499 = vmatpush1.bf16.msra.mxu0 0
      %1500 = vmatprep.subr.bf16.mxu0 0
      %1501 = vmatpush1.bf16.msra.mxu0 0
      %1502 = vmatprep.subr.bf16.mxu0 0
      %1503 = vmatpush1.bf16.msra.mxu0 0
      %1504 = vmatprep.subr.bf16.mxu0 0
      %1505 = vmatpush1.bf16.msra.mxu0 0
      %1506 = vmatprep.subr.bf16.mxu0 0
      %1507 = vmatpush1.bf16.msra.mxu0 0
      %1508 = vmatprep.mubr.bf16.mxu0 0
      %1509 = vmatmul.mubr.bf16.gmra.mrb[0].mxu0 %v1426
      %v1510 = vpop.f32.mrb[0].mxu0
      %v1511 = vadd.f32 0.0, %v1510
      %v1512 = vpop.f32.mrb[0].mxu0
      %v1513 = vpop.f32.mrb[0].mxu0
      %v1514 = vadd.f32 0.0, %v1513
      %v1515 = vpop.f32.mrb[0].mxu0
      %1516 = vmatprep.mubr.bf16.mxu0 0
      %1517 = vmatmul.mubr.bf16.gmra.mrb[0].mxu0 %v1429
      %v1518 = vpop.f32.mrb[0].mxu0
      %v1519 = vadd.f32 0.0, %v1518
      %v1520 = vpop.f32.mrb[0].mxu0
      %v1521 = vpop.f32.mrb[0].mxu0
      %v1522 = vadd.f32 0.0, %v1521
      %v1523 = vpop.f32.mrb[0].mxu0
      %1524 = vmatprep.mubr.bf16.mxu0 0
      %1525 = vmatmul.mubr.bf16.gmra.mrb[0].mxu0 %v1432
      %v1526 = vpop.f32.mrb[0].mxu0
      %v1527 = vadd.f32 0.0, %v1526
      %v1528 = vpop.f32.mrb[0].mxu0
      %v1529 = vpop.f32.mrb[0].mxu0
      %v1530 = vadd.f32 0.0, %v1529
      %v1531 = vpop.f32.mrb[0].mxu0
      %1532 = vmatprep.mubr.bf16.mxu0 0
      %1533 = vmatmul.mubr.bf16.gmra.mrb[0].mxu0 %v1435
      %v1534 = vpop.f32.mrb[0].mxu0
      %v1535 = vadd.f32 0.0, %v1534
      %v1536 = vpop.f32.mrb[0].mxu0
      %v1537 = vpop.f32.mrb[0].mxu0
      %v1538 = vadd.f32 0.0, %v1537
      %v1539 = vpop.f32.mrb[0].mxu0
      %1540 = vmatprep.mubr.bf16.mxu0 0
      %1541 = vmatmul.mubr.bf16.gmra.mrb[0].mxu0 %v1438
      %v1542 = vpop.f32.mrb[0].mxu0
      %v1543 = vadd.f32 0.0, %v1542
      %v1544 = vpop.f32.mrb[0].mxu0
      %v1545 = vpop.f32.mrb[0].mxu0
      %v1546 = vadd.f32 0.0, %v1545
      %v1547 = vpop.f32.mrb[0].mxu0
      %1548 = vmatprep.mubr.bf16.mxu0 0
      %1549 = vmatmul.mubr.bf16.gmra.mrb[0].mxu0 %v1441
      %v1550 = vpop.f32.mrb[0].mxu0
      %v1551 = vadd.f32 0.0, %v1550
      %v1552 = vpop.f32.mrb[0].mxu0
      %v1553 = vpop.f32.mrb[0].mxu0
      %v1554 = vadd.f32 0.0, %v1553
      %v1555 = vpop.f32.mrb[0].mxu0
      %1556 = vmatprep.mubr.bf16.mxu0 0
      %1557 = vmatmul.mubr.bf16.gmra.mrb[0].mxu0 %v1444
      %v1558 = vpop.f32.mrb[0].mxu0
      %v1559 = vadd.f32 0.0, %v1558
      %v1560 = vpop.f32.mrb[0].mxu0
      %v1561 = vpop.f32.mrb[0].mxu0
      %v1562 = vadd.f32 0.0, %v1561
      %v1563 = vpop.f32.mrb[0].mxu0
      %1564 = vmatprep.mubr.bf16.mxu0 0
      %1565 = vmatmul.mubr.bf16.gmra.mrb[0].mxu0 %v1447
      %v1566 = vpop.f32.mrb[0].mxu0
      %v1567 = vadd.f32 0.0, %v1566
      %v1568 = vpop.f32.mrb[0].mxu0
      %v1569 = vpop.f32.mrb[0].mxu0
      %v1570 = vadd.f32 0.0, %v1569
      %v1571 = vpop.f32.mrb[0].mxu0
      %1572 = vmatprep.mubr.bf16.mxu0 0
      %1573 = vmatmul.mubr.bf16.gmra.mrb[0].mxu0 %v1450
      %v1574 = vpop.f32.mrb[0].mxu0
      %v1575 = vadd.f32 0.0, %v1574
      %v1576 = vpop.f32.mrb[0].mxu0
      %v1577 = vpop.f32.mrb[0].mxu0
      %v1578 = vadd.f32 0.0, %v1577
      %v1579 = vpop.f32.mrb[0].mxu0
      %1580 = vmatprep.mubr.bf16.mxu0 0
      %1581 = vmatmul.mubr.bf16.gmra.mrb[0].mxu0 %v1453
      %v1582 = vpop.f32.mrb[0].mxu0
      %v1583 = vadd.f32 0.0, %v1582
      %v1584 = vpop.f32.mrb[0].mxu0
      %v1585 = vpop.f32.mrb[0].mxu0
      %v1586 = vadd.f32 0.0, %v1585
      %v1587 = vpop.f32.mrb[0].mxu0
      %1588 = vmatprep.mubr.bf16.mxu0 0
      %1589 = vmatmul.mubr.bf16.gmra.mrb[0].mxu0 %v1456
      %v1590 = vpop.f32.mrb[0].mxu0
      %v1591 = vadd.f32 0.0, %v1590
      %v1592 = vpop.f32.mrb[0].mxu0
      %v1593 = vpop.f32.mrb[0].mxu0
      %v1594 = vadd.f32 0.0, %v1593
      %v1595 = vpop.f32.mrb[0].mxu0
      %1596 = vmatprep.mubr.bf16.mxu0 0
      %1597 = vmatmul.mubr.bf16.gmra.mrb[0].mxu0 %v1459
      %v1598 = vpop.f32.mrb[0].mxu0
      %v1599 = vadd.f32 0.0, %v1598
      %v1600 = vpop.f32.mrb[0].mxu0
      %v1601 = vpop.f32.mrb[0].mxu0
      %v1602 = vadd.f32 0.0, %v1601
      %v1603 = vpop.f32.mrb[0].mxu0
      %1604 = vmatprep.mubr.bf16.mxu0 0
      %1605 = vmatmul.mubr.bf16.gmra.mrb[0].mxu0 %v1462
      %v1606 = vpop.f32.mrb[0].mxu0
      %v1607 = vadd.f32 0.0, %v1606
      %v1608 = vpop.f32.mrb[0].mxu0
      %v1609 = vpop.f32.mrb[0].mxu0
      %v1610 = vadd.f32 0.0, %v1609
      %v1611 = vpop.f32.mrb[0].mxu0
      %1612 = vmatprep.mubr.bf16.mxu0 0
      %1613 = vmatmul.mubr.bf16.gmra.mrb[0].mxu0 %v1465
      %v1614 = vpop.f32.mrb[0].mxu0
      %v1615 = vadd.f32 0.0, %v1614
      %v1616 = vpop.f32.mrb[0].mxu0
      %v1617 = vpop.f32.mrb[0].mxu0
      %v1618 = vadd.f32 0.0, %v1617
      %v1619 = vpop.f32.mrb[0].mxu0
      %1620 = vmatprep.mubr.bf16.mxu0 0
      %1621 = vmatmul.mubr.bf16.gmra.mrb[0].mxu0 %v1468
      %v1622 = vpop.f32.mrb[0].mxu0
      %v1623 = vadd.f32 0.0, %v1622
      %v1624 = vpop.f32.mrb[0].mxu0
      %v1625 = vpop.f32.mrb[0].mxu0
      %v1626 = vadd.f32 0.0, %v1625
      %v1627 = vpop.f32.mrb[0].mxu0
      %1628 = vmatprep.mubr.bf16.mxu0 0
      %1629 = vmatmul.mubr.bf16.gmra.mrb[0].mxu0 %v1471
      %v1630 = vpop.f32.mrb[0].mxu0
      %v1631 = vadd.f32 0.0, %v1630
      %v1632 = vpop.f32.mrb[0].mxu0
      %v1633 = vpop.f32.mrb[0].mxu0
      %v1634 = vadd.f32 0.0, %v1633
      %v1635 = vpop.f32.mrb[0].mxu0
      %1636 = vdwg.mxu0
      %v1637 = vadd.f32 %v1355, %v1511
      %v1638 = vadd.f32 %v1356, %v1514
      %v1639 = vadd.f32 %v1357, %v1519
      %v1640 = vadd.f32 %v1358, %v1522
      %v1641 = vadd.f32 %v1359, %v1527
      %v1642 = vadd.f32 %v1360, %v1530
      %v1643 = vadd.f32 %v1361, %v1535
      %v1644 = vadd.f32 %v1362, %v1538
      %v1645 = vadd.f32 %v1363, %v1543
      %v1646 = vadd.f32 %v1364, %v1546
      %v1647 = vadd.f32 %v1365, %v1551
      %v1648 = vadd.f32 %v1366, %v1554
      %v1649 = vadd.f32 %v1367, %v1559
      %v1650 = vadd.f32 %v1368, %v1562
      %v1651 = vadd.f32 %v1369, %v1567
      %v1652 = vadd.f32 %v1370, %v1570
      %v1653 = vadd.f32 %v1371, %v1575
      %v1654 = vadd.f32 %v1372, %v1578
      %v1655 = vadd.f32 %v1373, %v1583
      %v1656 = vadd.f32 %v1374, %v1586
      %v1657 = vadd.f32 %v1375, %v1591
      %v1658 = vadd.f32 %v1376, %v1594
      %v1659 = vadd.f32 %v1377, %v1599
      %v1660 = vadd.f32 %v1378, %v1602
      %v1661 = vadd.f32 %v1379, %v1607
      %v1662 = vadd.f32 %v1380, %v1610
      %v1663 = vadd.f32 %v1381, %v1615
      %v1664 = vadd.f32 %v1382, %v1618
      %v1665 = vadd.f32 %v1383, %v1623
      %v1666 = vadd.f32 %v1384, %v1626
      %v1667 = vadd.f32 %v1385, %v1631
      %v1668 = vadd.f32 %v1386, %v1634
      %s1669 = scalar_lea.vmem [#allocation2], 40
      %v1670 = vld [vmem:[%s1669] sm:$0xff]
      %v1671 = vld [vmem:[%s1669 + $0x8] sm:$0xff]
      %v1672 = vld [vmem:[%s1669 + $0x10] sm:$0xff]
      %v1673 = vld [vmem:[%s1669 + $0x18] sm:$0xff]
      %v1674 = vld [vmem:[%s1669 + $0x20] sm:$0xff]
      %v1675 = vld [vmem:[%s1669 + $0x28] sm:$0xff]
      %v1676 = vld [vmem:[%s1669 + $0x30] sm:$0xff]
      %v1677 = vld [vmem:[%s1669 + $0x38] sm:$0xff]
      %v1678 = vld [vmem:[%s1669 + $0x40] sm:$0xff]
      %v1679 = vld [vmem:[%s1669 + $0x48] sm:$0xff]
      %v1680 = vld [vmem:[%s1669 + $0x50] sm:$0xff]
      %v1681 = vld [vmem:[%s1669 + $0x58] sm:$0xff]
      %v1682 = vld [vmem:[%s1669 + $0x60] sm:$0xff]
      %v1683 = vld [vmem:[%s1669 + $0x68] sm:$0xff]
      %v1684 = vld [vmem:[%s1669 + $0x70] sm:$0xff]
      %v1685 = vld [vmem:[%s1669 + $0x78] sm:$0xff]
      %s1686 = scalar_lea.vmem %s1, 100
      %v1687 = vld [vmem:[%s1686] sm:$0xf]
      %v1688 = vld [vmem:[%s1686 + $0x4] sm:$0xf]
      %v1689 = vld [vmem:[%s1686 + $0x8] sm:$0xf]
      %v1690 = vld [vmem:[%s1686 + $0xc] sm:$0xf]
      %v1691 = vld [vmem:[%s1686 + $0x10] sm:$0xf]
      %v1697 = vunpack.c.l.b16 %v1687
      %v1698 = vunpack.c.l.b16 %v1688
      %v1699 = vunpack.c.l.b16 %v1689
      %v1700 = vunpack.c.l.b16 %v1690
      %v1701 = vunpack.c.l.b16 %v1691
      %v1702 = vpack.c.b16 %v1698, %v1697
      %v1703 = vpack.c.b16 %v1700, %v1699
      %v1704 = vpack.c.b16 %v1701, %v1701
      %v1708 = vsel %vm172, %v1670, 0
      %v1711 = vsel %vm172, %v1671, 0
      %v1714 = vsel %vm172, %v1672, 0
      %v1717 = vsel %vm172, %v1673, 0
      %v1720 = vsel %vm172, %v1674, 0
      %v1723 = vsel %vm172, %v1675, 0
      %v1726 = vsel %vm172, %v1676, 0
      %v1729 = vsel %vm172, %v1677, 0
      %v1732 = vsel %vm172, %v1678, 0
      %v1735 = vsel %vm172, %v1679, 0
      %v1738 = vsel %vm172, %v1680, 0
      %v1741 = vsel %vm172, %v1681, 0
      %v1744 = vsel %vm172, %v1682, 0
      %v1747 = vsel %vm172, %v1683, 0
      %v1750 = vsel %vm172, %v1684, 0
      %v1753 = vsel %vm172, %v1685, 0
      %v1756 = vsel %vm432, %v1704, 0
      %1758 = vmatprep.subr.bf16.mxu0 0
      %1759 = vmatpush1.bf16.msra.mxu0 %v1702
      %1760 = vmatprep.subr.bf16.mxu0 0
      %1761 = vmatpush1.bf16.msra.mxu0 %v1703
      %1762 = vmatprep.subr.bf16.mxu0 0
      %1763 = vmatpush1.bf16.msra.mxu0 %v1756
      %1764 = vmatprep.subr.bf16.mxu0 0
      %1765 = vmatpush1.bf16.msra.mxu0 0
      %1766 = vmatprep.subr.bf16.mxu0 0
      %1767 = vmatpush1.bf16.msra.mxu0 0
      %1768 = vmatprep.subr.bf16.mxu0 0
      %1769 = vmatpush1.bf16.msra.mxu0 0
      %1770 = vmatprep.subr.bf16.mxu0 0
      %1771 = vmatpush1.bf16.msra.mxu0 0
      %1772 = vmatprep.subr.bf16.mxu0 0
      %1773 = vmatpush1.bf16.msra.mxu0 0
      %1774 = vmatprep.subr.bf16.mxu0 0
      %1775 = vmatpush1.bf16.msra.mxu0 0
      %1776 = vmatprep.subr.bf16.mxu0 0
      %1777 = vmatpush1.bf16.msra.mxu0 0
      %1778 = vmatprep.subr.bf16.mxu0 0
      %1779 = vmatpush1.bf16.msra.mxu0 0
      %1780 = vmatprep.subr.bf16.mxu0 0
      %1781 = vmatpush1.bf16.msra.mxu0 0
      %1782 = vmatprep.subr.bf16.mxu0 0
      %1783 = vmatpush1.bf16.msra.mxu0 0
      %1784 = vmatprep.subr.bf16.mxu0 0
      %1785 = vmatpush1.bf16.msra.mxu0 0
      %1786 = vmatprep.subr.bf16.mxu0 0
      %1787 = vmatpush1.bf16.msra.mxu0 0
      %1788 = vmatprep.subr.bf16.mxu0 0
      %1789 = vmatpush1.bf16.msra.mxu0 0
      %1790 = vmatprep.mubr.bf16.mxu0 0
      %1791 = vmatmul.mubr.bf16.gmra.mrb[0].mxu0 %v1708
      %v1792 = vpop.f32.mrb[0].mxu0
      %v1793 = vadd.f32 0.0, %v1792
      %v1794 = vpop.f32.mrb[0].mxu0
      %v1795 = vpop.f32.mrb[0].mxu0
      %v1796 = vadd.f32 0.0, %v1795
      %v1797 = vpop.f32.mrb[0].mxu0
      %1798 = vmatprep.mubr.bf16.mxu0 0
      %1799 = vmatmul.mubr.bf16.gmra.mrb[0].mxu0 %v1711
      %v1800 = vpop.f32.mrb[0].mxu0
      %v1801 = vadd.f32 0.0, %v1800
      %v1802 = vpop.f32.mrb[0].mxu0
      %v1803 = vpop.f32.mrb[0].mxu0
      %v1804 = vadd.f32 0.0, %v1803
      %v1805 = vpop.f32.mrb[0].mxu0
      %1806 = vmatprep.mubr.bf16.mxu0 0
      %1807 = vmatmul.mubr.bf16.gmra.mrb[0].mxu0 %v1714
      %v1808 = vpop.f32.mrb[0].mxu0
      %v1809 = vadd.f32 0.0, %v1808
      %v1810 = vpop.f32.mrb[0].mxu0
      %v1811 = vpop.f32.mrb[0].mxu0
      %v1812 = vadd.f32 0.0, %v1811
      %v1813 = vpop.f32.mrb[0].mxu0
      %1814 = vmatprep.mubr.bf16.mxu0 0
      %1815 = vmatmul.mubr.bf16.gmra.mrb[0].mxu0 %v1717
      %v1816 = vpop.f32.mrb[0].mxu0
      %v1817 = vadd.f32 0.0, %v1816
      %v1818 = vpop.f32.mrb[0].mxu0
      %v1819 = vpop.f32.mrb[0].mxu0
      %v1820 = vadd.f32 0.0, %v1819
      %v1821 = vpop.f32.mrb[0].mxu0
      %1822 = vmatprep.mubr.bf16.mxu0 0
      %1823 = vmatmul.mubr.bf16.gmra.mrb[0].mxu0 %v1720
      %v1824 = vpop.f32.mrb[0].mxu0
      %v1825 = vadd.f32 0.0, %v1824
      %v1826 = vpop.f32.mrb[0].mxu0
      %v1827 = vpop.f32.mrb[0].mxu0
      %v1828 = vadd.f32 0.0, %v1827
      %v1829 = vpop.f32.mrb[0].mxu0
      %1830 = vmatprep.mubr.bf16.mxu0 0
      %1831 = vmatmul.mubr.bf16.gmra.mrb[0].mxu0 %v1723
      %v1832 = vpop.f32.mrb[0].mxu0
      %v1833 = vadd.f32 0.0, %v1832
      %v1834 = vpop.f32.mrb[0].mxu0
      %v1835 = vpop.f32.mrb[0].mxu0
      %v1836 = vadd.f32 0.0, %v1835
      %v1837 = vpop.f32.mrb[0].mxu0
      %1838 = vmatprep.mubr.bf16.mxu0 0
      %1839 = vmatmul.mubr.bf16.gmra.mrb[0].mxu0 %v1726
      %v1840 = vpop.f32.mrb[0].mxu0
      %v1841 = vadd.f32 0.0, %v1840
      %v1842 = vpop.f32.mrb[0].mxu0
      %v1843 = vpop.f32.mrb[0].mxu0
      %v1844 = vadd.f32 0.0, %v1843
      %v1845 = vpop.f32.mrb[0].mxu0
      %1846 = vmatprep.mubr.bf16.mxu0 0
      %1847 = vmatmul.mubr.bf16.gmra.mrb[0].mxu0 %v1729
      %v1848 = vpop.f32.mrb[0].mxu0
      %v1849 = vadd.f32 0.0, %v1848
      %v1850 = vpop.f32.mrb[0].mxu0
      %v1851 = vpop.f32.mrb[0].mxu0
      %v1852 = vadd.f32 0.0, %v1851
      %v1853 = vpop.f32.mrb[0].mxu0
      %1854 = vmatprep.mubr.bf16.mxu0 0
      %1855 = vmatmul.mubr.bf16.gmra.mrb[0].mxu0 %v1732
      %v1856 = vpop.f32.mrb[0].mxu0
      %v1857 = vadd.f32 0.0, %v1856
      %v1858 = vpop.f32.mrb[0].mxu0
      %v1859 = vpop.f32.mrb[0].mxu0
      %v1860 = vadd.f32 0.0, %v1859
      %v1861 = vpop.f32.mrb[0].mxu0
      %1862 = vmatprep.mubr.bf16.mxu0 0
      %1863 = vmatmul.mubr.bf16.gmra.mrb[0].mxu0 %v1735
      %v1864 = vpop.f32.mrb[0].mxu0
      %v1865 = vadd.f32 0.0, %v1864
      %v1866 = vpop.f32.mrb[0].mxu0
      %v1867 = vpop.f32.mrb[0].mxu0
      %v1868 = vadd.f32 0.0, %v1867
      %v1869 = vpop.f32.mrb[0].mxu0
      %1870 = vmatprep.mubr.bf16.mxu0 0
      %1871 = vmatmul.mubr.bf16.gmra.mrb[0].mxu0 %v1738
      %v1872 = vpop.f32.mrb[0].mxu0
      %v1873 = vadd.f32 0.0, %v1872
      %v1874 = vpop.f32.mrb[0].mxu0
      %v1875 = vpop.f32.mrb[0].mxu0
      %v1876 = vadd.f32 0.0, %v1875
      %v1877 = vpop.f32.mrb[0].mxu0
      %1878 = vmatprep.mubr.bf16.mxu0 0
      %1879 = vmatmul.mubr.bf16.gmra.mrb[0].mxu0 %v1741
      %v1880 = vpop.f32.mrb[0].mxu0
      %v1881 = vadd.f32 0.0, %v1880
      %v1882 = vpop.f32.mrb[0].mxu0
      %v1883 = vpop.f32.mrb[0].mxu0
      %v1884 = vadd.f32 0.0, %v1883
      %v1885 = vpop.f32.mrb[0].mxu0
      %1886 = vmatprep.mubr.bf16.mxu0 0
      %1887 = vmatmul.mubr.bf16.gmra.mrb[0].mxu0 %v1744
      %v1888 = vpop.f32.mrb[0].mxu0
      %v1889 = vadd.f32 0.0, %v1888
      %v1890 = vpop.f32.mrb[0].mxu0
      %v1891 = vpop.f32.mrb[0].mxu0
      %v1892 = vadd.f32 0.0, %v1891
      %v1893 = vpop.f32.mrb[0].mxu0
      %1894 = vmatprep.mubr.bf16.mxu0 0
      %1895 = vmatmul.mubr.bf16.gmra.mrb[0].mxu0 %v1747
      %v1896 = vpop.f32.mrb[0].mxu0
      %v1897 = vadd.f32 0.0, %v1896
      %v1898 = vpop.f32.mrb[0].mxu0
      %v1899 = vpop.f32.mrb[0].mxu0
      %v1900 = vadd.f32 0.0, %v1899
      %v1901 = vpop.f32.mrb[0].mxu0
      %1902 = vmatprep.mubr.bf16.mxu0 0
      %1903 = vmatmul.mubr.bf16.gmra.mrb[0].mxu0 %v1750
      %v1904 = vpop.f32.mrb[0].mxu0
      %v1905 = vadd.f32 0.0, %v1904
      %v1906 = vpop.f32.mrb[0].mxu0
      %v1907 = vpop.f32.mrb[0].mxu0
      %v1908 = vadd.f32 0.0, %v1907
      %v1909 = vpop.f32.mrb[0].mxu0
      %1910 = vmatprep.mubr.bf16.mxu0 0
      %1911 = vmatmul.mubr.bf16.gmra.mrb[0].mxu0 %v1753
      %v1912 = vpop.f32.mrb[0].mxu0
      %v1913 = vadd.f32 0.0, %v1912
      %v1914 = vpop.f32.mrb[0].mxu0
      %v1915 = vpop.f32.mrb[0].mxu0
      %v1916 = vadd.f32 0.0, %v1915
      %v1917 = vpop.f32.mrb[0].mxu0
      %1918 = vdwg.mxu0
      %v1919 = vadd.f32 %v1637, %v1793
      %v1920 = vadd.f32 %v1638, %v1796
      %v1921 = vadd.f32 %v1639, %v1801
      %v1922 = vadd.f32 %v1640, %v1804
      %v1923 = vadd.f32 %v1641, %v1809
      %v1924 = vadd.f32 %v1642, %v1812
      %v1925 = vadd.f32 %v1643, %v1817
      %v1926 = vadd.f32 %v1644, %v1820
      %v1927 = vadd.f32 %v1645, %v1825
      %v1928 = vadd.f32 %v1646, %v1828
      %v1929 = vadd.f32 %v1647, %v1833
      %v1930 = vadd.f32 %v1648, %v1836
      %v1931 = vadd.f32 %v1649, %v1841
      %v1932 = vadd.f32 %v1650, %v1844
      %v1933 = vadd.f32 %v1651, %v1849
      %v1934 = vadd.f32 %v1652, %v1852
      %v1935 = vadd.f32 %v1653, %v1857
      %v1936 = vadd.f32 %v1654, %v1860
      %v1937 = vadd.f32 %v1655, %v1865
      %v1938 = vadd.f32 %v1656, %v1868
      %v1939 = vadd.f32 %v1657, %v1873
      %v1940 = vadd.f32 %v1658, %v1876
      %v1941 = vadd.f32 %v1659, %v1881
      %v1942 = vadd.f32 %v1660, %v1884
      %v1943 = vadd.f32 %v1661, %v1889
      %v1944 = vadd.f32 %v1662, %v1892
      %v1945 = vadd.f32 %v1663, %v1897
      %v1946 = vadd.f32 %v1664, %v1900
      %v1947 = vadd.f32 %v1665, %v1905
      %v1948 = vadd.f32 %v1666, %v1908
      %v1949 = vadd.f32 %v1667, %v1913
      %v1950 = vadd.f32 %v1668, %v1916
      %s1951 = scalar_lea.vmem [#allocation2], 48
      %v1952 = vld [vmem:[%s1951] sm:$0xff]
      %v1953 = vld [vmem:[%s1951 + $0x8] sm:$0xff]
      %v1954 = vld [vmem:[%s1951 + $0x10] sm:$0xff]
      %v1955 = vld [vmem:[%s1951 + $0x18] sm:$0xff]
      %v1956 = vld [vmem:[%s1951 + $0x20] sm:$0xff]
      %v1957 = vld [vmem:[%s1951 + $0x28] sm:$0xff]
      %v1958 = vld [vmem:[%s1951 + $0x30] sm:$0xff]
      %v1959 = vld [vmem:[%s1951 + $0x38] sm:$0xff]
      %v1960 = vld [vmem:[%s1951 + $0x40] sm:$0xff]
      %v1961 = vld [vmem:[%s1951 + $0x48] sm:$0xff]
      %v1962 = vld [vmem:[%s1951 + $0x50] sm:$0xff]
      %v1963 = vld [vmem:[%s1951 + $0x58] sm:$0xff]
      %v1964 = vld [vmem:[%s1951 + $0x60] sm:$0xff]
      %v1965 = vld [vmem:[%s1951 + $0x68] sm:$0xff]
      %v1966 = vld [vmem:[%s1951 + $0x70] sm:$0xff]
      %v1967 = vld [vmem:[%s1951 + $0x78] sm:$0xff]
      %s1968 = scalar_lea.vmem %s1, 120
      %v1969 = vld [vmem:[%s1968] sm:$0xf]
      %v1970 = vld [vmem:[%s1968 + $0x4] sm:$0xf]
      %v1971 = vld [vmem:[%s1968 + $0x8] sm:$0xf]
      %v1972 = vld [vmem:[%s1968 + $0xc] sm:$0xf]
      %v1973 = vld [vmem:[%s1968 + $0x10] sm:$0xf]
      %v1979 = vunpack.c.l.b16 %v1969
      %v1980 = vunpack.c.l.b16 %v1970
      %v1981 = vunpack.c.l.b16 %v1971
      %v1982 = vunpack.c.l.b16 %v1972
      %v1983 = vunpack.c.l.b16 %v1973
      %v1984 = vpack.c.b16 %v1980, %v1979
      %v1985 = vpack.c.b16 %v1982, %v1981
      %v1986 = vpack.c.b16 %v1983, %v1983
      %v1990 = vsel %vm172, %v1952, 0
      %v1993 = vsel %vm172, %v1953, 0
      %v1996 = vsel %vm172, %v1954, 0
      %v1999 = vsel %vm172, %v1955, 0
      %v2002 = vsel %vm172, %v1956, 0
      %v2005 = vsel %vm172, %v1957, 0
      %v2008 = vsel %vm172, %v1958, 0
      %v2011 = vsel %vm172, %v1959, 0
      %v2014 = vsel %vm172, %v1960, 0
      %v2017 = vsel %vm172, %v1961, 0
      %v2020 = vsel %vm172, %v1962, 0
      %v2023 = vsel %vm172, %v1963, 0
      %v2026 = vsel %vm172, %v1964, 0
      %v2029 = vsel %vm172, %v1965, 0
      %v2032 = vsel %vm172, %v1966, 0
      %v2035 = vsel %vm172, %v1967, 0
      %v2038 = vsel %vm432, %v1986, 0
      %2040 = vmatprep.subr.bf16.mxu0 0
      %2041 = vmatpush1.bf16.msra.mxu0 %v1984
      %2042 = vmatprep.subr.bf16.mxu0 0
      %2043 = vmatpush1.bf16.msra.mxu0 %v1985
      %2044 = vmatprep.subr.bf16.mxu0 0
      %2045 = vmatpush1.bf16.msra.mxu0 %v2038
      %2046 = vmatprep.subr.bf16.mxu0 0
      %2047 = vmatpush1.bf16.msra.mxu0 0
      %2048 = vmatprep.subr.bf16.mxu0 0
      %2049 = vmatpush1.bf16.msra.mxu0 0
      %2050 = vmatprep.subr.bf16.mxu0 0
      %2051 = vmatpush1.bf16.msra.mxu0 0
      %2052 = vmatprep.subr.bf16.mxu0 0
      %2053 = vmatpush1.bf16.msra.mxu0 0
      %2054 = vmatprep.subr.bf16.mxu0 0
      %2055 = vmatpush1.bf16.msra.mxu0 0
      %2056 = vmatprep.subr.bf16.mxu0 0
      %2057 = vmatpush1.bf16.msra.mxu0 0
      %2058 = vmatprep.subr.bf16.mxu0 0
      %2059 = vmatpush1.bf16.msra.mxu0 0
      %2060 = vmatprep.subr.bf16.mxu0 0
      %2061 = vmatpush1.bf16.msra.mxu0 0
      %2062 = vmatprep.subr.bf16.mxu0 0
      %2063 = vmatpush1.bf16.msra.mxu0 0
      %2064 = vmatprep.subr.bf16.mxu0 0
      %2065 = vmatpush1.bf16.msra.mxu0 0
      %2066 = vmatprep.subr.bf16.mxu0 0
      %2067 = vmatpush1.bf16.msra.mxu0 0
      %2068 = vmatprep.subr.bf16.mxu0 0
      %2069 = vmatpush1.bf16.msra.mxu0 0
      %2070 = vmatprep.subr.bf16.mxu0 0
      %2071 = vmatpush1.bf16.msra.mxu0 0
      %2072 = vmatprep.mubr.bf16.mxu0 0
      %2073 = vmatmul.mubr.bf16.gmra.mrb[0].mxu0 %v1990
      %v2074 = vpop.f32.mrb[0].mxu0
      %v2075 = vadd.f32 0.0, %v2074
      %v2076 = vpop.f32.mrb[0].mxu0
      %v2077 = vpop.f32.mrb[0].mxu0
      %v2078 = vadd.f32 0.0, %v2077
      %v2079 = vpop.f32.mrb[0].mxu0
      %2080 = vmatprep.mubr.bf16.mxu0 0
      %2081 = vmatmul.mubr.bf16.gmra.mrb[0].mxu0 %v1993
      %v2082 = vpop.f32.mrb[0].mxu0
      %v2083 = vadd.f32 0.0, %v2082
      %v2084 = vpop.f32.mrb[0].mxu0
      %v2085 = vpop.f32.mrb[0].mxu0
      %v2086 = vadd.f32 0.0, %v2085
      %v2087 = vpop.f32.mrb[0].mxu0
      %2088 = vmatprep.mubr.bf16.mxu0 0
      %2089 = vmatmul.mubr.bf16.gmra.mrb[0].mxu0 %v1996
      %v2090 = vpop.f32.mrb[0].mxu0
      %v2091 = vadd.f32 0.0, %v2090
      %v2092 = vpop.f32.mrb[0].mxu0
      %v2093 = vpop.f32.mrb[0].mxu0
      %v2094 = vadd.f32 0.0, %v2093
      %v2095 = vpop.f32.mrb[0].mxu0
      %2096 = vmatprep.mubr.bf16.mxu0 0
      %2097 = vmatmul.mubr.bf16.gmra.mrb[0].mxu0 %v1999
      %v2098 = vpop.f32.mrb[0].mxu0
      %v2099 = vadd.f32 0.0, %v2098
      %v2100 = vpop.f32.mrb[0].mxu0
      %v2101 = vpop.f32.mrb[0].mxu0
      %v2102 = vadd.f32 0.0, %v2101
      %v2103 = vpop.f32.mrb[0].mxu0
      %2104 = vmatprep.mubr.bf16.mxu0 0
      %2105 = vmatmul.mubr.bf16.gmra.mrb[0].mxu0 %v2002
      %v2106 = vpop.f32.mrb[0].mxu0
      %v2107 = vadd.f32 0.0, %v2106
      %v2108 = vpop.f32.mrb[0].mxu0
      %v2109 = vpop.f32.mrb[0].mxu0
      %v2110 = vadd.f32 0.0, %v2109
      %v2111 = vpop.f32.mrb[0].mxu0
      %2112 = vmatprep.mubr.bf16.mxu0 0
      %2113 = vmatmul.mubr.bf16.gmra.mrb[0].mxu0 %v2005
      %v2114 = vpop.f32.mrb[0].mxu0
      %v2115 = vadd.f32 0.0, %v2114
      %v2116 = vpop.f32.mrb[0].mxu0
      %v2117 = vpop.f32.mrb[0].mxu0
      %v2118 = vadd.f32 0.0, %v2117
      %v2119 = vpop.f32.mrb[0].mxu0
      %2120 = vmatprep.mubr.bf16.mxu0 0
      %2121 = vmatmul.mubr.bf16.gmra.mrb[0].mxu0 %v2008
      %v2122 = vpop.f32.mrb[0].mxu0
      %v2123 = vadd.f32 0.0, %v2122
      %v2124 = vpop.f32.mrb[0].mxu0
      %v2125 = vpop.f32.mrb[0].mxu0
      %v2126 = vadd.f32 0.0, %v2125
      %v2127 = vpop.f32.mrb[0].mxu0
      %2128 = vmatprep.mubr.bf16.mxu0 0
      %2129 = vmatmul.mubr.bf16.gmra.mrb[0].mxu0 %v2011
      %v2130 = vpop.f32.mrb[0].mxu0
      %v2131 = vadd.f32 0.0, %v2130
      %v2132 = vpop.f32.mrb[0].mxu0
      %v2133 = vpop.f32.mrb[0].mxu0
      %v2134 = vadd.f32 0.0, %v2133
      %v2135 = vpop.f32.mrb[0].mxu0
      %2136 = vmatprep.mubr.bf16.mxu0 0
      %2137 = vmatmul.mubr.bf16.gmra.mrb[0].mxu0 %v2014
      %v2138 = vpop.f32.mrb[0].mxu0
      %v2139 = vadd.f32 0.0, %v2138
      %v2140 = vpop.f32.mrb[0].mxu0
      %v2141 = vpop.f32.mrb[0].mxu0
      %v2142 = vadd.f32 0.0, %v2141
      %v2143 = vpop.f32.mrb[0].mxu0
      %2144 = vmatprep.mubr.bf16.mxu0 0
      %2145 = vmatmul.mubr.bf16.gmra.mrb[0].mxu0 %v2017
      %v2146 = vpop.f32.mrb[0].mxu0
      %v2147 = vadd.f32 0.0, %v2146
      %v2148 = vpop.f32.mrb[0].mxu0
      %v2149 = vpop.f32.mrb[0].mxu0
      %v2150 = vadd.f32 0.0, %v2149
      %v2151 = vpop.f32.mrb[0].mxu0
      %2152 = vmatprep.mubr.bf16.mxu0 0
      %2153 = vmatmul.mubr.bf16.gmra.mrb[0].mxu0 %v2020
      %v2154 = vpop.f32.mrb[0].mxu0
      %v2155 = vadd.f32 0.0, %v2154
      %v2156 = vpop.f32.mrb[0].mxu0
      %v2157 = vpop.f32.mrb[0].mxu0
      %v2158 = vadd.f32 0.0, %v2157
      %v2159 = vpop.f32.mrb[0].mxu0
      %2160 = vmatprep.mubr.bf16.mxu0 0
      %2161 = vmatmul.mubr.bf16.gmra.mrb[0].mxu0 %v2023
      %v2162 = vpop.f32.mrb[0].mxu0
      %v2163 = vadd.f32 0.0, %v2162
      %v2164 = vpop.f32.mrb[0].mxu0
      %v2165 = vpop.f32.mrb[0].mxu0
      %v2166 = vadd.f32 0.0, %v2165
      %v2167 = vpop.f32.mrb[0].mxu0
      %2168 = vmatprep.mubr.bf16.mxu0 0
      %2169 = vmatmul.mubr.bf16.gmra.mrb[0].mxu0 %v2026
      %v2170 = vpop.f32.mrb[0].mxu0
      %v2171 = vadd.f32 0.0, %v2170
      %v2172 = vpop.f32.mrb[0].mxu0
      %v2173 = vpop.f32.mrb[0].mxu0
      %v2174 = vadd.f32 0.0, %v2173
      %v2175 = vpop.f32.mrb[0].mxu0
      %2176 = vmatprep.mubr.bf16.mxu0 0
      %2177 = vmatmul.mubr.bf16.gmra.mrb[0].mxu0 %v2029
      %v2178 = vpop.f32.mrb[0].mxu0
      %v2179 = vadd.f32 0.0, %v2178
      %v2180 = vpop.f32.mrb[0].mxu0
      %v2181 = vpop.f32.mrb[0].mxu0
      %v2182 = vadd.f32 0.0, %v2181
      %v2183 = vpop.f32.mrb[0].mxu0
      %2184 = vmatprep.mubr.bf16.mxu0 0
      %2185 = vmatmul.mubr.bf16.gmra.mrb[0].mxu0 %v2032
      %v2186 = vpop.f32.mrb[0].mxu0
      %v2187 = vadd.f32 0.0, %v2186
      %v2188 = vpop.f32.mrb[0].mxu0
      %v2189 = vpop.f32.mrb[0].mxu0
      %v2190 = vadd.f32 0.0, %v2189
      %v2191 = vpop.f32.mrb[0].mxu0
      %2192 = vmatprep.mubr.bf16.mxu0 0
      %2193 = vmatmul.mubr.bf16.gmra.mrb[0].mxu0 %v2035
      %v2194 = vpop.f32.mrb[0].mxu0
      %v2195 = vadd.f32 0.0, %v2194
      %v2196 = vpop.f32.mrb[0].mxu0
      %v2197 = vpop.f32.mrb[0].mxu0
      %v2198 = vadd.f32 0.0, %v2197
      %v2199 = vpop.f32.mrb[0].mxu0
      %2200 = vdwg.mxu0
      %v2201 = vadd.f32 %v1919, %v2075
      %v2202 = vadd.f32 %v1920, %v2078
      %v2203 = vadd.f32 %v1921, %v2083
      %v2204 = vadd.f32 %v1922, %v2086
      %v2205 = vadd.f32 %v1923, %v2091
      %v2206 = vadd.f32 %v1924, %v2094
      %v2207 = vadd.f32 %v1925, %v2099
      %v2208 = vadd.f32 %v1926, %v2102
      %v2209 = vadd.f32 %v1927, %v2107
      %v2210 = vadd.f32 %v1928, %v2110
      %v2211 = vadd.f32 %v1929, %v2115
      %v2212 = vadd.f32 %v1930, %v2118
      %v2213 = vadd.f32 %v1931, %v2123
      %v2214 = vadd.f32 %v1932, %v2126
      %v2215 = vadd.f32 %v1933, %v2131
      %v2216 = vadd.f32 %v1934, %v2134
      %v2217 = vadd.f32 %v1935, %v2139
      %v2218 = vadd.f32 %v1936, %v2142
      %v2219 = vadd.f32 %v1937, %v2147
      %v2220 = vadd.f32 %v1938, %v2150
      %v2221 = vadd.f32 %v1939, %v2155
      %v2222 = vadd.f32 %v1940, %v2158
      %v2223 = vadd.f32 %v1941, %v2163
      %v2224 = vadd.f32 %v1942, %v2166
      %v2225 = vadd.f32 %v1943, %v2171
      %v2226 = vadd.f32 %v1944, %v2174
      %v2227 = vadd.f32 %v1945, %v2179
      %v2228 = vadd.f32 %v1946, %v2182
      %v2229 = vadd.f32 %v1947, %v2187
      %v2230 = vadd.f32 %v1948, %v2190
      %v2231 = vadd.f32 %v1949, %v2195
      %v2232 = vadd.f32 %v1950, %v2198
      %v2233 = vld [vmem:[%s2] sm:$0x1]
      %v2235 = vlaneseq
      %v2236 = vshrl.u32 %v2235, 7
      %v2237 = vsub.s32 0, %v2236
      %v2238 = vrot.slane %v2233, %v2237
      %v2240 = vadd.f32 %v2201, %v2238
      %v2241 = vadd.f32 %v2202, %v2238
      %v2242 = vadd.f32 %v2203, %v2238
      %v2243 = vadd.f32 %v2204, %v2238
      %v2244 = vadd.f32 %v2205, %v2238
      %v2245 = vadd.f32 %v2206, %v2238
      %v2246 = vadd.f32 %v2207, %v2238
      %v2247 = vadd.f32 %v2208, %v2238
      %v2248 = vadd.f32 %v2209, %v2238
      %v2249 = vadd.f32 %v2210, %v2238
      %v2250 = vadd.f32 %v2211, %v2238
      %v2251 = vadd.f32 %v2212, %v2238
      %v2252 = vadd.f32 %v2213, %v2238
      %v2253 = vadd.f32 %v2214, %v2238
      %v2254 = vadd.f32 %v2215, %v2238
      %v2255 = vadd.f32 %v2216, %v2238
      %v2256 = vadd.f32 %v2217, %v2238
      %v2257 = vadd.f32 %v2218, %v2238
      %v2258 = vadd.f32 %v2219, %v2238
      %v2259 = vadd.f32 %v2220, %v2238
      %v2260 = vadd.f32 %v2221, %v2238
      %v2261 = vadd.f32 %v2222, %v2238
      %v2262 = vadd.f32 %v2223, %v2238
      %v2263 = vadd.f32 %v2224, %v2238
      %v2264 = vadd.f32 %v2225, %v2238
      %v2265 = vadd.f32 %v2226, %v2238
      %v2266 = vadd.f32 %v2227, %v2238
      %v2267 = vadd.f32 %v2228, %v2238
      %v2268 = vadd.f32 %v2229, %v2238
      %v2269 = vadd.f32 %v2230, %v2238
      %v2270 = vadd.f32 %v2231, %v2238
      %v2271 = vadd.f32 %v2232, %v2238
      %v2272 = vmax.f32 %v2240, 0.0
      %v2273 = vmax.f32 %v2241, 0.0
      %v2274 = vmax.f32 %v2242, 0.0
      %v2275 = vmax.f32 %v2243, 0.0
      %v2276 = vmax.f32 %v2244, 0.0
      %v2277 = vmax.f32 %v2245, 0.0
      %v2278 = vmax.f32 %v2246, 0.0
      %v2279 = vmax.f32 %v2247, 0.0
      %v2280 = vmax.f32 %v2248, 0.0
      %v2281 = vmax.f32 %v2249, 0.0
      %v2282 = vmax.f32 %v2250, 0.0
      %v2283 = vmax.f32 %v2251, 0.0
      %v2284 = vmax.f32 %v2252, 0.0
      %v2285 = vmax.f32 %v2253, 0.0
      %v2286 = vmax.f32 %v2254, 0.0
      %v2287 = vmax.f32 %v2255, 0.0
      %v2288 = vmax.f32 %v2256, 0.0
      %v2289 = vmax.f32 %v2257, 0.0
      %v2290 = vmax.f32 %v2258, 0.0
      %v2291 = vmax.f32 %v2259, 0.0
      %v2292 = vmax.f32 %v2260, 0.0
      %v2293 = vmax.f32 %v2261, 0.0
      %v2294 = vmax.f32 %v2262, 0.0
      %v2295 = vmax.f32 %v2263, 0.0
      %v2296 = vmax.f32 %v2264, 0.0
      %v2297 = vmax.f32 %v2265, 0.0
      %v2298 = vmax.f32 %v2266, 0.0
      %v2299 = vmax.f32 %v2267, 0.0
      %v2300 = vmax.f32 %v2268, 0.0
      %v2301 = vmax.f32 %v2269, 0.0
      %v2302 = vmax.f32 %v2270, 0.0
      %v2303 = vmax.f32 %v2271, 0.0
      %v2304 = vpack.c.bf16 %v2273, %v2272
      %v2305 = vpack.c.bf16 %v2275, %v2274
      %v2306 = vpack.c.bf16 %v2277, %v2276
      %v2307 = vpack.c.bf16 %v2279, %v2278
      %v2308 = vpack.c.bf16 %v2281, %v2280
      %v2309 = vpack.c.bf16 %v2283, %v2282
      %v2310 = vpack.c.bf16 %v2285, %v2284
      %v2311 = vpack.c.bf16 %v2287, %v2286
      %v2312 = vpack.c.bf16 %v2289, %v2288
      %v2313 = vpack.c.bf16 %v2291, %v2290
      %v2314 = vpack.c.bf16 %v2293, %v2292
      %v2315 = vpack.c.bf16 %v2295, %v2294
      %v2316 = vpack.c.bf16 %v2297, %v2296
      %v2317 = vpack.c.bf16 %v2299, %v2298
      %v2318 = vpack.c.bf16 %v2301, %v2300
      %v2319 = vpack.c.bf16 %v2303, %v2302
      %v2336 = vunpack.c.l.b16 %v2304
      %v2337 = vunpack.c.h.b16 %v2304
      %v2338 = vunpack.c.l.b16 %v2305
      %v2339 = vunpack.c.h.b16 %v2305
      %v2340 = vunpack.c.l.b16 %v2306
      %v2341 = vunpack.c.h.b16 %v2306
      %v2342 = vunpack.c.l.b16 %v2307
      %v2343 = vunpack.c.h.b16 %v2307
      %v2344 = vunpack.c.l.b16 %v2308
      %v2345 = vunpack.c.h.b16 %v2308
      %v2346 = vunpack.c.l.b16 %v2309
      %v2347 = vunpack.c.h.b16 %v2309
      %v2348 = vunpack.c.l.b16 %v2310
      %v2349 = vunpack.c.h.b16 %v2310
      %v2350 = vunpack.c.l.b16 %v2311
      %v2351 = vunpack.c.h.b16 %v2311
      %v2352 = vunpack.c.l.b16 %v2312
      %v2353 = vunpack.c.h.b16 %v2312
      %v2354 = vunpack.c.l.b16 %v2313
      %v2355 = vunpack.c.h.b16 %v2313
      %v2356 = vunpack.c.l.b16 %v2314
      %v2357 = vunpack.c.h.b16 %v2314
      %v2358 = vunpack.c.l.b16 %v2315
      %v2359 = vunpack.c.h.b16 %v2315
      %v2360 = vunpack.c.l.b16 %v2316
      %v2361 = vunpack.c.h.b16 %v2316
      %v2362 = vunpack.c.l.b16 %v2317
      %v2363 = vunpack.c.h.b16 %v2317
      %v2364 = vunpack.c.l.b16 %v2318
      %v2365 = vunpack.c.h.b16 %v2318
      %v2366 = vunpack.c.l.b16 %v2319
      %v2367 = vunpack.c.h.b16 %v2319
      %v2368 = vpack.c.b16 %v2336, %v2336
      %v2369 = vpack.c.b16 %v2337, %v2337
      %v2370 = vpack.c.b16 %v2338, %v2338
      %v2371 = vpack.c.b16 %v2339, %v2339
      %v2372 = vpack.c.b16 %v2340, %v2340
      %v2373 = vpack.c.b16 %v2341, %v2341
      %v2374 = vpack.c.b16 %v2342, %v2342
      %v2375 = vpack.c.b16 %v2343, %v2343
      %v2376 = vpack.c.b16 %v2344, %v2344
      %v2377 = vpack.c.b16 %v2345, %v2345
      %v2378 = vpack.c.b16 %v2346, %v2346
      %v2379 = vpack.c.b16 %v2347, %v2347
      %v2380 = vpack.c.b16 %v2348, %v2348
      %v2381 = vpack.c.b16 %v2349, %v2349
      %v2382 = vpack.c.b16 %v2350, %v2350
      %v2383 = vpack.c.b16 %v2351, %v2351
      %v2384 = vpack.c.b16 %v2352, %v2352
      %v2385 = vpack.c.b16 %v2353, %v2353
      %v2386 = vpack.c.b16 %v2354, %v2354
      %v2387 = vpack.c.b16 %v2355, %v2355
      %v2388 = vpack.c.b16 %v2356, %v2356
      %v2389 = vpack.c.b16 %v2357, %v2357
      %v2390 = vpack.c.b16 %v2358, %v2358
      %v2391 = vpack.c.b16 %v2359, %v2359
      %v2392 = vpack.c.b16 %v2360, %v2360
      %v2393 = vpack.c.b16 %v2361, %v2361
      %v2394 = vpack.c.b16 %v2362, %v2362
      %v2395 = vpack.c.b16 %v2363, %v2363
      %v2396 = vpack.c.b16 %v2364, %v2364
      %v2397 = vpack.c.b16 %v2365, %v2365
      %v2398 = vpack.c.b16 %v2366, %v2366
      %v2399 = vpack.c.b16 %v2367, %v2367
      %vm2432 = vcmask 388096
      %2433 = vst.msk [vmem:[%s170] sm:$0xf] %vm2432, %v2368
      %2434 = vst.msk [vmem:[%s170 + $0x4] sm:$0xf] %vm2432, %v2369
      %2435 = vst.msk [vmem:[%s170 + $0x8] sm:$0xf] %vm2432, %v2370
      %2436 = vst.msk [vmem:[%s170 + $0xc] sm:$0xf] %vm2432, %v2371
      %2437 = vst.msk [vmem:[%s170 + $0x10] sm:$0xf] %vm2432, %v2372
      %2438 = vst.msk [vmem:[%s170 + $0x14] sm:$0xf] %vm2432, %v2373
      %2439 = vst.msk [vmem:[%s170 + $0x18] sm:$0xf] %vm2432, %v2374
      %2440 = vst.msk [vmem:[%s170 + $0x1c] sm:$0xf] %vm2432, %v2375
      %2441 = vst.msk [vmem:[%s170 + $0x20] sm:$0xf] %vm2432, %v2376
      %2442 = vst.msk [vmem:[%s170 + $0x24] sm:$0xf] %vm2432, %v2377
      %2443 = vst.msk [vmem:[%s170 + $0x28] sm:$0xf] %vm2432, %v2378
      %2444 = vst.msk [vmem:[%s170 + $0x2c] sm:$0xf] %vm2432, %v2379
      %2445 = vst.msk [vmem:[%s170 + $0x30] sm:$0xf] %vm2432, %v2380
      %2446 = vst.msk [vmem:[%s170 + $0x34] sm:$0xf] %vm2432, %v2381
      %2447 = vst.msk [vmem:[%s170 + $0x38] sm:$0xf] %vm2432, %v2382
      %2448 = vst.msk [vmem:[%s170 + $0x3c] sm:$0xf] %vm2432, %v2383
      %2449 = vst.msk [vmem:[%s170 + $0x40] sm:$0xf] %vm2432, %v2384
      %2450 = vst.msk [vmem:[%s170 + $0x44] sm:$0xf] %vm2432, %v2385
      %2451 = vst.msk [vmem:[%s170 + $0x48] sm:$0xf] %vm2432, %v2386
      %2452 = vst.msk [vmem:[%s170 + $0x4c] sm:$0xf] %vm2432, %v2387
      %2453 = vst.msk [vmem:[%s170 + $0x50] sm:$0xf] %vm2432, %v2388
      %2454 = vst.msk [vmem:[%s170 + $0x54] sm:$0xf] %vm2432, %v2389
      %2455 = vst.msk [vmem:[%s170 + $0x58] sm:$0xf] %vm2432, %v2390
      %2456 = vst.msk [vmem:[%s170 + $0x5c] sm:$0xf] %vm2432, %v2391
      %2457 = vst.msk [vmem:[%s170 + $0x60] sm:$0xf] %vm2432, %v2392
      %2458 = vst.msk [vmem:[%s170 + $0x64] sm:$0xf] %vm2432, %v2393
      %2459 = vst.msk [vmem:[%s170 + $0x68] sm:$0xf] %vm2432, %v2394
      %2460 = vst.msk [vmem:[%s170 + $0x6c] sm:$0xf] %vm2432, %v2395
      %2461 = vst.msk [vmem:[%s170 + $0x70] sm:$0xf] %vm2432, %v2396
      %2462 = vst.msk [vmem:[%s170 + $0x74] sm:$0xf] %vm2432, %v2397
      %2463 = vst.msk [vmem:[%s170 + $0x78] sm:$0xf] %vm2432, %v2398
      %2464 = vst.msk [vmem:[%s170 + $0x7c] sm:$0xf] %vm2432, %v2399
      %p2465 = scmp.lt.s32.totalorder %s14, 1
      %s2466 = scalar_select %p2465, %s14, 1
      %s2467 = smul.addr %s2466, 32
      %s2468 = smul.addr %s2467, 4
      %s2469 = scalar_lea.vmem %s3, %s2468
      // Predicated region
      $region33: #{inception_resnet_b_forward.6} parent=31 // pred_check
        %p2470 = pneg %p100
      $region34: #{inception_resnet_b_forward.6} parent=31 // pred_check_branch
        %2472 = sbr.rel (%p2470) target = $region36
      $region35: #{inception_resnet_b_forward.6} parent=31 // pred_region
        _
      $region36: #{inception_resnet_b_forward.6} parent=31 // pred_fallthru
        _
    $region32: #{inception_resnet_b_forward.6} parent=5 // pred_fallthru
      _
    %p2473 = scmp.le.s32.totalorder 2, %s9
    // Predicated region
    $region37: #{inception_resnet_b_forward.6} parent=5 // pred_check
      %p2474 = pneg %p2473
    $region38: #{inception_resnet_b_forward.6} parent=5 // pred_check_branch
      %2476 = sbr.rel (%p2474) target = $region40
    $region39: #{inception_resnet_b_forward.6} parent=5 // pred_region
      %s2477 = ssub.s32 %s9, 2
      // Predicated region
      $region41: #{inception_resnet_b_forward.6} parent=39 // pred_check
        %p2478 = pneg %p106
      $region42: #{inception_resnet_b_forward.6} parent=39 // pred_check_branch
        %2480 = sbr.rel (%p2478) target = $region44
      $region43: #{inception_resnet_b_forward.6} parent=39 // pred_region
        %p2481 = scmp.lt.s32.totalorder %s15, 1
        %s2482 = scalar_select %p2481, %s15, 1
        %s2483 = smul.addr %s2482, 32
        %s2484 = smul.addr %s2483, 4
        %s2485 = scalar_lea.vmem %s3, %s2484
      $region44: #{inception_resnet_b_forward.6} parent=39 // pred_fallthru
        _
    $region40: #{inception_resnet_b_forward.6} parent=5 // pred_fallthru
      _
  $region6: #{inception_resnet_b_forward.6} parent=0 // loop_footer
    %s13 = sadd.s32 1, %s9
  $region7: #{inception_resnet_b_forward.6} parent=0 // loop_footer_branch
    %8 = sbr.rel target = $region3
  $region8: #{inception_resnet_b_forward.6} parent=0 // loop_exit
    _

// kernel: inception_resnet_b_forward.5
$region0: #{inception_resnet_b_forward.5}
  #allocation0 [shape = 'u32[]', space=smem, size = 0x4, offset = 0x4, fixed_abs, tag = 'smem constant byte address 0x4 - core index']
  #allocation1 [shape = 'u32[144,128]{1,0:T(1,128)}', space=vmem, size = 0x12000, scoped, tag = 'internal scratch']
  #allocation2 [shape = 'bf16[16,32,32]{2,1,0:T(16,128)(2,1)}', space=vmem, size = 0x20000, scoped, tag = 'scratch operand']
  %s0 = inlined_call_operand.vmem [shape: bf16[32,16,32], index: 0, kind: input, shape index: {}]
  %s1 = inlined_call_operand.vmem [shape: bf16[7,32,40], index: 1, kind: input, shape index: {}]
  %s2 = inlined_call_operand.vmem [shape: f32[1,40], index: 2, kind: input, shape index: {}]
  %s3 = inlined_call_operand.vmem [shape: bf16[32,16,40], index: 3, kind: output, shape index: {}]
  %s4 = sld [smem:[#allocation0]]
  $region45: #{inception_resnet_b_forward.5} parent=0
    _
  %s6 = ssub.s32 1, %s4
  %s7 = scalar_select 0, %s6, %s4
  loop: start=0, step=1, limit=4
  $region2: #{inception_resnet_b_forward.5} parent=0 // loop_pre_header
    _
  $region3: #{inception_resnet_b_forward.5} parent=0 // loop_header
    %s9 = sphi 0, %s13
    %p10 = scmp.ge.s32.totalorder %s9, 4
    %s19 = sphi 0, %s21
    %s22 = sphi 0, %s19
    %s23 = sphi 0, %s22
    %s39 = sphi 0, %s23
    %s43 = sphi 0, %s43
    %s45 = sphi 0, %s43
    %s46 = sphi 0, %s45
    %s60 = sphi 0, %s46
    %s64 = sphi 0, %s64
    %s66 = sphi 0, %s64
    %s67 = sphi 0, %s66
    %s81 = sphi 0, %s67
    %s87 = sphi 0, %s89
    %s90 = sphi 0, %s87
    %s91 = sphi 0, %s90
    %s107 = sphi 0, %s91
  $region4: #{inception_resnet_b_forward.5} parent=0 // loop_header_branch
    %12 = sbr.rel (%p10) target = $region8
  $region5: #{inception_resnet_b_forward.5} parent=0 // loop_body
    %s14 = ssub.s32 %s9, 1
    %s15 = ssub.s32 %s9, 2
    %s16 = sadd.s32 %s9, 1
    %s17 = ssub.s32 %s9, %s16
    %p18 = scmp.eq.s32.totalorder %s17, 0
    %s20 = sadd.s32 %s19, 1
    %s21 = scalar_select %p18, %s19, %s20
    %p24 = pneg %p18
    %p25 = scmp.eq.s32.totalorder %s9, 1
    %p26 = por %p24, %p25
    %p27 = scmp.ne.s32.totalorder %s19, %s22
    %p28 = scmp.eq.s32.totalorder %s9, 0
    %p29 = por %p27, %p28
    %p30 = scmp.ne.s32.totalorder %s19, %s22
    %p31 = scmp.eq.s32.totalorder %s14, 1
    %p32 = por %p30, %p31
    %p33 = scmp.ne.s32.totalorder %s22, %s23
    %p34 = scmp.eq.s32.totalorder %s14, 0
    %p35 = por %p33, %p34
    %p36 = scmp.ne.s32.totalorder %s22, %s23
    %p37 = scmp.eq.s32.totalorder %s15, 1
    %p38 = por %p36, %p37
    %p40 = scmp.ne.s32.totalorder %s23, %s39
    %p41 = scmp.eq.s32.totalorder %s15, 0
    %p42 = por %p40, %p41
    %s44 = sadd.s32 %s43, 1
    %p47 = scmp.eq.s32.totalorder %s9, 1
    %p48 = scmp.ne.s32.totalorder %s43, %s45
    %p49 = scmp.eq.s32.totalorder %s9, 0
    %p50 = por %p48, %p49
    %p51 = scmp.ne.s32.totalorder %s43, %s45
    %p52 = scmp.eq.s32.totalorder %s14, 1
    %p53 = por %p51, %p52
    %p54 = scmp.ne.s32.totalorder %s45, %s46
    %p55 = scmp.eq.s32.totalorder %s14, 0
    %p56 = por %p54, %p55
    %p57 = scmp.ne.s32.totalorder %s45, %s46
    %p58 = scmp.eq.s32.totalorder %s15, 1
    %p59 = por %p57, %p58
    %p61 = scmp.ne.s32.totalorder %s46, %s60
    %p62 = scmp.eq.s32.totalorder %s15, 0
    %p63 = por %p61, %p62
    %s65 = sadd.s32 %s64, 1
    %p68 = scmp.eq.s32.totalorder %s9, 1
    %p69 = scmp.ne.s32.totalorder %s64, %s66
    %p70 = scmp.eq.s32.totalorder %s9, 0
    %p71 = por %p69, %p70
    %p72 = scmp.ne.s32.totalorder %s64, %s66
    %p73 = scmp.eq.s32.totalorder %s14, 1
    %p74 = por %p72, %p73
    %p75 = scmp.ne.s32.totalorder %s66, %s67
    %p76 = scmp.eq.s32.totalorder %s14, 0
    %p77 = por %p75, %p76
    %p78 = scmp.ne.s32.totalorder %s66, %s67
    %p79 = scmp.eq.s32.totalorder %s15, 1
    %p80 = por %p78, %p79
    %p82 = scmp.ne.s32.totalorder %s67, %s81
    %p83 = scmp.eq.s32.totalorder %s15, 0
    %p84 = por %p82, %p83
    %s85 = ssub.s32 %s9, %s16
    %p86 = scmp.eq.s32.totalorder %s85, 0
    %s88 = sadd.s32 %s87, 1
    %s89 = scalar_select %p86, %s87, %s88
    %p92 = pneg %p86
    %p93 = scmp.eq.s32.totalorder %s9, 1
    %p94 = por %p92, %p93
    %p95 = scmp.ne.s32.totalorder %s87, %s90
    %p96 = scmp.eq.s32.totalorder %s9, 0
    %p97 = por %p95, %p96
    %p98 = scmp.ne.s32.totalorder %s87, %s90
    %p99 = scmp.eq.s32.totalorder %s14, 1
    %p100 = por %p98, %p99
    %p101 = scmp.ne.s32.totalorder %s90, %s91
    %p102 = scmp.eq.s32.totalorder %s14, 0
    %p103 = por %p101, %p102
    %p104 = scmp.ne.s32.totalorder %s90, %s91
    %p105 = scmp.eq.s32.totalorder %s15, 1
    %p106 = por %p104, %p105
    %p108 = scmp.ne.s32.totalorder %s91, %s107
    %p109 = scmp.eq.s32.totalorder %s15, 0
    %p110 = por %p108, %p109
    %p111 = scmp.le.s32.totalorder 1, %s9
    %p112 = scmp.lt.s32.totalorder %s9, 3
    %p113 = pnand %p111, %p112
    %p114 = pneg %p113
    // Predicated region
    $region9: #{inception_resnet_b_forward.5} parent=5 // pred_check
      _
    $region10: #{inception_resnet_b_forward.5} parent=5 // pred_check_branch
      %116 = sbr.rel (%p113) target = $region12
    $region11: #{inception_resnet_b_forward.5} parent=5 // pred_region
      %s117 = ssub.s32 %s9, 1
      // Predicated region
      $region13: #{inception_resnet_b_forward.5} parent=11 // pred_check
        %p118 = pneg %p56
      $region14: #{inception_resnet_b_forward.5} parent=11 // pred_check_branch
        %120 = sbr.rel (%p118) target = $region16
      $region15: #{inception_resnet_b_forward.5} parent=11 // pred_region
        _
      $region16: #{inception_resnet_b_forward.5} parent=11 // pred_fallthru
        _
      // Predicated region
      $region17: #{inception_resnet_b_forward.5} parent=11 // pred_check
        %p121 = pneg %p77
      $region18: #{inception_resnet_b_forward.5} parent=11 // pred_check_branch
        %123 = sbr.rel (%p121) target = $region20
      $region19: #{inception_resnet_b_forward.5} parent=11 // pred_region
        _
      $region20: #{inception_resnet_b_forward.5} parent=11 // pred_fallthru
        _
    $region12: #{inception_resnet_b_forward.5} parent=5 // pred_fallthru
      _
    %p124 = scmp.lt.s32.totalorder %s9, 2
    // Predicated region
    $region21: #{inception_resnet_b_forward.5} parent=5 // pred_check
      %p125 = pneg %p124
    $region22: #{inception_resnet_b_forward.5} parent=5 // pred_check_branch
      %127 = sbr.rel (%p125) target = $region24
    $region23: #{inception_resnet_b_forward.5} parent=5 // pred_region
      // Predicated region
      $region25: #{inception_resnet_b_forward.5} parent=23 // pred_check
        %p128 = pneg %p29
      $region26: #{inception_resnet_b_forward.5} parent=23 // pred_check_branch
        %130 = sbr.rel (%p128) target = $region28
      $region27: #{inception_resnet_b_forward.5} parent=23 // pred_region
        %s131 = smul.u32 16, %s9
        %p132 = scmp.lt.s32.totalorder %s131, 31
        %s133 = scalar_select %p132, %s131, 31
        %s134 = smul.addr %s133, 2
        %s135 = smul.addr %s134, 4
        %s136 = scalar_lea.vmem %s0, %s135
        %s137 = smul.u32 16, %s9
      $region28: #{inception_resnet_b_forward.5} parent=23 // pred_fallthru
        _
    $region24: #{inception_resnet_b_forward.5} parent=5 // pred_fallthru
      _
    %p138 = scmp.le.s32.totalorder 1, %s9
    %p139 = scmp.lt.s32.totalorder %s9, 3
    %p140 = pnand %p138, %p139
    %p141 = pneg %p140
    // Predicated region
    $region29: #{inception_resnet_b_forward.5} parent=5 // pred_check
      _
    $region30: #{inception_resnet_b_forward.5} parent=5 // pred_check_branch
      %143 = sbr.rel (%p140) target = $region32
    $region31: #{inception_resnet_b_forward.5} parent=5 // pred_region
      %s144 = ssub.s32 %s9, 1
      %s145 = smul.u32 16, %s14
      %p146 = scmp.lt.s32.totalorder %s145, 31
      %s147 = scalar_select %p146, %s145, 31
      %s148 = smul.addr %s147, 2
      %s149 = smul.addr %s148, 4
      %s150 = scalar_lea.vmem %s0, %s149
      %p151 = pneg %p35
      %p152 = pneg %p32
      %p153 = pneg %p56
      %p154 = pneg %p53
      %p155 = pneg %p77
      %p156 = pneg %p74
      %p157 = pneg %p103
      %p158 = pneg %p100
      %s159 = smul.u32 16, %s14
      %p160 = scmp.lt.s32.totalorder %s159, 31
      %s161 = scalar_select %p160, %s159, 31
      %s162 = smul.addr %s161, 2
      %s163 = smul.addr %s162, 4
      %s164 = scalar_lea.vmem %s3, %s163
      %s165 = smul.u32 16, %s14
      %p166 = scmp.lt.s32.totalorder %s165, 31
      %s167 = scalar_select %p166, %s165, 31
      %s168 = smul.addr %s167, 2
      %s169 = smul.addr %s168, 4
      %s170 = scalar_lea.vmem %s0, %s169
      %s171 = smul.u32 16, %s14
      %s172 = smul.u32 16, %s14
      %p173 = scmp.lt.s32.totalorder %s172, 31
      %s174 = scalar_select %p173, %s172, 31
      %s175 = smul.addr %s174, 2
      %s176 = smul.addr %s175, 4
      %s177 = scalar_lea.vmem %s3, %s176
      %s178 = smul.u32 16, %s14
      %vm180 = vcmask 261120
      %181 = vst.msk [vmem:[#allocation2] sm:$0xff] %vm180, 0
      %182 = vst.msk [vmem:[#allocation2 + $0x8] sm:$0xff] %vm180, 0
      %183 = vst.msk [vmem:[#allocation2 + $0x10] sm:$0xff] %vm180, 0
      %184 = vst.msk [vmem:[#allocation2 + $0x18] sm:$0xff] %vm180, 0
      %185 = vst.msk [vmem:[#allocation2 + $0x20] sm:$0xff] %vm180, 0
      %186 = vst.msk [vmem:[#allocation2 + $0x28] sm:$0xff] %vm180, 0
      %187 = vst.msk [vmem:[#allocation2 + $0x30] sm:$0xff] %vm180, 0
      %188 = vst.msk [vmem:[#allocation2 + $0x38] sm:$0xff] %vm180, 0
      %189 = vst.msk [vmem:[#allocation2 + $0x40] sm:$0xff] %vm180, 0
      %190 = vst.msk [vmem:[#allocation2 + $0x48] sm:$0xff] %vm180, 0
      %191 = vst.msk [vmem:[#allocation2 + $0x50] sm:$0xff] %vm180, 0
      %192 = vst.msk [vmem:[#allocation2 + $0x58] sm:$0xff] %vm180, 0
      %193 = vst.msk [vmem:[#allocation2 + $0x60] sm:$0xff] %vm180, 0
      %194 = vst.msk [vmem:[#allocation2 + $0x68] sm:$0xff] %vm180, 0
      %195 = vst.msk [vmem:[#allocation2 + $0x70] sm:$0xff] %vm180, 0
      %196 = vst.msk [vmem:[#allocation2 + $0x78] sm:$0xff] %vm180, 0
      %197 = vst.msk [vmem:[#allocation2 + $0x80] sm:$0xff] %vm180, 0
      %198 = vst.msk [vmem:[#allocation2 + $0x88] sm:$0xff] %vm180, 0
      %199 = vst.msk [vmem:[#allocation2 + $0x90] sm:$0xff] %vm180, 0
      %200 = vst.msk [vmem:[#allocation2 + $0x98] sm:$0xff] %vm180, 0
      %201 = vst.msk [vmem:[#allocation2 + $0xa0] sm:$0xff] %vm180, 0
      %202 = vst.msk [vmem:[#allocation2 + $0xa8] sm:$0xff] %vm180, 0
      %203 = vst.msk [vmem:[#allocation2 + $0xb0] sm:$0xff] %vm180, 0
      %204 = vst.msk [vmem:[#allocation2 + $0xb8] sm:$0xff] %vm180, 0
      %205 = vst.msk [vmem:[#allocation2 + $0xc0] sm:$0xff] %vm180, 0
      %206 = vst.msk [vmem:[#allocation2 + $0xc8] sm:$0xff] %vm180, 0
      %207 = vst.msk [vmem:[#allocation2 + $0xd0] sm:$0xff] %vm180, 0
      %208 = vst.msk [vmem:[#allocation2 + $0xd8] sm:$0xff] %vm180, 0
      %209 = vst.msk [vmem:[#allocation2 + $0xe0] sm:$0xff] %vm180, 0
      %210 = vst.msk [vmem:[#allocation2 + $0xe8] sm:$0xff] %vm180, 0
      %211 = vst.msk [vmem:[#allocation2 + $0xf0] sm:$0xff] %vm180, 0
      %212 = vst.msk [vmem:[#allocation2 + $0xf8] sm:$0xff] %vm180, 0
      %v213 = vld [vmem:[%s170] sm:$0xf]
      %v214 = vld [vmem:[%s170 + $0x4] sm:$0xf]
      %v215 = vld [vmem:[%s170 + $0x8] sm:$0xf]
      %v216 = vld [vmem:[%s170 + $0xc] sm:$0xf]
      %v217 = vld [vmem:[%s170 + $0x10] sm:$0xf]
      %v218 = vld [vmem:[%s170 + $0x14] sm:$0xf]
      %v219 = vld [vmem:[%s170 + $0x18] sm:$0xf]
      %v220 = vld [vmem:[%s170 + $0x1c] sm:$0xf]
      %v221 = vld [vmem:[%s170 + $0x20] sm:$0xf]
      %v222 = vld [vmem:[%s170 + $0x24] sm:$0xf]
      %v223 = vld [vmem:[%s170 + $0x28] sm:$0xf]
      %v224 = vld [vmem:[%s170 + $0x2c] sm:$0xf]
      %v225 = vld [vmem:[%s170 + $0x30] sm:$0xf]
      %v226 = vld [vmem:[%s170 + $0x34] sm:$0xf]
      %v227 = vld [vmem:[%s170 + $0x38] sm:$0xf]
      %v228 = vld [vmem:[%s170 + $0x3c] sm:$0xf]
      %v229 = vld [vmem:[%s170 + $0x40] sm:$0xf]
      %v230 = vld [vmem:[%s170 + $0x44] sm:$0xf]
      %v231 = vld [vmem:[%s170 + $0x48] sm:$0xf]
      %v232 = vld [vmem:[%s170 + $0x4c] sm:$0xf]
      %v233 = vld [vmem:[%s170 + $0x50] sm:$0xf]
      %v234 = vld [vmem:[%s170 + $0x54] sm:$0xf]
      %v235 = vld [vmem:[%s170 + $0x58] sm:$0xf]
      %v236 = vld [vmem:[%s170 + $0x5c] sm:$0xf]
      %v237 = vld [vmem:[%s170 + $0x60] sm:$0xf]
      %v238 = vld [vmem:[%s170 + $0x64] sm:$0xf]
      %v239 = vld [vmem:[%s170 + $0x68] sm:$0xf]
      %v240 = vld [vmem:[%s170 + $0x6c] sm:$0xf]
      %v241 = vld [vmem:[%s170 + $0x70] sm:$0xf]
      %v242 = vld [vmem:[%s170 + $0x74] sm:$0xf]
      %v243 = vld [vmem:[%s170 + $0x78] sm:$0xf]
      %v244 = vld [vmem:[%s170 + $0x7c] sm:$0xf]
      %v277 = vunpack.c.l.b16 %v213
      %v278 = vunpack.c.l.b16 %v214
      %v279 = vunpack.c.l.b16 %v215
      %v280 = vunpack.c.l.b16 %v216
      %v281 = vunpack.c.l.b16 %v217
      %v282 = vunpack.c.l.b16 %v218
      %v283 = vunpack.c.l.b16 %v219
      %v284 = vunpack.c.l.b16 %v220
      %v285 = vunpack.c.l.b16 %v221
      %v286 = vunpack.c.l.b16 %v222
      %v287 = vunpack.c.l.b16 %v223
      %v288 = vunpack.c.l.b16 %v224
      %v289 = vunpack.c.l.b16 %v225
      %v290 = vunpack.c.l.b16 %v226
      %v291 = vunpack.c.l.b16 %v227
      %v292 = vunpack.c.l.b16 %v228
      %v293 = vunpack.c.l.b16 %v229
      %v294 = vunpack.c.l.b16 %v230
      %v295 = vunpack.c.l.b16 %v231
      %v296 = vunpack.c.l.b16 %v232
      %v297 = vunpack.c.l.b16 %v233
      %v298 = vunpack.c.l.b16 %v234
      %v299 = vunpack.c.l.b16 %v235
      %v300 = vunpack.c.l.b16 %v236
      %v301 = vunpack.c.l.b16 %v237
      %v302 = vunpack.c.l.b16 %v238
      %v303 = vunpack.c.l.b16 %v239
      %v304 = vunpack.c.l.b16 %v240
      %v305 = vunpack.c.l.b16 %v241
      %v306 = vunpack.c.l.b16 %v242
      %v307 = vunpack.c.l.b16 %v243
      %v308 = vunpack.c.l.b16 %v244
      %v309 = vpack.c.b16 %v277, %v277
      %v310 = vpack.c.b16 %v278, %v278
      %v311 = vpack.c.b16 %v279, %v279
      %v312 = vpack.c.b16 %v280, %v280
      %v313 = vpack.c.b16 %v281, %v281
      %v314 = vpack.c.b16 %v282, %v282
      %v315 = vpack.c.b16 %v283, %v283
      %v316 = vpack.c.b16 %v284, %v284
      %v317 = vpack.c.b16 %v285, %v285
      %v318 = vpack.c.b16 %v286, %v286
      %v319 = vpack.c.b16 %v287, %v287
      %v320 = vpack.c.b16 %v288, %v288
      %v321 = vpack.c.b16 %v289, %v289
      %v322 = vpack.c.b16 %v290, %v290
      %v323 = vpack.c.b16 %v291, %v291
      %v324 = vpack.c.b16 %v292, %v292
      %v325 = vpack.c.b16 %v293, %v293
      %v326 = vpack.c.b16 %v294, %v294
      %v327 = vpack.c.b16 %v295, %v295
      %v328 = vpack.c.b16 %v296, %v296
      %v329 = vpack.c.b16 %v297, %v297
      %v330 = vpack.c.b16 %v298, %v298
      %v331 = vpack.c.b16 %v299, %v299
      %v332 = vpack.c.b16 %v300, %v300
      %v333 = vpack.c.b16 %v301, %v301
      %v334 = vpack.c.b16 %v302, %v302
      %v335 = vpack.c.b16 %v303, %v303
      %v336 = vpack.c.b16 %v304, %v304
      %v337 = vpack.c.b16 %v305, %v305
      %v338 = vpack.c.b16 %v306, %v306
      %v339 = vpack.c.b16 %v307, %v307
      %v340 = vpack.c.b16 %v308, %v308
      %vm373 = vcmask 261124
      %374 = vst.msk [vmem:[#allocation2] sm:$0xf0] %vm373, %v309
      %vm375 = vcmask 257024
      %376 = vst.msk [vmem:[#allocation2 + $0x8] sm:$0xf] %vm375, %v310
      %377 = vst.msk [vmem:[#allocation2 + $0x10] sm:$0xf0] %vm373, %v311
      %378 = vst.msk [vmem:[#allocation2 + $0x18] sm:$0xf] %vm375, %v312
      %379 = vst.msk [vmem:[#allocation2 + $0x20] sm:$0xf0] %vm373, %v313
      %380 = vst.msk [vmem:[#allocation2 + $0x28] sm:$0xf] %vm375, %v314
      %381 = vst.msk [vmem:[#allocation2 + $0x30] sm:$0xf0] %vm373, %v315
      %382 = vst.msk [vmem:[#allocation2 + $0x38] sm:$0xf] %vm375, %v316
      %383 = vst.msk [vmem:[#allocation2 + $0x40] sm:$0xf0] %vm373, %v317
      %384 = vst.msk [vmem:[#allocation2 + $0x48] sm:$0xf] %vm375, %v318
      %385 = vst.msk [vmem:[#allocation2 + $0x50] sm:$0xf0] %vm373, %v319
      %386 = vst.msk [vmem:[#allocation2 + $0x58] sm:$0xf] %vm375, %v320
      %387 = vst.msk [vmem:[#allocation2 + $0x60] sm:$0xf0] %vm373, %v321
      %388 = vst.msk [vmem:[#allocation2 + $0x68] sm:$0xf] %vm375, %v322
      %389 = vst.msk [vmem:[#allocation2 + $0x70] sm:$0xf0] %vm373, %v323
      %390 = vst.msk [vmem:[#allocation2 + $0x78] sm:$0xf] %vm375, %v324
      %391 = vst.msk [vmem:[#allocation2 + $0x80] sm:$0xf0] %vm373, %v325
      %392 = vst.msk [vmem:[#allocation2 + $0x88] sm:$0xf] %vm375, %v326
      %393 = vst.msk [vmem:[#allocation2 + $0x90] sm:$0xf0] %vm373, %v327
      %394 = vst.msk [vmem:[#allocation2 + $0x98] sm:$0xf] %vm375, %v328
      %395 = vst.msk [vmem:[#allocation2 + $0xa0] sm:$0xf0] %vm373, %v329
      %396 = vst.msk [vmem:[#allocation2 + $0xa8] sm:$0xf] %vm375, %v330
      %397 = vst.msk [vmem:[#allocation2 + $0xb0] sm:$0xf0] %vm373, %v331
      %398 = vst.msk [vmem:[#allocation2 + $0xb8] sm:$0xf] %vm375, %v332
      %399 = vst.msk [vmem:[#allocation2 + $0xc0] sm:$0xf0] %vm373, %v333
      %400 = vst.msk [vmem:[#allocation2 + $0xc8] sm:$0xf] %vm375, %v334
      %401 = vst.msk [vmem:[#allocation2 + $0xd0] sm:$0xf0] %vm373, %v335
      %402 = vst.msk [vmem:[#allocation2 + $0xd8] sm:$0xf] %vm375, %v336
      %403 = vst.msk [vmem:[#allocation2 + $0xe0] sm:$0xf0] %vm373, %v337
      %404 = vst.msk [vmem:[#allocation2 + $0xe8] sm:$0xf] %vm375, %v338
      %405 = vst.msk [vmem:[#allocation2 + $0xf0] sm:$0xf0] %vm373, %v339
      %406 = vst.msk [vmem:[#allocation2 + $0xf8] sm:$0xf] %vm375, %v340
      %v407 = vld [vmem:[#allocation2] sm:$0xfc]
      %v408 = vld [vmem:[#allocation2 + $0x8] sm:$0x7]
      %v409 = vld [vmem:[#allocation2 + $0x10] sm:$0xfc]
      %v410 = vld [vmem:[#allocation2 + $0x18] sm:$0x7]
      %v411 = vld [vmem:[#allocation2 + $0x20] sm:$0xfc]
      %v412 = vld [vmem:[#allocation2 + $0x28] sm:$0x7]
      %v413 = vld [vmem:[#allocation2 + $0x30] sm:$0xfc]
      %v414 = vld [vmem:[#allocation2 + $0x38] sm:$0x7]
      %v415 = vld [vmem:[#allocation2 + $0x40] sm:$0xfc]
      %v416 = vld [vmem:[#allocation2 + $0x48] sm:$0x7]
      %v417 = vld [vmem:[#allocation2 + $0x50] sm:$0xfc]
      %v418 = vld [vmem:[#allocation2 + $0x58] sm:$0x7]
      %v419 = vld [vmem:[#allocation2 + $0x60] sm:$0xfc]
      %v420 = vld [vmem:[#allocation2 + $0x68] sm:$0x7]
      %v421 = vld [vmem:[#allocation2 + $0x70] sm:$0xfc]
      %v422 = vld [vmem:[#allocation2 + $0x78] sm:$0x7]
      %v423 = vld [vmem:[#allocation2 + $0x80] sm:$0xfc]
      %v424 = vld [vmem:[#allocation2 + $0x88] sm:$0x7]
      %v425 = vld [vmem:[#allocation2 + $0x90] sm:$0xfc]
      %v426 = vld [vmem:[#allocation2 + $0x98] sm:$0x7]
      %v427 = vld [vmem:[#allocation2 + $0xa0] sm:$0xfc]
      %v428 = vld [vmem:[#allocation2 + $0xa8] sm:$0x7]
      %v429 = vld [vmem:[#allocation2 + $0xb0] sm:$0xfc]
      %v430 = vld [vmem:[#allocation2 + $0xb8] sm:$0x7]
      %v431 = vld [vmem:[#allocation2 + $0xc0] sm:$0xfc]
      %v432 = vld [vmem:[#allocation2 + $0xc8] sm:$0x7]
      %v433 = vld [vmem:[#allocation2 + $0xd0] sm:$0xfc]
      %v434 = vld [vmem:[#allocation2 + $0xd8] sm:$0x7]
      %v435 = vld [vmem:[#allocation2 + $0xe0] sm:$0xfc]
      %v436 = vld [vmem:[#allocation2 + $0xe8] sm:$0x7]
      %v437 = vld [vmem:[#allocation2 + $0xf0] sm:$0xfc]
      %v438 = vld [vmem:[#allocation2 + $0xf8] sm:$0x7]
      %vm439 = vsmask.f32 5376
      %v441 = vshrl.u32 %v407, 16
      %v443 = vrot.slane %v441, 2
      %v444 = vshll.u32 %v407, 16
      %v446 = vrot.slane %v444, 3
      %v447 = vor.u32 %v443, %v446
      %v449 = vshrl.u32 %v408, 16
      %v451 = vrot.slane %v449, 2
      %v452 = vshll.u32 %v408, 16
      %v454 = vrot.slane %v452, 3
      %v455 = vor.u32 %v451, %v454
      %v456 = vsel %vm439, %v447, %v455
      %v458 = vshrl.u32 %v409, 16
      %v460 = vrot.slane %v458, 2
      %v461 = vshll.u32 %v409, 16
      %v463 = vrot.slane %v461, 3
      %v464 = vor.u32 %v460, %v463
      %v466 = vshrl.u32 %v410, 16
      %v468 = vrot.slane %v466, 2
      %v469 = vshll.u32 %v410, 16
      %v471 = vrot.slane %v469, 3
      %v472 = vor.u32 %v468, %v471
      %v473 = vsel %vm439, %v464, %v472
      %v475 = vshrl.u32 %v411, 16
      %v477 = vrot.slane %v475, 2
      %v478 = vshll.u32 %v411, 16
      %v480 = vrot.slane %v478, 3
      %v481 = vor.u32 %v477, %v480
      %v483 = vshrl.u32 %v412, 16
      %v485 = vrot.slane %v483, 2
      %v486 = vshll.u32 %v412, 16
      %v488 = vrot.slane %v486, 3
      %v489 = vor.u32 %v485, %v488
      %v490 = vsel %vm439, %v481, %v489
      %v492 = vshrl.u32 %v413, 16
      %v494 = vrot.slane %v492, 2
      %v495 = vshll.u32 %v413, 16
      %v497 = vrot.slane %v495, 3
      %v498 = vor.u32 %v494, %v497
      %v500 = vshrl.u32 %v414, 16
      %v502 = vrot.slane %v500, 2
      %v503 = vshll.u32 %v414, 16
      %v505 = vrot.slane %v503, 3
      %v506 = vor.u32 %v502, %v505
      %v507 = vsel %vm439, %v498, %v506
      %v509 = vshrl.u32 %v415, 16
      %v511 = vrot.slane %v509, 2
      %v512 = vshll.u32 %v415, 16
      %v514 = vrot.slane %v512, 3
      %v515 = vor.u32 %v511, %v514
      %v517 = vshrl.u32 %v416, 16
      %v519 = vrot.slane %v517, 2
      %v520 = vshll.u32 %v416, 16
      %v522 = vrot.slane %v520, 3
      %v523 = vor.u32 %v519, %v522
      %v524 = vsel %vm439, %v515, %v523
      %v526 = vshrl.u32 %v417, 16
      %v528 = vrot.slane %v526, 2
      %v529 = vshll.u32 %v417, 16
      %v531 = vrot.slane %v529, 3
      %v532 = vor.u32 %v528, %v531
      %v534 = vshrl.u32 %v418, 16
      %v536 = vrot.slane %v534, 2
      %v537 = vshll.u32 %v418, 16
      %v539 = vrot.slane %v537, 3
      %v540 = vor.u32 %v536, %v539
      %v541 = vsel %vm439, %v532, %v540
      %v543 = vshrl.u32 %v419, 16
      %v545 = vrot.slane %v543, 2
      %v546 = vshll.u32 %v419, 16
      %v548 = vrot.slane %v546, 3
      %v549 = vor.u32 %v545, %v548
      %v551 = vshrl.u32 %v420, 16
      %v553 = vrot.slane %v551, 2
      %v554 = vshll.u32 %v420, 16
      %v556 = vrot.slane %v554, 3
      %v557 = vor.u32 %v553, %v556
      %v558 = vsel %vm439, %v549, %v557
      %v560 = vshrl.u32 %v421, 16
      %v562 = vrot.slane %v560, 2
      %v563 = vshll.u32 %v421, 16
      %v565 = vrot.slane %v563, 3
      %v566 = vor.u32 %v562, %v565
      %v568 = vshrl.u32 %v422, 16
      %v570 = vrot.slane %v568, 2
      %v571 = vshll.u32 %v422, 16
      %v573 = vrot.slane %v571, 3
      %v574 = vor.u32 %v570, %v573
      %v575 = vsel %vm439, %v566, %v574
      %v577 = vshrl.u32 %v423, 16
      %v579 = vrot.slane %v577, 2
      %v580 = vshll.u32 %v423, 16
      %v582 = vrot.slane %v580, 3
      %v583 = vor.u32 %v579, %v582
      %v585 = vshrl.u32 %v424, 16
      %v587 = vrot.slane %v585, 2
      %v588 = vshll.u32 %v424, 16
      %v590 = vrot.slane %v588, 3
      %v591 = vor.u32 %v587, %v590
      %v592 = vsel %vm439, %v583, %v591
      %v594 = vshrl.u32 %v425, 16
      %v596 = vrot.slane %v594, 2
      %v597 = vshll.u32 %v425, 16
      %v599 = vrot.slane %v597, 3
      %v600 = vor.u32 %v596, %v599
      %v602 = vshrl.u32 %v426, 16
      %v604 = vrot.slane %v602, 2
      %v605 = vshll.u32 %v426, 16
      %v607 = vrot.slane %v605, 3
      %v608 = vor.u32 %v604, %v607
      %v609 = vsel %vm439, %v600, %v608
      %v611 = vshrl.u32 %v427, 16
      %v613 = vrot.slane %v611, 2
      %v614 = vshll.u32 %v427, 16
      %v616 = vrot.slane %v614, 3
      %v617 = vor.u32 %v613, %v616
      %v619 = vshrl.u32 %v428, 16
      %v621 = vrot.slane %v619, 2
      %v622 = vshll.u32 %v428, 16
      %v624 = vrot.slane %v622, 3
      %v625 = vor.u32 %v621, %v624
      %v626 = vsel %vm439, %v617, %v625
      %v628 = vshrl.u32 %v429, 16
      %v630 = vrot.slane %v628, 2
      %v631 = vshll.u32 %v429, 16
      %v633 = vrot.slane %v631, 3
      %v634 = vor.u32 %v630, %v633
      %v636 = vshrl.u32 %v430, 16
      %v638 = vrot.slane %v636, 2
      %v639 = vshll.u32 %v430, 16
      %v641 = vrot.slane %v639, 3
      %v642 = vor.u32 %v638, %v641
      %v643 = vsel %vm439, %v634, %v642
      %v645 = vshrl.u32 %v431, 16
      %v647 = vrot.slane %v645, 2
      %v648 = vshll.u32 %v431, 16
      %v650 = vrot.slane %v648, 3
      %v651 = vor.u32 %v647, %v650
      %v653 = vshrl.u32 %v432, 16
      %v655 = vrot.slane %v653, 2
      %v656 = vshll.u32 %v432, 16
      %v658 = vrot.slane %v656, 3
      %v659 = vor.u32 %v655, %v658
      %v660 = vsel %vm439, %v651, %v659
      %v662 = vshrl.u32 %v433, 16
      %v664 = vrot.slane %v662, 2
      %v665 = vshll.u32 %v433, 16
      %v667 = vrot.slane %v665, 3
      %v668 = vor.u32 %v664, %v667
      %v670 = vshrl.u32 %v434, 16
      %v672 = vrot.slane %v670, 2
      %v673 = vshll.u32 %v434, 16
      %v675 = vrot.slane %v673, 3
      %v676 = vor.u32 %v672, %v675
      %v677 = vsel %vm439, %v668, %v676
      %v679 = vshrl.u32 %v435, 16
      %v681 = vrot.slane %v679, 2
      %v682 = vshll.u32 %v435, 16
      %v684 = vrot.slane %v682, 3
      %v685 = vor.u32 %v681, %v684
      %v687 = vshrl.u32 %v436, 16
      %v689 = vrot.slane %v687, 2
      %v690 = vshll.u32 %v436, 16
      %v692 = vrot.slane %v690, 3
      %v693 = vor.u32 %v689, %v692
      %v694 = vsel %vm439, %v685, %v693
      %v696 = vshrl.u32 %v437, 16
      %v698 = vrot.slane %v696, 2
      %v699 = vshll.u32 %v437, 16
      %v701 = vrot.slane %v699, 3
      %v702 = vor.u32 %v698, %v701
      %v704 = vshrl.u32 %v438, 16
      %v706 = vrot.slane %v704, 2
      %v707 = vshll.u32 %v438, 16
      %v709 = vrot.slane %v707, 3
      %v710 = vor.u32 %v706, %v709
      %v711 = vsel %vm439, %v702, %v710
      %v712 = vld [vmem:[%s1] sm:$0xf]
      %v713 = vld [vmem:[%s1 + $0x4] sm:$0xf]
      %v714 = vld [vmem:[%s1 + $0x8] sm:$0xf]
      %v715 = vld [vmem:[%s1 + $0xc] sm:$0xf]
      %v716 = vld [vmem:[#allocation2] sm:$0xf8]
      %v717 = vld [vmem:[#allocation2 + $0x10] sm:$0xf8]
      %v718 = vld [vmem:[#allocation2 + $0x20] sm:$0xf8]
      %v719 = vld [vmem:[#allocation2 + $0x30] sm:$0xf8]
      %v720 = vld [vmem:[#allocation2 + $0x40] sm:$0xf8]
      %v721 = vld [vmem:[#allocation2 + $0x50] sm:$0xf8]
      %v722 = vld [vmem:[#allocation2 + $0x60] sm:$0xf8]
      %v723 = vld [vmem:[#allocation2 + $0x70] sm:$0xf8]
      %v724 = vld [vmem:[#allocation2 + $0x80] sm:$0xf8]
      %v725 = vld [vmem:[#allocation2 + $0x90] sm:$0xf8]
      %v726 = vld [vmem:[#allocation2 + $0xa0] sm:$0xf8]
      %v727 = vld [vmem:[#allocation2 + $0xb0] sm:$0xf8]
      %v728 = vld [vmem:[#allocation2 + $0xc0] sm:$0xf8]
      %v729 = vld [vmem:[#allocation2 + $0xd0] sm:$0xf8]
      %v730 = vld [vmem:[#allocation2 + $0xe0] sm:$0xf8]
      %v731 = vld [vmem:[#allocation2 + $0xf0] sm:$0xf8]
      %vm764 = vcmask 1044480
      %v765 = vrot.slane %v716, 3
      %v766 = vrot.slane %v408, 3
      %v767 = vsel %vm764, %v765, %v766
      %v768 = vrot.slane %v717, 3
      %v769 = vrot.slane %v410, 3
      %v770 = vsel %vm764, %v768, %v769
      %v771 = vrot.slane %v718, 3
      %v772 = vrot.slane %v412, 3
      %v773 = vsel %vm764, %v771, %v772
      %v774 = vrot.slane %v719, 3
      %v775 = vrot.slane %v414, 3
      %v776 = vsel %vm764, %v774, %v775
      %v777 = vrot.slane %v720, 3
      %v778 = vrot.slane %v416, 3
      %v779 = vsel %vm764, %v777, %v778
      %v780 = vrot.slane %v721, 3
      %v781 = vrot.slane %v418, 3
      %v782 = vsel %vm764, %v780, %v781
      %v783 = vrot.slane %v722, 3
      %v784 = vrot.slane %v420, 3
      %v785 = vsel %vm764, %v783, %v784
      %v786 = vrot.slane %v723, 3
      %v787 = vrot.slane %v422, 3
      %v788 = vsel %vm764, %v786, %v787
      %v789 = vrot.slane %v724, 3
      %v790 = vrot.slane %v424, 3
      %v791 = vsel %vm764, %v789, %v790
      %v792 = vrot.slane %v725, 3
      %v793 = vrot.slane %v426, 3
      %v794 = vsel %vm764, %v792, %v793
      %v795 = vrot.slane %v726, 3
      %v796 = vrot.slane %v428, 3
      %v797 = vsel %vm764, %v795, %v796
      %v798 = vrot.slane %v727, 3
      %v799 = vrot.slane %v430, 3
      %v800 = vsel %vm764, %v798, %v799
      %v801 = vrot.slane %v728, 3
      %v802 = vrot.slane %v432, 3
      %v803 = vsel %vm764, %v801, %v802
      %v804 = vrot.slane %v729, 3
      %v805 = vrot.slane %v434, 3
      %v806 = vsel %vm764, %v804, %v805
      %v807 = vrot.slane %v730, 3
      %v808 = vrot.slane %v436, 3
      %v809 = vsel %vm764, %v807, %v808
      %v810 = vrot.slane %v731, 3
      %v811 = vrot.slane %v438, 3
      %v812 = vsel %vm764, %v810, %v811
      %s813 = scalar_lea.vmem %s1, 16
      %v814 = vld [vmem:[%s813] sm:$0xf]
      %v815 = vld [vmem:[%s813 + $0x4] sm:$0xf]
      %v816 = vld [vmem:[%s813 + $0x8] sm:$0xf]
      %v817 = vld [vmem:[%s813 + $0xc] sm:$0xf]
      %v822 = vunpack.c.l.b16 %v814
      %v823 = vunpack.c.l.b16 %v815
      %v824 = vunpack.c.l.b16 %v816
      %v825 = vunpack.c.l.b16 %v817
      %v826 = vpack.c.b16 %v823, %v822
      %v827 = vpack.c.b16 %v825, %v824
      %v831 = vsel %vm180, %v767, 0
      %v834 = vsel %vm180, %v770, 0
      %v837 = vsel %vm180, %v773, 0
      %v840 = vsel %vm180, %v776, 0
      %v843 = vsel %vm180, %v779, 0
      %v846 = vsel %vm180, %v782, 0
      %v849 = vsel %vm180, %v785, 0
      %v852 = vsel %vm180, %v788, 0
      %v855 = vsel %vm180, %v791, 0
      %v858 = vsel %vm180, %v794, 0
      %v861 = vsel %vm180, %v797, 0
      %v864 = vsel %vm180, %v800, 0
      %v867 = vsel %vm180, %v803, 0
      %v870 = vsel %vm180, %v806, 0
      %v873 = vsel %vm180, %v809, 0
      %v876 = vsel %vm180, %v812, 0
      %878 = vmatprep.subr.bf16.mxu0 0
      %879 = vmatpush1.bf16.msra.mxu0 %v826
      %880 = vmatprep.subr.bf16.mxu0 0
      %881 = vmatpush1.bf16.msra.mxu0 %v827
      %882 = vmatprep.subr.bf16.mxu0 0
      %883 = vmatpush1.bf16.msra.mxu0 0
      %884 = vmatprep.subr.bf16.mxu0 0
      %885 = vmatpush1.bf16.msra.mxu0 0
      %886 = vmatprep.subr.bf16.mxu0 0
      %887 = vmatpush1.bf16.msra.mxu0 0
      %888 = vmatprep.subr.bf16.mxu0 0
      %889 = vmatpush1.bf16.msra.mxu0 0
      %890 = vmatprep.subr.bf16.mxu0 0
      %891 = vmatpush1.bf16.msra.mxu0 0
      %892 = vmatprep.subr.bf16.mxu0 0
      %893 = vmatpush1.bf16.msra.mxu0 0
      %894 = vmatprep.subr.bf16.mxu0 0
      %895 = vmatpush1.bf16.msra.mxu0 0
      %896 = vmatprep.subr.bf16.mxu0 0
      %897 = vmatpush1.bf16.msra.mxu0 0
      %898 = vmatprep.subr.bf16.mxu0 0
      %899 = vmatpush1.bf16.msra.mxu0 0
      %900 = vmatprep.subr.bf16.mxu0 0
      %901 = vmatpush1.bf16.msra.mxu0 0
      %902 = vmatprep.subr.bf16.mxu0 0
      %903 = vmatpush1.bf16.msra.mxu0 0
      %904 = vmatprep.subr.bf16.mxu0 0
      %905 = vmatpush1.bf16.msra.mxu0 0
      %906 = vmatprep.subr.bf16.mxu0 0
      %907 = vmatpush1.bf16.msra.mxu0 0
      %908 = vmatprep.subr.bf16.mxu0 0
      %909 = vmatpush1.bf16.msra.mxu0 0
      %910 = vmatprep.mubr.bf16.mxu0 0
      %911 = vmatmul.mubr.bf16.gmra.mrb[0].mxu0 %v831
      %v912 = vpop.f32.mrb[0].mxu0
      %v913 = vadd.f32 0.0, %v912
      %v914 = vpop.f32.mrb[0].mxu0
      %v915 = vpop.f32.mrb[0].mxu0
      %v916 = vadd.f32 0.0, %v915
      %v917 = vpop.f32.mrb[0].mxu0
      %918 = vmatprep.mubr.bf16.mxu0 0
      %919 = vmatmul.mubr.bf16.gmra.mrb[0].mxu0 %v834
      %v920 = vpop.f32.mrb[0].mxu0
      %v921 = vadd.f32 0.0, %v920
      %v922 = vpop.f32.mrb[0].mxu0
      %v923 = vpop.f32.mrb[0].mxu0
      %v924 = vadd.f32 0.0, %v923
      %v925 = vpop.f32.mrb[0].mxu0
      %926 = vmatprep.mubr.bf16.mxu0 0
      %927 = vmatmul.mubr.bf16.gmra.mrb[0].mxu0 %v837
      %v928 = vpop.f32.mrb[0].mxu0
      %v929 = vadd.f32 0.0, %v928
      %v930 = vpop.f32.mrb[0].mxu0
      %v931 = vpop.f32.mrb[0].mxu0
      %v932 = vadd.f32 0.0, %v931
      %v933 = vpop.f32.mrb[0].mxu0
      %934 = vmatprep.mubr.bf16.mxu0 0
      %935 = vmatmul.mubr.bf16.gmra.mrb[0].mxu0 %v840
      %v936 = vpop.f32.mrb[0].mxu0
      %v937 = vadd.f32 0.0, %v936
      %v938 = vpop.f32.mrb[0].mxu0
      %v939 = vpop.f32.mrb[0].mxu0
      %v940 = vadd.f32 0.0, %v939
      %v941 = vpop.f32.mrb[0].mxu0
      %942 = vmatprep.mubr.bf16.mxu0 0
      %943 = vmatmul.mubr.bf16.gmra.mrb[0].mxu0 %v843
      %v944 = vpop.f32.mrb[0].mxu0
      %v945 = vadd.f32 0.0, %v944
      %v946 = vpop.f32.mrb[0].mxu0
      %v947 = vpop.f32.mrb[0].mxu0
      %v948 = vadd.f32 0.0, %v947
      %v949 = vpop.f32.mrb[0].mxu0
      %950 = vmatprep.mubr.bf16.mxu0 0
      %951 = vmatmul.mubr.bf16.gmra.mrb[0].mxu0 %v846
      %v952 = vpop.f32.mrb[0].mxu0
      %v953 = vadd.f32 0.0, %v952
      %v954 = vpop.f32.mrb[0].mxu0
      %v955 = vpop.f32.mrb[0].mxu0
      %v956 = vadd.f32 0.0, %v955
      %v957 = vpop.f32.mrb[0].mxu0
      %958 = vmatprep.mubr.bf16.mxu0 0
      %959 = vmatmul.mubr.bf16.gmra.mrb[0].mxu0 %v849
      %v960 = vpop.f32.mrb[0].mxu0
      %v961 = vadd.f32 0.0, %v960
      %v962 = vpop.f32.mrb[0].mxu0
      %v963 = vpop.f32.mrb[0].mxu0
      %v964 = vadd.f32 0.0, %v963
      %v965 = vpop.f32.mrb[0].mxu0
      %966 = vmatprep.mubr.bf16.mxu0 0
      %967 = vmatmul.mubr.bf16.gmra.mrb[0].mxu0 %v852
      %v968 = vpop.f32.mrb[0].mxu0
      %v969 = vadd.f32 0.0, %v968
      %v970 = vpop.f32.mrb[0].mxu0
      %v971 = vpop.f32.mrb[0].mxu0
      %v972 = vadd.f32 0.0, %v971
      %v973 = vpop.f32.mrb[0].mxu0
      %974 = vmatprep.mubr.bf16.mxu0 0
      %975 = vmatmul.mubr.bf16.gmra.mrb[0].mxu0 %v855
      %v976 = vpop.f32.mrb[0].mxu0
      %v977 = vadd.f32 0.0, %v976
      %v978 = vpop.f32.mrb[0].mxu0
      %v979 = vpop.f32.mrb[0].mxu0
      %v980 = vadd.f32 0.0, %v979
      %v981 = vpop.f32.mrb[0].mxu0
      %982 = vmatprep.mubr.bf16.mxu0 0
      %983 = vmatmul.mubr.bf16.gmra.mrb[0].mxu0 %v858
      %v984 = vpop.f32.mrb[0].mxu0
      %v985 = vadd.f32 0.0, %v984
      %v986 = vpop.f32.mrb[0].mxu0
      %v987 = vpop.f32.mrb[0].mxu0
      %v988 = vadd.f32 0.0, %v987
      %v989 = vpop.f32.mrb[0].mxu0
      %990 = vmatprep.mubr.bf16.mxu0 0
      %991 = vmatmul.mubr.bf16.gmra.mrb[0].mxu0 %v861
      %v992 = vpop.f32.mrb[0].mxu0
      %v993 = vadd.f32 0.0, %v992
      %v994 = vpop.f32.mrb[0].mxu0
      %v995 = vpop.f32.mrb[0].mxu0
      %v996 = vadd.f32 0.0, %v995
      %v997 = vpop.f32.mrb[0].mxu0
      %998 = vmatprep.mubr.bf16.mxu0 0
      %999 = vmatmul.mubr.bf16.gmra.mrb[0].mxu0 %v864
      %v1000 = vpop.f32.mrb[0].mxu0
      %v1001 = vadd.f32 0.0, %v1000
      %v1002 = vpop.f32.mrb[0].mxu0
      %v1003 = vpop.f32.mrb[0].mxu0
      %v1004 = vadd.f32 0.0, %v1003
      %v1005 = vpop.f32.mrb[0].mxu0
      %1006 = vmatprep.mubr.bf16.mxu0 0
      %1007 = vmatmul.mubr.bf16.gmra.mrb[0].mxu0 %v867
      %v1008 = vpop.f32.mrb[0].mxu0
      %v1009 = vadd.f32 0.0, %v1008
      %v1010 = vpop.f32.mrb[0].mxu0
      %v1011 = vpop.f32.mrb[0].mxu0
      %v1012 = vadd.f32 0.0, %v1011
      %v1013 = vpop.f32.mrb[0].mxu0
      %1014 = vmatprep.mubr.bf16.mxu0 0
      %1015 = vmatmul.mubr.bf16.gmra.mrb[0].mxu0 %v870
      %v1016 = vpop.f32.mrb[0].mxu0
      %v1017 = vadd.f32 0.0, %v1016
      %v1018 = vpop.f32.mrb[0].mxu0
      %v1019 = vpop.f32.mrb[0].mxu0
      %v1020 = vadd.f32 0.0, %v1019
      %v1021 = vpop.f32.mrb[0].mxu0
      %1022 = vmatprep.mubr.bf16.mxu0 0
      %1023 = vmatmul.mubr.bf16.gmra.mrb[0].mxu0 %v873
      %v1024 = vpop.f32.mrb[0].mxu0
      %v1025 = vadd.f32 0.0, %v1024
      %v1026 = vpop.f32.mrb[0].mxu0
      %v1027 = vpop.f32.mrb[0].mxu0
      %v1028 = vadd.f32 0.0, %v1027
      %v1029 = vpop.f32.mrb[0].mxu0
      %1030 = vmatprep.mubr.bf16.mxu0 0
      %1031 = vmatmul.mubr.bf16.gmra.mrb[0].mxu0 %v876
      %v1032 = vpop.f32.mrb[0].mxu0
      %v1033 = vadd.f32 0.0, %v1032
      %v1034 = vpop.f32.mrb[0].mxu0
      %v1035 = vpop.f32.mrb[0].mxu0
      %v1036 = vadd.f32 0.0, %v1035
      %v1037 = vpop.f32.mrb[0].mxu0
      %1038 = vdwg.mxu0
      %v1043 = vunpack.c.l.b16 %v712
      %v1044 = vunpack.c.l.b16 %v713
      %v1045 = vunpack.c.l.b16 %v714
      %v1046 = vunpack.c.l.b16 %v715
      %v1047 = vpack.c.b16 %v1044, %v1043
      %v1048 = vpack.c.b16 %v1046, %v1045
      %v1052 = vsel %vm180, %v456, 0
      %v1055 = vsel %vm180, %v473, 0
      %v1058 = vsel %vm180, %v490, 0
      %v1061 = vsel %vm180, %v507, 0
      %v1064 = vsel %vm180, %v524, 0
      %v1067 = vsel %vm180, %v541, 0
      %v1070 = vsel %vm180, %v558, 0
      %v1073 = vsel %vm180, %v575, 0
      %v1076 = vsel %vm180, %v592, 0
      %v1079 = vsel %vm180, %v609, 0
      %v1082 = vsel %vm180, %v626, 0
      %v1085 = vsel %vm180, %v643, 0
      %v1088 = vsel %vm180, %v660, 0
      %v1091 = vsel %vm180, %v677, 0
      %v1094 = vsel %vm180, %v694, 0
      %v1097 = vsel %vm180, %v711, 0
      %1099 = vmatprep.subr.bf16.mxu0 0
      %1100 = vmatpush1.bf16.msra.mxu0 %v1047
      %1101 = vmatprep.subr.bf16.mxu0 0
      %1102 = vmatpush1.bf16.msra.mxu0 %v1048
      %1103 = vmatprep.subr.bf16.mxu0 0
      %1104 = vmatpush1.bf16.msra.mxu0 0
      %1105 = vmatprep.subr.bf16.mxu0 0
      %1106 = vmatpush1.bf16.msra.mxu0 0
      %1107 = vmatprep.subr.bf16.mxu0 0
      %1108 = vmatpush1.bf16.msra.mxu0 0
      %1109 = vmatprep.subr.bf16.mxu0 0
      %1110 = vmatpush1.bf16.msra.mxu0 0
      %1111 = vmatprep.subr.bf16.mxu0 0
      %1112 = vmatpush1.bf16.msra.mxu0 0
      %1113 = vmatprep.subr.bf16.mxu0 0
      %1114 = vmatpush1.bf16.msra.mxu0 0
      %1115 = vmatprep.subr.bf16.mxu0 0
      %1116 = vmatpush1.bf16.msra.mxu0 0
      %1117 = vmatprep.subr.bf16.mxu0 0
      %1118 = vmatpush1.bf16.msra.mxu0 0
      %1119 = vmatprep.subr.bf16.mxu0 0
      %1120 = vmatpush1.bf16.msra.mxu0 0
      %1121 = vmatprep.subr.bf16.mxu0 0
      %1122 = vmatpush1.bf16.msra.mxu0 0
      %1123 = vmatprep.subr.bf16.mxu0 0
      %1124 = vmatpush1.bf16.msra.mxu0 0
      %1125 = vmatprep.subr.bf16.mxu0 0
      %1126 = vmatpush1.bf16.msra.mxu0 0
      %1127 = vmatprep.subr.bf16.mxu0 0
      %1128 = vmatpush1.bf16.msra.mxu0 0
      %1129 = vmatprep.subr.bf16.mxu0 0
      %1130 = vmatpush1.bf16.msra.mxu0 0
      %1131 = vmatprep.mubr.bf16.mxu0 0
      %1132 = vmatmul.mubr.bf16.gmra.mrb[0].mxu0 %v1052
      %v1133 = vpop.f32.mrb[0].mxu0
      %v1134 = vadd.f32 %v913, %v1133
      %v1135 = vpop.f32.mrb[0].mxu0
      %v1136 = vpop.f32.mrb[0].mxu0
      %v1137 = vadd.f32 %v916, %v1136
      %v1138 = vpop.f32.mrb[0].mxu0
      %1139 = vmatprep.mubr.bf16.mxu0 0
      %1140 = vmatmul.mubr.bf16.gmra.mrb[0].mxu0 %v1055
      %v1141 = vpop.f32.mrb[0].mxu0
      %v1142 = vadd.f32 %v921, %v1141
      %v1143 = vpop.f32.mrb[0].mxu0
      %v1144 = vpop.f32.mrb[0].mxu0
      %v1145 = vadd.f32 %v924, %v1144
      %v1146 = vpop.f32.mrb[0].mxu0
      %1147 = vmatprep.mubr.bf16.mxu0 0
      %1148 = vmatmul.mubr.bf16.gmra.mrb[0].mxu0 %v1058
      %v1149 = vpop.f32.mrb[0].mxu0
      %v1150 = vadd.f32 %v929, %v1149
      %v1151 = vpop.f32.mrb[0].mxu0
      %v1152 = vpop.f32.mrb[0].mxu0
      %v1153 = vadd.f32 %v932, %v1152
      %v1154 = vpop.f32.mrb[0].mxu0
      %1155 = vmatprep.mubr.bf16.mxu0 0
      %1156 = vmatmul.mubr.bf16.gmra.mrb[0].mxu0 %v1061
      %v1157 = vpop.f32.mrb[0].mxu0
      %v1158 = vadd.f32 %v937, %v1157
      %v1159 = vpop.f32.mrb[0].mxu0
      %v1160 = vpop.f32.mrb[0].mxu0
      %v1161 = vadd.f32 %v940, %v1160
      %v1162 = vpop.f32.mrb[0].mxu0
      %1163 = vmatprep.mubr.bf16.mxu0 0
      %1164 = vmatmul.mubr.bf16.gmra.mrb[0].mxu0 %v1064
      %v1165 = vpop.f32.mrb[0].mxu0
      %v1166 = vadd.f32 %v945, %v1165
      %v1167 = vpop.f32.mrb[0].mxu0
      %v1168 = vpop.f32.mrb[0].mxu0
      %v1169 = vadd.f32 %v948, %v1168
      %v1170 = vpop.f32.mrb[0].mxu0
      %1171 = vmatprep.mubr.bf16.mxu0 0
      %1172 = vmatmul.mubr.bf16.gmra.mrb[0].mxu0 %v1067
      %v1173 = vpop.f32.mrb[0].mxu0
      %v1174 = vadd.f32 %v953, %v1173
      %v1175 = vpop.f32.mrb[0].mxu0
      %v1176 = vpop.f32.mrb[0].mxu0
      %v1177 = vadd.f32 %v956, %v1176
      %v1178 = vpop.f32.mrb[0].mxu0
      %1179 = vmatprep.mubr.bf16.mxu0 0
      %1180 = vmatmul.mubr.bf16.gmra.mrb[0].mxu0 %v1070
      %v1181 = vpop.f32.mrb[0].mxu0
      %v1182 = vadd.f32 %v961, %v1181
      %v1183 = vpop.f32.mrb[0].mxu0
      %v1184 = vpop.f32.mrb[0].mxu0
      %v1185 = vadd.f32 %v964, %v1184
      %v1186 = vpop.f32.mrb[0].mxu0
      %1187 = vmatprep.mubr.bf16.mxu0 0
      %1188 = vmatmul.mubr.bf16.gmra.mrb[0].mxu0 %v1073
      %v1189 = vpop.f32.mrb[0].mxu0
      %v1190 = vadd.f32 %v969, %v1189
      %v1191 = vpop.f32.mrb[0].mxu0
      %v1192 = vpop.f32.mrb[0].mxu0
      %v1193 = vadd.f32 %v972, %v1192
      %v1194 = vpop.f32.mrb[0].mxu0
      %1195 = vmatprep.mubr.bf16.mxu0 0
      %1196 = vmatmul.mubr.bf16.gmra.mrb[0].mxu0 %v1076
      %v1197 = vpop.f32.mrb[0].mxu0
      %v1198 = vadd.f32 %v977, %v1197
      %v1199 = vpop.f32.mrb[0].mxu0
      %v1200 = vpop.f32.mrb[0].mxu0
      %v1201 = vadd.f32 %v980, %v1200
      %v1202 = vpop.f32.mrb[0].mxu0
      %1203 = vmatprep.mubr.bf16.mxu0 0
      %1204 = vmatmul.mubr.bf16.gmra.mrb[0].mxu0 %v1079
      %v1205 = vpop.f32.mrb[0].mxu0
      %v1206 = vadd.f32 %v985, %v1205
      %v1207 = vpop.f32.mrb[0].mxu0
      %v1208 = vpop.f32.mrb[0].mxu0
      %v1209 = vadd.f32 %v988, %v1208
      %v1210 = vpop.f32.mrb[0].mxu0
      %1211 = vmatprep.mubr.bf16.mxu0 0
      %1212 = vmatmul.mubr.bf16.gmra.mrb[0].mxu0 %v1082
      %v1213 = vpop.f32.mrb[0].mxu0
      %v1214 = vadd.f32 %v993, %v1213
      %v1215 = vpop.f32.mrb[0].mxu0
      %v1216 = vpop.f32.mrb[0].mxu0
      %v1217 = vadd.f32 %v996, %v1216
      %v1218 = vpop.f32.mrb[0].mxu0
      %1219 = vmatprep.mubr.bf16.mxu0 0
      %1220 = vmatmul.mubr.bf16.gmra.mrb[0].mxu0 %v1085
      %v1221 = vpop.f32.mrb[0].mxu0
      %v1222 = vadd.f32 %v1001, %v1221
      %v1223 = vpop.f32.mrb[0].mxu0
      %v1224 = vpop.f32.mrb[0].mxu0
      %v1225 = vadd.f32 %v1004, %v1224
      %v1226 = vpop.f32.mrb[0].mxu0
      %1227 = vmatprep.mubr.bf16.mxu0 0
      %1228 = vmatmul.mubr.bf16.gmra.mrb[0].mxu0 %v1088
      %v1229 = vpop.f32.mrb[0].mxu0
      %v1230 = vadd.f32 %v1009, %v1229
      %v1231 = vpop.f32.mrb[0].mxu0
      %v1232 = vpop.f32.mrb[0].mxu0
      %v1233 = vadd.f32 %v1012, %v1232
      %v1234 = vpop.f32.mrb[0].mxu0
      %1235 = vmatprep.mubr.bf16.mxu0 0
      %1236 = vmatmul.mubr.bf16.gmra.mrb[0].mxu0 %v1091
      %v1237 = vpop.f32.mrb[0].mxu0
      %v1238 = vadd.f32 %v1017, %v1237
      %v1239 = vpop.f32.mrb[0].mxu0
      %v1240 = vpop.f32.mrb[0].mxu0
      %v1241 = vadd.f32 %v1020, %v1240
      %v1242 = vpop.f32.mrb[0].mxu0
      %1243 = vmatprep.mubr.bf16.mxu0 0
      %1244 = vmatmul.mubr.bf16.gmra.mrb[0].mxu0 %v1094
      %v1245 = vpop.f32.mrb[0].mxu0
      %v1246 = vadd.f32 %v1025, %v1245
      %v1247 = vpop.f32.mrb[0].mxu0
      %v1248 = vpop.f32.mrb[0].mxu0
      %v1249 = vadd.f32 %v1028, %v1248
      %v1250 = vpop.f32.mrb[0].mxu0
      %1251 = vmatprep.mubr.bf16.mxu0 0
      %1252 = vmatmul.mubr.bf16.gmra.mrb[0].mxu0 %v1097
      %v1253 = vpop.f32.mrb[0].mxu0
      %v1254 = vadd.f32 %v1033, %v1253
      %v1255 = vpop.f32.mrb[0].mxu0
      %v1256 = vpop.f32.mrb[0].mxu0
      %v1257 = vadd.f32 %v1036, %v1256
      %v1258 = vpop.f32.mrb[0].mxu0
      %1259 = vdwg.mxu0
      %v1260 = vld [vmem:[#allocation2 + $0x8] sm:$0xf]
      %v1261 = vld [vmem:[#allocation2 + $0x18] sm:$0xf]
      %v1262 = vld [vmem:[#allocation2 + $0x28] sm:$0xf]
      %v1263 = vld [vmem:[#allocation2 + $0x38] sm:$0xf]
      %v1264 = vld [vmem:[#allocation2 + $0x48] sm:$0xf]
      %v1265 = vld [vmem:[#allocation2 + $0x58] sm:$0xf]
      %v1266 = vld [vmem:[#allocation2 + $0x68] sm:$0xf]
      %v1267 = vld [vmem:[#allocation2 + $0x78] sm:$0xf]
      %v1268 = vld [vmem:[#allocation2 + $0x88] sm:$0xf]
      %v1269 = vld [vmem:[#allocation2 + $0x98] sm:$0xf]
      %v1270 = vld [vmem:[#allocation2 + $0xa8] sm:$0xf]
      %v1271 = vld [vmem:[#allocation2 + $0xb8] sm:$0xf]
      %v1272 = vld [vmem:[#allocation2 + $0xc8] sm:$0xf]
      %v1273 = vld [vmem:[#allocation2 + $0xd8] sm:$0xf]
      %v1274 = vld [vmem:[#allocation2 + $0xe8] sm:$0xf]
      %v1275 = vld [vmem:[#allocation2 + $0xf8] sm:$0xf]
      %vm1276 = vsmask.f32 4352
      %v1278 = vshrl.u32 %v716, 16
      %v1280 = vrot.slane %v1278, 3
      %v1281 = vshll.u32 %v716, 16
      %v1283 = vrot.slane %v1281, 4
      %v1284 = vor.u32 %v1280, %v1283
      %v1286 = vshrl.u32 %v1260, 16
      %v1288 = vrot.slane %v1286, 3
      %v1289 = vshll.u32 %v1260, 16
      %v1291 = vrot.slane %v1289, 4
      %v1292 = vor.u32 %v1288, %v1291
      %v1293 = vsel %vm1276, %v1284, %v1292
      %v1295 = vshrl.u32 %v717, 16
      %v1297 = vrot.slane %v1295, 3
      %v1298 = vshll.u32 %v717, 16
      %v1300 = vrot.slane %v1298, 4
      %v1301 = vor.u32 %v1297, %v1300
      %v1303 = vshrl.u32 %v1261, 16
      %v1305 = vrot.slane %v1303, 3
      %v1306 = vshll.u32 %v1261, 16
      %v1308 = vrot.slane %v1306, 4
      %v1309 = vor.u32 %v1305, %v1308
      %v1310 = vsel %vm1276, %v1301, %v1309
      %v1312 = vshrl.u32 %v718, 16
      %v1314 = vrot.slane %v1312, 3
      %v1315 = vshll.u32 %v718, 16
      %v1317 = vrot.slane %v1315, 4
      %v1318 = vor.u32 %v1314, %v1317
      %v1320 = vshrl.u32 %v1262, 16
      %v1322 = vrot.slane %v1320, 3
      %v1323 = vshll.u32 %v1262, 16
      %v1325 = vrot.slane %v1323, 4
      %v1326 = vor.u32 %v1322, %v1325
      %v1327 = vsel %vm1276, %v1318, %v1326
      %v1329 = vshrl.u32 %v719, 16
      %v1331 = vrot.slane %v1329, 3
      %v1332 = vshll.u32 %v719, 16
      %v1334 = vrot.slane %v1332, 4
      %v1335 = vor.u32 %v1331, %v1334
      %v1337 = vshrl.u32 %v1263, 16
      %v1339 = vrot.slane %v1337, 3
      %v1340 = vshll.u32 %v1263, 16
      %v1342 = vrot.slane %v1340, 4
      %v1343 = vor.u32 %v1339, %v1342
      %v1344 = vsel %vm1276, %v1335, %v1343
      %v1346 = vshrl.u32 %v720, 16
      %v1348 = vrot.slane %v1346, 3
      %v1349 = vshll.u32 %v720, 16
      %v1351 = vrot.slane %v1349, 4
      %v1352 = vor.u32 %v1348, %v1351
      %v1354 = vshrl.u32 %v1264, 16
      %v1356 = vrot.slane %v1354, 3
      %v1357 = vshll.u32 %v1264, 16
      %v1359 = vrot.slane %v1357, 4
      %v1360 = vor.u32 %v1356, %v1359
      %v1361 = vsel %vm1276, %v1352, %v1360
      %v1363 = vshrl.u32 %v721, 16
      %v1365 = vrot.slane %v1363, 3
      %v1366 = vshll.u32 %v721, 16
      %v1368 = vrot.slane %v1366, 4
      %v1369 = vor.u32 %v1365, %v1368
      %v1371 = vshrl.u32 %v1265, 16
      %v1373 = vrot.slane %v1371, 3
      %v1374 = vshll.u32 %v1265, 16
      %v1376 = vrot.slane %v1374, 4
      %v1377 = vor.u32 %v1373, %v1376
      %v1378 = vsel %vm1276, %v1369, %v1377
      %v1380 = vshrl.u32 %v722, 16
      %v1382 = vrot.slane %v1380, 3
      %v1383 = vshll.u32 %v722, 16
      %v1385 = vrot.slane %v1383, 4
      %v1386 = vor.u32 %v1382, %v1385
      %v1388 = vshrl.u32 %v1266, 16
      %v1390 = vrot.slane %v1388, 3
      %v1391 = vshll.u32 %v1266, 16
      %v1393 = vrot.slane %v1391, 4
      %v1394 = vor.u32 %v1390, %v1393
      %v1395 = vsel %vm1276, %v1386, %v1394
      %v1397 = vshrl.u32 %v723, 16
      %v1399 = vrot.slane %v1397, 3
      %v1400 = vshll.u32 %v723, 16
      %v1402 = vrot.slane %v1400, 4
      %v1403 = vor.u32 %v1399, %v1402
      %v1405 = vshrl.u32 %v1267, 16
      %v1407 = vrot.slane %v1405, 3
      %v1408 = vshll.u32 %v1267, 16
      %v1410 = vrot.slane %v1408, 4
      %v1411 = vor.u32 %v1407, %v1410
      %v1412 = vsel %vm1276, %v1403, %v1411
      %v1414 = vshrl.u32 %v724, 16
      %v1416 = vrot.slane %v1414, 3
      %v1417 = vshll.u32 %v724, 16
      %v1419 = vrot.slane %v1417, 4
      %v1420 = vor.u32 %v1416, %v1419
      %v1422 = vshrl.u32 %v1268, 16
      %v1424 = vrot.slane %v1422, 3
      %v1425 = vshll.u32 %v1268, 16
      %v1427 = vrot.slane %v1425, 4
      %v1428 = vor.u32 %v1424, %v1427
      %v1429 = vsel %vm1276, %v1420, %v1428
      %v1431 = vshrl.u32 %v725, 16
      %v1433 = vrot.slane %v1431, 3
      %v1434 = vshll.u32 %v725, 16
      %v1436 = vrot.slane %v1434, 4
      %v1437 = vor.u32 %v1433, %v1436
      %v1439 = vshrl.u32 %v1269, 16
      %v1441 = vrot.slane %v1439, 3
      %v1442 = vshll.u32 %v1269, 16
      %v1444 = vrot.slane %v1442, 4
      %v1445 = vor.u32 %v1441, %v1444
      %v1446 = vsel %vm1276, %v1437, %v1445
      %v1448 = vshrl.u32 %v726, 16
      %v1450 = vrot.slane %v1448, 3
      %v1451 = vshll.u32 %v726, 16
      %v1453 = vrot.slane %v1451, 4
      %v1454 = vor.u32 %v1450, %v1453
      %v1456 = vshrl.u32 %v1270, 16
      %v1458 = vrot.slane %v1456, 3
      %v1459 = vshll.u32 %v1270, 16
      %v1461 = vrot.slane %v1459, 4
      %v1462 = vor.u32 %v1458, %v1461
      %v1463 = vsel %vm1276, %v1454, %v1462
      %v1465 = vshrl.u32 %v727, 16
      %v1467 = vrot.slane %v1465, 3
      %v1468 = vshll.u32 %v727, 16
      %v1470 = vrot.slane %v1468, 4
      %v1471 = vor.u32 %v1467, %v1470
      %v1473 = vshrl.u32 %v1271, 16
      %v1475 = vrot.slane %v1473, 3
      %v1476 = vshll.u32 %v1271, 16
      %v1478 = vrot.slane %v1476, 4
      %v1479 = vor.u32 %v1475, %v1478
      %v1480 = vsel %vm1276, %v1471, %v1479
      %v1482 = vshrl.u32 %v728, 16
      %v1484 = vrot.slane %v1482, 3
      %v1485 = vshll.u32 %v728, 16
      %v1487 = vrot.slane %v1485, 4
      %v1488 = vor.u32 %v1484, %v1487
      %v1490 = vshrl.u32 %v1272, 16
      %v1492 = vrot.slane %v1490, 3
      %v1493 = vshll.u32 %v1272, 16
      %v1495 = vrot.slane %v1493, 4
      %v1496 = vor.u32 %v1492, %v1495
      %v1497 = vsel %vm1276, %v1488, %v1496
      %v1499 = vshrl.u32 %v729, 16
      %v1501 = vrot.slane %v1499, 3
      %v1502 = vshll.u32 %v729, 16
      %v1504 = vrot.slane %v1502, 4
      %v1505 = vor.u32 %v1501, %v1504
      %v1507 = vshrl.u32 %v1273, 16
      %v1509 = vrot.slane %v1507, 3
      %v1510 = vshll.u32 %v1273, 16
      %v1512 = vrot.slane %v1510, 4
      %v1513 = vor.u32 %v1509, %v1512
      %v1514 = vsel %vm1276, %v1505, %v1513
      %v1516 = vshrl.u32 %v730, 16
      %v1518 = vrot.slane %v1516, 3
      %v1519 = vshll.u32 %v730, 16
      %v1521 = vrot.slane %v1519, 4
      %v1522 = vor.u32 %v1518, %v1521
      %v1524 = vshrl.u32 %v1274, 16
      %v1526 = vrot.slane %v1524, 3
      %v1527 = vshll.u32 %v1274, 16
      %v1529 = vrot.slane %v1527, 4
      %v1530 = vor.u32 %v1526, %v1529
      %v1531 = vsel %vm1276, %v1522, %v1530
      %v1533 = vshrl.u32 %v731, 16
      %v1535 = vrot.slane %v1533, 3
      %v1536 = vshll.u32 %v731, 16
      %v1538 = vrot.slane %v1536, 4
      %v1539 = vor.u32 %v1535, %v1538
      %v1541 = vshrl.u32 %v1275, 16
      %v1543 = vrot.slane %v1541, 3
      %v1544 = vshll.u32 %v1275, 16
      %v1546 = vrot.slane %v1544, 4
      %v1547 = vor.u32 %v1543, %v1546
      %v1548 = vsel %vm1276, %v1539, %v1547
      %s1549 = scalar_lea.vmem %s1, 32
      %v1550 = vld [vmem:[%s1549] sm:$0xf]
      %v1551 = vld [vmem:[%s1549 + $0x4] sm:$0xf]
      %v1552 = vld [vmem:[%s1549 + $0x8] sm:$0xf]
      %v1553 = vld [vmem:[%s1549 + $0xc] sm:$0xf]
      %v1558 = vunpack.c.l.b16 %v1550
      %v1559 = vunpack.c.l.b16 %v1551
      %v1560 = vunpack.c.l.b16 %v1552
      %v1561 = vunpack.c.l.b16 %v1553
      %v1562 = vpack.c.b16 %v1559, %v1558
      %v1563 = vpack.c.b16 %v1561, %v1560
      %v1567 = vsel %vm180, %v1293, 0
      %v1570 = vsel %vm180, %v1310, 0
      %v1573 = vsel %vm180, %v1327, 0
      %v1576 = vsel %vm180, %v1344, 0
      %v1579 = vsel %vm180, %v1361, 0
      %v1582 = vsel %vm180, %v1378, 0
      %v1585 = vsel %vm180, %v1395, 0
      %v1588 = vsel %vm180, %v1412, 0
      %v1591 = vsel %vm180, %v1429, 0
      %v1594 = vsel %vm180, %v1446, 0
      %v1597 = vsel %vm180, %v1463, 0
      %v1600 = vsel %vm180, %v1480, 0
      %v1603 = vsel %vm180, %v1497, 0
      %v1606 = vsel %vm180, %v1514, 0
      %v1609 = vsel %vm180, %v1531, 0
      %v1612 = vsel %vm180, %v1548, 0
      %1614 = vmatprep.subr.bf16.mxu0 0
      %1615 = vmatpush1.bf16.msra.mxu0 %v1562
      %1616 = vmatprep.subr.bf16.mxu0 0
      %1617 = vmatpush1.bf16.msra.mxu0 %v1563
      %1618 = vmatprep.subr.bf16.mxu0 0
      %1619 = vmatpush1.bf16.msra.mxu0 0
      %1620 = vmatprep.subr.bf16.mxu0 0
      %1621 = vmatpush1.bf16.msra.mxu0 0
      %1622 = vmatprep.subr.bf16.mxu0 0
      %1623 = vmatpush1.bf16.msra.mxu0 0
      %1624 = vmatprep.subr.bf16.mxu0 0
      %1625 = vmatpush1.bf16.msra.mxu0 0
      %1626 = vmatprep.subr.bf16.mxu0 0
      %1627 = vmatpush1.bf16.msra.mxu0 0
      %1628 = vmatprep.subr.bf16.mxu0 0
      %1629 = vmatpush1.bf16.msra.mxu0 0
      %1630 = vmatprep.subr.bf16.mxu0 0
      %1631 = vmatpush1.bf16.msra.mxu0 0
      %1632 = vmatprep.subr.bf16.mxu0 0
      %1633 = vmatpush1.bf16.msra.mxu0 0
      %1634 = vmatprep.subr.bf16.mxu0 0
      %1635 = vmatpush1.bf16.msra.mxu0 0
      %1636 = vmatprep.subr.bf16.mxu0 0
      %1637 = vmatpush1.bf16.msra.mxu0 0
      %1638 = vmatprep.subr.bf16.mxu0 0
      %1639 = vmatpush1.bf16.msra.mxu0 0
      %1640 = vmatprep.subr.bf16.mxu0 0
      %1641 = vmatpush1.bf16.msra.mxu0 0
      %1642 = vmatprep.subr.bf16.mxu0 0
      %1643 = vmatpush1.bf16.msra.mxu0 0
      %1644 = vmatprep.subr.bf16.mxu0 0
      %1645 = vmatpush1.bf16.msra.mxu0 0
      %1646 = vmatprep.mubr.bf16.mxu0 0
      %1647 = vmatmul.mubr.bf16.gmra.mrb[0].mxu0 %v1567
      %v1648 = vpop.f32.mrb[0].mxu0
      %v1649 = vadd.f32 0.0, %v1648
      %v1650 = vpop.f32.mrb[0].mxu0
      %v1651 = vpop.f32.mrb[0].mxu0
      %v1652 = vadd.f32 0.0, %v1651
      %v1653 = vpop.f32.mrb[0].mxu0
      %1654 = vmatprep.mubr.bf16.mxu0 0
      %1655 = vmatmul.mubr.bf16.gmra.mrb[0].mxu0 %v1570
      %v1656 = vpop.f32.mrb[0].mxu0
      %v1657 = vadd.f32 0.0, %v1656
      %v1658 = vpop.f32.mrb[0].mxu0
      %v1659 = vpop.f32.mrb[0].mxu0
      %v1660 = vadd.f32 0.0, %v1659
      %v1661 = vpop.f32.mrb[0].mxu0
      %1662 = vmatprep.mubr.bf16.mxu0 0
      %1663 = vmatmul.mubr.bf16.gmra.mrb[0].mxu0 %v1573
      %v1664 = vpop.f32.mrb[0].mxu0
      %v1665 = vadd.f32 0.0, %v1664
      %v1666 = vpop.f32.mrb[0].mxu0
      %v1667 = vpop.f32.mrb[0].mxu0
      %v1668 = vadd.f32 0.0, %v1667
      %v1669 = vpop.f32.mrb[0].mxu0
      %1670 = vmatprep.mubr.bf16.mxu0 0
      %1671 = vmatmul.mubr.bf16.gmra.mrb[0].mxu0 %v1576
      %v1672 = vpop.f32.mrb[0].mxu0
      %v1673 = vadd.f32 0.0, %v1672
      %v1674 = vpop.f32.mrb[0].mxu0
      %v1675 = vpop.f32.mrb[0].mxu0
      %v1676 = vadd.f32 0.0, %v1675
      %v1677 = vpop.f32.mrb[0].mxu0
      %1678 = vmatprep.mubr.bf16.mxu0 0
      %1679 = vmatmul.mubr.bf16.gmra.mrb[0].mxu0 %v1579
      %v1680 = vpop.f32.mrb[0].mxu0
      %v1681 = vadd.f32 0.0, %v1680
      %v1682 = vpop.f32.mrb[0].mxu0
      %v1683 = vpop.f32.mrb[0].mxu0
      %v1684 = vadd.f32 0.0, %v1683
      %v1685 = vpop.f32.mrb[0].mxu0
      %1686 = vmatprep.mubr.bf16.mxu0 0
      %1687 = vmatmul.mubr.bf16.gmra.mrb[0].mxu0 %v1582
      %v1688 = vpop.f32.mrb[0].mxu0
      %v1689 = vadd.f32 0.0, %v1688
      %v1690 = vpop.f32.mrb[0].mxu0
      %v1691 = vpop.f32.mrb[0].mxu0
      %v1692 = vadd.f32 0.0, %v1691
      %v1693 = vpop.f32.mrb[0].mxu0
      %1694 = vmatprep.mubr.bf16.mxu0 0
      %1695 = vmatmul.mubr.bf16.gmra.mrb[0].mxu0 %v1585
      %v1696 = vpop.f32.mrb[0].mxu0
      %v1697 = vadd.f32 0.0, %v1696
      %v1698 = vpop.f32.mrb[0].mxu0
      %v1699 = vpop.f32.mrb[0].mxu0
      %v1700 = vadd.f32 0.0, %v1699
      %v1701 = vpop.f32.mrb[0].mxu0
      %1702 = vmatprep.mubr.bf16.mxu0 0
      %1703 = vmatmul.mubr.bf16.gmra.mrb[0].mxu0 %v1588
      %v1704 = vpop.f32.mrb[0].mxu0
      %v1705 = vadd.f32 0.0, %v1704
      %v1706 = vpop.f32.mrb[0].mxu0
      %v1707 = vpop.f32.mrb[0].mxu0
      %v1708 = vadd.f32 0.0, %v1707
      %v1709 = vpop.f32.mrb[0].mxu0
      %1710 = vmatprep.mubr.bf16.mxu0 0
      %1711 = vmatmul.mubr.bf16.gmra.mrb[0].mxu0 %v1591
      %v1712 = vpop.f32.mrb[0].mxu0
      %v1713 = vadd.f32 0.0, %v1712
      %v1714 = vpop.f32.mrb[0].mxu0
      %v1715 = vpop.f32.mrb[0].mxu0
      %v1716 = vadd.f32 0.0, %v1715
      %v1717 = vpop.f32.mrb[0].mxu0
      %1718 = vmatprep.mubr.bf16.mxu0 0
      %1719 = vmatmul.mubr.bf16.gmra.mrb[0].mxu0 %v1594
      %v1720 = vpop.f32.mrb[0].mxu0
      %v1721 = vadd.f32 0.0, %v1720
      %v1722 = vpop.f32.mrb[0].mxu0
      %v1723 = vpop.f32.mrb[0].mxu0
      %v1724 = vadd.f32 0.0, %v1723
      %v1725 = vpop.f32.mrb[0].mxu0
      %1726 = vmatprep.mubr.bf16.mxu0 0
      %1727 = vmatmul.mubr.bf16.gmra.mrb[0].mxu0 %v1597
      %v1728 = vpop.f32.mrb[0].mxu0
      %v1729 = vadd.f32 0.0, %v1728
      %v1730 = vpop.f32.mrb[0].mxu0
      %v1731 = vpop.f32.mrb[0].mxu0
      %v1732 = vadd.f32 0.0, %v1731
      %v1733 = vpop.f32.mrb[0].mxu0
      %1734 = vmatprep.mubr.bf16.mxu0 0
      %1735 = vmatmul.mubr.bf16.gmra.mrb[0].mxu0 %v1600
      %v1736 = vpop.f32.mrb[0].mxu0
      %v1737 = vadd.f32 0.0, %v1736
      %v1738 = vpop.f32.mrb[0].mxu0
      %v1739 = vpop.f32.mrb[0].mxu0
      %v1740 = vadd.f32 0.0, %v1739
      %v1741 = vpop.f32.mrb[0].mxu0
      %1742 = vmatprep.mubr.bf16.mxu0 0
      %1743 = vmatmul.mubr.bf16.gmra.mrb[0].mxu0 %v1603
      %v1744 = vpop.f32.mrb[0].mxu0
      %v1745 = vadd.f32 0.0, %v1744
      %v1746 = vpop.f32.mrb[0].mxu0
      %v1747 = vpop.f32.mrb[0].mxu0
      %v1748 = vadd.f32 0.0, %v1747
      %v1749 = vpop.f32.mrb[0].mxu0
      %1750 = vmatprep.mubr.bf16.mxu0 0
      %1751 = vmatmul.mubr.bf16.gmra.mrb[0].mxu0 %v1606
      %v1752 = vpop.f32.mrb[0].mxu0
      %v1753 = vadd.f32 0.0, %v1752
      %v1754 = vpop.f32.mrb[0].mxu0
      %v1755 = vpop.f32.mrb[0].mxu0
      %v1756 = vadd.f32 0.0, %v1755
      %v1757 = vpop.f32.mrb[0].mxu0
      %1758 = vmatprep.mubr.bf16.mxu0 0
      %1759 = vmatmul.mubr.bf16.gmra.mrb[0].mxu0 %v1609
      %v1760 = vpop.f32.mrb[0].mxu0
      %v1761 = vadd.f32 0.0, %v1760
      %v1762 = vpop.f32.mrb[0].mxu0
      %v1763 = vpop.f32.mrb[0].mxu0
      %v1764 = vadd.f32 0.0, %v1763
      %v1765 = vpop.f32.mrb[0].mxu0
      %1766 = vmatprep.mubr.bf16.mxu0 0
      %1767 = vmatmul.mubr.bf16.gmra.mrb[0].mxu0 %v1612
      %v1768 = vpop.f32.mrb[0].mxu0
      %v1769 = vadd.f32 0.0, %v1768
      %v1770 = vpop.f32.mrb[0].mxu0
      %v1771 = vpop.f32.mrb[0].mxu0
      %v1772 = vadd.f32 0.0, %v1771
      %v1773 = vpop.f32.mrb[0].mxu0
      %1774 = vdwg.mxu0
      %v1775 = vadd.f32 %v1134, %v1649
      %v1776 = vadd.f32 %v1137, %v1652
      %v1777 = vadd.f32 %v1142, %v1657
      %v1778 = vadd.f32 %v1145, %v1660
      %v1779 = vadd.f32 %v1150, %v1665
      %v1780 = vadd.f32 %v1153, %v1668
      %v1781 = vadd.f32 %v1158, %v1673
      %v1782 = vadd.f32 %v1161, %v1676
      %v1783 = vadd.f32 %v1166, %v1681
      %v1784 = vadd.f32 %v1169, %v1684
      %v1785 = vadd.f32 %v1174, %v1689
      %v1786 = vadd.f32 %v1177, %v1692
      %v1787 = vadd.f32 %v1182, %v1697
      %v1788 = vadd.f32 %v1185, %v1700
      %v1789 = vadd.f32 %v1190, %v1705
      %v1790 = vadd.f32 %v1193, %v1708
      %v1791 = vadd.f32 %v1198, %v1713
      %v1792 = vadd.f32 %v1201, %v1716
      %v1793 = vadd.f32 %v1206, %v1721
      %v1794 = vadd.f32 %v1209, %v1724
      %v1795 = vadd.f32 %v1214, %v1729
      %v1796 = vadd.f32 %v1217, %v1732
      %v1797 = vadd.f32 %v1222, %v1737
      %v1798 = vadd.f32 %v1225, %v1740
      %v1799 = vadd.f32 %v1230, %v1745
      %v1800 = vadd.f32 %v1233, %v1748
      %v1801 = vadd.f32 %v1238, %v1753
      %v1802 = vadd.f32 %v1241, %v1756
      %v1803 = vadd.f32 %v1246, %v1761
      %v1804 = vadd.f32 %v1249, %v1764
      %v1805 = vadd.f32 %v1254, %v1769
      %v1806 = vadd.f32 %v1257, %v1772
      %v1807 = vld [vmem:[#allocation2] sm:$0xf0]
      %v1808 = vld [vmem:[#allocation2 + $0x10] sm:$0xf0]
      %v1809 = vld [vmem:[#allocation2 + $0x20] sm:$0xf0]
      %v1810 = vld [vmem:[#allocation2 + $0x30] sm:$0xf0]
      %v1811 = vld [vmem:[#allocation2 + $0x40] sm:$0xf0]
      %v1812 = vld [vmem:[#allocation2 + $0x50] sm:$0xf0]
      %v1813 = vld [vmem:[#allocation2 + $0x60] sm:$0xf0]
      %v1814 = vld [vmem:[#allocation2 + $0x70] sm:$0xf0]
      %v1815 = vld [vmem:[#allocation2 + $0x80] sm:$0xf0]
      %v1816 = vld [vmem:[#allocation2 + $0x90] sm:$0xf0]
      %v1817 = vld [vmem:[#allocation2 + $0xa0] sm:$0xf0]
      %v1818 = vld [vmem:[#allocation2 + $0xb0] sm:$0xf0]
      %v1819 = vld [vmem:[#allocation2 + $0xc0] sm:$0xf0]
      %v1820 = vld [vmem:[#allocation2 + $0xd0] sm:$0xf0]
      %v1821 = vld [vmem:[#allocation2 + $0xe0] sm:$0xf0]
      %v1822 = vld [vmem:[#allocation2 + $0xf0] sm:$0xf0]
      %vm1855 = vcmask 1043456
      %v1856 = vrot.slane %v1807, 4
      %v1857 = vrot.slane %v1260, 4
      %v1858 = vsel %vm1855, %v1856, %v1857
      %v1859 = vrot.slane %v1808, 4
      %v1860 = vrot.slane %v1261, 4
      %v1861 = vsel %vm1855, %v1859, %v1860
      %v1862 = vrot.slane %v1809, 4
      %v1863 = vrot.slane %v1262, 4
      %v1864 = vsel %vm1855, %v1862, %v1863
      %v1865 = vrot.slane %v1810, 4
      %v1866 = vrot.slane %v1263, 4
      %v1867 = vsel %vm1855, %v1865, %v1866
      %v1868 = vrot.slane %v1811, 4
      %v1869 = vrot.slane %v1264, 4
      %v1870 = vsel %vm1855, %v1868, %v1869
      %v1871 = vrot.slane %v1812, 4
      %v1872 = vrot.slane %v1265, 4
      %v1873 = vsel %vm1855, %v1871, %v1872
      %v1874 = vrot.slane %v1813, 4
      %v1875 = vrot.slane %v1266, 4
      %v1876 = vsel %vm1855, %v1874, %v1875
      %v1877 = vrot.slane %v1814, 4
      %v1878 = vrot.slane %v1267, 4
      %v1879 = vsel %vm1855, %v1877, %v1878
      %v1880 = vrot.slane %v1815, 4
      %v1881 = vrot.slane %v1268, 4
      %v1882 = vsel %vm1855, %v1880, %v1881
      %v1883 = vrot.slane %v1816, 4
      %v1884 = vrot.slane %v1269, 4
      %v1885 = vsel %vm1855, %v1883, %v1884
      %v1886 = vrot.slane %v1817, 4
      %v1887 = vrot.slane %v1270, 4
      %v1888 = vsel %vm1855, %v1886, %v1887
      %v1889 = vrot.slane %v1818, 4
      %v1890 = vrot.slane %v1271, 4
      %v1891 = vsel %vm1855, %v1889, %v1890
      %v1892 = vrot.slane %v1819, 4
      %v1893 = vrot.slane %v1272, 4
      %v1894 = vsel %vm1855, %v1892, %v1893
      %v1895 = vrot.slane %v1820, 4
      %v1896 = vrot.slane %v1273, 4
      %v1897 = vsel %vm1855, %v1895, %v1896
      %v1898 = vrot.slane %v1821, 4
      %v1899 = vrot.slane %v1274, 4
      %v1900 = vsel %vm1855, %v1898, %v1899
      %v1901 = vrot.slane %v1822, 4
      %v1902 = vrot.slane %v1275, 4
      %v1903 = vsel %vm1855, %v1901, %v1902
      %s1904 = scalar_lea.vmem %s1, 48
      %v1905 = vld [vmem:[%s1904] sm:$0xf]
      %v1906 = vld [vmem:[%s1904 + $0x4] sm:$0xf]
      %v1907 = vld [vmem:[%s1904 + $0x8] sm:$0xf]
      %v1908 = vld [vmem:[%s1904 + $0xc] sm:$0xf]
      %v1913 = vunpack.c.l.b16 %v1905
      %v1914 = vunpack.c.l.b16 %v1906
      %v1915 = vunpack.c.l.b16 %v1907
      %v1916 = vunpack.c.l.b16 %v1908
      %v1917 = vpack.c.b16 %v1914, %v1913
      %v1918 = vpack.c.b16 %v1916, %v1915
      %v1922 = vsel %vm180, %v1858, 0
      %v1925 = vsel %vm180, %v1861, 0
      %v1928 = vsel %vm180, %v1864, 0
      %v1931 = vsel %vm180, %v1867, 0
      %v1934 = vsel %vm180, %v1870, 0
      %v1937 = vsel %vm180, %v1873, 0
      %v1940 = vsel %vm180, %v1876, 0
      %v1943 = vsel %vm180, %v1879, 0
      %v1946 = vsel %vm180, %v1882, 0
      %v1949 = vsel %vm180, %v1885, 0
      %v1952 = vsel %vm180, %v1888, 0
      %v1955 = vsel %vm180, %v1891, 0
      %v1958 = vsel %vm180, %v1894, 0
      %v1961 = vsel %vm180, %v1897, 0
      %v1964 = vsel %vm180, %v1900, 0
      %v1967 = vsel %vm180, %v1903, 0
      %1969 = vmatprep.subr.bf16.mxu0 0
      %1970 = vmatpush1.bf16.msra.mxu0 %v1917
      %1971 = vmatprep.subr.bf16.mxu0 0
      %1972 = vmatpush1.bf16.msra.mxu0 %v1918
      %1973 = vmatprep.subr.bf16.mxu0 0
      %1974 = vmatpush1.bf16.msra.mxu0 0
      %1975 = vmatprep.subr.bf16.mxu0 0
      %1976 = vmatpush1.bf16.msra.mxu0 0
      %1977 = vmatprep.subr.bf16.mxu0 0
      %1978 = vmatpush1.bf16.msra.mxu0 0
      %1979 = vmatprep.subr.bf16.mxu0 0
      %1980 = vmatpush1.bf16.msra.mxu0 0
      %1981 = vmatprep.subr.bf16.mxu0 0
      %1982 = vmatpush1.bf16.msra.mxu0 0
      %1983 = vmatprep.subr.bf16.mxu0 0
      %1984 = vmatpush1.bf16.msra.mxu0 0
      %1985 = vmatprep.subr.bf16.mxu0 0
      %1986 = vmatpush1.bf16.msra.mxu0 0
      %1987 = vmatprep.subr.bf16.mxu0 0
      %1988 = vmatpush1.bf16.msra.mxu0 0
      %1989 = vmatprep.subr.bf16.mxu0 0
      %1990 = vmatpush1.bf16.msra.mxu0 0
      %1991 = vmatprep.subr.bf16.mxu0 0
      %1992 = vmatpush1.bf16.msra.mxu0 0
      %1993 = vmatprep.subr.bf16.mxu0 0
      %1994 = vmatpush1.bf16.msra.mxu0 0
      %1995 = vmatprep.subr.bf16.mxu0 0
      %1996 = vmatpush1.bf16.msra.mxu0 0
      %1997 = vmatprep.subr.bf16.mxu0 0
      %1998 = vmatpush1.bf16.msra.mxu0 0
      %1999 = vmatprep.subr.bf16.mxu0 0
      %2000 = vmatpush1.bf16.msra.mxu0 0
      %2001 = vmatprep.mubr.bf16.mxu0 0
      %2002 = vmatmul.mubr.bf16.gmra.mrb[0].mxu0 %v1922
      %v2003 = vpop.f32.mrb[0].mxu0
      %v2004 = vadd.f32 0.0, %v2003
      %v2005 = vpop.f32.mrb[0].mxu0
      %v2006 = vpop.f32.mrb[0].mxu0
      %v2007 = vadd.f32 0.0, %v2006
      %v2008 = vpop.f32.mrb[0].mxu0
      %2009 = vmatprep.mubr.bf16.mxu0 0
      %2010 = vmatmul.mubr.bf16.gmra.mrb[0].mxu0 %v1925
      %v2011 = vpop.f32.mrb[0].mxu0
      %v2012 = vadd.f32 0.0, %v2011
      %v2013 = vpop.f32.mrb[0].mxu0
      %v2014 = vpop.f32.mrb[0].mxu0
      %v2015 = vadd.f32 0.0, %v2014
      %v2016 = vpop.f32.mrb[0].mxu0
      %2017 = vmatprep.mubr.bf16.mxu0 0
      %2018 = vmatmul.mubr.bf16.gmra.mrb[0].mxu0 %v1928
      %v2019 = vpop.f32.mrb[0].mxu0
      %v2020 = vadd.f32 0.0, %v2019
      %v2021 = vpop.f32.mrb[0].mxu0
      %v2022 = vpop.f32.mrb[0].mxu0
      %v2023 = vadd.f32 0.0, %v2022
      %v2024 = vpop.f32.mrb[0].mxu0
      %2025 = vmatprep.mubr.bf16.mxu0 0
      %2026 = vmatmul.mubr.bf16.gmra.mrb[0].mxu0 %v1931
      %v2027 = vpop.f32.mrb[0].mxu0
      %v2028 = vadd.f32 0.0, %v2027
      %v2029 = vpop.f32.mrb[0].mxu0
      %v2030 = vpop.f32.mrb[0].mxu0
      %v2031 = vadd.f32 0.0, %v2030
      %v2032 = vpop.f32.mrb[0].mxu0
      %2033 = vmatprep.mubr.bf16.mxu0 0
      %2034 = vmatmul.mubr.bf16.gmra.mrb[0].mxu0 %v1934
      %v2035 = vpop.f32.mrb[0].mxu0
      %v2036 = vadd.f32 0.0, %v2035
      %v2037 = vpop.f32.mrb[0].mxu0
      %v2038 = vpop.f32.mrb[0].mxu0
      %v2039 = vadd.f32 0.0, %v2038
      %v2040 = vpop.f32.mrb[0].mxu0
      %2041 = vmatprep.mubr.bf16.mxu0 0
      %2042 = vmatmul.mubr.bf16.gmra.mrb[0].mxu0 %v1937
      %v2043 = vpop.f32.mrb[0].mxu0
      %v2044 = vadd.f32 0.0, %v2043
      %v2045 = vpop.f32.mrb[0].mxu0
      %v2046 = vpop.f32.mrb[0].mxu0
      %v2047 = vadd.f32 0.0, %v2046
      %v2048 = vpop.f32.mrb[0].mxu0
      %2049 = vmatprep.mubr.bf16.mxu0 0
      %2050 = vmatmul.mubr.bf16.gmra.mrb[0].mxu0 %v1940
      %v2051 = vpop.f32.mrb[0].mxu0
      %v2052 = vadd.f32 0.0, %v2051
      %v2053 = vpop.f32.mrb[0].mxu0
      %v2054 = vpop.f32.mrb[0].mxu0
      %v2055 = vadd.f32 0.0, %v2054
      %v2056 = vpop.f32.mrb[0].mxu0
      %2057 = vmatprep.mubr.bf16.mxu0 0
      %2058 = vmatmul.mubr.bf16.gmra.mrb[0].mxu0 %v1943
      %v2059 = vpop.f32.mrb[0].mxu0
      %v2060 = vadd.f32 0.0, %v2059
      %v2061 = vpop.f32.mrb[0].mxu0
      %v2062 = vpop.f32.mrb[0].mxu0
      %v2063 = vadd.f32 0.0, %v2062
      %v2064 = vpop.f32.mrb[0].mxu0
      %2065 = vmatprep.mubr.bf16.mxu0 0
      %2066 = vmatmul.mubr.bf16.gmra.mrb[0].mxu0 %v1946
      %v2067 = vpop.f32.mrb[0].mxu0
      %v2068 = vadd.f32 0.0, %v2067
      %v2069 = vpop.f32.mrb[0].mxu0
      %v2070 = vpop.f32.mrb[0].mxu0
      %v2071 = vadd.f32 0.0, %v2070
      %v2072 = vpop.f32.mrb[0].mxu0
      %2073 = vmatprep.mubr.bf16.mxu0 0
      %2074 = vmatmul.mubr.bf16.gmra.mrb[0].mxu0 %v1949
      %v2075 = vpop.f32.mrb[0].mxu0
      %v2076 = vadd.f32 0.0, %v2075
      %v2077 = vpop.f32.mrb[0].mxu0
      %v2078 = vpop.f32.mrb[0].mxu0
      %v2079 = vadd.f32 0.0, %v2078
      %v2080 = vpop.f32.mrb[0].mxu0
      %2081 = vmatprep.mubr.bf16.mxu0 0
      %2082 = vmatmul.mubr.bf16.gmra.mrb[0].mxu0 %v1952
      %v2083 = vpop.f32.mrb[0].mxu0
      %v2084 = vadd.f32 0.0, %v2083
      %v2085 = vpop.f32.mrb[0].mxu0
      %v2086 = vpop.f32.mrb[0].mxu0
      %v2087 = vadd.f32 0.0, %v2086
      %v2088 = vpop.f32.mrb[0].mxu0
      %2089 = vmatprep.mubr.bf16.mxu0 0
      %2090 = vmatmul.mubr.bf16.gmra.mrb[0].mxu0 %v1955
      %v2091 = vpop.f32.mrb[0].mxu0
      %v2092 = vadd.f32 0.0, %v2091
      %v2093 = vpop.f32.mrb[0].mxu0
      %v2094 = vpop.f32.mrb[0].mxu0
      %v2095 = vadd.f32 0.0, %v2094
      %v2096 = vpop.f32.mrb[0].mxu0
      %2097 = vmatprep.mubr.bf16.mxu0 0
      %2098 = vmatmul.mubr.bf16.gmra.mrb[0].mxu0 %v1958
      %v2099 = vpop.f32.mrb[0].mxu0
      %v2100 = vadd.f32 0.0, %v2099
      %v2101 = vpop.f32.mrb[0].mxu0
      %v2102 = vpop.f32.mrb[0].mxu0
      %v2103 = vadd.f32 0.0, %v2102
      %v2104 = vpop.f32.mrb[0].mxu0
      %2105 = vmatprep.mubr.bf16.mxu0 0
      %2106 = vmatmul.mubr.bf16.gmra.mrb[0].mxu0 %v1961
      %v2107 = vpop.f32.mrb[0].mxu0
      %v2108 = vadd.f32 0.0, %v2107
      %v2109 = vpop.f32.mrb[0].mxu0
      %v2110 = vpop.f32.mrb[0].mxu0
      %v2111 = vadd.f32 0.0, %v2110
      %v2112 = vpop.f32.mrb[0].mxu0
      %2113 = vmatprep.mubr.bf16.mxu0 0
      %2114 = vmatmul.mubr.bf16.gmra.mrb[0].mxu0 %v1964
      %v2115 = vpop.f32.mrb[0].mxu0
      %v2116 = vadd.f32 0.0, %v2115
      %v2117 = vpop.f32.mrb[0].mxu0
      %v2118 = vpop.f32.mrb[0].mxu0
      %v2119 = vadd.f32 0.0, %v2118
      %v2120 = vpop.f32.mrb[0].mxu0
      %2121 = vmatprep.mubr.bf16.mxu0 0
      %2122 = vmatmul.mubr.bf16.gmra.mrb[0].mxu0 %v1967
      %v2123 = vpop.f32.mrb[0].mxu0
      %v2124 = vadd.f32 0.0, %v2123
      %v2125 = vpop.f32.mrb[0].mxu0
      %v2126 = vpop.f32.mrb[0].mxu0
      %v2127 = vadd.f32 0.0, %v2126
      %v2128 = vpop.f32.mrb[0].mxu0
      %2129 = vdwg.mxu0
      %v2130 = vadd.f32 %v1775, %v2004
      %v2131 = vadd.f32 %v1776, %v2007
      %v2132 = vadd.f32 %v1777, %v2012
      %v2133 = vadd.f32 %v1778, %v2015
      %v2134 = vadd.f32 %v1779, %v2020
      %v2135 = vadd.f32 %v1780, %v2023
      %v2136 = vadd.f32 %v1781, %v2028
      %v2137 = vadd.f32 %v1782, %v2031
      %v2138 = vadd.f32 %v1783, %v2036
      %v2139 = vadd.f32 %v1784, %v2039
      %v2140 = vadd.f32 %v1785, %v2044
      %v2141 = vadd.f32 %v1786, %v2047
      %v2142 = vadd.f32 %v1787, %v2052
      %v2143 = vadd.f32 %v1788, %v2055
      %v2144 = vadd.f32 %v1789, %v2060
      %v2145 = vadd.f32 %v1790, %v2063
      %v2146 = vadd.f32 %v1791, %v2068
      %v2147 = vadd.f32 %v1792, %v2071
      %v2148 = vadd.f32 %v1793, %v2076
      %v2149 = vadd.f32 %v1794, %v2079
      %v2150 = vadd.f32 %v1795, %v2084
      %v2151 = vadd.f32 %v1796, %v2087
      %v2152 = vadd.f32 %v1797, %v2092
      %v2153 = vadd.f32 %v1798, %v2095
      %v2154 = vadd.f32 %v1799, %v2100
      %v2155 = vadd.f32 %v1800, %v2103
      %v2156 = vadd.f32 %v1801, %v2108
      %v2157 = vadd.f32 %v1802, %v2111
      %v2158 = vadd.f32 %v1803, %v2116
      %v2159 = vadd.f32 %v1804, %v2119
      %v2160 = vadd.f32 %v1805, %v2124
      %v2161 = vadd.f32 %v1806, %v2127
      %v2162 = vld [vmem:[#allocation2 + $0x8] sm:$0x1f]
      %v2163 = vld [vmem:[#allocation2 + $0x18] sm:$0x1f]
      %v2164 = vld [vmem:[#allocation2 + $0x28] sm:$0x1f]
      %v2165 = vld [vmem:[#allocation2 + $0x38] sm:$0x1f]
      %v2166 = vld [vmem:[#allocation2 + $0x48] sm:$0x1f]
      %v2167 = vld [vmem:[#allocation2 + $0x58] sm:$0x1f]
      %v2168 = vld [vmem:[#allocation2 + $0x68] sm:$0x1f]
      %v2169 = vld [vmem:[#allocation2 + $0x78] sm:$0x1f]
      %v2170 = vld [vmem:[#allocation2 + $0x88] sm:$0x1f]
      %v2171 = vld [vmem:[#allocation2 + $0x98] sm:$0x1f]
      %v2172 = vld [vmem:[#allocation2 + $0xa8] sm:$0x1f]
      %v2173 = vld [vmem:[#allocation2 + $0xb8] sm:$0x1f]
      %v2174 = vld [vmem:[#allocation2 + $0xc8] sm:$0x1f]
      %v2175 = vld [vmem:[#allocation2 + $0xd8] sm:$0x1f]
      %v2176 = vld [vmem:[#allocation2 + $0xe8] sm:$0x1f]
      %v2177 = vld [vmem:[#allocation2 + $0xf8] sm:$0x1f]
      %vm2178 = vsmask.f32 3328
      %v2180 = vshrl.u32 %v1807, 16
      %v2182 = vrot.slane %v2180, 4
      %v2183 = vshll.u32 %v1807, 16
      %v2185 = vrot.slane %v2183, 5
      %v2186 = vor.u32 %v2182, %v2185
      %v2188 = vshrl.u32 %v2162, 16
      %v2190 = vrot.slane %v2188, 4
      %v2191 = vshll.u32 %v2162, 16
      %v2193 = vrot.slane %v2191, 5
      %v2194 = vor.u32 %v2190, %v2193
      %v2195 = vsel %vm2178, %v2186, %v2194
      %v2197 = vshrl.u32 %v1808, 16
      %v2199 = vrot.slane %v2197, 4
      %v2200 = vshll.u32 %v1808, 16
      %v2202 = vrot.slane %v2200, 5
      %v2203 = vor.u32 %v2199, %v2202
      %v2205 = vshrl.u32 %v2163, 16
      %v2207 = vrot.slane %v2205, 4
      %v2208 = vshll.u32 %v2163, 16
      %v2210 = vrot.slane %v2208, 5
      %v2211 = vor.u32 %v2207, %v2210
      %v2212 = vsel %vm2178, %v2203, %v2211
      %v2214 = vshrl.u32 %v1809, 16
      %v2216 = vrot.slane %v2214, 4
      %v2217 = vshll.u32 %v1809, 16
      %v2219 = vrot.slane %v2217, 5
      %v2220 = vor.u32 %v2216, %v2219
      %v2222 = vshrl.u32 %v2164, 16
      %v2224 = vrot.slane %v2222, 4
      %v2225 = vshll.u32 %v2164, 16
      %v2227 = vrot.slane %v2225, 5
      %v2228 = vor.u32 %v2224, %v2227
      %v2229 = vsel %vm2178, %v2220, %v2228
      %v2231 = vshrl.u32 %v1810, 16
      %v2233 = vrot.slane %v2231, 4
      %v2234 = vshll.u32 %v1810, 16
      %v2236 = vrot.slane %v2234, 5
      %v2237 = vor.u32 %v2233, %v2236
      %v2239 = vshrl.u32 %v2165, 16
      %v2241 = vrot.slane %v2239, 4
      %v2242 = vshll.u32 %v2165, 16
      %v2244 = vrot.slane %v2242, 5
      %v2245 = vor.u32 %v2241, %v2244
      %v2246 = vsel %vm2178, %v2237, %v2245
      %v2248 = vshrl.u32 %v1811, 16
      %v2250 = vrot.slane %v2248, 4
      %v2251 = vshll.u32 %v1811, 16
      %v2253 = vrot.slane %v2251, 5
      %v2254 = vor.u32 %v2250, %v2253
      %v2256 = vshrl.u32 %v2166, 16
      %v2258 = vrot.slane %v2256, 4
      %v2259 = vshll.u32 %v2166, 16
      %v2261 = vrot.slane %v2259, 5
      %v2262 = vor.u32 %v2258, %v2261
      %v2263 = vsel %vm2178, %v2254, %v2262
      %v2265 = vshrl.u32 %v1812, 16
      %v2267 = vrot.slane %v2265, 4
      %v2268 = vshll.u32 %v1812, 16
      %v2270 = vrot.slane %v2268, 5
      %v2271 = vor.u32 %v2267, %v2270
      %v2273 = vshrl.u32 %v2167, 16
      %v2275 = vrot.slane %v2273, 4
      %v2276 = vshll.u32 %v2167, 16
      %v2278 = vrot.slane %v2276, 5
      %v2279 = vor.u32 %v2275, %v2278
      %v2280 = vsel %vm2178, %v2271, %v2279
      %v2282 = vshrl.u32 %v1813, 16
      %v2284 = vrot.slane %v2282, 4
      %v2285 = vshll.u32 %v1813, 16
      %v2287 = vrot.slane %v2285, 5
      %v2288 = vor.u32 %v2284, %v2287
      %v2290 = vshrl.u32 %v2168, 16
      %v2292 = vrot.slane %v2290, 4
      %v2293 = vshll.u32 %v2168, 16
      %v2295 = vrot.slane %v2293, 5
      %v2296 = vor.u32 %v2292, %v2295
      %v2297 = vsel %vm2178, %v2288, %v2296
      %v2299 = vshrl.u32 %v1814, 16
      %v2301 = vrot.slane %v2299, 4
      %v2302 = vshll.u32 %v1814, 16
      %v2304 = vrot.slane %v2302, 5
      %v2305 = vor.u32 %v2301, %v2304
      %v2307 = vshrl.u32 %v2169, 16
      %v2309 = vrot.slane %v2307, 4
      %v2310 = vshll.u32 %v2169, 16
      %v2312 = vrot.slane %v2310, 5
      %v2313 = vor.u32 %v2309, %v2312
      %v2314 = vsel %vm2178, %v2305, %v2313
      %v2316 = vshrl.u32 %v1815, 16
      %v2318 = vrot.slane %v2316, 4
      %v2319 = vshll.u32 %v1815, 16
      %v2321 = vrot.slane %v2319, 5
      %v2322 = vor.u32 %v2318, %v2321
      %v2324 = vshrl.u32 %v2170, 16
      %v2326 = vrot.slane %v2324, 4
      %v2327 = vshll.u32 %v2170, 16
      %v2329 = vrot.slane %v2327, 5
      %v2330 = vor.u32 %v2326, %v2329
      %v2331 = vsel %vm2178, %v2322, %v2330
      %v2333 = vshrl.u32 %v1816, 16
      %v2335 = vrot.slane %v2333, 4
      %v2336 = vshll.u32 %v1816, 16
      %v2338 = vrot.slane %v2336, 5
      %v2339 = vor.u32 %v2335, %v2338
      %v2341 = vshrl.u32 %v2171, 16
      %v2343 = vrot.slane %v2341, 4
      %v2344 = vshll.u32 %v2171, 16
      %v2346 = vrot.slane %v2344, 5
      %v2347 = vor.u32 %v2343, %v2346
      %v2348 = vsel %vm2178, %v2339, %v2347
      %v2350 = vshrl.u32 %v1817, 16
      %v2352 = vrot.slane %v2350, 4
      %v2353 = vshll.u32 %v1817, 16
      %v2355 = vrot.slane %v2353, 5
      %v2356 = vor.u32 %v2352, %v2355
      %v2358 = vshrl.u32 %v2172, 16
      %v2360 = vrot.slane %v2358, 4
      %v2361 = vshll.u32 %v2172, 16
      %v2363 = vrot.slane %v2361, 5
      %v2364 = vor.u32 %v2360, %v2363
      %v2365 = vsel %vm2178, %v2356, %v2364
      %v2367 = vshrl.u32 %v1818, 16
      %v2369 = vrot.slane %v2367, 4
      %v2370 = vshll.u32 %v1818, 16
      %v2372 = vrot.slane %v2370, 5
      %v2373 = vor.u32 %v2369, %v2372
      %v2375 = vshrl.u32 %v2173, 16
      %v2377 = vrot.slane %v2375, 4
      %v2378 = vshll.u32 %v2173, 16
      %v2380 = vrot.slane %v2378, 5
      %v2381 = vor.u32 %v2377, %v2380
      %v2382 = vsel %vm2178, %v2373, %v2381
      %v2384 = vshrl.u32 %v1819, 16
      %v2386 = vrot.slane %v2384, 4
      %v2387 = vshll.u32 %v1819, 16
      %v2389 = vrot.slane %v2387, 5
      %v2390 = vor.u32 %v2386, %v2389
      %v2392 = vshrl.u32 %v2174, 16
      %v2394 = vrot.slane %v2392, 4
      %v2395 = vshll.u32 %v2174, 16
      %v2397 = vrot.slane %v2395, 5
      %v2398 = vor.u32 %v2394, %v2397
      %v2399 = vsel %vm2178, %v2390, %v2398
      %v2401 = vshrl.u32 %v1820, 16
      %v2403 = vrot.slane %v2401, 4
      %v2404 = vshll.u32 %v1820, 16
      %v2406 = vrot.slane %v2404, 5
      %v2407 = vor.u32 %v2403, %v2406
      %v2409 = vshrl.u32 %v2175, 16
      %v2411 = vrot.slane %v2409, 4
      %v2412 = vshll.u32 %v2175, 16
      %v2414 = vrot.slane %v2412, 5
      %v2415 = vor.u32 %v2411, %v2414
      %v2416 = vsel %vm2178, %v2407, %v2415
      %v2418 = vshrl.u32 %v1821, 16
      %v2420 = vrot.slane %v2418, 4
      %v2421 = vshll.u32 %v1821, 16
      %v2423 = vrot.slane %v2421, 5
      %v2424 = vor.u32 %v2420, %v2423
      %v2426 = vshrl.u32 %v2176, 16
      %v2428 = vrot.slane %v2426, 4
      %v2429 = vshll.u32 %v2176, 16
      %v2431 = vrot.slane %v2429, 5
      %v2432 = vor.u32 %v2428, %v2431
      %v2433 = vsel %vm2178, %v2424, %v2432
      %v2435 = vshrl.u32 %v1822, 16
      %v2437 = vrot.slane %v2435, 4
      %v2438 = vshll.u32 %v1822, 16
      %v2440 = vrot.slane %v2438, 5
      %v2441 = vor.u32 %v2437, %v2440
      %v2443 = vshrl.u32 %v2177, 16
      %v2445 = vrot.slane %v2443, 4
      %v2446 = vshll.u32 %v2177, 16
      %v2448 = vrot.slane %v2446, 5
      %v2449 = vor.u32 %v2445, %v2448
      %v2450 = vsel %vm2178, %v2441, %v2449
      %s2451 = scalar_lea.vmem %s1, 64
      %v2452 = vld [vmem:[%s2451] sm:$0xf]
      %v2453 = vld [vmem:[%s2451 + $0x4] sm:$0xf]
      %v2454 = vld [vmem:[%s2451 + $0x8] sm:$0xf]
      %v2455 = vld [vmem:[%s2451 + $0xc] sm:$0xf]
      %v2460 = vunpack.c.l.b16 %v2452
      %v2461 = vunpack.c.l.b16 %v2453
      %v2462 = vunpack.c.l.b16 %v2454
      %v2463 = vunpack.c.l.b16 %v2455
      %v2464 = vpack.c.b16 %v2461, %v2460
      %v2465 = vpack.c.b16 %v2463, %v2462
      %v2469 = vsel %vm180, %v2195, 0
      %v2472 = vsel %vm180, %v2212, 0
      %v2475 = vsel %vm180, %v2229, 0
      %v2478 = vsel %vm180, %v2246, 0
      %v2481 = vsel %vm180, %v2263, 0
      %v2484 = vsel %vm180, %v2280, 0
      %v2487 = vsel %vm180, %v2297, 0
      %v2490 = vsel %vm180, %v2314, 0
      %v2493 = vsel %vm180, %v2331, 0
      %v2496 = vsel %vm180, %v2348, 0
      %v2499 = vsel %vm180, %v2365, 0
      %v2502 = vsel %vm180, %v2382, 0
      %v2505 = vsel %vm180, %v2399, 0
      %v2508 = vsel %vm180, %v2416, 0
      %v2511 = vsel %vm180, %v2433, 0
      %v2514 = vsel %vm180, %v2450, 0
      %2516 = vmatprep.subr.bf16.mxu0 0
      %2517 = vmatpush1.bf16.msra.mxu0 %v2464
      %2518 = vmatprep.subr.bf16.mxu0 0
      %2519 = vmatpush1.bf16.msra.mxu0 %v2465
      %2520 = vmatprep.subr.bf16.mxu0 0
      %2521 = vmatpush1.bf16.msra.mxu0 0
      %2522 = vmatprep.subr.bf16.mxu0 0
      %2523 = vmatpush1.bf16.msra.mxu0 0
      %2524 = vmatprep.subr.bf16.mxu0 0
      %2525 = vmatpush1.bf16.msra.mxu0 0
      %2526 = vmatprep.subr.bf16.mxu0 0
      %2527 = vmatpush1.bf16.msra.mxu0 0
      %2528 = vmatprep.subr.bf16.mxu0 0
      %2529 = vmatpush1.bf16.msra.mxu0 0
      %2530 = vmatprep.subr.bf16.mxu0 0
      %2531 = vmatpush1.bf16.msra.mxu0 0
      %2532 = vmatprep.subr.bf16.mxu0 0
      %2533 = vmatpush1.bf16.msra.mxu0 0
      %2534 = vmatprep.subr.bf16.mxu0 0
      %2535 = vmatpush1.bf16.msra.mxu0 0
      %2536 = vmatprep.subr.bf16.mxu0 0
      %2537 = vmatpush1.bf16.msra.mxu0 0
      %2538 = vmatprep.subr.bf16.mxu0 0
      %2539 = vmatpush1.bf16.msra.mxu0 0
      %2540 = vmatprep.subr.bf16.mxu0 0
      %2541 = vmatpush1.bf16.msra.mxu0 0
      %2542 = vmatprep.subr.bf16.mxu0 0
      %2543 = vmatpush1.bf16.msra.mxu0 0
      %2544 = vmatprep.subr.bf16.mxu0 0
      %2545 = vmatpush1.bf16.msra.mxu0 0
      %2546 = vmatprep.subr.bf16.mxu0 0
      %2547 = vmatpush1.bf16.msra.mxu0 0
      %2548 = vmatprep.mubr.bf16.mxu0 0
      %2549 = vmatmul.mubr.bf16.gmra.mrb[0].mxu0 %v2469
      %v2550 = vpop.f32.mrb[0].mxu0
      %v2551 = vadd.f32 0.0, %v2550
      %v2552 = vpop.f32.mrb[0].mxu0
      %v2553 = vpop.f32.mrb[0].mxu0
      %v2554 = vadd.f32 0.0, %v2553
      %v2555 = vpop.f32.mrb[0].mxu0
      %2556 = vmatprep.mubr.bf16.mxu0 0
      %2557 = vmatmul.mubr.bf16.gmra.mrb[0].mxu0 %v2472
      %v2558 = vpop.f32.mrb[0].mxu0
      %v2559 = vadd.f32 0.0, %v2558
      %v2560 = vpop.f32.mrb[0].mxu0
      %v2561 = vpop.f32.mrb[0].mxu0
      %v2562 = vadd.f32 0.0, %v2561
      %v2563 = vpop.f32.mrb[0].mxu0
      %2564 = vmatprep.mubr.bf16.mxu0 0
      %2565 = vmatmul.mubr.bf16.gmra.mrb[0].mxu0 %v2475
      %v2566 = vpop.f32.mrb[0].mxu0
      %v2567 = vadd.f32 0.0, %v2566
      %v2568 = vpop.f32.mrb[0].mxu0
      %v2569 = vpop.f32.mrb[0].mxu0
      %v2570 = vadd.f32 0.0, %v2569
      %v2571 = vpop.f32.mrb[0].mxu0
      %2572 = vmatprep.mubr.bf16.mxu0 0
      %2573 = vmatmul.mubr.bf16.gmra.mrb[0].mxu0 %v2478
      %v2574 = vpop.f32.mrb[0].mxu0
      %v2575 = vadd.f32 0.0, %v2574
      %v2576 = vpop.f32.mrb[0].mxu0
      %v2577 = vpop.f32.mrb[0].mxu0
      %v2578 = vadd.f32 0.0, %v2577
      %v2579 = vpop.f32.mrb[0].mxu0
      %2580 = vmatprep.mubr.bf16.mxu0 0
      %2581 = vmatmul.mubr.bf16.gmra.mrb[0].mxu0 %v2481
      %v2582 = vpop.f32.mrb[0].mxu0
      %v2583 = vadd.f32 0.0, %v2582
      %v2584 = vpop.f32.mrb[0].mxu0
      %v2585 = vpop.f32.mrb[0].mxu0
      %v2586 = vadd.f32 0.0, %v2585
      %v2587 = vpop.f32.mrb[0].mxu0
      %2588 = vmatprep.mubr.bf16.mxu0 0
      %2589 = vmatmul.mubr.bf16.gmra.mrb[0].mxu0 %v2484
      %v2590 = vpop.f32.mrb[0].mxu0
      %v2591 = vadd.f32 0.0, %v2590
      %v2592 = vpop.f32.mrb[0].mxu0
      %v2593 = vpop.f32.mrb[0].mxu0
      %v2594 = vadd.f32 0.0, %v2593
      %v2595 = vpop.f32.mrb[0].mxu0
      %2596 = vmatprep.mubr.bf16.mxu0 0
      %2597 = vmatmul.mubr.bf16.gmra.mrb[0].mxu0 %v2487
      %v2598 = vpop.f32.mrb[0].mxu0
      %v2599 = vadd.f32 0.0, %v2598
      %v2600 = vpop.f32.mrb[0].mxu0
      %v2601 = vpop.f32.mrb[0].mxu0
      %v2602 = vadd.f32 0.0, %v2601
      %v2603 = vpop.f32.mrb[0].mxu0
      %2604 = vmatprep.mubr.bf16.mxu0 0
      %2605 = vmatmul.mubr.bf16.gmra.mrb[0].mxu0 %v2490
      %v2606 = vpop.f32.mrb[0].mxu0
      %v2607 = vadd.f32 0.0, %v2606
      %v2608 = vpop.f32.mrb[0].mxu0
      %v2609 = vpop.f32.mrb[0].mxu0
      %v2610 = vadd.f32 0.0, %v2609
      %v2611 = vpop.f32.mrb[0].mxu0
      %2612 = vmatprep.mubr.bf16.mxu0 0
      %2613 = vmatmul.mubr.bf16.gmra.mrb[0].mxu0 %v2493
      %v2614 = vpop.f32.mrb[0].mxu0
      %v2615 = vadd.f32 0.0, %v2614
      %v2616 = vpop.f32.mrb[0].mxu0
      %v2617 = vpop.f32.mrb[0].mxu0
      %v2618 = vadd.f32 0.0, %v2617
      %v2619 = vpop.f32.mrb[0].mxu0
      %2620 = vmatprep.mubr.bf16.mxu0 0
      %2621 = vmatmul.mubr.bf16.gmra.mrb[0].mxu0 %v2496
      %v2622 = vpop.f32.mrb[0].mxu0
      %v2623 = vadd.f32 0.0, %v2622
      %v2624 = vpop.f32.mrb[0].mxu0
      %v2625 = vpop.f32.mrb[0].mxu0
      %v2626 = vadd.f32 0.0, %v2625
      %v2627 = vpop.f32.mrb[0].mxu0
      %2628 = vmatprep.mubr.bf16.mxu0 0
      %2629 = vmatmul.mubr.bf16.gmra.mrb[0].mxu0 %v2499
      %v2630 = vpop.f32.mrb[0].mxu0
      %v2631 = vadd.f32 0.0, %v2630
      %v2632 = vpop.f32.mrb[0].mxu0
      %v2633 = vpop.f32.mrb[0].mxu0
      %v2634 = vadd.f32 0.0, %v2633
      %v2635 = vpop.f32.mrb[0].mxu0
      %2636 = vmatprep.mubr.bf16.mxu0 0
      %2637 = vmatmul.mubr.bf16.gmra.mrb[0].mxu0 %v2502
      %v2638 = vpop.f32.mrb[0].mxu0
      %v2639 = vadd.f32 0.0, %v2638
      %v2640 = vpop.f32.mrb[0].mxu0
      %v2641 = vpop.f32.mrb[0].mxu0
      %v2642 = vadd.f32 0.0, %v2641
      %v2643 = vpop.f32.mrb[0].mxu0
      %2644 = vmatprep.mubr.bf16.mxu0 0
      %2645 = vmatmul.mubr.bf16.gmra.mrb[0].mxu0 %v2505
      %v2646 = vpop.f32.mrb[0].mxu0
      %v2647 = vadd.f32 0.0, %v2646
      %v2648 = vpop.f32.mrb[0].mxu0
      %v2649 = vpop.f32.mrb[0].mxu0
      %v2650 = vadd.f32 0.0, %v2649
      %v2651 = vpop.f32.mrb[0].mxu0
      %2652 = vmatprep.mubr.bf16.mxu0 0
      %2653 = vmatmul.mubr.bf16.gmra.mrb[0].mxu0 %v2508
      %v2654 = vpop.f32.mrb[0].mxu0
      %v2655 = vadd.f32 0.0, %v2654
      %v2656 = vpop.f32.mrb[0].mxu0
      %v2657 = vpop.f32.mrb[0].mxu0
      %v2658 = vadd.f32 0.0, %v2657
      %v2659 = vpop.f32.mrb[0].mxu0
      %2660 = vmatprep.mubr.bf16.mxu0 0
      %2661 = vmatmul.mubr.bf16.gmra.mrb[0].mxu0 %v2511
      %v2662 = vpop.f32.mrb[0].mxu0
      %v2663 = vadd.f32 0.0, %v2662
      %v2664 = vpop.f32.mrb[0].mxu0
      %v2665 = vpop.f32.mrb[0].mxu0
      %v2666 = vadd.f32 0.0, %v2665
      %v2667 = vpop.f32.mrb[0].mxu0
      %2668 = vmatprep.mubr.bf16.mxu0 0
      %2669 = vmatmul.mubr.bf16.gmra.mrb[0].mxu0 %v2514
      %v2670 = vpop.f32.mrb[0].mxu0
      %v2671 = vadd.f32 0.0, %v2670
      %v2672 = vpop.f32.mrb[0].mxu0
      %v2673 = vpop.f32.mrb[0].mxu0
      %v2674 = vadd.f32 0.0, %v2673
      %v2675 = vpop.f32.mrb[0].mxu0
      %2676 = vdwg.mxu0
      %v2677 = vadd.f32 %v2130, %v2551
      %v2678 = vadd.f32 %v2131, %v2554
      %v2679 = vadd.f32 %v2132, %v2559
      %v2680 = vadd.f32 %v2133, %v2562
      %v2681 = vadd.f32 %v2134, %v2567
      %v2682 = vadd.f32 %v2135, %v2570
      %v2683 = vadd.f32 %v2136, %v2575
      %v2684 = vadd.f32 %v2137, %v2578
      %v2685 = vadd.f32 %v2138, %v2583
      %v2686 = vadd.f32 %v2139, %v2586
      %v2687 = vadd.f32 %v2140, %v2591
      %v2688 = vadd.f32 %v2141, %v2594
      %v2689 = vadd.f32 %v2142, %v2599
      %v2690 = vadd.f32 %v2143, %v2602
      %v2691 = vadd.f32 %v2144, %v2607
      %v2692 = vadd.f32 %v2145, %v2610
      %v2693 = vadd.f32 %v2146, %v2615
      %v2694 = vadd.f32 %v2147, %v2618
      %v2695 = vadd.f32 %v2148, %v2623
      %v2696 = vadd.f32 %v2149, %v2626
      %v2697 = vadd.f32 %v2150, %v2631
      %v2698 = vadd.f32 %v2151, %v2634
      %v2699 = vadd.f32 %v2152, %v2639
      %v2700 = vadd.f32 %v2153, %v2642
      %v2701 = vadd.f32 %v2154, %v2647
      %v2702 = vadd.f32 %v2155, %v2650
      %v2703 = vadd.f32 %v2156, %v2655
      %v2704 = vadd.f32 %v2157, %v2658
      %v2705 = vadd.f32 %v2158, %v2663
      %v2706 = vadd.f32 %v2159, %v2666
      %v2707 = vadd.f32 %v2160, %v2671
      %v2708 = vadd.f32 %v2161, %v2674
      %v2709 = vld [vmem:[#allocation2] sm:$0xe0]
      %v2710 = vld [vmem:[#allocation2 + $0x10] sm:$0xe0]
      %v2711 = vld [vmem:[#allocation2 + $0x20] sm:$0xe0]
      %v2712 = vld [vmem:[#allocation2 + $0x30] sm:$0xe0]
      %v2713 = vld [vmem:[#allocation2 + $0x40] sm:$0xe0]
      %v2714 = vld [vmem:[#allocation2 + $0x50] sm:$0xe0]
      %v2715 = vld [vmem:[#allocation2 + $0x60] sm:$0xe0]
      %v2716 = vld [vmem:[#allocation2 + $0x70] sm:$0xe0]
      %v2717 = vld [vmem:[#allocation2 + $0x80] sm:$0xe0]
      %v2718 = vld [vmem:[#allocation2 + $0x90] sm:$0xe0]
      %v2719 = vld [vmem:[#allocation2 + $0xa0] sm:$0xe0]
      %v2720 = vld [vmem:[#allocation2 + $0xb0] sm:$0xe0]
      %v2721 = vld [vmem:[#allocation2 + $0xc0] sm:$0xe0]
      %v2722 = vld [vmem:[#allocation2 + $0xd0] sm:$0xe0]
      %v2723 = vld [vmem:[#allocation2 + $0xe0] sm:$0xe0]
      %v2724 = vld [vmem:[#allocation2 + $0xf0] sm:$0xe0]
      %vm2757 = vcmask 1042432
      %v2758 = vrot.slane %v2709, 5
      %v2759 = vrot.slane %v2162, 5
      %v2760 = vsel %vm2757, %v2758, %v2759
      %v2761 = vrot.slane %v2710, 5
      %v2762 = vrot.slane %v2163, 5
      %v2763 = vsel %vm2757, %v2761, %v2762
      %v2764 = vrot.slane %v2711, 5
      %v2765 = vrot.slane %v2164, 5
      %v2766 = vsel %vm2757, %v2764, %v2765
      %v2767 = vrot.slane %v2712, 5
      %v2768 = vrot.slane %v2165, 5
      %v2769 = vsel %vm2757, %v2767, %v2768
      %v2770 = vrot.slane %v2713, 5
      %v2771 = vrot.slane %v2166, 5
      %v2772 = vsel %vm2757, %v2770, %v2771
      %v2773 = vrot.slane %v2714, 5
      %v2774 = vrot.slane %v2167, 5
      %v2775 = vsel %vm2757, %v2773, %v2774
      %v2776 = vrot.slane %v2715, 5
      %v2777 = vrot.slane %v2168, 5
      %v2778 = vsel %vm2757, %v2776, %v2777
      %v2779 = vrot.slane %v2716, 5
      %v2780 = vrot.slane %v2169, 5
      %v2781 = vsel %vm2757, %v2779, %v2780
      %v2782 = vrot.slane %v2717, 5
      %v2783 = vrot.slane %v2170, 5
      %v2784 = vsel %vm2757, %v2782, %v2783
      %v2785 = vrot.slane %v2718, 5
      %v2786 = vrot.slane %v2171, 5
      %v2787 = vsel %vm2757, %v2785, %v2786
      %v2788 = vrot.slane %v2719, 5
      %v2789 = vrot.slane %v2172, 5
      %v2790 = vsel %vm2757, %v2788, %v2789
      %v2791 = vrot.slane %v2720, 5
      %v2792 = vrot.slane %v2173, 5
      %v2793 = vsel %vm2757, %v2791, %v2792
      %v2794 = vrot.slane %v2721, 5
      %v2795 = vrot.slane %v2174, 5
      %v2796 = vsel %vm2757, %v2794, %v2795
      %v2797 = vrot.slane %v2722, 5
      %v2798 = vrot.slane %v2175, 5
      %v2799 = vsel %vm2757, %v2797, %v2798
      %v2800 = vrot.slane %v2723, 5
      %v2801 = vrot.slane %v2176, 5
      %v2802 = vsel %vm2757, %v2800, %v2801
      %v2803 = vrot.slane %v2724, 5
      %v2804 = vrot.slane %v2177, 5
      %v2805 = vsel %vm2757, %v2803, %v2804
      %s2806 = scalar_lea.vmem %s1, 80
      %v2807 = vld [vmem:[%s2806] sm:$0xf]
      %v2808 = vld [vmem:[%s2806 + $0x4] sm:$0xf]
      %v2809 = vld [vmem:[%s2806 + $0x8] sm:$0xf]
      %v2810 = vld [vmem:[%s2806 + $0xc] sm:$0xf]
      %v2815 = vunpack.c.l.b16 %v2807
      %v2816 = vunpack.c.l.b16 %v2808
      %v2817 = vunpack.c.l.b16 %v2809
      %v2818 = vunpack.c.l.b16 %v2810
      %v2819 = vpack.c.b16 %v2816, %v2815
      %v2820 = vpack.c.b16 %v2818, %v2817
      %v2824 = vsel %vm180, %v2760, 0
      %v2827 = vsel %vm180, %v2763, 0
      %v2830 = vsel %vm180, %v2766, 0
      %v2833 = vsel %vm180, %v2769, 0
      %v2836 = vsel %vm180, %v2772, 0
      %v2839 = vsel %vm180, %v2775, 0
      %v2842 = vsel %vm180, %v2778, 0
      %v2845 = vsel %vm180, %v2781, 0
      %v2848 = vsel %vm180, %v2784, 0
      %v2851 = vsel %vm180, %v2787, 0
      %v2854 = vsel %vm180, %v2790, 0
      %v2857 = vsel %vm180, %v2793, 0
      %v2860 = vsel %vm180, %v2796, 0
      %v2863 = vsel %vm180, %v2799, 0
      %v2866 = vsel %vm180, %v2802, 0
      %v2869 = vsel %vm180, %v2805, 0
      %2871 = vmatprep.subr.bf16.mxu0 0
      %2872 = vmatpush1.bf16.msra.mxu0 %v2819
      %2873 = vmatprep.subr.bf16.mxu0 0
      %2874 = vmatpush1.bf16.msra.mxu0 %v2820
      %2875 = vmatprep.subr.bf16.mxu0 0
      %2876 = vmatpush1.bf16.msra.mxu0 0
      %2877 = vmatprep.subr.bf16.mxu0 0
      %2878 = vmatpush1.bf16.msra.mxu0 0
      %2879 = vmatprep.subr.bf16.mxu0 0
      %2880 = vmatpush1.bf16.msra.mxu0 0
      %2881 = vmatprep.subr.bf16.mxu0 0
      %2882 = vmatpush1.bf16.msra.mxu0 0
      %2883 = vmatprep.subr.bf16.mxu0 0
      %2884 = vmatpush1.bf16.msra.mxu0 0
      %2885 = vmatprep.subr.bf16.mxu0 0
      %2886 = vmatpush1.bf16.msra.mxu0 0
      %2887 = vmatprep.subr.bf16.mxu0 0
      %2888 = vmatpush1.bf16.msra.mxu0 0
      %2889 = vmatprep.subr.bf16.mxu0 0
      %2890 = vmatpush1.bf16.msra.mxu0 0
      %2891 = vmatprep.subr.bf16.mxu0 0
      %2892 = vmatpush1.bf16.msra.mxu0 0
      %2893 = vmatprep.subr.bf16.mxu0 0
      %2894 = vmatpush1.bf16.msra.mxu0 0
      %2895 = vmatprep.subr.bf16.mxu0 0
      %2896 = vmatpush1.bf16.msra.mxu0 0
      %2897 = vmatprep.subr.bf16.mxu0 0
      %2898 = vmatpush1.bf16.msra.mxu0 0
      %2899 = vmatprep.subr.bf16.mxu0 0
      %2900 = vmatpush1.bf16.msra.mxu0 0
      %2901 = vmatprep.subr.bf16.mxu0 0
      %2902 = vmatpush1.bf16.msra.mxu0 0
      %2903 = vmatprep.mubr.bf16.mxu0 0
      %2904 = vmatmul.mubr.bf16.gmra.mrb[0].mxu0 %v2824
      %v2905 = vpop.f32.mrb[0].mxu0
      %v2906 = vadd.f32 0.0, %v2905
      %v2907 = vpop.f32.mrb[0].mxu0
      %v2908 = vpop.f32.mrb[0].mxu0
      %v2909 = vadd.f32 0.0, %v2908
      %v2910 = vpop.f32.mrb[0].mxu0
      %2911 = vmatprep.mubr.bf16.mxu0 0
      %2912 = vmatmul.mubr.bf16.gmra.mrb[0].mxu0 %v2827
      %v2913 = vpop.f32.mrb[0].mxu0
      %v2914 = vadd.f32 0.0, %v2913
      %v2915 = vpop.f32.mrb[0].mxu0
      %v2916 = vpop.f32.mrb[0].mxu0
      %v2917 = vadd.f32 0.0, %v2916
      %v2918 = vpop.f32.mrb[0].mxu0
      %2919 = vmatprep.mubr.bf16.mxu0 0
      %2920 = vmatmul.mubr.bf16.gmra.mrb[0].mxu0 %v2830
      %v2921 = vpop.f32.mrb[0].mxu0
      %v2922 = vadd.f32 0.0, %v2921
      %v2923 = vpop.f32.mrb[0].mxu0
      %v2924 = vpop.f32.mrb[0].mxu0
      %v2925 = vadd.f32 0.0, %v2924
      %v2926 = vpop.f32.mrb[0].mxu0
      %2927 = vmatprep.mubr.bf16.mxu0 0
      %2928 = vmatmul.mubr.bf16.gmra.mrb[0].mxu0 %v2833
      %v2929 = vpop.f32.mrb[0].mxu0
      %v2930 = vadd.f32 0.0, %v2929
      %v2931 = vpop.f32.mrb[0].mxu0
      %v2932 = vpop.f32.mrb[0].mxu0
      %v2933 = vadd.f32 0.0, %v2932
      %v2934 = vpop.f32.mrb[0].mxu0
      %2935 = vmatprep.mubr.bf16.mxu0 0
      %2936 = vmatmul.mubr.bf16.gmra.mrb[0].mxu0 %v2836
      %v2937 = vpop.f32.mrb[0].mxu0
      %v2938 = vadd.f32 0.0, %v2937
      %v2939 = vpop.f32.mrb[0].mxu0
      %v2940 = vpop.f32.mrb[0].mxu0
      %v2941 = vadd.f32 0.0, %v2940
      %v2942 = vpop.f32.mrb[0].mxu0
      %2943 = vmatprep.mubr.bf16.mxu0 0
      %2944 = vmatmul.mubr.bf16.gmra.mrb[0].mxu0 %v2839
      %v2945 = vpop.f32.mrb[0].mxu0
      %v2946 = vadd.f32 0.0, %v2945
      %v2947 = vpop.f32.mrb[0].mxu0
      %v2948 = vpop.f32.mrb[0].mxu0
      %v2949 = vadd.f32 0.0, %v2948
      %v2950 = vpop.f32.mrb[0].mxu0
      %2951 = vmatprep.mubr.bf16.mxu0 0
      %2952 = vmatmul.mubr.bf16.gmra.mrb[0].mxu0 %v2842
      %v2953 = vpop.f32.mrb[0].mxu0
      %v2954 = vadd.f32 0.0, %v2953
      %v2955 = vpop.f32.mrb[0].mxu0
      %v2956 = vpop.f32.mrb[0].mxu0
      %v2957 = vadd.f32 0.0, %v2956
      %v2958 = vpop.f32.mrb[0].mxu0
      %2959 = vmatprep.mubr.bf16.mxu0 0
      %2960 = vmatmul.mubr.bf16.gmra.mrb[0].mxu0 %v2845
      %v2961 = vpop.f32.mrb[0].mxu0
      %v2962 = vadd.f32 0.0, %v2961
      %v2963 = vpop.f32.mrb[0].mxu0
      %v2964 = vpop.f32.mrb[0].mxu0
      %v2965 = vadd.f32 0.0, %v2964
      %v2966 = vpop.f32.mrb[0].mxu0
      %2967 = vmatprep.mubr.bf16.mxu0 0
      %2968 = vmatmul.mubr.bf16.gmra.mrb[0].mxu0 %v2848
      %v2969 = vpop.f32.mrb[0].mxu0
      %v2970 = vadd.f32 0.0, %v2969
      %v2971 = vpop.f32.mrb[0].mxu0
      %v2972 = vpop.f32.mrb[0].mxu0
      %v2973 = vadd.f32 0.0, %v2972
      %v2974 = vpop.f32.mrb[0].mxu0
      %2975 = vmatprep.mubr.bf16.mxu0 0
      %2976 = vmatmul.mubr.bf16.gmra.mrb[0].mxu0 %v2851
      %v2977 = vpop.f32.mrb[0].mxu0
      %v2978 = vadd.f32 0.0, %v2977
      %v2979 = vpop.f32.mrb[0].mxu0
      %v2980 = vpop.f32.mrb[0].mxu0
      %v2981 = vadd.f32 0.0, %v2980
      %v2982 = vpop.f32.mrb[0].mxu0
      %2983 = vmatprep.mubr.bf16.mxu0 0
      %2984 = vmatmul.mubr.bf16.gmra.mrb[0].mxu0 %v2854
      %v2985 = vpop.f32.mrb[0].mxu0
      %v2986 = vadd.f32 0.0, %v2985
      %v2987 = vpop.f32.mrb[0].mxu0
      %v2988 = vpop.f32.mrb[0].mxu0
      %v2989 = vadd.f32 0.0, %v2988
      %v2990 = vpop.f32.mrb[0].mxu0
      %2991 = vmatprep.mubr.bf16.mxu0 0
      %2992 = vmatmul.mubr.bf16.gmra.mrb[0].mxu0 %v2857
      %v2993 = vpop.f32.mrb[0].mxu0
      %v2994 = vadd.f32 0.0, %v2993
      %v2995 = vpop.f32.mrb[0].mxu0
      %v2996 = vpop.f32.mrb[0].mxu0
      %v2997 = vadd.f32 0.0, %v2996
      %v2998 = vpop.f32.mrb[0].mxu0
      %2999 = vmatprep.mubr.bf16.mxu0 0
      %3000 = vmatmul.mubr.bf16.gmra.mrb[0].mxu0 %v2860
      %v3001 = vpop.f32.mrb[0].mxu0
      %v3002 = vadd.f32 0.0, %v3001
      %v3003 = vpop.f32.mrb[0].mxu0
      %v3004 = vpop.f32.mrb[0].mxu0
      %v3005 = vadd.f32 0.0, %v3004
      %v3006 = vpop.f32.mrb[0].mxu0
      %3007 = vmatprep.mubr.bf16.mxu0 0
      %3008 = vmatmul.mubr.bf16.gmra.mrb[0].mxu0 %v2863
      %v3009 = vpop.f32.mrb[0].mxu0
      %v3010 = vadd.f32 0.0, %v3009
      %v3011 = vpop.f32.mrb[0].mxu0
      %v3012 = vpop.f32.mrb[0].mxu0
      %v3013 = vadd.f32 0.0, %v3012
      %v3014 = vpop.f32.mrb[0].mxu0
      %3015 = vmatprep.mubr.bf16.mxu0 0
      %3016 = vmatmul.mubr.bf16.gmra.mrb[0].mxu0 %v2866
      %v3017 = vpop.f32.mrb[0].mxu0
      %v3018 = vadd.f32 0.0, %v3017
      %v3019 = vpop.f32.mrb[0].mxu0
      %v3020 = vpop.f32.mrb[0].mxu0
      %v3021 = vadd.f32 0.0, %v3020
      %v3022 = vpop.f32.mrb[0].mxu0
      %3023 = vmatprep.mubr.bf16.mxu0 0
      %3024 = vmatmul.mubr.bf16.gmra.mrb[0].mxu0 %v2869
      %v3025 = vpop.f32.mrb[0].mxu0
      %v3026 = vadd.f32 0.0, %v3025
      %v3027 = vpop.f32.mrb[0].mxu0
      %v3028 = vpop.f32.mrb[0].mxu0
      %v3029 = vadd.f32 0.0, %v3028
      %v3030 = vpop.f32.mrb[0].mxu0
      %3031 = vdwg.mxu0
      %v3032 = vadd.f32 %v2677, %v2906
      %v3033 = vadd.f32 %v2678, %v2909
      %v3034 = vadd.f32 %v2679, %v2914
      %v3035 = vadd.f32 %v2680, %v2917
      %v3036 = vadd.f32 %v2681, %v2922
      %v3037 = vadd.f32 %v2682, %v2925
      %v3038 = vadd.f32 %v2683, %v2930
      %v3039 = vadd.f32 %v2684, %v2933
      %v3040 = vadd.f32 %v2685, %v2938
      %v3041 = vadd.f32 %v2686, %v2941
      %v3042 = vadd.f32 %v2687, %v2946
      %v3043 = vadd.f32 %v2688, %v2949
      %v3044 = vadd.f32 %v2689, %v2954
      %v3045 = vadd.f32 %v2690, %v2957
      %v3046 = vadd.f32 %v2691, %v2962
      %v3047 = vadd.f32 %v2692, %v2965
      %v3048 = vadd.f32 %v2693, %v2970
      %v3049 = vadd.f32 %v2694, %v2973
      %v3050 = vadd.f32 %v2695, %v2978
      %v3051 = vadd.f32 %v2696, %v2981
      %v3052 = vadd.f32 %v2697, %v2986
      %v3053 = vadd.f32 %v2698, %v2989
      %v3054 = vadd.f32 %v2699, %v2994
      %v3055 = vadd.f32 %v2700, %v2997
      %v3056 = vadd.f32 %v2701, %v3002
      %v3057 = vadd.f32 %v2702, %v3005
      %v3058 = vadd.f32 %v2703, %v3010
      %v3059 = vadd.f32 %v2704, %v3013
      %v3060 = vadd.f32 %v2705, %v3018
      %v3061 = vadd.f32 %v2706, %v3021
      %v3062 = vadd.f32 %v2707, %v3026
      %v3063 = vadd.f32 %v2708, %v3029
      %v3064 = vld [vmem:[#allocation2 + $0x8] sm:$0x3f]
      %v3065 = vld [vmem:[#allocation2 + $0x18] sm:$0x3f]
      %v3066 = vld [vmem:[#allocation2 + $0x28] sm:$0x3f]
      %v3067 = vld [vmem:[#allocation2 + $0x38] sm:$0x3f]
      %v3068 = vld [vmem:[#allocation2 + $0x48] sm:$0x3f]
      %v3069 = vld [vmem:[#allocation2 + $0x58] sm:$0x3f]
      %v3070 = vld [vmem:[#allocation2 + $0x68] sm:$0x3f]
      %v3071 = vld [vmem:[#allocation2 + $0x78] sm:$0x3f]
      %v3072 = vld [vmem:[#allocation2 + $0x88] sm:$0x3f]
      %v3073 = vld [vmem:[#allocation2 + $0x98] sm:$0x3f]
      %v3074 = vld [vmem:[#allocation2 + $0xa8] sm:$0x3f]
      %v3075 = vld [vmem:[#allocation2 + $0xb8] sm:$0x3f]
      %v3076 = vld [vmem:[#allocation2 + $0xc8] sm:$0x3f]
      %v3077 = vld [vmem:[#allocation2 + $0xd8] sm:$0x3f]
      %v3078 = vld [vmem:[#allocation2 + $0xe8] sm:$0x3f]
      %v3079 = vld [vmem:[#allocation2 + $0xf8] sm:$0x3f]
      %vm3080 = vsmask.f32 2304
      %v3082 = vshrl.u32 %v2709, 16
      %v3084 = vrot.slane %v3082, 5
      %v3085 = vshll.u32 %v2709, 16
      %v3087 = vrot.slane %v3085, 6
      %v3088 = vor.u32 %v3084, %v3087
      %v3090 = vshrl.u32 %v3064, 16
      %v3092 = vrot.slane %v3090, 5
      %v3093 = vshll.u32 %v3064, 16
      %v3095 = vrot.slane %v3093, 6
      %v3096 = vor.u32 %v3092, %v3095
      %v3097 = vsel %vm3080, %v3088, %v3096
      %v3099 = vshrl.u32 %v2710, 16
      %v3101 = vrot.slane %v3099, 5
      %v3102 = vshll.u32 %v2710, 16
      %v3104 = vrot.slane %v3102, 6
      %v3105 = vor.u32 %v3101, %v3104
      %v3107 = vshrl.u32 %v3065, 16
      %v3109 = vrot.slane %v3107, 5
      %v3110 = vshll.u32 %v3065, 16
      %v3112 = vrot.slane %v3110, 6
      %v3113 = vor.u32 %v3109, %v3112
      %v3114 = vsel %vm3080, %v3105, %v3113
      %v3116 = vshrl.u32 %v2711, 16
      %v3118 = vrot.slane %v3116, 5
      %v3119 = vshll.u32 %v2711, 16
      %v3121 = vrot.slane %v3119, 6
      %v3122 = vor.u32 %v3118, %v3121
      %v3124 = vshrl.u32 %v3066, 16
      %v3126 = vrot.slane %v3124, 5
      %v3127 = vshll.u32 %v3066, 16
      %v3129 = vrot.slane %v3127, 6
      %v3130 = vor.u32 %v3126, %v3129
      %v3131 = vsel %vm3080, %v3122, %v3130
      %v3133 = vshrl.u32 %v2712, 16
      %v3135 = vrot.slane %v3133, 5
      %v3136 = vshll.u32 %v2712, 16
      %v3138 = vrot.slane %v3136, 6
      %v3139 = vor.u32 %v3135, %v3138
      %v3141 = vshrl.u32 %v3067, 16
      %v3143 = vrot.slane %v3141, 5
      %v3144 = vshll.u32 %v3067, 16
      %v3146 = vrot.slane %v3144, 6
      %v3147 = vor.u32 %v3143, %v3146
      %v3148 = vsel %vm3080, %v3139, %v3147
      %v3150 = vshrl.u32 %v2713, 16
      %v3152 = vrot.slane %v3150, 5
      %v3153 = vshll.u32 %v2713, 16
      %v3155 = vrot.slane %v3153, 6
      %v3156 = vor.u32 %v3152, %v3155
      %v3158 = vshrl.u32 %v3068, 16
      %v3160 = vrot.slane %v3158, 5
      %v3161 = vshll.u32 %v3068, 16
      %v3163 = vrot.slane %v3161, 6
      %v3164 = vor.u32 %v3160, %v3163
      %v3165 = vsel %vm3080, %v3156, %v3164
      %v3167 = vshrl.u32 %v2714, 16
      %v3169 = vrot.slane %v3167, 5
      %v3170 = vshll.u32 %v2714, 16
      %v3172 = vrot.slane %v3170, 6
      %v3173 = vor.u32 %v3169, %v3172
      %v3175 = vshrl.u32 %v3069, 16
      %v3177 = vrot.slane %v3175, 5
      %v3178 = vshll.u32 %v3069, 16
      %v3180 = vrot.slane %v3178, 6
      %v3181 = vor.u32 %v3177, %v3180
      %v3182 = vsel %vm3080, %v3173, %v3181
      %v3184 = vshrl.u32 %v2715, 16
      %v3186 = vrot.slane %v3184, 5
      %v3187 = vshll.u32 %v2715, 16
      %v3189 = vrot.slane %v3187, 6
      %v3190 = vor.u32 %v3186, %v3189
      %v3192 = vshrl.u32 %v3070, 16
      %v3194 = vrot.slane %v3192, 5
      %v3195 = vshll.u32 %v3070, 16
      %v3197 = vrot.slane %v3195, 6
      %v3198 = vor.u32 %v3194, %v3197
      %v3199 = vsel %vm3080, %v3190, %v3198
      %v3201 = vshrl.u32 %v2716, 16
      %v3203 = vrot.slane %v3201, 5
      %v3204 = vshll.u32 %v2716, 16
      %v3206 = vrot.slane %v3204, 6
      %v3207 = vor.u32 %v3203, %v3206
      %v3209 = vshrl.u32 %v3071, 16
      %v3211 = vrot.slane %v3209, 5
      %v3212 = vshll.u32 %v3071, 16
      %v3214 = vrot.slane %v3212, 6
      %v3215 = vor.u32 %v3211, %v3214
      %v3216 = vsel %vm3080, %v3207, %v3215
      %v3218 = vshrl.u32 %v2717, 16
      %v3220 = vrot.slane %v3218, 5
      %v3221 = vshll.u32 %v2717, 16
      %v3223 = vrot.slane %v3221, 6
      %v3224 = vor.u32 %v3220, %v3223
      %v3226 = vshrl.u32 %v3072, 16
      %v3228 = vrot.slane %v3226, 5
      %v3229 = vshll.u32 %v3072, 16
      %v3231 = vrot.slane %v3229, 6
      %v3232 = vor.u32 %v3228, %v3231
      %v3233 = vsel %vm3080, %v3224, %v3232
      %v3235 = vshrl.u32 %v2718, 16
      %v3237 = vrot.slane %v3235, 5
      %v3238 = vshll.u32 %v2718, 16
      %v3240 = vrot.slane %v3238, 6
      %v3241 = vor.u32 %v3237, %v3240
      %v3243 = vshrl.u32 %v3073, 16
      %v3245 = vrot.slane %v3243, 5
      %v3246 = vshll.u32 %v3073, 16
      %v3248 = vrot.slane %v3246, 6
      %v3249 = vor.u32 %v3245, %v3248
      %v3250 = vsel %vm3080, %v3241, %v3249
      %v3252 = vshrl.u32 %v2719, 16
      %v3254 = vrot.slane %v3252, 5
      %v3255 = vshll.u32 %v2719, 16
      %v3257 = vrot.slane %v3255, 6
      %v3258 = vor.u32 %v3254, %v3257
      %v3260 = vshrl.u32 %v3074, 16
      %v3262 = vrot.slane %v3260, 5
      %v3263 = vshll.u32 %v3074, 16
      %v3265 = vrot.slane %v3263, 6
      %v3266 = vor.u32 %v3262, %v3265
      %v3267 = vsel %vm3080, %v3258, %v3266
      %v3269 = vshrl.u32 %v2720, 16
      %v3271 = vrot.slane %v3269, 5
      %v3272 = vshll.u32 %v2720, 16
      %v3274 = vrot.slane %v3272, 6
      %v3275 = vor.u32 %v3271, %v3274
      %v3277 = vshrl.u32 %v3075, 16
      %v3279 = vrot.slane %v3277, 5
      %v3280 = vshll.u32 %v3075, 16
      %v3282 = vrot.slane %v3280, 6
      %v3283 = vor.u32 %v3279, %v3282
      %v3284 = vsel %vm3080, %v3275, %v3283
      %v3286 = vshrl.u32 %v2721, 16
      %v3288 = vrot.slane %v3286, 5
      %v3289 = vshll.u32 %v2721, 16
      %v3291 = vrot.slane %v3289, 6
      %v3292 = vor.u32 %v3288, %v3291
      %v3294 = vshrl.u32 %v3076, 16
      %v3296 = vrot.slane %v3294, 5
      %v3297 = vshll.u32 %v3076, 16
      %v3299 = vrot.slane %v3297, 6
      %v3300 = vor.u32 %v3296, %v3299
      %v3301 = vsel %vm3080, %v3292, %v3300
      %v3303 = vshrl.u32 %v2722, 16
      %v3305 = vrot.slane %v3303, 5
      %v3306 = vshll.u32 %v2722, 16
      %v3308 = vrot.slane %v3306, 6
      %v3309 = vor.u32 %v3305, %v3308
      %v3311 = vshrl.u32 %v3077, 16
      %v3313 = vrot.slane %v3311, 5
      %v3314 = vshll.u32 %v3077, 16
      %v3316 = vrot.slane %v3314, 6
      %v3317 = vor.u32 %v3313, %v3316
      %v3318 = vsel %vm3080, %v3309, %v3317
      %v3320 = vshrl.u32 %v2723, 16
      %v3322 = vrot.slane %v3320, 5
      %v3323 = vshll.u32 %v2723, 16
      %v3325 = vrot.slane %v3323, 6
      %v3326 = vor.u32 %v3322, %v3325
      %v3328 = vshrl.u32 %v3078, 16
      %v3330 = vrot.slane %v3328, 5
      %v3331 = vshll.u32 %v3078, 16
      %v3333 = vrot.slane %v3331, 6
      %v3334 = vor.u32 %v3330, %v3333
      %v3335 = vsel %vm3080, %v3326, %v3334
      %v3337 = vshrl.u32 %v2724, 16
      %v3339 = vrot.slane %v3337, 5
      %v3340 = vshll.u32 %v2724, 16
      %v3342 = vrot.slane %v3340, 6
      %v3343 = vor.u32 %v3339, %v3342
      %v3345 = vshrl.u32 %v3079, 16
      %v3347 = vrot.slane %v3345, 5
      %v3348 = vshll.u32 %v3079, 16
      %v3350 = vrot.slane %v3348, 6
      %v3351 = vor.u32 %v3347, %v3350
      %v3352 = vsel %vm3080, %v3343, %v3351
      %s3353 = scalar_lea.vmem %s1, 96
      %v3354 = vld [vmem:[%s3353] sm:$0xf]
      %v3355 = vld [vmem:[%s3353 + $0x4] sm:$0xf]
      %v3356 = vld [vmem:[%s3353 + $0x8] sm:$0xf]
      %v3357 = vld [vmem:[%s3353 + $0xc] sm:$0xf]
      %v3362 = vunpack.c.l.b16 %v3354
      %v3363 = vunpack.c.l.b16 %v3355
      %v3364 = vunpack.c.l.b16 %v3356
      %v3365 = vunpack.c.l.b16 %v3357
      %v3366 = vpack.c.b16 %v3363, %v3362
      %v3367 = vpack.c.b16 %v3365, %v3364
      %v3371 = vsel %vm180, %v3097, 0
      %v3374 = vsel %vm180, %v3114, 0
      %v3377 = vsel %vm180, %v3131, 0
      %v3380 = vsel %vm180, %v3148, 0
      %v3383 = vsel %vm180, %v3165, 0
      %v3386 = vsel %vm180, %v3182, 0
      %v3389 = vsel %vm180, %v3199, 0
      %v3392 = vsel %vm180, %v3216, 0
      %v3395 = vsel %vm180, %v3233, 0
      %v3398 = vsel %vm180, %v3250, 0
      %v3401 = vsel %vm180, %v3267, 0
      %v3404 = vsel %vm180, %v3284, 0
      %v3407 = vsel %vm180, %v3301, 0
      %v3410 = vsel %vm180, %v3318, 0
      %v3413 = vsel %vm180, %v3335, 0
      %v3416 = vsel %vm180, %v3352, 0
      %3418 = vmatprep.subr.bf16.mxu0 0
      %3419 = vmatpush1.bf16.msra.mxu0 %v3366
      %3420 = vmatprep.subr.bf16.mxu0 0
      %3421 = vmatpush1.bf16.msra.mxu0 %v3367
      %3422 = vmatprep.subr.bf16.mxu0 0
      %3423 = vmatpush1.bf16.msra.mxu0 0
      %3424 = vmatprep.subr.bf16.mxu0 0
      %3425 = vmatpush1.bf16.msra.mxu0 0
      %3426 = vmatprep.subr.bf16.mxu0 0
      %3427 = vmatpush1.bf16.msra.mxu0 0
      %3428 = vmatprep.subr.bf16.mxu0 0
      %3429 = vmatpush1.bf16.msra.mxu0 0
      %3430 = vmatprep.subr.bf16.mxu0 0
      %3431 = vmatpush1.bf16.msra.mxu0 0
      %3432 = vmatprep.subr.bf16.mxu0 0
      %3433 = vmatpush1.bf16.msra.mxu0 0
      %3434 = vmatprep.subr.bf16.mxu0 0
      %3435 = vmatpush1.bf16.msra.mxu0 0
      %3436 = vmatprep.subr.bf16.mxu0 0
      %3437 = vmatpush1.bf16.msra.mxu0 0
      %3438 = vmatprep.subr.bf16.mxu0 0
      %3439 = vmatpush1.bf16.msra.mxu0 0
      %3440 = vmatprep.subr.bf16.mxu0 0
      %3441 = vmatpush1.bf16.msra.mxu0 0
      %3442 = vmatprep.subr.bf16.mxu0 0
      %3443 = vmatpush1.bf16.msra.mxu0 0
      %3444 = vmatprep.subr.bf16.mxu0 0
      %3445 = vmatpush1.bf16.msra.mxu0 0
      %3446 = vmatprep.subr.bf16.mxu0 0
      %3447 = vmatpush1.bf16.msra.mxu0 0
      %3448 = vmatprep.subr.bf16.mxu0 0
      %3449 = vmatpush1.bf16.msra.mxu0 0
      %3450 = vmatprep.mubr.bf16.mxu0 0
      %3451 = vmatmul.mubr.bf16.gmra.mrb[0].mxu0 %v3371
      %v3452 = vpop.f32.mrb[0].mxu0
      %v3453 = vadd.f32 0.0, %v3452
      %v3454 = vpop.f32.mrb[0].mxu0
      %v3455 = vpop.f32.mrb[0].mxu0
      %v3456 = vadd.f32 0.0, %v3455
      %v3457 = vpop.f32.mrb[0].mxu0
      %3458 = vmatprep.mubr.bf16.mxu0 0
      %3459 = vmatmul.mubr.bf16.gmra.mrb[0].mxu0 %v3374
      %v3460 = vpop.f32.mrb[0].mxu0
      %v3461 = vadd.f32 0.0, %v3460
      %v3462 = vpop.f32.mrb[0].mxu0
      %v3463 = vpop.f32.mrb[0].mxu0
      %v3464 = vadd.f32 0.0, %v3463
      %v3465 = vpop.f32.mrb[0].mxu0
      %3466 = vmatprep.mubr.bf16.mxu0 0
      %3467 = vmatmul.mubr.bf16.gmra.mrb[0].mxu0 %v3377
      %v3468 = vpop.f32.mrb[0].mxu0
      %v3469 = vadd.f32 0.0, %v3468
      %v3470 = vpop.f32.mrb[0].mxu0
      %v3471 = vpop.f32.mrb[0].mxu0
      %v3472 = vadd.f32 0.0, %v3471
      %v3473 = vpop.f32.mrb[0].mxu0
      %3474 = vmatprep.mubr.bf16.mxu0 0
      %3475 = vmatmul.mubr.bf16.gmra.mrb[0].mxu0 %v3380
      %v3476 = vpop.f32.mrb[0].mxu0
      %v3477 = vadd.f32 0.0, %v3476
      %v3478 = vpop.f32.mrb[0].mxu0
      %v3479 = vpop.f32.mrb[0].mxu0
      %v3480 = vadd.f32 0.0, %v3479
      %v3481 = vpop.f32.mrb[0].mxu0
      %3482 = vmatprep.mubr.bf16.mxu0 0
      %3483 = vmatmul.mubr.bf16.gmra.mrb[0].mxu0 %v3383
      %v3484 = vpop.f32.mrb[0].mxu0
      %v3485 = vadd.f32 0.0, %v3484
      %v3486 = vpop.f32.mrb[0].mxu0
      %v3487 = vpop.f32.mrb[0].mxu0
      %v3488 = vadd.f32 0.0, %v3487
      %v3489 = vpop.f32.mrb[0].mxu0
      %3490 = vmatprep.mubr.bf16.mxu0 0
      %3491 = vmatmul.mubr.bf16.gmra.mrb[0].mxu0 %v3386
      %v3492 = vpop.f32.mrb[0].mxu0
      %v3493 = vadd.f32 0.0, %v3492
      %v3494 = vpop.f32.mrb[0].mxu0
      %v3495 = vpop.f32.mrb[0].mxu0
      %v3496 = vadd.f32 0.0, %v3495
      %v3497 = vpop.f32.mrb[0].mxu0
      %3498 = vmatprep.mubr.bf16.mxu0 0
      %3499 = vmatmul.mubr.bf16.gmra.mrb[0].mxu0 %v3389
      %v3500 = vpop.f32.mrb[0].mxu0
      %v3501 = vadd.f32 0.0, %v3500
      %v3502 = vpop.f32.mrb[0].mxu0
      %v3503 = vpop.f32.mrb[0].mxu0
      %v3504 = vadd.f32 0.0, %v3503
      %v3505 = vpop.f32.mrb[0].mxu0
      %3506 = vmatprep.mubr.bf16.mxu0 0
      %3507 = vmatmul.mubr.bf16.gmra.mrb[0].mxu0 %v3392
      %v3508 = vpop.f32.mrb[0].mxu0
      %v3509 = vadd.f32 0.0, %v3508
      %v3510 = vpop.f32.mrb[0].mxu0
      %v3511 = vpop.f32.mrb[0].mxu0
      %v3512 = vadd.f32 0.0, %v3511
      %v3513 = vpop.f32.mrb[0].mxu0
      %3514 = vmatprep.mubr.bf16.mxu0 0
      %3515 = vmatmul.mubr.bf16.gmra.mrb[0].mxu0 %v3395
      %v3516 = vpop.f32.mrb[0].mxu0
      %v3517 = vadd.f32 0.0, %v3516
      %v3518 = vpop.f32.mrb[0].mxu0
      %v3519 = vpop.f32.mrb[0].mxu0
      %v3520 = vadd.f32 0.0, %v3519
      %v3521 = vpop.f32.mrb[0].mxu0
      %3522 = vmatprep.mubr.bf16.mxu0 0
      %3523 = vmatmul.mubr.bf16.gmra.mrb[0].mxu0 %v3398
      %v3524 = vpop.f32.mrb[0].mxu0
      %v3525 = vadd.f32 0.0, %v3524
      %v3526 = vpop.f32.mrb[0].mxu0
      %v3527 = vpop.f32.mrb[0].mxu0
      %v3528 = vadd.f32 0.0, %v3527
      %v3529 = vpop.f32.mrb[0].mxu0
      %3530 = vmatprep.mubr.bf16.mxu0 0
      %3531 = vmatmul.mubr.bf16.gmra.mrb[0].mxu0 %v3401
      %v3532 = vpop.f32.mrb[0].mxu0
      %v3533 = vadd.f32 0.0, %v3532
      %v3534 = vpop.f32.mrb[0].mxu0
      %v3535 = vpop.f32.mrb[0].mxu0
      %v3536 = vadd.f32 0.0, %v3535
      %v3537 = vpop.f32.mrb[0].mxu0
      %3538 = vmatprep.mubr.bf16.mxu0 0
      %3539 = vmatmul.mubr.bf16.gmra.mrb[0].mxu0 %v3404
      %v3540 = vpop.f32.mrb[0].mxu0
      %v3541 = vadd.f32 0.0, %v3540
      %v3542 = vpop.f32.mrb[0].mxu0
      %v3543 = vpop.f32.mrb[0].mxu0
      %v3544 = vadd.f32 0.0, %v3543
      %v3545 = vpop.f32.mrb[0].mxu0
      %3546 = vmatprep.mubr.bf16.mxu0 0
      %3547 = vmatmul.mubr.bf16.gmra.mrb[0].mxu0 %v3407
      %v3548 = vpop.f32.mrb[0].mxu0
      %v3549 = vadd.f32 0.0, %v3548
      %v3550 = vpop.f32.mrb[0].mxu0
      %v3551 = vpop.f32.mrb[0].mxu0
      %v3552 = vadd.f32 0.0, %v3551
      %v3553 = vpop.f32.mrb[0].mxu0
      %3554 = vmatprep.mubr.bf16.mxu0 0
      %3555 = vmatmul.mubr.bf16.gmra.mrb[0].mxu0 %v3410
      %v3556 = vpop.f32.mrb[0].mxu0
      %v3557 = vadd.f32 0.0, %v3556
      %v3558 = vpop.f32.mrb[0].mxu0
      %v3559 = vpop.f32.mrb[0].mxu0
      %v3560 = vadd.f32 0.0, %v3559
      %v3561 = vpop.f32.mrb[0].mxu0
      %3562 = vmatprep.mubr.bf16.mxu0 0
      %3563 = vmatmul.mubr.bf16.gmra.mrb[0].mxu0 %v3413
      %v3564 = vpop.f32.mrb[0].mxu0
      %v3565 = vadd.f32 0.0, %v3564
      %v3566 = vpop.f32.mrb[0].mxu0
      %v3567 = vpop.f32.mrb[0].mxu0
      %v3568 = vadd.f32 0.0, %v3567
      %v3569 = vpop.f32.mrb[0].mxu0
      %3570 = vmatprep.mubr.bf16.mxu0 0
      %3571 = vmatmul.mubr.bf16.gmra.mrb[0].mxu0 %v3416
      %v3572 = vpop.f32.mrb[0].mxu0
      %v3573 = vadd.f32 0.0, %v3572
      %v3574 = vpop.f32.mrb[0].mxu0
      %v3575 = vpop.f32.mrb[0].mxu0
      %v3576 = vadd.f32 0.0, %v3575
      %v3577 = vpop.f32.mrb[0].mxu0
      %3578 = vdwg.mxu0
      %v3579 = vadd.f32 %v3032, %v3453
      %v3580 = vadd.f32 %v3033, %v3456
      %v3581 = vadd.f32 %v3034, %v3461
      %v3582 = vadd.f32 %v3035, %v3464
      %v3583 = vadd.f32 %v3036, %v3469
      %v3584 = vadd.f32 %v3037, %v3472
      %v3585 = vadd.f32 %v3038, %v3477
      %v3586 = vadd.f32 %v3039, %v3480
      %v3587 = vadd.f32 %v3040, %v3485
      %v3588 = vadd.f32 %v3041, %v3488
      %v3589 = vadd.f32 %v3042, %v3493
      %v3590 = vadd.f32 %v3043, %v3496
      %v3591 = vadd.f32 %v3044, %v3501
      %v3592 = vadd.f32 %v3045, %v3504
      %v3593 = vadd.f32 %v3046, %v3509
      %v3594 = vadd.f32 %v3047, %v3512
      %v3595 = vadd.f32 %v3048, %v3517
      %v3596 = vadd.f32 %v3049, %v3520
      %v3597 = vadd.f32 %v3050, %v3525
      %v3598 = vadd.f32 %v3051, %v3528
      %v3599 = vadd.f32 %v3052, %v3533
      %v3600 = vadd.f32 %v3053, %v3536
      %v3601 = vadd.f32 %v3054, %v3541
      %v3602 = vadd.f32 %v3055, %v3544
      %v3603 = vadd.f32 %v3056, %v3549
      %v3604 = vadd.f32 %v3057, %v3552
      %v3605 = vadd.f32 %v3058, %v3557
      %v3606 = vadd.f32 %v3059, %v3560
      %v3607 = vadd.f32 %v3060, %v3565
      %v3608 = vadd.f32 %v3061, %v3568
      %v3609 = vadd.f32 %v3062, %v3573
      %v3610 = vadd.f32 %v3063, %v3576
      %v3611 = vld [vmem:[%s2] sm:$0x1]
      %v3613 = vlaneseq
      %v3614 = vshrl.u32 %v3613, 7
      %v3615 = vsub.s32 0, %v3614
      %v3616 = vrot.slane %v3611, %v3615
      %v3618 = vadd.f32 %v3579, %v3616
      %v3619 = vadd.f32 %v3580, %v3616
      %v3620 = vadd.f32 %v3581, %v3616
      %v3621 = vadd.f32 %v3582, %v3616
      %v3622 = vadd.f32 %v3583, %v3616
      %v3623 = vadd.f32 %v3584, %v3616
      %v3624 = vadd.f32 %v3585, %v3616
      %v3625 = vadd.f32 %v3586, %v3616
      %v3626 = vadd.f32 %v3587, %v3616
      %v3627 = vadd.f32 %v3588, %v3616
      %v3628 = vadd.f32 %v3589, %v3616
      %v3629 = vadd.f32 %v3590, %v3616
      %v3630 = vadd.f32 %v3591, %v3616
      %v3631 = vadd.f32 %v3592, %v3616
      %v3632 = vadd.f32 %v3593, %v3616
      %v3633 = vadd.f32 %v3594, %v3616
      %v3634 = vadd.f32 %v3595, %v3616
      %v3635 = vadd.f32 %v3596, %v3616
      %v3636 = vadd.f32 %v3597, %v3616
      %v3637 = vadd.f32 %v3598, %v3616
      %v3638 = vadd.f32 %v3599, %v3616
      %v3639 = vadd.f32 %v3600, %v3616
      %v3640 = vadd.f32 %v3601, %v3616
      %v3641 = vadd.f32 %v3602, %v3616
      %v3642 = vadd.f32 %v3603, %v3616
      %v3643 = vadd.f32 %v3604, %v3616
      %v3644 = vadd.f32 %v3605, %v3616
      %v3645 = vadd.f32 %v3606, %v3616
      %v3646 = vadd.f32 %v3607, %v3616
      %v3647 = vadd.f32 %v3608, %v3616
      %v3648 = vadd.f32 %v3609, %v3616
      %v3649 = vadd.f32 %v3610, %v3616
      %v3650 = vmax.f32 %v3618, 0.0
      %v3651 = vmax.f32 %v3619, 0.0
      %v3652 = vmax.f32 %v3620, 0.0
      %v3653 = vmax.f32 %v3621, 0.0
      %v3654 = vmax.f32 %v3622, 0.0
      %v3655 = vmax.f32 %v3623, 0.0
      %v3656 = vmax.f32 %v3624, 0.0
      %v3657 = vmax.f32 %v3625, 0.0
      %v3658 = vmax.f32 %v3626, 0.0
      %v3659 = vmax.f32 %v3627, 0.0
      %v3660 = vmax.f32 %v3628, 0.0
      %v3661 = vmax.f32 %v3629, 0.0
      %v3662 = vmax.f32 %v3630, 0.0
      %v3663 = vmax.f32 %v3631, 0.0
      %v3664 = vmax.f32 %v3632, 0.0
      %v3665 = vmax.f32 %v3633, 0.0
      %v3666 = vmax.f32 %v3634, 0.0
      %v3667 = vmax.f32 %v3635, 0.0
      %v3668 = vmax.f32 %v3636, 0.0
      %v3669 = vmax.f32 %v3637, 0.0
      %v3670 = vmax.f32 %v3638, 0.0
      %v3671 = vmax.f32 %v3639, 0.0
      %v3672 = vmax.f32 %v3640, 0.0
      %v3673 = vmax.f32 %v3641, 0.0
      %v3674 = vmax.f32 %v3642, 0.0
      %v3675 = vmax.f32 %v3643, 0.0
      %v3676 = vmax.f32 %v3644, 0.0
      %v3677 = vmax.f32 %v3645, 0.0
      %v3678 = vmax.f32 %v3646, 0.0
      %v3679 = vmax.f32 %v3647, 0.0
      %v3680 = vmax.f32 %v3648, 0.0
      %v3681 = vmax.f32 %v3649, 0.0
      %v3682 = vpack.c.bf16 %v3651, %v3650
      %v3683 = vpack.c.bf16 %v3653, %v3652
      %v3684 = vpack.c.bf16 %v3655, %v3654
      %v3685 = vpack.c.bf16 %v3657, %v3656
      %v3686 = vpack.c.bf16 %v3659, %v3658
      %v3687 = vpack.c.bf16 %v3661, %v3660
      %v3688 = vpack.c.bf16 %v3663, %v3662
      %v3689 = vpack.c.bf16 %v3665, %v3664
      %v3690 = vpack.c.bf16 %v3667, %v3666
      %v3691 = vpack.c.bf16 %v3669, %v3668
      %v3692 = vpack.c.bf16 %v3671, %v3670
      %v3693 = vpack.c.bf16 %v3673, %v3672
      %v3694 = vpack.c.bf16 %v3675, %v3674
      %v3695 = vpack.c.bf16 %v3677, %v3676
      %v3696 = vpack.c.bf16 %v3679, %v3678
      %v3697 = vpack.c.bf16 %v3681, %v3680
      %v3714 = vunpack.c.l.b16 %v3682
      %v3715 = vunpack.c.h.b16 %v3682
      %v3716 = vunpack.c.l.b16 %v3683
      %v3717 = vunpack.c.h.b16 %v3683
      %v3718 = vunpack.c.l.b16 %v3684
      %v3719 = vunpack.c.h.b16 %v3684
      %v3720 = vunpack.c.l.b16 %v3685
      %v3721 = vunpack.c.h.b16 %v3685
      %v3722 = vunpack.c.l.b16 %v3686
      %v3723 = vunpack.c.h.b16 %v3686
      %v3724 = vunpack.c.l.b16 %v3687
      %v3725 = vunpack.c.h.b16 %v3687
      %v3726 = vunpack.c.l.b16 %v3688
      %v3727 = vunpack.c.h.b16 %v3688
      %v3728 = vunpack.c.l.b16 %v3689
      %v3729 = vunpack.c.h.b16 %v3689
      %v3730 = vunpack.c.l.b16 %v3690
      %v3731 = vunpack.c.h.b16 %v3690
      %v3732 = vunpack.c.l.b16 %v3691
      %v3733 = vunpack.c.h.b16 %v3691
      %v3734 = vunpack.c.l.b16 %v3692
      %v3735 = vunpack.c.h.b16 %v3692
      %v3736 = vunpack.c.l.b16 %v3693
      %v3737 = vunpack.c.h.b16 %v3693
      %v3738 = vunpack.c.l.b16 %v3694
      %v3739 = vunpack.c.h.b16 %v3694
      %v3740 = vunpack.c.l.b16 %v3695
      %v3741 = vunpack.c.h.b16 %v3695
      %v3742 = vunpack.c.l.b16 %v3696
      %v3743 = vunpack.c.h.b16 %v3696
      %v3744 = vunpack.c.l.b16 %v3697
      %v3745 = vunpack.c.h.b16 %v3697
      %v3746 = vpack.c.b16 %v3714, %v3714
      %v3747 = vpack.c.b16 %v3715, %v3715
      %v3748 = vpack.c.b16 %v3716, %v3716
      %v3749 = vpack.c.b16 %v3717, %v3717
      %v3750 = vpack.c.b16 %v3718, %v3718
      %v3751 = vpack.c.b16 %v3719, %v3719
      %v3752 = vpack.c.b16 %v3720, %v3720
      %v3753 = vpack.c.b16 %v3721, %v3721
      %v3754 = vpack.c.b16 %v3722, %v3722
      %v3755 = vpack.c.b16 %v3723, %v3723
      %v3756 = vpack.c.b16 %v3724, %v3724
      %v3757 = vpack.c.b16 %v3725, %v3725
      %v3758 = vpack.c.b16 %v3726, %v3726
      %v3759 = vpack.c.b16 %v3727, %v3727
      %v3760 = vpack.c.b16 %v3728, %v3728
      %v3761 = vpack.c.b16 %v3729, %v3729
      %v3762 = vpack.c.b16 %v3730, %v3730
      %v3763 = vpack.c.b16 %v3731, %v3731
      %v3764 = vpack.c.b16 %v3732, %v3732
      %v3765 = vpack.c.b16 %v3733, %v3733
      %v3766 = vpack.c.b16 %v3734, %v3734
      %v3767 = vpack.c.b16 %v3735, %v3735
      %v3768 = vpack.c.b16 %v3736, %v3736
      %v3769 = vpack.c.b16 %v3737, %v3737
      %v3770 = vpack.c.b16 %v3738, %v3738
      %v3771 = vpack.c.b16 %v3739, %v3739
      %v3772 = vpack.c.b16 %v3740, %v3740
      %v3773 = vpack.c.b16 %v3741, %v3741
      %v3774 = vpack.c.b16 %v3742, %v3742
      %v3775 = vpack.c.b16 %v3743, %v3743
      %v3776 = vpack.c.b16 %v3744, %v3744
      %v3777 = vpack.c.b16 %v3745, %v3745
      %vm3810 = vcmask 322560
      %3811 = vst.msk [vmem:[%s177] sm:$0xf] %vm3810, %v3746
      %3812 = vst.msk [vmem:[%s177 + $0x4] sm:$0xf] %vm3810, %v3747
      %3813 = vst.msk [vmem:[%s177 + $0x8] sm:$0xf] %vm3810, %v3748
      %3814 = vst.msk [vmem:[%s177 + $0xc] sm:$0xf] %vm3810, %v3749
      %3815 = vst.msk [vmem:[%s177 + $0x10] sm:$0xf] %vm3810, %v3750
      %3816 = vst.msk [vmem:[%s177 + $0x14] sm:$0xf] %vm3810, %v3751
      %3817 = vst.msk [vmem:[%s177 + $0x18] sm:$0xf] %vm3810, %v3752
      %3818 = vst.msk [vmem:[%s177 + $0x1c] sm:$0xf] %vm3810, %v3753
      %3819 = vst.msk [vmem:[%s177 + $0x20] sm:$0xf] %vm3810, %v3754
      %3820 = vst.msk [vmem:[%s177 + $0x24] sm:$0xf] %vm3810, %v3755
      %3821 = vst.msk [vmem:[%s177 + $0x28] sm:$0xf] %vm3810, %v3756
      %3822 = vst.msk [vmem:[%s177 + $0x2c] sm:$0xf] %vm3810, %v3757
      %3823 = vst.msk [vmem:[%s177 + $0x30] sm:$0xf] %vm3810, %v3758
      %3824 = vst.msk [vmem:[%s177 + $0x34] sm:$0xf] %vm3810, %v3759
      %3825 = vst.msk [vmem:[%s177 + $0x38] sm:$0xf] %vm3810, %v3760
      %3826 = vst.msk [vmem:[%s177 + $0x3c] sm:$0xf] %vm3810, %v3761
      %3827 = vst.msk [vmem:[%s177 + $0x40] sm:$0xf] %vm3810, %v3762
      %3828 = vst.msk [vmem:[%s177 + $0x44] sm:$0xf] %vm3810, %v3763
      %3829 = vst.msk [vmem:[%s177 + $0x48] sm:$0xf] %vm3810, %v3764
      %3830 = vst.msk [vmem:[%s177 + $0x4c] sm:$0xf] %vm3810, %v3765
      %3831 = vst.msk [vmem:[%s177 + $0x50] sm:$0xf] %vm3810, %v3766
      %3832 = vst.msk [vmem:[%s177 + $0x54] sm:$0xf] %vm3810, %v3767
      %3833 = vst.msk [vmem:[%s177 + $0x58] sm:$0xf] %vm3810, %v3768
      %3834 = vst.msk [vmem:[%s177 + $0x5c] sm:$0xf] %vm3810, %v3769
      %3835 = vst.msk [vmem:[%s177 + $0x60] sm:$0xf] %vm3810, %v3770
      %3836 = vst.msk [vmem:[%s177 + $0x64] sm:$0xf] %vm3810, %v3771
      %3837 = vst.msk [vmem:[%s177 + $0x68] sm:$0xf] %vm3810, %v3772
      %3838 = vst.msk [vmem:[%s177 + $0x6c] sm:$0xf] %vm3810, %v3773
      %3839 = vst.msk [vmem:[%s177 + $0x70] sm:$0xf] %vm3810, %v3774
      %3840 = vst.msk [vmem:[%s177 + $0x74] sm:$0xf] %vm3810, %v3775
      %3841 = vst.msk [vmem:[%s177 + $0x78] sm:$0xf] %vm3810, %v3776
      %3842 = vst.msk [vmem:[%s177 + $0x7c] sm:$0xf] %vm3810, %v3777
      %s3843 = smul.u32 16, %s14
      %p3844 = scmp.lt.s32.totalorder %s3843, 31
      %s3845 = scalar_select %p3844, %s3843, 31
      %s3846 = smul.addr %s3845, 2
      %s3847 = smul.addr %s3846, 4
      %s3848 = scalar_lea.vmem %s3, %s3847
      // Predicated region
      $region33: #{inception_resnet_b_forward.5} parent=31 // pred_check
        %p3849 = pneg %p100
      $region34: #{inception_resnet_b_forward.5} parent=31 // pred_check_branch
        %3851 = sbr.rel (%p3849) target = $region36
      $region35: #{inception_resnet_b_forward.5} parent=31 // pred_region
        %s3852 = smul.u32 16, %s14
      $region36: #{inception_resnet_b_forward.5} parent=31 // pred_fallthru
        _
    $region32: #{inception_resnet_b_forward.5} parent=5 // pred_fallthru
      _
    %p3853 = scmp.le.s32.totalorder 2, %s9
    // Predicated region
    $region37: #{inception_resnet_b_forward.5} parent=5 // pred_check
      %p3854 = pneg %p3853
    $region38: #{inception_resnet_b_forward.5} parent=5 // pred_check_branch
      %3856 = sbr.rel (%p3854) target = $region40
    $region39: #{inception_resnet_b_forward.5} parent=5 // pred_region
      %s3857 = ssub.s32 %s9, 2
      // Predicated region
      $region41: #{inception_resnet_b_forward.5} parent=39 // pred_check
        %p3858 = pneg %p106
      $region42: #{inception_resnet_b_forward.5} parent=39 // pred_check_branch
        %3860 = sbr.rel (%p3858) target = $region44
      $region43: #{inception_resnet_b_forward.5} parent=39 // pred_region
        %s3861 = smul.u32 16, %s15
        %p3862 = scmp.lt.s32.totalorder %s3861, 31
        %s3863 = scalar_select %p3862, %s3861, 31
        %s3864 = smul.addr %s3863, 2
        %s3865 = smul.addr %s3864, 4
        %s3866 = scalar_lea.vmem %s3, %s3865
      $region44: #{inception_resnet_b_forward.5} parent=39 // pred_fallthru
        _
    $region40: #{inception_resnet_b_forward.5} parent=5 // pred_fallthru
      _
  $region6: #{inception_resnet_b_forward.5} parent=0 // loop_footer
    %s13 = sadd.s32 1, %s9
  $region7: #{inception_resnet_b_forward.5} parent=0 // loop_footer_branch
    %8 = sbr.rel target = $region3
  $region8: #{inception_resnet_b_forward.5} parent=0 // loop_exit
    _

</llo_original>
